<compile_context>
chip_gen: v6e
topology: v6e:2x2x1
jax: 0.10.0
libtpu: 0.0.40
codegen_flags: <defaults>
</compile_context>

<pallas_src>
import functools

import jax
import jax.numpy as jnp
from jax.experimental import pallas as pl
from jax.experimental.pallas import tpu as pltpu

TM = 512      # max row tile (v6e HBM-roofline sweet spot; fits v7x VMEM w/ bf16)
LANE = 128
SUB = 8


# ----------------------------------------------------------------------------
# Pallas kernel: fused (implicit concat ->) Linear -> SiLU -> Linear (-> LN)
#                (-> + residual)
# ----------------------------------------------------------------------------
def _mlp_kernel(*refs, n_in, use_ln, has_res):
    """refs layout:
         x_0 .. x_{n_in-1}   [tm, Din_i] f32/bf16 row tiles
         w1_0 .. w1_{n_in-1} [Din_i, H]  bf16 (row blocks of the concat W1)
         b1  [1, H]  f32
         w2  [H, Dp] bf16
         b2  [1, Dp] f32
         (gamma, beta) [1, Dp] f32   -- only if use_ln
         (res) [tm, Dp]              -- only if has_res
         o   [tm, Dp] f32/bf16
    """
    xs = refs[:n_in]
    w1s = refs[n_in:2 * n_in]
    b1_ref = refs[2 * n_in]
    w2_ref = refs[2 * n_in + 1]
    b2_ref = refs[2 * n_in + 2]
    k = 2 * n_in + 3
    if use_ln:
        g_ref, be_ref = refs[k], refs[k + 1]
        k += 2
    if has_res:
        res_ref = refs[k]
        k += 1
    o_ref = refs[k]

    # First linear: sum of per-chunk bf16 matmuls (== concat(chunks) @ W1).
    acc = None
    for x_ref, w1_ref in zip(xs, w1s):
        p = jnp.dot(x_ref[...].astype(jnp.bfloat16), w1_ref[...],
                    preferred_element_type=jnp.float32)
        acc = p if acc is None else acc + p
    h = acc + b1_ref[...]
    h = h * jax.nn.sigmoid(h)                      # SiLU (f32)

    y = jnp.dot(h.astype(jnp.bfloat16), w2_ref[...],
                preferred_element_type=jnp.float32) + b2_ref[...]

    if use_ln:
        inv_d = 1.0 / y.shape[-1]
        mu = jnp.sum(y, axis=-1, keepdims=True) * inv_d
        c = y - mu
        var = jnp.sum(c * c, axis=-1, keepdims=True) * inv_d
        y = c * jax.lax.rsqrt(var + 1e-5) * g_ref[...] + be_ref[...]

    if has_res:                                    # fused residual (f32 add)
        y = y + res_ref[...].astype(jnp.float32)

    o_ref[...] = y.astype(o_ref.dtype)


def _pick_tile(n):
    """Row tile + grid: >=2 grid steps whenever possible (v7x dual TC)."""
    if n <= SUB:
        return n, 1
    half = (pl.cdiv(n, 2) + SUB - 1) // SUB * SUB
    tm = min(TM, max(SUB, half))
    return tm, pl.cdiv(n, tm)


def mesh_graph_mlp(xs, params, residual=None, out_dtype=jnp.bfloat16):
    """Fused MeshGraphMLP.  `xs` is one array or a tuple of arrays [N, Din_i]
    whose implicit concatenation feeds Linear->SiLU->Linear(->LayerNorm)
    (-> + residual).  Output dtype defaults to bf16 (chained activations)."""
    if not isinstance(xs, (tuple, list)):
        xs = (xs,)
    xs = tuple(xs)
    n_in = len(xs)
    N = xs[0].shape[0]
    assert all(int(x.shape[0]) == N for x in xs), \
        "all MLP inputs must share the same leading dimension"
    dins = tuple(int(x.shape[1]) for x in xs)

    use_ln = "gamma" in params
    w1 = params["w1"]          # pre-cast bf16
    b1 = params["b1"].reshape(1, -1)
    w2 = params["w2"]          # pre-cast bf16
    b2 = params["b2"].reshape(1, -1)
    H = w1.shape[1]
    Dout = w2.shape[1]

    # Split concat-W1 into per-input row blocks (tiny static slices).
    w1_parts, off = [], 0
    for d in dins:
        w1_parts.append(w1[off:off + d])
        off += d
    assert off == w1.shape[0], "sum of input dims must match W1 rows"

    # Lane-dense output: pad Dout up to a multiple of 128 when there is no
    # LayerNorm (LN statistics must see the true width).
    if use_ln:
        assert Dout % LANE == 0, \
            "LayerNorm output width must be a multiple of 128 lanes"
    Dout_p = Dout
    if (not use_ln) and Dout % LANE != 0:
        Dout_p = ((Dout + LANE - 1) // LANE) * LANE
        w2 = jnp.pad(w2, ((0, 0), (0, Dout_p - Dout)))
        b2 = jnp.pad(b2, ((0, 0), (0, Dout_p - Dout)))

    has_res = residual is not None
    if has_res:
        assert Dout_p == Dout
        assert residual.shape == (N, Dout), residual.shape

    tm, steps = _pick_tile(N)
    grid = (steps,)

    args = list(xs) + w1_parts + [b1, w2, b2]
    in_specs = (
        [pl.BlockSpec((tm, d), lambda i: (i, 0)) for d in dins]
        + [pl.BlockSpec((d, H), lambda i: (0, 0)) for d in dins]
        + [pl.BlockSpec((1, H), lambda i: (0, 0)),
           pl.BlockSpec((H, Dout_p), lambda i: (0, 0)),
           pl.BlockSpec((1, Dout_p), lambda i: (0, 0))]
    )
    if use_ln:
        args += [params["gamma"].reshape(1, -1), params["beta"].reshape(1, -1)]
        in_specs += [pl.BlockSpec((1, Dout_p), lambda i: (0, 0))] * 2
    if has_res:
        args += [residual]
        in_specs += [pl.BlockSpec((tm, Dout_p), lambda i: (i, 0))]

    # Scoped-VMEM budget: double-buffered per-step footprint, capped so it is
    # safe on v7x (64 MiB physical) and above the v5e/v6e defaults when needed.
    est = sum(tm * max(d, LANE) * x.dtype.itemsize for x, d in zip(xs, dins))
    est += tm * Dout_p * jnp.dtype(out_dtype).itemsize
    if has_res:
        est += tm * Dout_p * residual.dtype.itemsize
    est += sum(d * H * 2 for d in dins) + H * Dout_p * 2 + 4 * (H + 3 * Dout_p)
    vmem_limit = int(min(max(4 * est, 32 * 1024 * 1024), 64 * 1024 * 1024))

    kern = functools.partial(_mlp_kernel, n_in=n_in, use_ln=use_ln,
                             has_res=has_res)
    out = pl.pallas_call(
        kern,
        out_shape=jax.ShapeDtypeStruct((N, Dout_p), out_dtype),
        grid=grid,
        in_specs=in_specs,
        out_specs=pl.BlockSpec((tm, Dout_p), lambda i: (i, 0)),
        compiler_params=pltpu.CompilerParams(
            dimension_semantics=("parallel",),
            vmem_limit_bytes=vmem_limit),
    )(*args)
    return out if Dout_p == Dout else out[:, :Dout]


# ----------------------------------------------------------------------------
# Deterministic parameter initialization (PyTorch Linear-like uniform init)
# Weights are stored pre-cast to bf16 (MXU-native); biases/LN affine stay f32.
# ----------------------------------------------------------------------------
def _linear_init(key, din, dout):
    k1, k2 = jax.random.split(key)
    bound = 1.0 / (din ** 0.5)
    w = jax.random.uniform(k1, (din, dout), jnp.float32, -bound, bound)
    b = jax.random.uniform(k2, (dout,), jnp.float32, -bound, bound)
    return w, b


def make_mlp_params(key, din, hidden, dout, use_ln=True):
    k1, k2 = jax.random.split(key)
    w1, b1 = _linear_init(k1, din, hidden)
    w2, b2 = _linear_init(k2, hidden, dout)
    p = {"w1": w1.astype(jnp.bfloat16), "b1": b1,
         "w2": w2.astype(jnp.bfloat16), "b2": b2}
    if use_ln:
        p["gamma"] = jnp.ones((dout,), jnp.float32)
        p["beta"] = jnp.zeros((dout,), jnp.float32)
    return p


# ----------------------------------------------------------------------------
# GraphCastNet forward (semantics of the PyTorch module)
# ----------------------------------------------------------------------------
def graphcast_forward(params, graphs, grid_nfeat):
    g2m_src, g2m_dst = graphs["g2m_src"], graphs["g2m_dst"]
    m2g_src, m2g_dst = graphs["m2g_src"], graphs["m2g_dst"]
    mesh_src, mesh_dst = graphs["mesh_src"], graphs["mesh_dst"]
    n_grid = grid_nfeat.shape[0]
    n_mesh = graphs["mesh_ndata"].shape[0]

    # --- encoder embedder (4 MLPs) ----------------------------------------
    grid_emb = mesh_graph_mlp(grid_nfeat, params["emb_grid"])
    mesh_emb = mesh_graph_mlp(graphs["mesh_ndata"], params["emb_mesh"])
    g2m_eemb = mesh_graph_mlp(graphs["g2m_edata"], params["emb_g2m_edge"])
    mesh_eemb = mesh_graph_mlp(graphs["mesh_edata"], params["emb_mesh_edge"])

    # --- encoder: grid -> mesh (MeshGraphEncoder) --------------------------
    # TODO(synk): jnp.take gather / segment_sum scatter stay in XLA; a fully
    #             fused Pallas gather needs scalar-prefetch + manual DMA and a
    #             sorted-segment reduction (graph is static, so this is doable).
    efeat = mesh_graph_mlp(
        (g2m_eemb,
         jnp.take(grid_emb, g2m_src, axis=0),
         jnp.take(mesh_emb, g2m_dst, axis=0)),
        params["enc_edge"])
    agg = jax.ops.segment_sum(efeat, g2m_dst, num_segments=n_mesh)
    mesh_feat = mesh_graph_mlp((agg, mesh_emb), params["enc_dst_node"],
                               residual=mesh_emb)
    grid_feat = mesh_graph_mlp(grid_emb, params["enc_src_node"],
                               residual=grid_emb)

    # --- processor (processor_encoder + processor + processor_decoder) -----
    efeat = mesh_eemb
    nfeat = mesh_feat
    for lp in params["proc_layers"]:
        # edge block (fused residual)
        efeat = mesh_graph_mlp(
            (efeat,
             jnp.take(nfeat, mesh_src, axis=0),
             jnp.take(nfeat, mesh_dst, axis=0)),
            lp["edge"], residual=efeat)
        # node block (fused residual)
        agg = jax.ops.segment_sum(efeat, mesh_dst, num_segments=n_mesh)
        nfeat = mesh_graph_mlp((agg, nfeat), lp["node"], residual=nfeat)
    mesh_feat_proc = nfeat

    # --- decoder embedder ---------------------------------------------------
    m2g_eemb = mesh_graph_mlp(graphs["m2g_edata"], params["emb_m2g_edge"])

    # --- decoder: mesh -> grid (MeshGraphDecoder) ---------------------------
    efeat = mesh_graph_mlp(
        (m2g_eemb,
         jnp.take(mesh_feat_proc, m2g_src, axis=0),
         jnp.take(grid_feat, m2g_dst, axis=0)),
        params["dec_edge"])
    agg = jax.ops.segment_sum(efeat, m2g_dst, num_segments=n_grid)
    grid_dec = mesh_graph_mlp((agg, grid_feat), params["dec_node"],
                              residual=grid_feat)

    # --- finale (no LayerNorm; lane-padded f32 output inside the wrapper) --
    return mesh_graph_mlp(grid_dec, params["finale"], out_dtype=jnp.float32)


# ----------------------------------------------------------------------------
# Build synthetic graphs + params and run
# ----------------------------------------------------------------------------
if __name__ == "__main__":
    key = jax.random.PRNGKey(0)

    HIDDEN = 128                 # lane-dense hidden width (multiple of 128)
    IN_GRID, IN_MESH, IN_EDGE, OUT_GRID = 10, 3, 4, 1
    N_GRID, N_MESH = 64, 16
    E_G2M, E_M2G, E_MESH = 96, 96, 48
    PROCESSOR_LAYERS = 4         # 1 (proc_encoder) + 2 (proc) + 1 (proc_decoder)

    ks = list(jax.random.split(key, 64))
    pop = lambda: ks.pop()

    graphs = {
        "g2m_src": jax.random.randint(pop(), (E_G2M,), 0, N_GRID, jnp.int32),
        "g2m_dst": jax.random.randint(pop(), (E_G2M,), 0, N_MESH, jnp.int32),
        "m2g_src": jax.random.randint(pop(), (E_M2G,), 0, N_MESH, jnp.int32),
        "m2g_dst": jax.random.randint(pop(), (E_M2G,), 0, N_GRID, jnp.int32),
        "mesh_src": jax.random.randint(pop(), (E_MESH,), 0, N_MESH, jnp.int32),
        "mesh_dst": jax.random.randint(pop(), (E_MESH,), 0, N_MESH, jnp.int32),
        "g2m_edata": jax.random.normal(pop(), (E_G2M, IN_EDGE), jnp.float32),
        "m2g_edata": jax.random.normal(pop(), (E_M2G, IN_EDGE), jnp.float32),
        "mesh_edata": jax.random.normal(pop(), (E_MESH, IN_EDGE), jnp.float32),
        "mesh_ndata": jax.random.normal(pop(), (N_MESH, IN_MESH), jnp.float32),
    }

    params = {
        # encoder embedder
        "emb_grid": make_mlp_params(pop(), IN_GRID, HIDDEN, HIDDEN),
        "emb_mesh": make_mlp_params(pop(), IN_MESH, HIDDEN, HIDDEN),
        "emb_g2m_edge": make_mlp_params(pop(), IN_EDGE, HIDDEN, HIDDEN),
        "emb_mesh_edge": make_mlp_params(pop(), IN_EDGE, HIDDEN, HIDDEN),
        # g2m encoder
        "enc_edge": make_mlp_params(pop(), 3 * HIDDEN, HIDDEN, HIDDEN),
        "enc_src_node": make_mlp_params(pop(), HIDDEN, HIDDEN, HIDDEN),
        "enc_dst_node": make_mlp_params(pop(), 2 * HIDDEN, HIDDEN, HIDDEN),
        # processor (edge block + node block per layer)
        "proc_layers": [
            {
                "edge": make_mlp_params(pop(), 3 * HIDDEN, HIDDEN, HIDDEN),
                "node": make_mlp_params(pop(), 2 * HIDDEN, HIDDEN, HIDDEN),
            }
            for _ in range(PROCESSOR_LAYERS)
        ],
        # decoder embedder
        "emb_m2g_edge": make_mlp_params(pop(), IN_EDGE, HIDDEN, HIDDEN),
        # m2g decoder
        "dec_edge": make_mlp_params(pop(), 3 * HIDDEN, HIDDEN, HIDDEN),
        "dec_node": make_mlp_params(pop(), 2 * HIDDEN, HIDDEN, HIDDEN),
        # finale (no LayerNorm)
        "finale": make_mlp_params(pop(), HIDDEN, HIDDEN, OUT_GRID, use_ln=False),
    }

    grid_nfeat = jax.random.normal(pop(), (N_GRID, IN_GRID), jnp.float32)

    fwd = jax.jit(graphcast_forward)
    out = fwd(params, graphs, grid_nfeat)
    jax.block_until_ready(out)
    assert out.shape == (N_GRID, OUT_GRID), out.shape
    assert out.dtype == jnp.float32
    assert jnp.all(jnp.isfinite(out))
    print("KERNEL_OK")
</pallas_src>

<mosaic_0001>
module attributes {stable_mosaic.version = 11 : i64} {
  func.func @_mlp_kernel(%arg0: i32, %arg1: memref<32x10xf32, #tpu.memory_space<vmem>>, %arg2: memref<10x128xbf16, #tpu.memory_space<vmem>>, %arg3: memref<1x128xf32, #tpu.memory_space<vmem>>, %arg4: memref<128x128xbf16, #tpu.memory_space<vmem>>, %arg5: memref<1x128xf32, #tpu.memory_space<vmem>>, %arg6: memref<1x128xf32, #tpu.memory_space<vmem>>, %arg7: memref<1x128xf32, #tpu.memory_space<vmem>>, %arg8: memref<32x128xbf16, #tpu.memory_space<vmem>>) attributes {dimension_semantics = [#tpu.dimension_semantics<parallel>], iteration_bounds = array<i64: 2>, scalar_prefetch = 0 : i64, scratch_operands = 0 : i64, tpu.core_type = #tpu.core_type<tc>, window_params = [{transform_indices = @transform_0, window_bounds = array<i64: 32, 10>}, {pipeline_mode = #tpu.pipeline_mode<synchronous>, transform_indices = @transform_1, window_bounds = array<i64: 10, 128>}, {pipeline_mode = #tpu.pipeline_mode<synchronous>, transform_indices = @transform_2, window_bounds = array<i64: 1, 128>}, {pipeline_mode = #tpu.pipeline_mode<synchronous>, transform_indices = @transform_3, window_bounds = array<i64: 128, 128>}, {pipeline_mode = #tpu.pipeline_mode<synchronous>, transform_indices = @transform_4, window_bounds = array<i64: 1, 128>}, {pipeline_mode = #tpu.pipeline_mode<synchronous>, transform_indices = @transform_5, window_bounds = array<i64: 1, 128>}, {pipeline_mode = #tpu.pipeline_mode<synchronous>, transform_indices = @transform_6, window_bounds = array<i64: 1, 128>}, {transform_indices = @transform_7, window_bounds = array<i64: 32, 128>}]} {
    %c0 = arith.constant 0 : index
    %c0_0 = arith.constant 0 : index
    %0 = vector.load %arg1[%c0, %c0_0] : memref<32x10xf32, #tpu.memory_space<vmem>>, vector<32x10xf32>
    %1 = arith.truncf %0 : vector<32x10xf32> to vector<32x10xbf16>
    %c0_1 = arith.constant 0 : index
    %c0_2 = arith.constant 0 : index
    %2 = vector.load %arg2[%c0_1, %c0_2] : memref<10x128xbf16, #tpu.memory_space<vmem>>, vector<10x128xbf16>
    %cst = arith.constant dense<0.000000e+00> : vector<32x128xf32>
    %3 = tpu.matmul %1, %2, %cst {dimension_numbers = #tpu.dot_dimension_numbers<[1], [0], [0], [1], [0, 0, 1, 1], [], []>} : vector<32x10xbf16>, vector<10x128xbf16>, vector<32x128xf32> -> vector<32x128xf32>
    %c0_3 = arith.constant 0 : index
    %c0_4 = arith.constant 0 : index
    %4 = vector.load %arg3[%c0_3, %c0_4] : memref<1x128xf32, #tpu.memory_space<vmem>>, vector<1x128xf32>
    %5 = vector.broadcast %4 : vector<1x128xf32> to vector<32x128xf32>
    %6 = arith.addf %3, %5 : vector<32x128xf32>
    %7 = arith.negf %6 : vector<32x128xf32>
    %8 = math.exp %7 : vector<32x128xf32>
    %cst_5 = arith.constant 1.000000e+00 : f32
    %9 = vector.broadcast %cst_5 : f32 to vector<32x128xf32>
    %10 = arith.addf %9, %8 : vector<32x128xf32>
    %11 = arith.divf %9, %10 : vector<32x128xf32>
    %12 = arith.mulf %6, %11 : vector<32x128xf32>
    %13 = arith.truncf %12 : vector<32x128xf32> to vector<32x128xbf16>
    %c0_6 = arith.constant 0 : index
    %c0_7 = arith.constant 0 : index
    %14 = vector.load %arg4[%c0_6, %c0_7] : memref<128x128xbf16, #tpu.memory_space<vmem>>, vector<128x128xbf16>
    %cst_8 = arith.constant dense<0.000000e+00> : vector<32x128xf32>
    %15 = tpu.matmul %13, %14, %cst_8 {dimension_numbers = #tpu.dot_dimension_numbers<[1], [0], [0], [1], [0, 0, 1, 1], [], []>} : vector<32x128xbf16>, vector<128x128xbf16>, vector<32x128xf32> -> vector<32x128xf32>
    %c0_9 = arith.constant 0 : index
    %c0_10 = arith.constant 0 : index
    %16 = vector.load %arg5[%c0_9, %c0_10] : memref<1x128xf32, #tpu.memory_space<vmem>>, vector<1x128xf32>
    %17 = vector.broadcast %16 : vector<1x128xf32> to vector<32x128xf32>
    %18 = arith.addf %15, %17 : vector<32x128xf32>
    %cst_11 = arith.constant dense<0.000000e+00> : vector<32xf32>
    %19 = vector.multi_reduction <add>, %18, %cst_11 [1] : vector<32x128xf32> to vector<32xf32>
    %20 = vector.shape_cast %19 : vector<32xf32> to vector<32x1xf32>
    %cst_12 = arith.constant 7.812500e-03 : f32
    %21 = vector.broadcast %cst_12 : f32 to vector<32x1xf32>
    %22 = arith.mulf %20, %21 : vector<32x1xf32>
    %23 = vector.broadcast %22 : vector<32x1xf32> to vector<32x128xf32>
    %24 = arith.subf %18, %23 : vector<32x128xf32>
    %25 = arith.mulf %24, %24 : vector<32x128xf32>
    %cst_13 = arith.constant dense<0.000000e+00> : vector<32xf32>
    %26 = vector.multi_reduction <add>, %25, %cst_13 [1] : vector<32x128xf32> to vector<32xf32>
    %27 = vector.shape_cast %26 : vector<32xf32> to vector<32x1xf32>
    %cst_14 = arith.constant 7.812500e-03 : f32
    %28 = vector.broadcast %cst_14 : f32 to vector<32x1xf32>
    %29 = arith.mulf %27, %28 : vector<32x1xf32>
    %cst_15 = arith.constant 9.99999974E-6 : f32
    %30 = vector.broadcast %cst_15 : f32 to vector<32x1xf32>
    %31 = arith.addf %29, %30 : vector<32x1xf32>
    %32 = math.rsqrt %31 : vector<32x1xf32>
    %33 = vector.broadcast %32 : vector<32x1xf32> to vector<32x128xf32>
    %34 = arith.mulf %24, %33 : vector<32x128xf32>
    %c0_16 = arith.constant 0 : index
    %c0_17 = arith.constant 0 : index
    %35 = vector.load %arg6[%c0_16, %c0_17] : memref<1x128xf32, #tpu.memory_space<vmem>>, vector<1x128xf32>
    %36 = vector.broadcast %35 : vector<1x128xf32> to vector<32x128xf32>
    %37 = arith.mulf %34, %36 : vector<32x128xf32>
    %c0_18 = arith.constant 0 : index
    %c0_19 = arith.constant 0 : index
    %38 = vector.load %arg7[%c0_18, %c0_19] : memref<1x128xf32, #tpu.memory_space<vmem>>, vector<1x128xf32>
    %39 = vector.broadcast %38 : vector<1x128xf32> to vector<32x128xf32>
    %40 = arith.addf %37, %39 : vector<32x128xf32>
    %41 = arith.truncf %40 : vector<32x128xf32> to vector<32x128xbf16>
    %c0_20 = arith.constant 0 : index
    %c0_21 = arith.constant 0 : index
    %42 = vector.load %arg8[%c0_20, %c0_21] : memref<32x128xbf16, #tpu.memory_space<vmem>>, vector<32x128xbf16>
    tpu.vector_store %arg8[%c0_20, %c0_21], %41 {strides = array<i32>} : memref<32x128xbf16, #tpu.memory_space<vmem>>, vector<32x128xbf16>,
    return
  }
  func.func @transform_0(%arg0: i32) -> (i32, i32) {
    %c0_i32 = arith.constant 0 : i32
    %c0_i32_0 = arith.constant 0 : i32
    return %arg0, %c0_i32 : i32, i32
  }
  func.func @transform_1(%arg0: i32) -> (i32, i32) {
    %c0_i32 = arith.constant 0 : i32
    %c0_i32_0 = arith.constant 0 : i32
    %c0_i32_1 = arith.constant 0 : i32
    return %c0_i32, %c0_i32_0 : i32, i32
  }
  func.func @transform_2(%arg0: i32) -> (i32, i32) {
    %c0_i32 = arith.constant 0 : i32
    %c0_i32_0 = arith.constant 0 : i32
    %c0_i32_1 = arith.constant 0 : i32
    return %c0_i32, %c0_i32_0 : i32, i32
  }
  func.func @transform_3(%arg0: i32) -> (i32, i32) {
    %c0_i32 = arith.constant 0 : i32
    %c0_i32_0 = arith.constant 0 : i32
    %c0_i32_1 = arith.constant 0 : i32
    return %c0_i32, %c0_i32_0 : i32, i32
  }
  func.func @transform_4(%arg0: i32) -> (i32, i32) {
    %c0_i32 = arith.constant 0 : i32
    %c0_i32_0 = arith.constant 0 : i32
    %c0_i32_1 = arith.constant 0 : i32
    return %c0_i32, %c0_i32_0 : i32, i32
  }
  func.func @transform_5(%arg0: i32) -> (i32, i32) {
    %c0_i32 = arith.constant 0 : i32
    %c0_i32_0 = arith.constant 0 : i32
    %c0_i32_1 = arith.constant 0 : i32
    return %c0_i32, %c0_i32_0 : i32, i32
  }
  func.func @transform_6(%arg0: i32) -> (i32, i32) {
    %c0_i32 = arith.constant 0 : i32
    %c0_i32_0 = arith.constant 0 : i32
    %c0_i32_1 = arith.constant 0 : i32
    return %c0_i32, %c0_i32_0 : i32, i32
  }
  func.func @transform_7(%arg0: i32) -> (i32, i32) {
    %c0_i32 = arith.constant 0 : i32
    %c0_i32_0 = arith.constant 0 : i32
    return %arg0, %c0_i32 : i32, i32
  }
}

module attributes {stable_mosaic.version = 11 : i64} {
  func.func @_mlp_kernel(%arg0: i32, %arg1: memref<8x3xf32, #tpu.memory_space<vmem>>, %arg2: memref<3x128xbf16, #tpu.memory_space<vmem>>, %arg3: memref<1x128xf32, #tpu.memory_space<vmem>>, %arg4: memref<128x128xbf16, #tpu.memory_space<vmem>>, %arg5: memref<1x128xf32, #tpu.memory_space<vmem>>, %arg6: memref<1x128xf32, #tpu.memory_space<vmem>>, %arg7: memref<1x128xf32, #tpu.memory_space<vmem>>, %arg8: memref<8x128xbf16, #tpu.memory_space<vmem>>) attributes {dimension_semantics = [#tpu.dimension_semantics<parallel>], iteration_bounds = array<i64: 2>, scalar_prefetch = 0 : i64, scratch_operands = 0 : i64, tpu.core_type = #tpu.core_type<tc>, window_params = [{transform_indices = @transform_0, window_bounds = array<i64: 8, 3>}, {pipeline_mode = #tpu.pipeline_mode<synchronous>, transform_indices = @transform_1, window_bounds = array<i64: 3, 128>}, {pipeline_mode = #tpu.pipeline_mode<synchronous>, transform_indices = @transform_2, window_bounds = array<i64: 1, 128>}, {pipeline_mode = #tpu.pipeline_mode<synchronous>, transform_indices = @transform_3, window_bounds = array<i64: 128, 128>}, {pipeline_mode = #tpu.pipeline_mode<synchronous>, transform_indices = @transform_4, window_bounds = array<i64: 1, 128>}, {pipeline_mode = #tpu.pipeline_mode<synchronous>, transform_indices = @transform_5, window_bounds = array<i64: 1, 128>}, {pipeline_mode = #tpu.pipeline_mode<synchronous>, transform_indices = @transform_6, window_bounds = array<i64: 1, 128>}, {transform_indices = @transform_7, window_bounds = array<i64: 8, 128>}]} {
    %c0 = arith.constant 0 : index
    %c0_0 = arith.constant 0 : index
    %0 = vector.load %arg1[%c0, %c0_0] : memref<8x3xf32, #tpu.memory_space<vmem>>, vector<8x3xf32>
    %1 = arith.truncf %0 : vector<8x3xf32> to vector<8x3xbf16>
    %c0_1 = arith.constant 0 : index
    %c0_2 = arith.constant 0 : index
    %2 = vector.load %arg2[%c0_1, %c0_2] : memref<3x128xbf16, #tpu.memory_space<vmem>>, vector<3x128xbf16>
    %cst = arith.constant dense<0.000000e+00> : vector<8x128xf32>
    %3 = tpu.matmul %1, %2, %cst {dimension_numbers = #tpu.dot_dimension_numbers<[1], [0], [0], [1], [0, 0, 1, 1], [], []>} : vector<8x3xbf16>, vector<3x128xbf16>, vector<8x128xf32> -> vector<8x128xf32>
    %c0_3 = arith.constant 0 : index
    %c0_4 = arith.constant 0 : index
    %4 = vector.load %arg3[%c0_3, %c0_4] : memref<1x128xf32, #tpu.memory_space<vmem>>, vector<1x128xf32>
    %5 = vector.broadcast %4 : vector<1x128xf32> to vector<8x128xf32>
    %6 = arith.addf %3, %5 : vector<8x128xf32>
    %7 = arith.negf %6 : vector<8x128xf32>
    %8 = math.exp %7 : vector<8x128xf32>
    %cst_5 = arith.constant 1.000000e+00 : f32
    %9 = vector.broadcast %cst_5 : f32 to vector<8x128xf32>
    %10 = arith.addf %9, %8 : vector<8x128xf32>
    %11 = arith.divf %9, %10 : vector<8x128xf32>
    %12 = arith.mulf %6, %11 : vector<8x128xf32>
    %13 = arith.truncf %12 : vector<8x128xf32> to vector<8x128xbf16>
    %c0_6 = arith.constant 0 : index
    %c0_7 = arith.constant 0 : index
    %14 = vector.load %arg4[%c0_6, %c0_7] : memref<128x128xbf16, #tpu.memory_space<vmem>>, vector<128x128xbf16>
    %cst_8 = arith.constant dense<0.000000e+00> : vector<8x128xf32>
    %15 = tpu.matmul %13, %14, %cst_8 {dimension_numbers = #tpu.dot_dimension_numbers<[1], [0], [0], [1], [0, 0, 1, 1], [], []>} : vector<8x128xbf16>, vector<128x128xbf16>, vector<8x128xf32> -> vector<8x128xf32>
    %c0_9 = arith.constant 0 : index
    %c0_10 = arith.constant 0 : index
    %16 = vector.load %arg5[%c0_9, %c0_10] : memref<1x128xf32, #tpu.memory_space<vmem>>, vector<1x128xf32>
    %17 = vector.broadcast %16 : vector<1x128xf32> to vector<8x128xf32>
    %18 = arith.addf %15, %17 : vector<8x128xf32>
    %cst_11 = arith.constant dense<0.000000e+00> : vector<8xf32>
    %19 = vector.multi_reduction <add>, %18, %cst_11 [1] : vector<8x128xf32> to vector<8xf32>
    %20 = vector.shape_cast %19 : vector<8xf32> to vector<8x1xf32>
    %cst_12 = arith.constant 7.812500e-03 : f32
    %21 = vector.broadcast %cst_12 : f32 to vector<8x1xf32>
    %22 = arith.mulf %20, %21 : vector<8x1xf32>
    %23 = vector.broadcast %22 : vector<8x1xf32> to vector<8x128xf32>
    %24 = arith.subf %18, %23 : vector<8x128xf32>
    %25 = arith.mulf %24, %24 : vector<8x128xf32>
    %cst_13 = arith.constant dense<0.000000e+00> : vector<8xf32>
    %26 = vector.multi_reduction <add>, %25, %cst_13 [1] : vector<8x128xf32> to vector<8xf32>
    %27 = vector.shape_cast %26 : vector<8xf32> to vector<8x1xf32>
    %cst_14 = arith.constant 7.812500e-03 : f32
    %28 = vector.broadcast %cst_14 : f32 to vector<8x1xf32>
    %29 = arith.mulf %27, %28 : vector<8x1xf32>
    %cst_15 = arith.constant 9.99999974E-6 : f32
    %30 = vector.broadcast %cst_15 : f32 to vector<8x1xf32>
    %31 = arith.addf %29, %30 : vector<8x1xf32>
    %32 = math.rsqrt %31 : vector<8x1xf32>
    %33 = vector.broadcast %32 : vector<8x1xf32> to vector<8x128xf32>
    %34 = arith.mulf %24, %33 : vector<8x128xf32>
    %c0_16 = arith.constant 0 : index
    %c0_17 = arith.constant 0 : index
    %35 = vector.load %arg6[%c0_16, %c0_17] : memref<1x128xf32, #tpu.memory_space<vmem>>, vector<1x128xf32>
    %36 = vector.broadcast %35 : vector<1x128xf32> to vector<8x128xf32>
    %37 = arith.mulf %34, %36 : vector<8x128xf32>
    %c0_18 = arith.constant 0 : index
    %c0_19 = arith.constant 0 : index
    %38 = vector.load %arg7[%c0_18, %c0_19] : memref<1x128xf32, #tpu.memory_space<vmem>>, vector<1x128xf32>
    %39 = vector.broadcast %38 : vector<1x128xf32> to vector<8x128xf32>
    %40 = arith.addf %37, %39 : vector<8x128xf32>
    %41 = arith.truncf %40 : vector<8x128xf32> to vector<8x128xbf16>
    %c0_20 = arith.constant 0 : index
    %c0_21 = arith.constant 0 : index
    %42 = vector.load %arg8[%c0_20, %c0_21] : memref<8x128xbf16, #tpu.memory_space<vmem>>, vector<8x128xbf16>
    tpu.vector_store %arg8[%c0_20, %c0_21], %41 {strides = array<i32>} : memref<8x128xbf16, #tpu.memory_space<vmem>>, vector<8x128xbf16>,
    return
  }
  func.func @transform_0(%arg0: i32) -> (i32, i32) {
    %c0_i32 = arith.constant 0 : i32
    %c0_i32_0 = arith.constant 0 : i32
    return %arg0, %c0_i32 : i32, i32
  }
  func.func @transform_1(%arg0: i32) -> (i32, i32) {
    %c0_i32 = arith.constant 0 : i32
    %c0_i32_0 = arith.constant 0 : i32
    %c0_i32_1 = arith.constant 0 : i32
    return %c0_i32, %c0_i32_0 : i32, i32
  }
  func.func @transform_2(%arg0: i32) -> (i32, i32) {
    %c0_i32 = arith.constant 0 : i32
    %c0_i32_0 = arith.constant 0 : i32
    %c0_i32_1 = arith.constant 0 : i32
    return %c0_i32, %c0_i32_0 : i32, i32
  }
  func.func @transform_3(%arg0: i32) -> (i32, i32) {
    %c0_i32 = arith.constant 0 : i32
    %c0_i32_0 = arith.constant 0 : i32
    %c0_i32_1 = arith.constant 0 : i32
    return %c0_i32, %c0_i32_0 : i32, i32
  }
  func.func @transform_4(%arg0: i32) -> (i32, i32) {
    %c0_i32 = arith.constant 0 : i32
    %c0_i32_0 = arith.constant 0 : i32
    %c0_i32_1 = arith.constant 0 : i32
    return %c0_i32, %c0_i32_0 : i32, i32
  }
  func.func @transform_5(%arg0: i32) -> (i32, i32) {
    %c0_i32 = arith.constant 0 : i32
    %c0_i32_0 = arith.constant 0 : i32
    %c0_i32_1 = arith.constant 0 : i32
    return %c0_i32, %c0_i32_0 : i32, i32
  }
  func.func @transform_6(%arg0: i32) -> (i32, i32) {
    %c0_i32 = arith.constant 0 : i32
    %c0_i32_0 = arith.constant 0 : i32
    %c0_i32_1 = arith.constant 0 : i32
    return %c0_i32, %c0_i32_0 : i32, i32
  }
  func.func @transform_7(%arg0: i32) -> (i32, i32) {
    %c0_i32 = arith.constant 0 : i32
    %c0_i32_0 = arith.constant 0 : i32
    return %arg0, %c0_i32 : i32, i32
  }
}

module attributes {stable_mosaic.version = 11 : i64} {
  func.func @_mlp_kernel(%arg0: i32, %arg1: memref<48x4xf32, #tpu.memory_space<vmem>>, %arg2: memref<4x128xbf16, #tpu.memory_space<vmem>>, %arg3: memref<1x128xf32, #tpu.memory_space<vmem>>, %arg4: memref<128x128xbf16, #tpu.memory_space<vmem>>, %arg5: memref<1x128xf32, #tpu.memory_space<vmem>>, %arg6: memref<1x128xf32, #tpu.memory_space<vmem>>, %arg7: memref<1x128xf32, #tpu.memory_space<vmem>>, %arg8: memref<48x128xbf16, #tpu.memory_space<vmem>>) attributes {dimension_semantics = [#tpu.dimension_semantics<parallel>], iteration_bounds = array<i64: 2>, scalar_prefetch = 0 : i64, scratch_operands = 0 : i64, tpu.core_type = #tpu.core_type<tc>, window_params = [{transform_indices = @transform_0, window_bounds = array<i64: 48, 4>}, {pipeline_mode = #tpu.pipeline_mode<synchronous>, transform_indices = @transform_1, window_bounds = array<i64: 4, 128>}, {pipeline_mode = #tpu.pipeline_mode<synchronous>, transform_indices = @transform_2, window_bounds = array<i64: 1, 128>}, {pipeline_mode = #tpu.pipeline_mode<synchronous>, transform_indices = @transform_3, window_bounds = array<i64: 128, 128>}, {pipeline_mode = #tpu.pipeline_mode<synchronous>, transform_indices = @transform_4, window_bounds = array<i64: 1, 128>}, {pipeline_mode = #tpu.pipeline_mode<synchronous>, transform_indices = @transform_5, window_bounds = array<i64: 1, 128>}, {pipeline_mode = #tpu.pipeline_mode<synchronous>, transform_indices = @transform_6, window_bounds = array<i64: 1, 128>}, {transform_indices = @transform_7, window_bounds = array<i64: 48, 128>}]} {
    %c0 = arith.constant 0 : index
    %c0_0 = arith.constant 0 : index
    %0 = vector.load %arg1[%c0, %c0_0] : memref<48x4xf32, #tpu.memory_space<vmem>>, vector<48x4xf32>
    %1 = arith.truncf %0 : vector<48x4xf32> to vector<48x4xbf16>
    %c0_1 = arith.constant 0 : index
    %c0_2 = arith.constant 0 : index
    %2 = vector.load %arg2[%c0_1, %c0_2] : memref<4x128xbf16, #tpu.memory_space<vmem>>, vector<4x128xbf16>
    %cst = arith.constant dense<0.000000e+00> : vector<48x128xf32>
    %3 = tpu.matmul %1, %2, %cst {dimension_numbers = #tpu.dot_dimension_numbers<[1], [0], [0], [1], [0, 0, 1, 1], [], []>} : vector<48x4xbf16>, vector<4x128xbf16>, vector<48x128xf32> -> vector<48x128xf32>
    %c0_3 = arith.constant 0 : index
    %c0_4 = arith.constant 0 : index
    %4 = vector.load %arg3[%c0_3, %c0_4] : memref<1x128xf32, #tpu.memory_space<vmem>>, vector<1x128xf32>
    %5 = vector.broadcast %4 : vector<1x128xf32> to vector<48x128xf32>
    %6 = arith.addf %3, %5 : vector<48x128xf32>
    %7 = arith.negf %6 : vector<48x128xf32>
    %8 = math.exp %7 : vector<48x128xf32>
    %cst_5 = arith.constant 1.000000e+00 : f32
    %9 = vector.broadcast %cst_5 : f32 to vector<48x128xf32>
    %10 = arith.addf %9, %8 : vector<48x128xf32>
    %11 = arith.divf %9, %10 : vector<48x128xf32>
    %12 = arith.mulf %6, %11 : vector<48x128xf32>
    %13 = arith.truncf %12 : vector<48x128xf32> to vector<48x128xbf16>
    %c0_6 = arith.constant 0 : index
    %c0_7 = arith.constant 0 : index
    %14 = vector.load %arg4[%c0_6, %c0_7] : memref<128x128xbf16, #tpu.memory_space<vmem>>, vector<128x128xbf16>
    %cst_8 = arith.constant dense<0.000000e+00> : vector<48x128xf32>
    %15 = tpu.matmul %13, %14, %cst_8 {dimension_numbers = #tpu.dot_dimension_numbers<[1], [0], [0], [1], [0, 0, 1, 1], [], []>} : vector<48x128xbf16>, vector<128x128xbf16>, vector<48x128xf32> -> vector<48x128xf32>
    %c0_9 = arith.constant 0 : index
    %c0_10 = arith.constant 0 : index
    %16 = vector.load %arg5[%c0_9, %c0_10] : memref<1x128xf32, #tpu.memory_space<vmem>>, vector<1x128xf32>
    %17 = vector.broadcast %16 : vector<1x128xf32> to vector<48x128xf32>
    %18 = arith.addf %15, %17 : vector<48x128xf32>
    %cst_11 = arith.constant dense<0.000000e+00> : vector<48xf32>
    %19 = vector.multi_reduction <add>, %18, %cst_11 [1] : vector<48x128xf32> to vector<48xf32>
    %20 = vector.shape_cast %19 : vector<48xf32> to vector<48x1xf32>
    %cst_12 = arith.constant 7.812500e-03 : f32
    %21 = vector.broadcast %cst_12 : f32 to vector<48x1xf32>
    %22 = arith.mulf %20, %21 : vector<48x1xf32>
    %23 = vector.broadcast %22 : vector<48x1xf32> to vector<48x128xf32>
    %24 = arith.subf %18, %23 : vector<48x128xf32>
    %25 = arith.mulf %24, %24 : vector<48x128xf32>
    %cst_13 = arith.constant dense<0.000000e+00> : vector<48xf32>
    %26 = vector.multi_reduction <add>, %25, %cst_13 [1] : vector<48x128xf32> to vector<48xf32>
    %27 = vector.shape_cast %26 : vector<48xf32> to vector<48x1xf32>
    %cst_14 = arith.constant 7.812500e-03 : f32
    %28 = vector.broadcast %cst_14 : f32 to vector<48x1xf32>
    %29 = arith.mulf %27, %28 : vector<48x1xf32>
    %cst_15 = arith.constant 9.99999974E-6 : f32
    %30 = vector.broadcast %cst_15 : f32 to vector<48x1xf32>
    %31 = arith.addf %29, %30 : vector<48x1xf32>
    %32 = math.rsqrt %31 : vector<48x1xf32>
    %33 = vector.broadcast %32 : vector<48x1xf32> to vector<48x128xf32>
    %34 = arith.mulf %24, %33 : vector<48x128xf32>
    %c0_16 = arith.constant 0 : index
    %c0_17 = arith.constant 0 : index
    %35 = vector.load %arg6[%c0_16, %c0_17] : memref<1x128xf32, #tpu.memory_space<vmem>>, vector<1x128xf32>
    %36 = vector.broadcast %35 : vector<1x128xf32> to vector<48x128xf32>
    %37 = arith.mulf %34, %36 : vector<48x128xf32>
    %c0_18 = arith.constant 0 : index
    %c0_19 = arith.constant 0 : index
    %38 = vector.load %arg7[%c0_18, %c0_19] : memref<1x128xf32, #tpu.memory_space<vmem>>, vector<1x128xf32>
    %39 = vector.broadcast %38 : vector<1x128xf32> to vector<48x128xf32>
    %40 = arith.addf %37, %39 : vector<48x128xf32>
    %41 = arith.truncf %40 : vector<48x128xf32> to vector<48x128xbf16>
    %c0_20 = arith.constant 0 : index
    %c0_21 = arith.constant 0 : index
    %42 = vector.load %arg8[%c0_20, %c0_21] : memref<48x128xbf16, #tpu.memory_space<vmem>>, vector<48x128xbf16>
    tpu.vector_store %arg8[%c0_20, %c0_21], %41 {strides = array<i32>} : memref<48x128xbf16, #tpu.memory_space<vmem>>, vector<48x128xbf16>,
    return
  }
  func.func @transform_0(%arg0: i32) -> (i32, i32) {
    %c0_i32 = arith.constant 0 : i32
    %c0_i32_0 = arith.constant 0 : i32
    return %arg0, %c0_i32 : i32, i32
  }
  func.func @transform_1(%arg0: i32) -> (i32, i32) {
    %c0_i32 = arith.constant 0 : i32
    %c0_i32_0 = arith.constant 0 : i32
    %c0_i32_1 = arith.constant 0 : i32
    return %c0_i32, %c0_i32_0 : i32, i32
  }
  func.func @transform_2(%arg0: i32) -> (i32, i32) {
    %c0_i32 = arith.constant 0 : i32
    %c0_i32_0 = arith.constant 0 : i32
    %c0_i32_1 = arith.constant 0 : i32
    return %c0_i32, %c0_i32_0 : i32, i32
  }
  func.func @transform_3(%arg0: i32) -> (i32, i32) {
    %c0_i32 = arith.constant 0 : i32
    %c0_i32_0 = arith.constant 0 : i32
    %c0_i32_1 = arith.constant 0 : i32
    return %c0_i32, %c0_i32_0 : i32, i32
  }
  func.func @transform_4(%arg0: i32) -> (i32, i32) {
    %c0_i32 = arith.constant 0 : i32
    %c0_i32_0 = arith.constant 0 : i32
    %c0_i32_1 = arith.constant 0 : i32
    return %c0_i32, %c0_i32_0 : i32, i32
  }
  func.func @transform_5(%arg0: i32) -> (i32, i32) {
    %c0_i32 = arith.constant 0 : i32
    %c0_i32_0 = arith.constant 0 : i32
    %c0_i32_1 = arith.constant 0 : i32
    return %c0_i32, %c0_i32_0 : i32, i32
  }
  func.func @transform_6(%arg0: i32) -> (i32, i32) {
    %c0_i32 = arith.constant 0 : i32
    %c0_i32_0 = arith.constant 0 : i32
    %c0_i32_1 = arith.constant 0 : i32
    return %c0_i32, %c0_i32_0 : i32, i32
  }
  func.func @transform_7(%arg0: i32) -> (i32, i32) {
    %c0_i32 = arith.constant 0 : i32
    %c0_i32_0 = arith.constant 0 : i32
    return %arg0, %c0_i32 : i32, i32
  }
}

module attributes {stable_mosaic.version = 11 : i64} {
  func.func @_mlp_kernel(%arg0: i32, %arg1: memref<48x128xbf16, #tpu.memory_space<vmem>>, %arg2: memref<48x128xbf16, #tpu.memory_space<vmem>>, %arg3: memref<48x128xbf16, #tpu.memory_space<vmem>>, %arg4: memref<128x128xbf16, #tpu.memory_space<vmem>>, %arg5: memref<128x128xbf16, #tpu.memory_space<vmem>>, %arg6: memref<128x128xbf16, #tpu.memory_space<vmem>>, %arg7: memref<1x128xf32, #tpu.memory_space<vmem>>, %arg8: memref<128x128xbf16, #tpu.memory_space<vmem>>, %arg9: memref<1x128xf32, #tpu.memory_space<vmem>>, %arg10: memref<1x128xf32, #tpu.memory_space<vmem>>, %arg11: memref<1x128xf32, #tpu.memory_space<vmem>>, %arg12: memref<48x128xbf16, #tpu.memory_space<vmem>>) attributes {dimension_semantics = [#tpu.dimension_semantics<parallel>], iteration_bounds = array<i64: 2>, scalar_prefetch = 0 : i64, scratch_operands = 0 : i64, tpu.core_type = #tpu.core_type<tc>, window_params = [{transform_indices = @transform_0, window_bounds = array<i64: 48, 128>}, {transform_indices = @transform_1, window_bounds = array<i64: 48, 128>}, {transform_indices = @transform_2, window_bounds = array<i64: 48, 128>}, {pipeline_mode = #tpu.pipeline_mode<synchronous>, transform_indices = @transform_3, window_bounds = array<i64: 128, 128>}, {pipeline_mode = #tpu.pipeline_mode<synchronous>, transform_indices = @transform_4, window_bounds = array<i64: 128, 128>}, {pipeline_mode = #tpu.pipeline_mode<synchronous>, transform_indices = @transform_5, window_bounds = array<i64: 128, 128>}, {pipeline_mode = #tpu.pipeline_mode<synchronous>, transform_indices = @transform_6, window_bounds = array<i64: 1, 128>}, {pipeline_mode = #tpu.pipeline_mode<synchronous>, transform_indices = @transform_7, window_bounds = array<i64: 128, 128>}, {pipeline_mode = #tpu.pipeline_mode<synchronous>, transform_indices = @transform_8, window_bounds = array<i64: 1, 128>}, {pipeline_mode = #tpu.pipeline_mode<synchronous>, transform_indices = @transform_9, window_bounds = array<i64: 1, 128>}, {pipeline_mode = #tpu.pipeline_mode<synchronous>, transform_indices = @transform_10, window_bounds = array<i64: 1, 128>}, {transform_indices = @transform_11, window_bounds = array<i64: 48, 128>}]} {
    %c0 = arith.constant 0 : index
    %c0_0 = arith.constant 0 : index
    %0 = vector.load %arg1[%c0, %c0_0] : memref<48x128xbf16, #tpu.memory_space<vmem>>, vector<48x128xbf16>
    %c0_1 = arith.constant 0 : index
    %c0_2 = arith.constant 0 : index
    %1 = vector.load %arg4[%c0_1, %c0_2] : memref<128x128xbf16, #tpu.memory_space<vmem>>, vector<128x128xbf16>
    %cst = arith.constant dense<0.000000e+00> : vector<48x128xf32>
    %2 = tpu.matmul %0, %1, %cst {dimension_numbers = #tpu.dot_dimension_numbers<[1], [0], [0], [1], [0, 0, 1, 1], [], []>} : vector<48x128xbf16>, vector<128x128xbf16>, vector<48x128xf32> -> vector<48x128xf32>
    %c0_3 = arith.constant 0 : index
    %c0_4 = arith.constant 0 : index
    %3 = vector.load %arg2[%c0_3, %c0_4] : memref<48x128xbf16, #tpu.memory_space<vmem>>, vector<48x128xbf16>
    %c0_5 = arith.constant 0 : index
    %c0_6 = arith.constant 0 : index
    %4 = vector.load %arg5[%c0_5, %c0_6] : memref<128x128xbf16, #tpu.memory_space<vmem>>, vector<128x128xbf16>
    %cst_7 = arith.constant dense<0.000000e+00> : vector<48x128xf32>
    %5 = tpu.matmul %3, %4, %cst_7 {dimension_numbers = #tpu.dot_dimension_numbers<[1], [0], [0], [1], [0, 0, 1, 1], [], []>} : vector<48x128xbf16>, vector<128x128xbf16>, vector<48x128xf32> -> vector<48x128xf32>
    %6 = arith.addf %2, %5 : vector<48x128xf32>
    %c0_8 = arith.constant 0 : index
    %c0_9 = arith.constant 0 : index
    %7 = vector.load %arg3[%c0_8, %c0_9] : memref<48x128xbf16, #tpu.memory_space<vmem>>, vector<48x128xbf16>
    %c0_10 = arith.constant 0 : index
    %c0_11 = arith.constant 0 : index
    %8 = vector.load %arg6[%c0_10, %c0_11] : memref<128x128xbf16, #tpu.memory_space<vmem>>, vector<128x128xbf16>
    %cst_12 = arith.constant dense<0.000000e+00> : vector<48x128xf32>
    %9 = tpu.matmul %7, %8, %cst_12 {dimension_numbers = #tpu.dot_dimension_numbers<[1], [0], [0], [1], [0, 0, 1, 1], [], []>} : vector<48x128xbf16>, vector<128x128xbf16>, vector<48x128xf32> -> vector<48x128xf32>
    %10 = arith.addf %6, %9 : vector<48x128xf32>
    %c0_13 = arith.constant 0 : index
    %c0_14 = arith.constant 0 : index
    %11 = vector.load %arg7[%c0_13, %c0_14] : memref<1x128xf32, #tpu.memory_space<vmem>>, vector<1x128xf32>
    %12 = vector.broadcast %11 : vector<1x128xf32> to vector<48x128xf32>
    %13 = arith.addf %10, %12 : vector<48x128xf32>
    %14 = arith.negf %13 : vector<48x128xf32>
    %15 = math.exp %14 : vector<48x128xf32>
    %cst_15 = arith.constant 1.000000e+00 : f32
    %16 = vector.broadcast %cst_15 : f32 to vector<48x128xf32>
    %17 = arith.addf %16, %15 : vector<48x128xf32>
    %18 = arith.divf %16, %17 : vector<48x128xf32>
    %19 = arith.mulf %13, %18 : vector<48x128xf32>
    %20 = arith.truncf %19 : vector<48x128xf32> to vector<48x128xbf16>
    %c0_16 = arith.constant 0 : index
    %c0_17 = arith.constant 0 : index
    %21 = vector.load %arg8[%c0_16, %c0_17] : memref<128x128xbf16, #tpu.memory_space<vmem>>, vector<128x128xbf16>
    %cst_18 = arith.constant dense<0.000000e+00> : vector<48x128xf32>
    %22 = tpu.matmul %20, %21, %cst_18 {dimension_numbers = #tpu.dot_dimension_numbers<[1], [0], [0], [1], [0, 0, 1, 1], [], []>} : vector<48x128xbf16>, vector<128x128xbf16>, vector<48x128xf32> -> vector<48x128xf32>
    %c0_19 = arith.constant 0 : index
    %c0_20 = arith.constant 0 : index
    %23 = vector.load %arg9[%c0_19, %c0_20] : memref<1x128xf32, #tpu.memory_space<vmem>>, vector<1x128xf32>
    %24 = vector.broadcast %23 : vector<1x128xf32> to vector<48x128xf32>
    %25 = arith.addf %22, %24 : vector<48x128xf32>
    %cst_21 = arith.constant dense<0.000000e+00> : vector<48xf32>
    %26 = vector.multi_reduction <add>, %25, %cst_21 [1] : vector<48x128xf32> to vector<48xf32>
    %27 = vector.shape_cast %26 : vector<48xf32> to vector<48x1xf32>
    %cst_22 = arith.constant 7.812500e-03 : f32
    %28 = vector.broadcast %cst_22 : f32 to vector<48x1xf32>
    %29 = arith.mulf %27, %28 : vector<48x1xf32>
    %30 = vector.broadcast %29 : vector<48x1xf32> to vector<48x128xf32>
    %31 = arith.subf %25, %30 : vector<48x128xf32>
    %32 = arith.mulf %31, %31 : vector<48x128xf32>
    %cst_23 = arith.constant dense<0.000000e+00> : vector<48xf32>
    %33 = vector.multi_reduction <add>, %32, %cst_23 [1] : vector<48x128xf32> to vector<48xf32>
    %34 = vector.shape_cast %33 : vector<48xf32> to vector<48x1xf32>
    %cst_24 = arith.constant 7.812500e-03 : f32
    %35 = vector.broadcast %cst_24 : f32 to vector<48x1xf32>
    %36 = arith.mulf %34, %35 : vector<48x1xf32>
    %cst_25 = arith.constant 9.99999974E-6 : f32
    %37 = vector.broadcast %cst_25 : f32 to vector<48x1xf32>
    %38 = arith.addf %36, %37 : vector<48x1xf32>
    %39 = math.rsqrt %38 : vector<48x1xf32>
    %40 = vector.broadcast %39 : vector<48x1xf32> to vector<48x128xf32>
    %41 = arith.mulf %31, %40 : vector<48x128xf32>
    %c0_26 = arith.constant 0 : index
    %c0_27 = arith.constant 0 : index
    %42 = vector.load %arg10[%c0_26, %c0_27] : memref<1x128xf32, #tpu.memory_space<vmem>>, vector<1x128xf32>
    %43 = vector.broadcast %42 : vector<1x128xf32> to vector<48x128xf32>
    %44 = arith.mulf %41, %43 : vector<48x128xf32>
    %c0_28 = arith.constant 0 : index
    %c0_29 = arith.constant 0 : index
    %45 = vector.load %arg11[%c0_28, %c0_29] : memref<1x128xf32, #tpu.memory_space<vmem>>, vector<1x128xf32>
    %46 = vector.broadcast %45 : vector<1x128xf32> to vector<48x128xf32>
    %47 = arith.addf %44, %46 : vector<48x128xf32>
    %48 = arith.truncf %47 : vector<48x128xf32> to vector<48x128xbf16>
    %c0_30 = arith.constant 0 : index
    %c0_31 = arith.constant 0 : index
    %49 = vector.load %arg12[%c0_30, %c0_31] : memref<48x128xbf16, #tpu.memory_space<vmem>>, vector<48x128xbf16>
    tpu.vector_store %arg12[%c0_30, %c0_31], %48 {strides = array<i32>} : memref<48x128xbf16, #tpu.memory_space<vmem>>, vector<48x128xbf16>,
    return
  }
  func.func @transform_0(%arg0: i32) -> (i32, i32) {
    %c0_i32 = arith.constant 0 : i32
    %c0_i32_0 = arith.constant 0 : i32
    return %arg0, %c0_i32 : i32, i32
  }
  func.func @transform_1(%arg0: i32) -> (i32, i32) {
    %c0_i32 = arith.constant 0 : i32
    %c0_i32_0 = arith.constant 0 : i32
    return %arg0, %c0_i32 : i32, i32
  }
  func.func @transform_2(%arg0: i32) -> (i32, i32) {
    %c0_i32 = arith.constant 0 : i32
    %c0_i32_0 = arith.constant 0 : i32
    return %arg0, %c0_i32 : i32, i32
  }
  func.func @transform_3(%arg0: i32) -> (i32, i32) {
    %c0_i32 = arith.constant 0 : i32
    %c0_i32_0 = arith.constant 0 : i32
    %c0_i32_1 = arith.constant 0 : i32
    return %c0_i32, %c0_i32_0 : i32, i32
  }
  func.func @transform_4(%arg0: i32) -> (i32, i32) {
    %c0_i32 = arith.constant 0 : i32
    %c0_i32_0 = arith.constant 0 : i32
    %c0_i32_1 = arith.constant 0 : i32
    return %c0_i32, %c0_i32_0 : i32, i32
  }
  func.func @transform_5(%arg0: i32) -> (i32, i32) {
    %c0_i32 = arith.constant 0 : i32
    %c0_i32_0 = arith.constant 0 : i32
    %c0_i32_1 = arith.constant 0 : i32
    return %c0_i32, %c0_i32_0 : i32, i32
  }
  func.func @transform_6(%arg0: i32) -> (i32, i32) {
    %c0_i32 = arith.constant 0 : i32
    %c0_i32_0 = arith.constant 0 : i32
    %c0_i32_1 = arith.constant 0 : i32
    return %c0_i32, %c0_i32_0 : i32, i32
  }
  func.func @transform_7(%arg0: i32) -> (i32, i32) {
    %c0_i32 = arith.constant 0 : i32
    %c0_i32_0 = arith.constant 0 : i32
    %c0_i32_1 = arith.constant 0 : i32
    return %c0_i32, %c0_i32_0 : i32, i32
  }
  func.func @transform_8(%arg0: i32) -> (i32, i32) {
    %c0_i32 = arith.constant 0 : i32
    %c0_i32_0 = arith.constant 0 : i32
    %c0_i32_1 = arith.constant 0 : i32
    return %c0_i32, %c0_i32_0 : i32, i32
  }
  func.func @transform_9(%arg0: i32) -> (i32, i32) {
    %c0_i32 = arith.constant 0 : i32
    %c0_i32_0 = arith.constant 0 : i32
    %c0_i32_1 = arith.constant 0 : i32
    return %c0_i32, %c0_i32_0 : i32, i32
  }
  func.func @transform_10(%arg0: i32) -> (i32, i32) {
    %c0_i32 = arith.constant 0 : i32
    %c0_i32_0 = arith.constant 0 : i32
    %c0_i32_1 = arith.constant 0 : i32
    return %c0_i32, %c0_i32_0 : i32, i32
  }
  func.func @transform_11(%arg0: i32) -> (i32, i32) {
    %c0_i32 = arith.constant 0 : i32
    %c0_i32_0 = arith.constant 0 : i32
    return %arg0, %c0_i32 : i32, i32
  }
}

module attributes {stable_mosaic.version = 11 : i64} {
  func.func @_mlp_kernel(%arg0: i32, %arg1: memref<8x128xbf16, #tpu.memory_space<vmem>>, %arg2: memref<8x128xbf16, #tpu.memory_space<vmem>>, %arg3: memref<128x128xbf16, #tpu.memory_space<vmem>>, %arg4: memref<128x128xbf16, #tpu.memory_space<vmem>>, %arg5: memref<1x128xf32, #tpu.memory_space<vmem>>, %arg6: memref<128x128xbf16, #tpu.memory_space<vmem>>, %arg7: memref<1x128xf32, #tpu.memory_space<vmem>>, %arg8: memref<1x128xf32, #tpu.memory_space<vmem>>, %arg9: memref<1x128xf32, #tpu.memory_space<vmem>>, %arg10: memref<8x128xbf16, #tpu.memory_space<vmem>>, %arg11: memref<8x128xbf16, #tpu.memory_space<vmem>>) attributes {dimension_semantics = [#tpu.dimension_semantics<parallel>], iteration_bounds = array<i64: 2>, scalar_prefetch = 0 : i64, scratch_operands = 0 : i64, tpu.core_type = #tpu.core_type<tc>, window_params = [{transform_indices = @transform_0, window_bounds = array<i64: 8, 128>}, {transform_indices = @transform_1, window_bounds = array<i64: 8, 128>}, {pipeline_mode = #tpu.pipeline_mode<synchronous>, transform_indices = @transform_2, window_bounds = array<i64: 128, 128>}, {pipeline_mode = #tpu.pipeline_mode<synchronous>, transform_indices = @transform_3, window_bounds = array<i64: 128, 128>}, {pipeline_mode = #tpu.pipeline_mode<synchronous>, transform_indices = @transform_4, window_bounds = array<i64: 1, 128>}, {pipeline_mode = #tpu.pipeline_mode<synchronous>, transform_indices = @transform_5, window_bounds = array<i64: 128, 128>}, {pipeline_mode = #tpu.pipeline_mode<synchronous>, transform_indices = @transform_6, window_bounds = array<i64: 1, 128>}, {pipeline_mode = #tpu.pipeline_mode<synchronous>, transform_indices = @transform_7, window_bounds = array<i64: 1, 128>}, {pipeline_mode = #tpu.pipeline_mode<synchronous>, transform_indices = @transform_8, window_bounds = array<i64: 1, 128>}, {transform_indices = @transform_9, window_bounds = array<i64: 8, 128>}, {transform_indices = @transform_10, window_bounds = array<i64: 8, 128>}]} {
    %c0 = arith.constant 0 : index
    %c0_0 = arith.constant 0 : index
    %0 = vector.load %arg1[%c0, %c0_0] : memref<8x128xbf16, #tpu.memory_space<vmem>>, vector<8x128xbf16>
    %c0_1 = arith.constant 0 : index
    %c0_2 = arith.constant 0 : index
    %1 = vector.load %arg3[%c0_1, %c0_2] : memref<128x128xbf16, #tpu.memory_space<vmem>>, vector<128x128xbf16>
    %cst = arith.constant dense<0.000000e+00> : vector<8x128xf32>
    %2 = tpu.matmul %0, %1, %cst {dimension_numbers = #tpu.dot_dimension_numbers<[1], [0], [0], [1], [0, 0, 1, 1], [], []>} : vector<8x128xbf16>, vector<128x128xbf16>, vector<8x128xf32> -> vector<8x128xf32>
    %c0_3 = arith.constant 0 : index
    %c0_4 = arith.constant 0 : index
    %3 = vector.load %arg2[%c0_3, %c0_4] : memref<8x128xbf16, #tpu.memory_space<vmem>>, vector<8x128xbf16>
    %c0_5 = arith.constant 0 : index
    %c0_6 = arith.constant 0 : index
    %4 = vector.load %arg4[%c0_5, %c0_6] : memref<128x128xbf16, #tpu.memory_space<vmem>>, vector<128x128xbf16>
    %cst_7 = arith.constant dense<0.000000e+00> : vector<8x128xf32>
    %5 = tpu.matmul %3, %4, %cst_7 {dimension_numbers = #tpu.dot_dimension_numbers<[1], [0], [0], [1], [0, 0, 1, 1], [], []>} : vector<8x128xbf16>, vector<128x128xbf16>, vector<8x128xf32> -> vector<8x128xf32>
    %6 = arith.addf %2, %5 : vector<8x128xf32>
    %c0_8 = arith.constant 0 : index
    %c0_9 = arith.constant 0 : index
    %7 = vector.load %arg5[%c0_8, %c0_9] : memref<1x128xf32, #tpu.memory_space<vmem>>, vector<1x128xf32>
    %8 = vector.broadcast %7 : vector<1x128xf32> to vector<8x128xf32>
    %9 = arith.addf %6, %8 : vector<8x128xf32>
    %10 = arith.negf %9 : vector<8x128xf32>
    %11 = math.exp %10 : vector<8x128xf32>
    %cst_10 = arith.constant 1.000000e+00 : f32
    %12 = vector.broadcast %cst_10 : f32 to vector<8x128xf32>
    %13 = arith.addf %12, %11 : vector<8x128xf32>
    %14 = arith.divf %12, %13 : vector<8x128xf32>
    %15 = arith.mulf %9, %14 : vector<8x128xf32>
    %16 = arith.truncf %15 : vector<8x128xf32> to vector<8x128xbf16>
    %c0_11 = arith.constant 0 : index
    %c0_12 = arith.constant 0 : index
    %17 = vector.load %arg6[%c0_11, %c0_12] : memref<128x128xbf16, #tpu.memory_space<vmem>>, vector<128x128xbf16>
    %cst_13 = arith.constant dense<0.000000e+00> : vector<8x128xf32>
    %18 = tpu.matmul %16, %17, %cst_13 {dimension_numbers = #tpu.dot_dimension_numbers<[1], [0], [0], [1], [0, 0, 1, 1], [], []>} : vector<8x128xbf16>, vector<128x128xbf16>, vector<8x128xf32> -> vector<8x128xf32>
    %c0_14 = arith.constant 0 : index
    %c0_15 = arith.constant 0 : index
    %19 = vector.load %arg7[%c0_14, %c0_15] : memref<1x128xf32, #tpu.memory_space<vmem>>, vector<1x128xf32>
    %20 = vector.broadcast %19 : vector<1x128xf32> to vector<8x128xf32>
    %21 = arith.addf %18, %20 : vector<8x128xf32>
    %cst_16 = arith.constant dense<0.000000e+00> : vector<8xf32>
    %22 = vector.multi_reduction <add>, %21, %cst_16 [1] : vector<8x128xf32> to vector<8xf32>
    %23 = vector.shape_cast %22 : vector<8xf32> to vector<8x1xf32>
    %cst_17 = arith.constant 7.812500e-03 : f32
    %24 = vector.broadcast %cst_17 : f32 to vector<8x1xf32>
    %25 = arith.mulf %23, %24 : vector<8x1xf32>
    %26 = vector.broadcast %25 : vector<8x1xf32> to vector<8x128xf32>
    %27 = arith.subf %21, %26 : vector<8x128xf32>
    %28 = arith.mulf %27, %27 : vector<8x128xf32>
    %cst_18 = arith.constant dense<0.000000e+00> : vector<8xf32>
    %29 = vector.multi_reduction <add>, %28, %cst_18 [1] : vector<8x128xf32> to vector<8xf32>
    %30 = vector.shape_cast %29 : vector<8xf32> to vector<8x1xf32>
    %cst_19 = arith.constant 7.812500e-03 : f32
    %31 = vector.broadcast %cst_19 : f32 to vector<8x1xf32>
    %32 = arith.mulf %30, %31 : vector<8x1xf32>
    %cst_20 = arith.constant 9.99999974E-6 : f32
    %33 = vector.broadcast %cst_20 : f32 to vector<8x1xf32>
    %34 = arith.addf %32, %33 : vector<8x1xf32>
    %35 = math.rsqrt %34 : vector<8x1xf32>
    %36 = vector.broadcast %35 : vector<8x1xf32> to vector<8x128xf32>
    %37 = arith.mulf %27, %36 : vector<8x128xf32>
    %c0_21 = arith.constant 0 : index
    %c0_22 = arith.constant 0 : index
    %38 = vector.load %arg8[%c0_21, %c0_22] : memref<1x128xf32, #tpu.memory_space<vmem>>, vector<1x128xf32>
    %39 = vector.broadcast %38 : vector<1x128xf32> to vector<8x128xf32>
    %40 = arith.mulf %37, %39 : vector<8x128xf32>
    %c0_23 = arith.constant 0 : index
    %c0_24 = arith.constant 0 : index
    %41 = vector.load %arg9[%c0_23, %c0_24] : memref<1x128xf32, #tpu.memory_space<vmem>>, vector<1x128xf32>
    %42 = vector.broadcast %41 : vector<1x128xf32> to vector<8x128xf32>
    %43 = arith.addf %40, %42 : vector<8x128xf32>
    %c0_25 = arith.constant 0 : index
    %c0_26 = arith.constant 0 : index
    %44 = vector.load %arg10[%c0_25, %c0_26] : memref<8x128xbf16, #tpu.memory_space<vmem>>, vector<8x128xbf16>
    %45 = arith.extf %44 : vector<8x128xbf16> to vector<8x128xf32>
    %46 = arith.addf %43, %45 : vector<8x128xf32>
    %47 = arith.truncf %46 : vector<8x128xf32> to vector<8x128xbf16>
    %c0_27 = arith.constant 0 : index
    %c0_28 = arith.constant 0 : index
    %48 = vector.load %arg11[%c0_27, %c0_28] : memref<8x128xbf16, #tpu.memory_space<vmem>>, vector<8x128xbf16>
    tpu.vector_store %arg11[%c0_27, %c0_28], %47 {strides = array<i32>} : memref<8x128xbf16, #tpu.memory_space<vmem>>, vector<8x128xbf16>,
    return
  }
  func.func @transform_0(%arg0: i32) -> (i32, i32) {
    %c0_i32 = arith.constant 0 : i32
    %c0_i32_0 = arith.constant 0 : i32
    return %arg0, %c0_i32 : i32, i32
  }
  func.func @transform_1(%arg0: i32) -> (i32, i32) {
    %c0_i32 = arith.constant 0 : i32
    %c0_i32_0 = arith.constant 0 : i32
    return %arg0, %c0_i32 : i32, i32
  }
  func.func @transform_2(%arg0: i32) -> (i32, i32) {
    %c0_i32 = arith.constant 0 : i32
    %c0_i32_0 = arith.constant 0 : i32
    %c0_i32_1 = arith.constant 0 : i32
    return %c0_i32, %c0_i32_0 : i32, i32
  }
  func.func @transform_3(%arg0: i32) -> (i32, i32) {
    %c0_i32 = arith.constant 0 : i32
    %c0_i32_0 = arith.constant 0 : i32
    %c0_i32_1 = arith.constant 0 : i32
    return %c0_i32, %c0_i32_0 : i32, i32
  }
  func.func @transform_4(%arg0: i32) -> (i32, i32) {
    %c0_i32 = arith.constant 0 : i32
    %c0_i32_0 = arith.constant 0 : i32
    %c0_i32_1 = arith.constant 0 : i32
    return %c0_i32, %c0_i32_0 : i32, i32
  }
  func.func @transform_5(%arg0: i32) -> (i32, i32) {
    %c0_i32 = arith.constant 0 : i32
    %c0_i32_0 = arith.constant 0 : i32
    %c0_i32_1 = arith.constant 0 : i32
    return %c0_i32, %c0_i32_0 : i32, i32
  }
  func.func @transform_6(%arg0: i32) -> (i32, i32) {
    %c0_i32 = arith.constant 0 : i32
    %c0_i32_0 = arith.constant 0 : i32
    %c0_i32_1 = arith.constant 0 : i32
    return %c0_i32, %c0_i32_0 : i32, i32
  }
  func.func @transform_7(%arg0: i32) -> (i32, i32) {
    %c0_i32 = arith.constant 0 : i32
    %c0_i32_0 = arith.constant 0 : i32
    %c0_i32_1 = arith.constant 0 : i32
    return %c0_i32, %c0_i32_0 : i32, i32
  }
  func.func @transform_8(%arg0: i32) -> (i32, i32) {
    %c0_i32 = arith.constant 0 : i32
    %c0_i32_0 = arith.constant 0 : i32
    %c0_i32_1 = arith.constant 0 : i32
    return %c0_i32, %c0_i32_0 : i32, i32
  }
  func.func @transform_9(%arg0: i32) -> (i32, i32) {
    %c0_i32 = arith.constant 0 : i32
    %c0_i32_0 = arith.constant 0 : i32
    return %arg0, %c0_i32 : i32, i32
  }
  func.func @transform_10(%arg0: i32) -> (i32, i32) {
    %c0_i32 = arith.constant 0 : i32
    %c0_i32_0 = arith.constant 0 : i32
    return %arg0, %c0_i32 : i32, i32
  }
}

module attributes {stable_mosaic.version = 11 : i64} {
  func.func @_mlp_kernel(%arg0: i32, %arg1: memref<24x128xbf16, #tpu.memory_space<vmem>>, %arg2: memref<24x128xbf16, #tpu.memory_space<vmem>>, %arg3: memref<24x128xbf16, #tpu.memory_space<vmem>>, %arg4: memref<128x128xbf16, #tpu.memory_space<vmem>>, %arg5: memref<128x128xbf16, #tpu.memory_space<vmem>>, %arg6: memref<128x128xbf16, #tpu.memory_space<vmem>>, %arg7: memref<1x128xf32, #tpu.memory_space<vmem>>, %arg8: memref<128x128xbf16, #tpu.memory_space<vmem>>, %arg9: memref<1x128xf32, #tpu.memory_space<vmem>>, %arg10: memref<1x128xf32, #tpu.memory_space<vmem>>, %arg11: memref<1x128xf32, #tpu.memory_space<vmem>>, %arg12: memref<24x128xbf16, #tpu.memory_space<vmem>>, %arg13: memref<24x128xbf16, #tpu.memory_space<vmem>>) attributes {dimension_semantics = [#tpu.dimension_semantics<parallel>], iteration_bounds = array<i64: 2>, scalar_prefetch = 0 : i64, scratch_operands = 0 : i64, tpu.core_type = #tpu.core_type<tc>, window_params = [{transform_indices = @transform_0, window_bounds = array<i64: 24, 128>}, {transform_indices = @transform_1, window_bounds = array<i64: 24, 128>}, {transform_indices = @transform_2, window_bounds = array<i64: 24, 128>}, {pipeline_mode = #tpu.pipeline_mode<synchronous>, transform_indices = @transform_3, window_bounds = array<i64: 128, 128>}, {pipeline_mode = #tpu.pipeline_mode<synchronous>, transform_indices = @transform_4, window_bounds = array<i64: 128, 128>}, {pipeline_mode = #tpu.pipeline_mode<synchronous>, transform_indices = @transform_5, window_bounds = array<i64: 128, 128>}, {pipeline_mode = #tpu.pipeline_mode<synchronous>, transform_indices = @transform_6, window_bounds = array<i64: 1, 128>}, {pipeline_mode = #tpu.pipeline_mode<synchronous>, transform_indices = @transform_7, window_bounds = array<i64: 128, 128>}, {pipeline_mode = #tpu.pipeline_mode<synchronous>, transform_indices = @transform_8, window_bounds = array<i64: 1, 128>}, {pipeline_mode = #tpu.pipeline_mode<synchronous>, transform_indices = @transform_9, window_bounds = array<i64: 1, 128>}, {pipeline_mode = #tpu.pipeline_mode<synchronous>, transform_indices = @transform_10, window_bounds = array<i64: 1, 128>}, {transform_indices = @transform_11, window_bounds = array<i64: 24, 128>}, {transform_indices = @transform_12, window_bounds = array<i64: 24, 128>}]} {
    %c0 = arith.constant 0 : index
    %c0_0 = arith.constant 0 : index
    %0 = vector.load %arg1[%c0, %c0_0] : memref<24x128xbf16, #tpu.memory_space<vmem>>, vector<24x128xbf16>
    %c0_1 = arith.constant 0 : index
    %c0_2 = arith.constant 0 : index
    %1 = vector.load %arg4[%c0_1, %c0_2] : memref<128x128xbf16, #tpu.memory_space<vmem>>, vector<128x128xbf16>
    %cst = arith.constant dense<0.000000e+00> : vector<24x128xf32>
    %2 = tpu.matmul %0, %1, %cst {dimension_numbers = #tpu.dot_dimension_numbers<[1], [0], [0], [1], [0, 0, 1, 1], [], []>} : vector<24x128xbf16>, vector<128x128xbf16>, vector<24x128xf32> -> vector<24x128xf32>
    %c0_3 = arith.constant 0 : index
    %c0_4 = arith.constant 0 : index
    %3 = vector.load %arg2[%c0_3, %c0_4] : memref<24x128xbf16, #tpu.memory_space<vmem>>, vector<24x128xbf16>
    %c0_5 = arith.constant 0 : index
    %c0_6 = arith.constant 0 : index
    %4 = vector.load %arg5[%c0_5, %c0_6] : memref<128x128xbf16, #tpu.memory_space<vmem>>, vector<128x128xbf16>
    %cst_7 = arith.constant dense<0.000000e+00> : vector<24x128xf32>
    %5 = tpu.matmul %3, %4, %cst_7 {dimension_numbers = #tpu.dot_dimension_numbers<[1], [0], [0], [1], [0, 0, 1, 1], [], []>} : vector<24x128xbf16>, vector<128x128xbf16>, vector<24x128xf32> -> vector<24x128xf32>
    %6 = arith.addf %2, %5 : vector<24x128xf32>
    %c0_8 = arith.constant 0 : index
    %c0_9 = arith.constant 0 : index
    %7 = vector.load %arg3[%c0_8, %c0_9] : memref<24x128xbf16, #tpu.memory_space<vmem>>, vector<24x128xbf16>
    %c0_10 = arith.constant 0 : index
    %c0_11 = arith.constant 0 : index
    %8 = vector.load %arg6[%c0_10, %c0_11] : memref<128x128xbf16, #tpu.memory_space<vmem>>, vector<128x128xbf16>
    %cst_12 = arith.constant dense<0.000000e+00> : vector<24x128xf32>
    %9 = tpu.matmul %7, %8, %cst_12 {dimension_numbers = #tpu.dot_dimension_numbers<[1], [0], [0], [1], [0, 0, 1, 1], [], []>} : vector<24x128xbf16>, vector<128x128xbf16>, vector<24x128xf32> -> vector<24x128xf32>
    %10 = arith.addf %6, %9 : vector<24x128xf32>
    %c0_13 = arith.constant 0 : index
    %c0_14 = arith.constant 0 : index
    %11 = vector.load %arg7[%c0_13, %c0_14] : memref<1x128xf32, #tpu.memory_space<vmem>>, vector<1x128xf32>
    %12 = vector.broadcast %11 : vector<1x128xf32> to vector<24x128xf32>
    %13 = arith.addf %10, %12 : vector<24x128xf32>
    %14 = arith.negf %13 : vector<24x128xf32>
    %15 = math.exp %14 : vector<24x128xf32>
    %cst_15 = arith.constant 1.000000e+00 : f32
    %16 = vector.broadcast %cst_15 : f32 to vector<24x128xf32>
    %17 = arith.addf %16, %15 : vector<24x128xf32>
    %18 = arith.divf %16, %17 : vector<24x128xf32>
    %19 = arith.mulf %13, %18 : vector<24x128xf32>
    %20 = arith.truncf %19 : vector<24x128xf32> to vector<24x128xbf16>
    %c0_16 = arith.constant 0 : index
    %c0_17 = arith.constant 0 : index
    %21 = vector.load %arg8[%c0_16, %c0_17] : memref<128x128xbf16, #tpu.memory_space<vmem>>, vector<128x128xbf16>
    %cst_18 = arith.constant dense<0.000000e+00> : vector<24x128xf32>
    %22 = tpu.matmul %20, %21, %cst_18 {dimension_numbers = #tpu.dot_dimension_numbers<[1], [0], [0], [1], [0, 0, 1, 1], [], []>} : vector<24x128xbf16>, vector<128x128xbf16>, vector<24x128xf32> -> vector<24x128xf32>
    %c0_19 = arith.constant 0 : index
    %c0_20 = arith.constant 0 : index
    %23 = vector.load %arg9[%c0_19, %c0_20] : memref<1x128xf32, #tpu.memory_space<vmem>>, vector<1x128xf32>
    %24 = vector.broadcast %23 : vector<1x128xf32> to vector<24x128xf32>
    %25 = arith.addf %22, %24 : vector<24x128xf32>
    %cst_21 = arith.constant dense<0.000000e+00> : vector<24xf32>
    %26 = vector.multi_reduction <add>, %25, %cst_21 [1] : vector<24x128xf32> to vector<24xf32>
    %27 = vector.shape_cast %26 : vector<24xf32> to vector<24x1xf32>
    %cst_22 = arith.constant 7.812500e-03 : f32
    %28 = vector.broadcast %cst_22 : f32 to vector<24x1xf32>
    %29 = arith.mulf %27, %28 : vector<24x1xf32>
    %30 = vector.broadcast %29 : vector<24x1xf32> to vector<24x128xf32>
    %31 = arith.subf %25, %30 : vector<24x128xf32>
    %32 = arith.mulf %31, %31 : vector<24x128xf32>
    %cst_23 = arith.constant dense<0.000000e+00> : vector<24xf32>
    %33 = vector.multi_reduction <add>, %32, %cst_23 [1] : vector<24x128xf32> to vector<24xf32>
    %34 = vector.shape_cast %33 : vector<24xf32> to vector<24x1xf32>
    %cst_24 = arith.constant 7.812500e-03 : f32
    %35 = vector.broadcast %cst_24 : f32 to vector<24x1xf32>
    %36 = arith.mulf %34, %35 : vector<24x1xf32>
    %cst_25 = arith.constant 9.99999974E-6 : f32
    %37 = vector.broadcast %cst_25 : f32 to vector<24x1xf32>
    %38 = arith.addf %36, %37 : vector<24x1xf32>
    %39 = math.rsqrt %38 : vector<24x1xf32>
    %40 = vector.broadcast %39 : vector<24x1xf32> to vector<24x128xf32>
    %41 = arith.mulf %31, %40 : vector<24x128xf32>
    %c0_26 = arith.constant 0 : index
    %c0_27 = arith.constant 0 : index
    %42 = vector.load %arg10[%c0_26, %c0_27] : memref<1x128xf32, #tpu.memory_space<vmem>>, vector<1x128xf32>
    %43 = vector.broadcast %42 : vector<1x128xf32> to vector<24x128xf32>
    %44 = arith.mulf %41, %43 : vector<24x128xf32>
    %c0_28 = arith.constant 0 : index
    %c0_29 = arith.constant 0 : index
    %45 = vector.load %arg11[%c0_28, %c0_29] : memref<1x128xf32, #tpu.memory_space<vmem>>, vector<1x128xf32>
    %46 = vector.broadcast %45 : vector<1x128xf32> to vector<24x128xf32>
    %47 = arith.addf %44, %46 : vector<24x128xf32>
    %c0_30 = arith.constant 0 : index
    %c0_31 = arith.constant 0 : index
    %48 = vector.load %arg12[%c0_30, %c0_31] : memref<24x128xbf16, #tpu.memory_space<vmem>>, vector<24x128xbf16>
    %49 = arith.extf %48 : vector<24x128xbf16> to vector<24x128xf32>
    %50 = arith.addf %47, %49 : vector<24x128xf32>
    %51 = arith.truncf %50 : vector<24x128xf32> to vector<24x128xbf16>
    %c0_32 = arith.constant 0 : index
    %c0_33 = arith.constant 0 : index
    %52 = vector.load %arg13[%c0_32, %c0_33] : memref<24x128xbf16, #tpu.memory_space<vmem>>, vector<24x128xbf16>
    tpu.vector_store %arg13[%c0_32, %c0_33], %51 {strides = array<i32>} : memref<24x128xbf16, #tpu.memory_space<vmem>>, vector<24x128xbf16>,
    return
  }
  func.func @transform_0(%arg0: i32) -> (i32, i32) {
    %c0_i32 = arith.constant 0 : i32
    %c0_i32_0 = arith.constant 0 : i32
    return %arg0, %c0_i32 : i32, i32
  }
  func.func @transform_1(%arg0: i32) -> (i32, i32) {
    %c0_i32 = arith.constant 0 : i32
    %c0_i32_0 = arith.constant 0 : i32
    return %arg0, %c0_i32 : i32, i32
  }
  func.func @transform_2(%arg0: i32) -> (i32, i32) {
    %c0_i32 = arith.constant 0 : i32
    %c0_i32_0 = arith.constant 0 : i32
    return %arg0, %c0_i32 : i32, i32
  }
  func.func @transform_3(%arg0: i32) -> (i32, i32) {
    %c0_i32 = arith.constant 0 : i32
    %c0_i32_0 = arith.constant 0 : i32
    %c0_i32_1 = arith.constant 0 : i32
    return %c0_i32, %c0_i32_0 : i32, i32
  }
  func.func @transform_4(%arg0: i32) -> (i32, i32) {
    %c0_i32 = arith.constant 0 : i32
    %c0_i32_0 = arith.constant 0 : i32
    %c0_i32_1 = arith.constant 0 : i32
    return %c0_i32, %c0_i32_0 : i32, i32
  }
  func.func @transform_5(%arg0: i32) -> (i32, i32) {
    %c0_i32 = arith.constant 0 : i32
    %c0_i32_0 = arith.constant 0 : i32
    %c0_i32_1 = arith.constant 0 : i32
    return %c0_i32, %c0_i32_0 : i32, i32
  }
  func.func @transform_6(%arg0: i32) -> (i32, i32) {
    %c0_i32 = arith.constant 0 : i32
    %c0_i32_0 = arith.constant 0 : i32
    %c0_i32_1 = arith.constant 0 : i32
    return %c0_i32, %c0_i32_0 : i32, i32
  }
  func.func @transform_7(%arg0: i32) -> (i32, i32) {
    %c0_i32 = arith.constant 0 : i32
    %c0_i32_0 = arith.constant 0 : i32
    %c0_i32_1 = arith.constant 0 : i32
    return %c0_i32, %c0_i32_0 : i32, i32
  }
  func.func @transform_8(%arg0: i32) -> (i32, i32) {
    %c0_i32 = arith.constant 0 : i32
    %c0_i32_0 = arith.constant 0 : i32
    %c0_i32_1 = arith.constant 0 : i32
    return %c0_i32, %c0_i32_0 : i32, i32
  }
  func.func @transform_9(%arg0: i32) -> (i32, i32) {
    %c0_i32 = arith.constant 0 : i32
    %c0_i32_0 = arith.constant 0 : i32
    %c0_i32_1 = arith.constant 0 : i32
    return %c0_i32, %c0_i32_0 : i32, i32
  }
  func.func @transform_10(%arg0: i32) -> (i32, i32) {
    %c0_i32 = arith.constant 0 : i32
    %c0_i32_0 = arith.constant 0 : i32
    %c0_i32_1 = arith.constant 0 : i32
    return %c0_i32, %c0_i32_0 : i32, i32
  }
  func.func @transform_11(%arg0: i32) -> (i32, i32) {
    %c0_i32 = arith.constant 0 : i32
    %c0_i32_0 = arith.constant 0 : i32
    return %arg0, %c0_i32 : i32, i32
  }
  func.func @transform_12(%arg0: i32) -> (i32, i32) {
    %c0_i32 = arith.constant 0 : i32
    %c0_i32_0 = arith.constant 0 : i32
    return %arg0, %c0_i32 : i32, i32
  }
}

module attributes {stable_mosaic.version = 11 : i64} {
  func.func @_mlp_kernel(%arg0: i32, %arg1: memref<24x4xf32, #tpu.memory_space<vmem>>, %arg2: memref<4x128xbf16, #tpu.memory_space<vmem>>, %arg3: memref<1x128xf32, #tpu.memory_space<vmem>>, %arg4: memref<128x128xbf16, #tpu.memory_space<vmem>>, %arg5: memref<1x128xf32, #tpu.memory_space<vmem>>, %arg6: memref<1x128xf32, #tpu.memory_space<vmem>>, %arg7: memref<1x128xf32, #tpu.memory_space<vmem>>, %arg8: memref<24x128xbf16, #tpu.memory_space<vmem>>) attributes {dimension_semantics = [#tpu.dimension_semantics<parallel>], iteration_bounds = array<i64: 2>, scalar_prefetch = 0 : i64, scratch_operands = 0 : i64, tpu.core_type = #tpu.core_type<tc>, window_params = [{transform_indices = @transform_0, window_bounds = array<i64: 24, 4>}, {pipeline_mode = #tpu.pipeline_mode<synchronous>, transform_indices = @transform_1, window_bounds = array<i64: 4, 128>}, {pipeline_mode = #tpu.pipeline_mode<synchronous>, transform_indices = @transform_2, window_bounds = array<i64: 1, 128>}, {pipeline_mode = #tpu.pipeline_mode<synchronous>, transform_indices = @transform_3, window_bounds = array<i64: 128, 128>}, {pipeline_mode = #tpu.pipeline_mode<synchronous>, transform_indices = @transform_4, window_bounds = array<i64: 1, 128>}, {pipeline_mode = #tpu.pipeline_mode<synchronous>, transform_indices = @transform_5, window_bounds = array<i64: 1, 128>}, {pipeline_mode = #tpu.pipeline_mode<synchronous>, transform_indices = @transform_6, window_bounds = array<i64: 1, 128>}, {transform_indices = @transform_7, window_bounds = array<i64: 24, 128>}]} {
    %c0 = arith.constant 0 : index
    %c0_0 = arith.constant 0 : index
    %0 = vector.load %arg1[%c0, %c0_0] : memref<24x4xf32, #tpu.memory_space<vmem>>, vector<24x4xf32>
    %1 = arith.truncf %0 : vector<24x4xf32> to vector<24x4xbf16>
    %c0_1 = arith.constant 0 : index
    %c0_2 = arith.constant 0 : index
    %2 = vector.load %arg2[%c0_1, %c0_2] : memref<4x128xbf16, #tpu.memory_space<vmem>>, vector<4x128xbf16>
    %cst = arith.constant dense<0.000000e+00> : vector<24x128xf32>
    %3 = tpu.matmul %1, %2, %cst {dimension_numbers = #tpu.dot_dimension_numbers<[1], [0], [0], [1], [0, 0, 1, 1], [], []>} : vector<24x4xbf16>, vector<4x128xbf16>, vector<24x128xf32> -> vector<24x128xf32>
    %c0_3 = arith.constant 0 : index
    %c0_4 = arith.constant 0 : index
    %4 = vector.load %arg3[%c0_3, %c0_4] : memref<1x128xf32, #tpu.memory_space<vmem>>, vector<1x128xf32>
    %5 = vector.broadcast %4 : vector<1x128xf32> to vector<24x128xf32>
    %6 = arith.addf %3, %5 : vector<24x128xf32>
    %7 = arith.negf %6 : vector<24x128xf32>
    %8 = math.exp %7 : vector<24x128xf32>
    %cst_5 = arith.constant 1.000000e+00 : f32
    %9 = vector.broadcast %cst_5 : f32 to vector<24x128xf32>
    %10 = arith.addf %9, %8 : vector<24x128xf32>
    %11 = arith.divf %9, %10 : vector<24x128xf32>
    %12 = arith.mulf %6, %11 : vector<24x128xf32>
    %13 = arith.truncf %12 : vector<24x128xf32> to vector<24x128xbf16>
    %c0_6 = arith.constant 0 : index
    %c0_7 = arith.constant 0 : index
    %14 = vector.load %arg4[%c0_6, %c0_7] : memref<128x128xbf16, #tpu.memory_space<vmem>>, vector<128x128xbf16>
    %cst_8 = arith.constant dense<0.000000e+00> : vector<24x128xf32>
    %15 = tpu.matmul %13, %14, %cst_8 {dimension_numbers = #tpu.dot_dimension_numbers<[1], [0], [0], [1], [0, 0, 1, 1], [], []>} : vector<24x128xbf16>, vector<128x128xbf16>, vector<24x128xf32> -> vector<24x128xf32>
    %c0_9 = arith.constant 0 : index
    %c0_10 = arith.constant 0 : index
    %16 = vector.load %arg5[%c0_9, %c0_10] : memref<1x128xf32, #tpu.memory_space<vmem>>, vector<1x128xf32>
    %17 = vector.broadcast %16 : vector<1x128xf32> to vector<24x128xf32>
    %18 = arith.addf %15, %17 : vector<24x128xf32>
    %cst_11 = arith.constant dense<0.000000e+00> : vector<24xf32>
    %19 = vector.multi_reduction <add>, %18, %cst_11 [1] : vector<24x128xf32> to vector<24xf32>
    %20 = vector.shape_cast %19 : vector<24xf32> to vector<24x1xf32>
    %cst_12 = arith.constant 7.812500e-03 : f32
    %21 = vector.broadcast %cst_12 : f32 to vector<24x1xf32>
    %22 = arith.mulf %20, %21 : vector<24x1xf32>
    %23 = vector.broadcast %22 : vector<24x1xf32> to vector<24x128xf32>
    %24 = arith.subf %18, %23 : vector<24x128xf32>
    %25 = arith.mulf %24, %24 : vector<24x128xf32>
    %cst_13 = arith.constant dense<0.000000e+00> : vector<24xf32>
    %26 = vector.multi_reduction <add>, %25, %cst_13 [1] : vector<24x128xf32> to vector<24xf32>
    %27 = vector.shape_cast %26 : vector<24xf32> to vector<24x1xf32>
    %cst_14 = arith.constant 7.812500e-03 : f32
    %28 = vector.broadcast %cst_14 : f32 to vector<24x1xf32>
    %29 = arith.mulf %27, %28 : vector<24x1xf32>
    %cst_15 = arith.constant 9.99999974E-6 : f32
    %30 = vector.broadcast %cst_15 : f32 to vector<24x1xf32>
    %31 = arith.addf %29, %30 : vector<24x1xf32>
    %32 = math.rsqrt %31 : vector<24x1xf32>
    %33 = vector.broadcast %32 : vector<24x1xf32> to vector<24x128xf32>
    %34 = arith.mulf %24, %33 : vector<24x128xf32>
    %c0_16 = arith.constant 0 : index
    %c0_17 = arith.constant 0 : index
    %35 = vector.load %arg6[%c0_16, %c0_17] : memref<1x128xf32, #tpu.memory_space<vmem>>, vector<1x128xf32>
    %36 = vector.broadcast %35 : vector<1x128xf32> to vector<24x128xf32>
    %37 = arith.mulf %34, %36 : vector<24x128xf32>
    %c0_18 = arith.constant 0 : index
    %c0_19 = arith.constant 0 : index
    %38 = vector.load %arg7[%c0_18, %c0_19] : memref<1x128xf32, #tpu.memory_space<vmem>>, vector<1x128xf32>
    %39 = vector.broadcast %38 : vector<1x128xf32> to vector<24x128xf32>
    %40 = arith.addf %37, %39 : vector<24x128xf32>
    %41 = arith.truncf %40 : vector<24x128xf32> to vector<24x128xbf16>
    %c0_20 = arith.constant 0 : index
    %c0_21 = arith.constant 0 : index
    %42 = vector.load %arg8[%c0_20, %c0_21] : memref<24x128xbf16, #tpu.memory_space<vmem>>, vector<24x128xbf16>
    tpu.vector_store %arg8[%c0_20, %c0_21], %41 {strides = array<i32>} : memref<24x128xbf16, #tpu.memory_space<vmem>>, vector<24x128xbf16>,
    return
  }
  func.func @transform_0(%arg0: i32) -> (i32, i32) {
    %c0_i32 = arith.constant 0 : i32
    %c0_i32_0 = arith.constant 0 : i32
    return %arg0, %c0_i32 : i32, i32
  }
  func.func @transform_1(%arg0: i32) -> (i32, i32) {
    %c0_i32 = arith.constant 0 : i32
    %c0_i32_0 = arith.constant 0 : i32
    %c0_i32_1 = arith.constant 0 : i32
    return %c0_i32, %c0_i32_0 : i32, i32
  }
  func.func @transform_2(%arg0: i32) -> (i32, i32) {
    %c0_i32 = arith.constant 0 : i32
    %c0_i32_0 = arith.constant 0 : i32
    %c0_i32_1 = arith.constant 0 : i32
    return %c0_i32, %c0_i32_0 : i32, i32
  }
  func.func @transform_3(%arg0: i32) -> (i32, i32) {
    %c0_i32 = arith.constant 0 : i32
    %c0_i32_0 = arith.constant 0 : i32
    %c0_i32_1 = arith.constant 0 : i32
    return %c0_i32, %c0_i32_0 : i32, i32
  }
  func.func @transform_4(%arg0: i32) -> (i32, i32) {
    %c0_i32 = arith.constant 0 : i32
    %c0_i32_0 = arith.constant 0 : i32
    %c0_i32_1 = arith.constant 0 : i32
    return %c0_i32, %c0_i32_0 : i32, i32
  }
  func.func @transform_5(%arg0: i32) -> (i32, i32) {
    %c0_i32 = arith.constant 0 : i32
    %c0_i32_0 = arith.constant 0 : i32
    %c0_i32_1 = arith.constant 0 : i32
    return %c0_i32, %c0_i32_0 : i32, i32
  }
  func.func @transform_6(%arg0: i32) -> (i32, i32) {
    %c0_i32 = arith.constant 0 : i32
    %c0_i32_0 = arith.constant 0 : i32
    %c0_i32_1 = arith.constant 0 : i32
    return %c0_i32, %c0_i32_0 : i32, i32
  }
  func.func @transform_7(%arg0: i32) -> (i32, i32) {
    %c0_i32 = arith.constant 0 : i32
    %c0_i32_0 = arith.constant 0 : i32
    return %arg0, %c0_i32 : i32, i32
  }
}

module attributes {stable_mosaic.version = 11 : i64} {
  func.func @_mlp_kernel(%arg0: i32, %arg1: memref<32x128xbf16, #tpu.memory_space<vmem>>, %arg2: memref<128x128xbf16, #tpu.memory_space<vmem>>, %arg3: memref<1x128xf32, #tpu.memory_space<vmem>>, %arg4: memref<128x128xbf16, #tpu.memory_space<vmem>>, %arg5: memref<1x128xf32, #tpu.memory_space<vmem>>, %arg6: memref<1x128xf32, #tpu.memory_space<vmem>>, %arg7: memref<1x128xf32, #tpu.memory_space<vmem>>, %arg8: memref<32x128xbf16, #tpu.memory_space<vmem>>, %arg9: memref<32x128xbf16, #tpu.memory_space<vmem>>) attributes {dimension_semantics = [#tpu.dimension_semantics<parallel>], iteration_bounds = array<i64: 2>, scalar_prefetch = 0 : i64, scratch_operands = 0 : i64, tpu.core_type = #tpu.core_type<tc>, window_params = [{transform_indices = @transform_0, window_bounds = array<i64: 32, 128>}, {pipeline_mode = #tpu.pipeline_mode<synchronous>, transform_indices = @transform_1, window_bounds = array<i64: 128, 128>}, {pipeline_mode = #tpu.pipeline_mode<synchronous>, transform_indices = @transform_2, window_bounds = array<i64: 1, 128>}, {pipeline_mode = #tpu.pipeline_mode<synchronous>, transform_indices = @transform_3, window_bounds = array<i64: 128, 128>}, {pipeline_mode = #tpu.pipeline_mode<synchronous>, transform_indices = @transform_4, window_bounds = array<i64: 1, 128>}, {pipeline_mode = #tpu.pipeline_mode<synchronous>, transform_indices = @transform_5, window_bounds = array<i64: 1, 128>}, {pipeline_mode = #tpu.pipeline_mode<synchronous>, transform_indices = @transform_6, window_bounds = array<i64: 1, 128>}, {transform_indices = @transform_7, window_bounds = array<i64: 32, 128>}, {transform_indices = @transform_8, window_bounds = array<i64: 32, 128>}]} {
    %c0 = arith.constant 0 : index
    %c0_0 = arith.constant 0 : index
    %0 = vector.load %arg1[%c0, %c0_0] : memref<32x128xbf16, #tpu.memory_space<vmem>>, vector<32x128xbf16>
    %c0_1 = arith.constant 0 : index
    %c0_2 = arith.constant 0 : index
    %1 = vector.load %arg2[%c0_1, %c0_2] : memref<128x128xbf16, #tpu.memory_space<vmem>>, vector<128x128xbf16>
    %cst = arith.constant dense<0.000000e+00> : vector<32x128xf32>
    %2 = tpu.matmul %0, %1, %cst {dimension_numbers = #tpu.dot_dimension_numbers<[1], [0], [0], [1], [0, 0, 1, 1], [], []>} : vector<32x128xbf16>, vector<128x128xbf16>, vector<32x128xf32> -> vector<32x128xf32>
    %c0_3 = arith.constant 0 : index
    %c0_4 = arith.constant 0 : index
    %3 = vector.load %arg3[%c0_3, %c0_4] : memref<1x128xf32, #tpu.memory_space<vmem>>, vector<1x128xf32>
    %4 = vector.broadcast %3 : vector<1x128xf32> to vector<32x128xf32>
    %5 = arith.addf %2, %4 : vector<32x128xf32>
    %6 = arith.negf %5 : vector<32x128xf32>
    %7 = math.exp %6 : vector<32x128xf32>
    %cst_5 = arith.constant 1.000000e+00 : f32
    %8 = vector.broadcast %cst_5 : f32 to vector<32x128xf32>
    %9 = arith.addf %8, %7 : vector<32x128xf32>
    %10 = arith.divf %8, %9 : vector<32x128xf32>
    %11 = arith.mulf %5, %10 : vector<32x128xf32>
    %12 = arith.truncf %11 : vector<32x128xf32> to vector<32x128xbf16>
    %c0_6 = arith.constant 0 : index
    %c0_7 = arith.constant 0 : index
    %13 = vector.load %arg4[%c0_6, %c0_7] : memref<128x128xbf16, #tpu.memory_space<vmem>>, vector<128x128xbf16>
    %cst_8 = arith.constant dense<0.000000e+00> : vector<32x128xf32>
    %14 = tpu.matmul %12, %13, %cst_8 {dimension_numbers = #tpu.dot_dimension_numbers<[1], [0], [0], [1], [0, 0, 1, 1], [], []>} : vector<32x128xbf16>, vector<128x128xbf16>, vector<32x128xf32> -> vector<32x128xf32>
    %c0_9 = arith.constant 0 : index
    %c0_10 = arith.constant 0 : index
    %15 = vector.load %arg5[%c0_9, %c0_10] : memref<1x128xf32, #tpu.memory_space<vmem>>, vector<1x128xf32>
    %16 = vector.broadcast %15 : vector<1x128xf32> to vector<32x128xf32>
    %17 = arith.addf %14, %16 : vector<32x128xf32>
    %cst_11 = arith.constant dense<0.000000e+00> : vector<32xf32>
    %18 = vector.multi_reduction <add>, %17, %cst_11 [1] : vector<32x128xf32> to vector<32xf32>
    %19 = vector.shape_cast %18 : vector<32xf32> to vector<32x1xf32>
    %cst_12 = arith.constant 7.812500e-03 : f32
    %20 = vector.broadcast %cst_12 : f32 to vector<32x1xf32>
    %21 = arith.mulf %19, %20 : vector<32x1xf32>
    %22 = vector.broadcast %21 : vector<32x1xf32> to vector<32x128xf32>
    %23 = arith.subf %17, %22 : vector<32x128xf32>
    %24 = arith.mulf %23, %23 : vector<32x128xf32>
    %cst_13 = arith.constant dense<0.000000e+00> : vector<32xf32>
    %25 = vector.multi_reduction <add>, %24, %cst_13 [1] : vector<32x128xf32> to vector<32xf32>
    %26 = vector.shape_cast %25 : vector<32xf32> to vector<32x1xf32>
    %cst_14 = arith.constant 7.812500e-03 : f32
    %27 = vector.broadcast %cst_14 : f32 to vector<32x1xf32>
    %28 = arith.mulf %26, %27 : vector<32x1xf32>
    %cst_15 = arith.constant 9.99999974E-6 : f32
    %29 = vector.broadcast %cst_15 : f32 to vector<32x1xf32>
    %30 = arith.addf %28, %29 : vector<32x1xf32>
    %31 = math.rsqrt %30 : vector<32x1xf32>
    %32 = vector.broadcast %31 : vector<32x1xf32> to vector<32x128xf32>
    %33 = arith.mulf %23, %32 : vector<32x128xf32>
    %c0_16 = arith.constant 0 : index
    %c0_17 = arith.constant 0 : index
    %34 = vector.load %arg6[%c0_16, %c0_17] : memref<1x128xf32, #tpu.memory_space<vmem>>, vector<1x128xf32>
    %35 = vector.broadcast %34 : vector<1x128xf32> to vector<32x128xf32>
    %36 = arith.mulf %33, %35 : vector<32x128xf32>
    %c0_18 = arith.constant 0 : index
    %c0_19 = arith.constant 0 : index
    %37 = vector.load %arg7[%c0_18, %c0_19] : memref<1x128xf32, #tpu.memory_space<vmem>>, vector<1x128xf32>
    %38 = vector.broadcast %37 : vector<1x128xf32> to vector<32x128xf32>
    %39 = arith.addf %36, %38 : vector<32x128xf32>
    %c0_20 = arith.constant 0 : index
    %c0_21 = arith.constant 0 : index
    %40 = vector.load %arg8[%c0_20, %c0_21] : memref<32x128xbf16, #tpu.memory_space<vmem>>, vector<32x128xbf16>
    %41 = arith.extf %40 : vector<32x128xbf16> to vector<32x128xf32>
    %42 = arith.addf %39, %41 : vector<32x128xf32>
    %43 = arith.truncf %42 : vector<32x128xf32> to vector<32x128xbf16>
    %c0_22 = arith.constant 0 : index
    %c0_23 = arith.constant 0 : index
    %44 = vector.load %arg9[%c0_22, %c0_23] : memref<32x128xbf16, #tpu.memory_space<vmem>>, vector<32x128xbf16>
    tpu.vector_store %arg9[%c0_22, %c0_23], %43 {strides = array<i32>} : memref<32x128xbf16, #tpu.memory_space<vmem>>, vector<32x128xbf16>,
    return
  }
  func.func @transform_0(%arg0: i32) -> (i32, i32) {
    %c0_i32 = arith.constant 0 : i32
    %c0_i32_0 = arith.constant 0 : i32
    return %arg0, %c0_i32 : i32, i32
  }
  func.func @transform_1(%arg0: i32) -> (i32, i32) {
    %c0_i32 = arith.constant 0 : i32
    %c0_i32_0 = arith.constant 0 : i32
    %c0_i32_1 = arith.constant 0 : i32
    return %c0_i32, %c0_i32_0 : i32, i32
  }
  func.func @transform_2(%arg0: i32) -> (i32, i32) {
    %c0_i32 = arith.constant 0 : i32
    %c0_i32_0 = arith.constant 0 : i32
    %c0_i32_1 = arith.constant 0 : i32
    return %c0_i32, %c0_i32_0 : i32, i32
  }
  func.func @transform_3(%arg0: i32) -> (i32, i32) {
    %c0_i32 = arith.constant 0 : i32
    %c0_i32_0 = arith.constant 0 : i32
    %c0_i32_1 = arith.constant 0 : i32
    return %c0_i32, %c0_i32_0 : i32, i32
  }
  func.func @transform_4(%arg0: i32) -> (i32, i32) {
    %c0_i32 = arith.constant 0 : i32
    %c0_i32_0 = arith.constant 0 : i32
    %c0_i32_1 = arith.constant 0 : i32
    return %c0_i32, %c0_i32_0 : i32, i32
  }
  func.func @transform_5(%arg0: i32) -> (i32, i32) {
    %c0_i32 = arith.constant 0 : i32
    %c0_i32_0 = arith.constant 0 : i32
    %c0_i32_1 = arith.constant 0 : i32
    return %c0_i32, %c0_i32_0 : i32, i32
  }
  func.func @transform_6(%arg0: i32) -> (i32, i32) {
    %c0_i32 = arith.constant 0 : i32
    %c0_i32_0 = arith.constant 0 : i32
    %c0_i32_1 = arith.constant 0 : i32
    return %c0_i32, %c0_i32_0 : i32, i32
  }
  func.func @transform_7(%arg0: i32) -> (i32, i32) {
    %c0_i32 = arith.constant 0 : i32
    %c0_i32_0 = arith.constant 0 : i32
    return %arg0, %c0_i32 : i32, i32
  }
  func.func @transform_8(%arg0: i32) -> (i32, i32) {
    %c0_i32 = arith.constant 0 : i32
    %c0_i32_0 = arith.constant 0 : i32
    return %arg0, %c0_i32 : i32, i32
  }
}

module attributes {stable_mosaic.version = 11 : i64} {
  func.func @_mlp_kernel(%arg0: i32, %arg1: memref<32x128xbf16, #tpu.memory_space<vmem>>, %arg2: memref<32x128xbf16, #tpu.memory_space<vmem>>, %arg3: memref<128x128xbf16, #tpu.memory_space<vmem>>, %arg4: memref<128x128xbf16, #tpu.memory_space<vmem>>, %arg5: memref<1x128xf32, #tpu.memory_space<vmem>>, %arg6: memref<128x128xbf16, #tpu.memory_space<vmem>>, %arg7: memref<1x128xf32, #tpu.memory_space<vmem>>, %arg8: memref<1x128xf32, #tpu.memory_space<vmem>>, %arg9: memref<1x128xf32, #tpu.memory_space<vmem>>, %arg10: memref<32x128xbf16, #tpu.memory_space<vmem>>, %arg11: memref<32x128xbf16, #tpu.memory_space<vmem>>) attributes {dimension_semantics = [#tpu.dimension_semantics<parallel>], iteration_bounds = array<i64: 2>, scalar_prefetch = 0 : i64, scratch_operands = 0 : i64, tpu.core_type = #tpu.core_type<tc>, window_params = [{transform_indices = @transform_0, window_bounds = array<i64: 32, 128>}, {transform_indices = @transform_1, window_bounds = array<i64: 32, 128>}, {pipeline_mode = #tpu.pipeline_mode<synchronous>, transform_indices = @transform_2, window_bounds = array<i64: 128, 128>}, {pipeline_mode = #tpu.pipeline_mode<synchronous>, transform_indices = @transform_3, window_bounds = array<i64: 128, 128>}, {pipeline_mode = #tpu.pipeline_mode<synchronous>, transform_indices = @transform_4, window_bounds = array<i64: 1, 128>}, {pipeline_mode = #tpu.pipeline_mode<synchronous>, transform_indices = @transform_5, window_bounds = array<i64: 128, 128>}, {pipeline_mode = #tpu.pipeline_mode<synchronous>, transform_indices = @transform_6, window_bounds = array<i64: 1, 128>}, {pipeline_mode = #tpu.pipeline_mode<synchronous>, transform_indices = @transform_7, window_bounds = array<i64: 1, 128>}, {pipeline_mode = #tpu.pipeline_mode<synchronous>, transform_indices = @transform_8, window_bounds = array<i64: 1, 128>}, {transform_indices = @transform_9, window_bounds = array<i64: 32, 128>}, {transform_indices = @transform_10, window_bounds = array<i64: 32, 128>}]} {
    %c0 = arith.constant 0 : index
    %c0_0 = arith.constant 0 : index
    %0 = vector.load %arg1[%c0, %c0_0] : memref<32x128xbf16, #tpu.memory_space<vmem>>, vector<32x128xbf16>
    %c0_1 = arith.constant 0 : index
    %c0_2 = arith.constant 0 : index
    %1 = vector.load %arg3[%c0_1, %c0_2] : memref<128x128xbf16, #tpu.memory_space<vmem>>, vector<128x128xbf16>
    %cst = arith.constant dense<0.000000e+00> : vector<32x128xf32>
    %2 = tpu.matmul %0, %1, %cst {dimension_numbers = #tpu.dot_dimension_numbers<[1], [0], [0], [1], [0, 0, 1, 1], [], []>} : vector<32x128xbf16>, vector<128x128xbf16>, vector<32x128xf32> -> vector<32x128xf32>
    %c0_3 = arith.constant 0 : index
    %c0_4 = arith.constant 0 : index
    %3 = vector.load %arg2[%c0_3, %c0_4] : memref<32x128xbf16, #tpu.memory_space<vmem>>, vector<32x128xbf16>
    %c0_5 = arith.constant 0 : index
    %c0_6 = arith.constant 0 : index
    %4 = vector.load %arg4[%c0_5, %c0_6] : memref<128x128xbf16, #tpu.memory_space<vmem>>, vector<128x128xbf16>
    %cst_7 = arith.constant dense<0.000000e+00> : vector<32x128xf32>
    %5 = tpu.matmul %3, %4, %cst_7 {dimension_numbers = #tpu.dot_dimension_numbers<[1], [0], [0], [1], [0, 0, 1, 1], [], []>} : vector<32x128xbf16>, vector<128x128xbf16>, vector<32x128xf32> -> vector<32x128xf32>
    %6 = arith.addf %2, %5 : vector<32x128xf32>
    %c0_8 = arith.constant 0 : index
    %c0_9 = arith.constant 0 : index
    %7 = vector.load %arg5[%c0_8, %c0_9] : memref<1x128xf32, #tpu.memory_space<vmem>>, vector<1x128xf32>
    %8 = vector.broadcast %7 : vector<1x128xf32> to vector<32x128xf32>
    %9 = arith.addf %6, %8 : vector<32x128xf32>
    %10 = arith.negf %9 : vector<32x128xf32>
    %11 = math.exp %10 : vector<32x128xf32>
    %cst_10 = arith.constant 1.000000e+00 : f32
    %12 = vector.broadcast %cst_10 : f32 to vector<32x128xf32>
    %13 = arith.addf %12, %11 : vector<32x128xf32>
    %14 = arith.divf %12, %13 : vector<32x128xf32>
    %15 = arith.mulf %9, %14 : vector<32x128xf32>
    %16 = arith.truncf %15 : vector<32x128xf32> to vector<32x128xbf16>
    %c0_11 = arith.constant 0 : index
    %c0_12 = arith.constant 0 : index
    %17 = vector.load %arg6[%c0_11, %c0_12] : memref<128x128xbf16, #tpu.memory_space<vmem>>, vector<128x128xbf16>
    %cst_13 = arith.constant dense<0.000000e+00> : vector<32x128xf32>
    %18 = tpu.matmul %16, %17, %cst_13 {dimension_numbers = #tpu.dot_dimension_numbers<[1], [0], [0], [1], [0, 0, 1, 1], [], []>} : vector<32x128xbf16>, vector<128x128xbf16>, vector<32x128xf32> -> vector<32x128xf32>
    %c0_14 = arith.constant 0 : index
    %c0_15 = arith.constant 0 : index
    %19 = vector.load %arg7[%c0_14, %c0_15] : memref<1x128xf32, #tpu.memory_space<vmem>>, vector<1x128xf32>
    %20 = vector.broadcast %19 : vector<1x128xf32> to vector<32x128xf32>
    %21 = arith.addf %18, %20 : vector<32x128xf32>
    %cst_16 = arith.constant dense<0.000000e+00> : vector<32xf32>
    %22 = vector.multi_reduction <add>, %21, %cst_16 [1] : vector<32x128xf32> to vector<32xf32>
    %23 = vector.shape_cast %22 : vector<32xf32> to vector<32x1xf32>
    %cst_17 = arith.constant 7.812500e-03 : f32
    %24 = vector.broadcast %cst_17 : f32 to vector<32x1xf32>
    %25 = arith.mulf %23, %24 : vector<32x1xf32>
    %26 = vector.broadcast %25 : vector<32x1xf32> to vector<32x128xf32>
    %27 = arith.subf %21, %26 : vector<32x128xf32>
    %28 = arith.mulf %27, %27 : vector<32x128xf32>
    %cst_18 = arith.constant dense<0.000000e+00> : vector<32xf32>
    %29 = vector.multi_reduction <add>, %28, %cst_18 [1] : vector<32x128xf32> to vector<32xf32>
    %30 = vector.shape_cast %29 : vector<32xf32> to vector<32x1xf32>
    %cst_19 = arith.constant 7.812500e-03 : f32
    %31 = vector.broadcast %cst_19 : f32 to vector<32x1xf32>
    %32 = arith.mulf %30, %31 : vector<32x1xf32>
    %cst_20 = arith.constant 9.99999974E-6 : f32
    %33 = vector.broadcast %cst_20 : f32 to vector<32x1xf32>
    %34 = arith.addf %32, %33 : vector<32x1xf32>
    %35 = math.rsqrt %34 : vector<32x1xf32>
    %36 = vector.broadcast %35 : vector<32x1xf32> to vector<32x128xf32>
    %37 = arith.mulf %27, %36 : vector<32x128xf32>
    %c0_21 = arith.constant 0 : index
    %c0_22 = arith.constant 0 : index
    %38 = vector.load %arg8[%c0_21, %c0_22] : memref<1x128xf32, #tpu.memory_space<vmem>>, vector<1x128xf32>
    %39 = vector.broadcast %38 : vector<1x128xf32> to vector<32x128xf32>
    %40 = arith.mulf %37, %39 : vector<32x128xf32>
    %c0_23 = arith.constant 0 : index
    %c0_24 = arith.constant 0 : index
    %41 = vector.load %arg9[%c0_23, %c0_24] : memref<1x128xf32, #tpu.memory_space<vmem>>, vector<1x128xf32>
    %42 = vector.broadcast %41 : vector<1x128xf32> to vector<32x128xf32>
    %43 = arith.addf %40, %42 : vector<32x128xf32>
    %c0_25 = arith.constant 0 : index
    %c0_26 = arith.constant 0 : index
    %44 = vector.load %arg10[%c0_25, %c0_26] : memref<32x128xbf16, #tpu.memory_space<vmem>>, vector<32x128xbf16>
    %45 = arith.extf %44 : vector<32x128xbf16> to vector<32x128xf32>
    %46 = arith.addf %43, %45 : vector<32x128xf32>
    %47 = arith.truncf %46 : vector<32x128xf32> to vector<32x128xbf16>
    %c0_27 = arith.constant 0 : index
    %c0_28 = arith.constant 0 : index
    %48 = vector.load %arg11[%c0_27, %c0_28] : memref<32x128xbf16, #tpu.memory_space<vmem>>, vector<32x128xbf16>
    tpu.vector_store %arg11[%c0_27, %c0_28], %47 {strides = array<i32>} : memref<32x128xbf16, #tpu.memory_space<vmem>>, vector<32x128xbf16>,
    return
  }
  func.func @transform_0(%arg0: i32) -> (i32, i32) {
    %c0_i32 = arith.constant 0 : i32
    %c0_i32_0 = arith.constant 0 : i32
    return %arg0, %c0_i32 : i32, i32
  }
  func.func @transform_1(%arg0: i32) -> (i32, i32) {
    %c0_i32 = arith.constant 0 : i32
    %c0_i32_0 = arith.constant 0 : i32
    return %arg0, %c0_i32 : i32, i32
  }
  func.func @transform_2(%arg0: i32) -> (i32, i32) {
    %c0_i32 = arith.constant 0 : i32
    %c0_i32_0 = arith.constant 0 : i32
    %c0_i32_1 = arith.constant 0 : i32
    return %c0_i32, %c0_i32_0 : i32, i32
  }
  func.func @transform_3(%arg0: i32) -> (i32, i32) {
    %c0_i32 = arith.constant 0 : i32
    %c0_i32_0 = arith.constant 0 : i32
    %c0_i32_1 = arith.constant 0 : i32
    return %c0_i32, %c0_i32_0 : i32, i32
  }
  func.func @transform_4(%arg0: i32) -> (i32, i32) {
    %c0_i32 = arith.constant 0 : i32
    %c0_i32_0 = arith.constant 0 : i32
    %c0_i32_1 = arith.constant 0 : i32
    return %c0_i32, %c0_i32_0 : i32, i32
  }
  func.func @transform_5(%arg0: i32) -> (i32, i32) {
    %c0_i32 = arith.constant 0 : i32
    %c0_i32_0 = arith.constant 0 : i32
    %c0_i32_1 = arith.constant 0 : i32
    return %c0_i32, %c0_i32_0 : i32, i32
  }
  func.func @transform_6(%arg0: i32) -> (i32, i32) {
    %c0_i32 = arith.constant 0 : i32
    %c0_i32_0 = arith.constant 0 : i32
    %c0_i32_1 = arith.constant 0 : i32
    return %c0_i32, %c0_i32_0 : i32, i32
  }
  func.func @transform_7(%arg0: i32) -> (i32, i32) {
    %c0_i32 = arith.constant 0 : i32
    %c0_i32_0 = arith.constant 0 : i32
    %c0_i32_1 = arith.constant 0 : i32
    return %c0_i32, %c0_i32_0 : i32, i32
  }
  func.func @transform_8(%arg0: i32) -> (i32, i32) {
    %c0_i32 = arith.constant 0 : i32
    %c0_i32_0 = arith.constant 0 : i32
    %c0_i32_1 = arith.constant 0 : i32
    return %c0_i32, %c0_i32_0 : i32, i32
  }
  func.func @transform_9(%arg0: i32) -> (i32, i32) {
    %c0_i32 = arith.constant 0 : i32
    %c0_i32_0 = arith.constant 0 : i32
    return %arg0, %c0_i32 : i32, i32
  }
  func.func @transform_10(%arg0: i32) -> (i32, i32) {
    %c0_i32 = arith.constant 0 : i32
    %c0_i32_0 = arith.constant 0 : i32
    return %arg0, %c0_i32 : i32, i32
  }
}

module attributes {stable_mosaic.version = 11 : i64} {
  func.func @_mlp_kernel(%arg0: i32, %arg1: memref<32x128xbf16, #tpu.memory_space<vmem>>, %arg2: memref<128x128xbf16, #tpu.memory_space<vmem>>, %arg3: memref<1x128xf32, #tpu.memory_space<vmem>>, %arg4: memref<128x128xbf16, #tpu.memory_space<vmem>>, %arg5: memref<1x128xf32, #tpu.memory_space<vmem>>, %arg6: memref<32x128xf32, #tpu.memory_space<vmem>>) attributes {dimension_semantics = [#tpu.dimension_semantics<parallel>], iteration_bounds = array<i64: 2>, scalar_prefetch = 0 : i64, scratch_operands = 0 : i64, tpu.core_type = #tpu.core_type<tc>, window_params = [{transform_indices = @transform_0, window_bounds = array<i64: 32, 128>}, {pipeline_mode = #tpu.pipeline_mode<synchronous>, transform_indices = @transform_1, window_bounds = array<i64: 128, 128>}, {pipeline_mode = #tpu.pipeline_mode<synchronous>, transform_indices = @transform_2, window_bounds = array<i64: 1, 128>}, {pipeline_mode = #tpu.pipeline_mode<synchronous>, transform_indices = @transform_3, window_bounds = array<i64: 128, 128>}, {pipeline_mode = #tpu.pipeline_mode<synchronous>, transform_indices = @transform_4, window_bounds = array<i64: 1, 128>}, {transform_indices = @transform_5, window_bounds = array<i64: 32, 128>}]} {
    %c0 = arith.constant 0 : index
    %c0_0 = arith.constant 0 : index
    %0 = vector.load %arg1[%c0, %c0_0] : memref<32x128xbf16, #tpu.memory_space<vmem>>, vector<32x128xbf16>
    %c0_1 = arith.constant 0 : index
    %c0_2 = arith.constant 0 : index
    %1 = vector.load %arg2[%c0_1, %c0_2] : memref<128x128xbf16, #tpu.memory_space<vmem>>, vector<128x128xbf16>
    %cst = arith.constant dense<0.000000e+00> : vector<32x128xf32>
    %2 = tpu.matmul %0, %1, %cst {dimension_numbers = #tpu.dot_dimension_numbers<[1], [0], [0], [1], [0, 0, 1, 1], [], []>} : vector<32x128xbf16>, vector<128x128xbf16>, vector<32x128xf32> -> vector<32x128xf32>
    %c0_3 = arith.constant 0 : index
    %c0_4 = arith.constant 0 : index
    %3 = vector.load %arg3[%c0_3, %c0_4] : memref<1x128xf32, #tpu.memory_space<vmem>>, vector<1x128xf32>
    %4 = vector.broadcast %3 : vector<1x128xf32> to vector<32x128xf32>
    %5 = arith.addf %2, %4 : vector<32x128xf32>
    %6 = arith.negf %5 : vector<32x128xf32>
    %7 = math.exp %6 : vector<32x128xf32>
    %cst_5 = arith.constant 1.000000e+00 : f32
    %8 = vector.broadcast %cst_5 : f32 to vector<32x128xf32>
    %9 = arith.addf %8, %7 : vector<32x128xf32>
    %10 = arith.divf %8, %9 : vector<32x128xf32>
    %11 = arith.mulf %5, %10 : vector<32x128xf32>
    %12 = arith.truncf %11 : vector<32x128xf32> to vector<32x128xbf16>
    %c0_6 = arith.constant 0 : index
    %c0_7 = arith.constant 0 : index
    %13 = vector.load %arg4[%c0_6, %c0_7] : memref<128x128xbf16, #tpu.memory_space<vmem>>, vector<128x128xbf16>
    %cst_8 = arith.constant dense<0.000000e+00> : vector<32x128xf32>
    %14 = tpu.matmul %12, %13, %cst_8 {dimension_numbers = #tpu.dot_dimension_numbers<[1], [0], [0], [1], [0, 0, 1, 1], [], []>} : vector<32x128xbf16>, vector<128x128xbf16>, vector<32x128xf32> -> vector<32x128xf32>
    %c0_9 = arith.constant 0 : index
    %c0_10 = arith.constant 0 : index
    %15 = vector.load %arg5[%c0_9, %c0_10] : memref<1x128xf32, #tpu.memory_space<vmem>>, vector<1x128xf32>
    %16 = vector.broadcast %15 : vector<1x128xf32> to vector<32x128xf32>
    %17 = arith.addf %14, %16 : vector<32x128xf32>
    %c0_11 = arith.constant 0 : index
    %c0_12 = arith.constant 0 : index
    %18 = vector.load %arg6[%c0_11, %c0_12] : memref<32x128xf32, #tpu.memory_space<vmem>>, vector<32x128xf32>
    tpu.vector_store %arg6[%c0_11, %c0_12], %17 {strides = array<i32>} : memref<32x128xf32, #tpu.memory_space<vmem>>, vector<32x128xf32>,
    return
  }
  func.func @transform_0(%arg0: i32) -> (i32, i32) {
    %c0_i32 = arith.constant 0 : i32
    %c0_i32_0 = arith.constant 0 : i32
    return %arg0, %c0_i32 : i32, i32
  }
  func.func @transform_1(%arg0: i32) -> (i32, i32) {
    %c0_i32 = arith.constant 0 : i32
    %c0_i32_0 = arith.constant 0 : i32
    %c0_i32_1 = arith.constant 0 : i32
    return %c0_i32, %c0_i32_0 : i32, i32
  }
  func.func @transform_2(%arg0: i32) -> (i32, i32) {
    %c0_i32 = arith.constant 0 : i32
    %c0_i32_0 = arith.constant 0 : i32
    %c0_i32_1 = arith.constant 0 : i32
    return %c0_i32, %c0_i32_0 : i32, i32
  }
  func.func @transform_3(%arg0: i32) -> (i32, i32) {
    %c0_i32 = arith.constant 0 : i32
    %c0_i32_0 = arith.constant 0 : i32
    %c0_i32_1 = arith.constant 0 : i32
    return %c0_i32, %c0_i32_0 : i32, i32
  }
  func.func @transform_4(%arg0: i32) -> (i32, i32) {
    %c0_i32 = arith.constant 0 : i32
    %c0_i32_0 = arith.constant 0 : i32
    %c0_i32_1 = arith.constant 0 : i32
    return %c0_i32, %c0_i32_0 : i32, i32
  }
  func.func @transform_5(%arg0: i32) -> (i32, i32) {
    %c0_i32 = arith.constant 0 : i32
    %c0_i32_0 = arith.constant 0 : i32
    return %arg0, %c0_i32 : i32, i32
  }
}

</mosaic_0001>

<llo_original>
// kernel: graphcast_forward.19
$region0: #{graphcast_forward.19}
  #allocation0 [shape = 'u32[]', space=smem, size = 0x4, offset = 0x4, fixed_abs, tag = 'smem constant byte address 0x4 - core index']
  #allocation1 [shape = 'u32[144,128]{1,0:T(1,128)}', space=vmem, size = 0x12000, scoped, tag = 'internal scratch']
  %s0 = inlined_call_operand.vmem [shape: f32[64,10], index: 0, kind: input, shape index: {}]
  %s1 = inlined_call_operand.vmem [shape: bf16[10,128], index: 1, kind: input, shape index: {}]
  %s2 = inlined_call_operand.vmem [shape: f32[1,128], index: 2, kind: input, shape index: {}]
  %s3 = inlined_call_operand.vmem [shape: bf16[128,128], index: 3, kind: input, shape index: {}]
  %s4 = inlined_call_operand.vmem [shape: f32[1,128], index: 4, kind: input, shape index: {}]
  %s5 = inlined_call_operand.vmem [shape: f32[1,128], index: 5, kind: input, shape index: {}]
  %s6 = inlined_call_operand.vmem [shape: f32[1,128], index: 6, kind: input, shape index: {}]
  %s7 = inlined_call_operand.vmem [shape: bf16[64,128], index: 7, kind: output, shape index: {}]
  %s8 = sld [smem:[#allocation0]]
  $region61: #{graphcast_forward.19} parent=0
    _
  %s10 = ssub.s32 1, %s8
  %s11 = scalar_select 0, %s10, %s8
  loop: start=0, step=1, limit=4
  $region2: #{graphcast_forward.19} parent=0 // loop_pre_header
    _
  $region3: #{graphcast_forward.19} parent=0 // loop_header
    %s13 = sphi 0, %s17
    %p14 = scmp.ge.s32.totalorder %s13, 4
    %s23 = sphi 0, %s25
    %s26 = sphi 0, %s23
    %s27 = sphi 0, %s26
    %s43 = sphi 0, %s27
    %s47 = sphi 0, %s47
    %s49 = sphi 0, %s47
    %s50 = sphi 0, %s49
    %s64 = sphi 0, %s50
    %s68 = sphi 0, %s68
    %s70 = sphi 0, %s68
    %s71 = sphi 0, %s70
    %s85 = sphi 0, %s71
    %s89 = sphi 0, %s89
    %s91 = sphi 0, %s89
    %s92 = sphi 0, %s91
    %s106 = sphi 0, %s92
    %s110 = sphi 0, %s110
    %s112 = sphi 0, %s110
    %s113 = sphi 0, %s112
    %s127 = sphi 0, %s113
    %s131 = sphi 0, %s131
    %s133 = sphi 0, %s131
    %s134 = sphi 0, %s133
    %s148 = sphi 0, %s134
    %s152 = sphi 0, %s152
    %s154 = sphi 0, %s152
    %s155 = sphi 0, %s154
    %s169 = sphi 0, %s155
    %s175 = sphi 0, %s177
    %s178 = sphi 0, %s175
    %s179 = sphi 0, %s178
    %s195 = sphi 0, %s179
  $region4: #{graphcast_forward.19} parent=0 // loop_header_branch
    %16 = sbr.rel (%p14) target = $region8
  $region5: #{graphcast_forward.19} parent=0 // loop_body
    %s18 = ssub.s32 %s13, 1
    %s19 = ssub.s32 %s13, 2
    %s20 = sadd.s32 %s13, 1
    %s21 = ssub.s32 %s13, %s20
    %p22 = scmp.eq.s32.totalorder %s21, 0
    %s24 = sadd.s32 %s23, 1
    %s25 = scalar_select %p22, %s23, %s24
    %p28 = pneg %p22
    %p29 = scmp.eq.s32.totalorder %s13, 1
    %p30 = por %p28, %p29
    %p31 = scmp.ne.s32.totalorder %s23, %s26
    %p32 = scmp.eq.s32.totalorder %s13, 0
    %p33 = por %p31, %p32
    %p34 = scmp.ne.s32.totalorder %s23, %s26
    %p35 = scmp.eq.s32.totalorder %s18, 1
    %p36 = por %p34, %p35
    %p37 = scmp.ne.s32.totalorder %s26, %s27
    %p38 = scmp.eq.s32.totalorder %s18, 0
    %p39 = por %p37, %p38
    %p40 = scmp.ne.s32.totalorder %s26, %s27
    %p41 = scmp.eq.s32.totalorder %s19, 1
    %p42 = por %p40, %p41
    %p44 = scmp.ne.s32.totalorder %s27, %s43
    %p45 = scmp.eq.s32.totalorder %s19, 0
    %p46 = por %p44, %p45
    %s48 = sadd.s32 %s47, 1
    %p51 = scmp.eq.s32.totalorder %s13, 1
    %p52 = scmp.ne.s32.totalorder %s47, %s49
    %p53 = scmp.eq.s32.totalorder %s13, 0
    %p54 = por %p52, %p53
    %p55 = scmp.ne.s32.totalorder %s47, %s49
    %p56 = scmp.eq.s32.totalorder %s18, 1
    %p57 = por %p55, %p56
    %p58 = scmp.ne.s32.totalorder %s49, %s50
    %p59 = scmp.eq.s32.totalorder %s18, 0
    %p60 = por %p58, %p59
    %p61 = scmp.ne.s32.totalorder %s49, %s50
    %p62 = scmp.eq.s32.totalorder %s19, 1
    %p63 = por %p61, %p62
    %p65 = scmp.ne.s32.totalorder %s50, %s64
    %p66 = scmp.eq.s32.totalorder %s19, 0
    %p67 = por %p65, %p66
    %s69 = sadd.s32 %s68, 1
    %p72 = scmp.eq.s32.totalorder %s13, 1
    %p73 = scmp.ne.s32.totalorder %s68, %s70
    %p74 = scmp.eq.s32.totalorder %s13, 0
    %p75 = por %p73, %p74
    %p76 = scmp.ne.s32.totalorder %s68, %s70
    %p77 = scmp.eq.s32.totalorder %s18, 1
    %p78 = por %p76, %p77
    %p79 = scmp.ne.s32.totalorder %s70, %s71
    %p80 = scmp.eq.s32.totalorder %s18, 0
    %p81 = por %p79, %p80
    %p82 = scmp.ne.s32.totalorder %s70, %s71
    %p83 = scmp.eq.s32.totalorder %s19, 1
    %p84 = por %p82, %p83
    %p86 = scmp.ne.s32.totalorder %s71, %s85
    %p87 = scmp.eq.s32.totalorder %s19, 0
    %p88 = por %p86, %p87
    %s90 = sadd.s32 %s89, 1
    %p93 = scmp.eq.s32.totalorder %s13, 1
    %p94 = scmp.ne.s32.totalorder %s89, %s91
    %p95 = scmp.eq.s32.totalorder %s13, 0
    %p96 = por %p94, %p95
    %p97 = scmp.ne.s32.totalorder %s89, %s91
    %p98 = scmp.eq.s32.totalorder %s18, 1
    %p99 = por %p97, %p98
    %p100 = scmp.ne.s32.totalorder %s91, %s92
    %p101 = scmp.eq.s32.totalorder %s18, 0
    %p102 = por %p100, %p101
    %p103 = scmp.ne.s32.totalorder %s91, %s92
    %p104 = scmp.eq.s32.totalorder %s19, 1
    %p105 = por %p103, %p104
    %p107 = scmp.ne.s32.totalorder %s92, %s106
    %p108 = scmp.eq.s32.totalorder %s19, 0
    %p109 = por %p107, %p108
    %s111 = sadd.s32 %s110, 1
    %p114 = scmp.eq.s32.totalorder %s13, 1
    %p115 = scmp.ne.s32.totalorder %s110, %s112
    %p116 = scmp.eq.s32.totalorder %s13, 0
    %p117 = por %p115, %p116
    %p118 = scmp.ne.s32.totalorder %s110, %s112
    %p119 = scmp.eq.s32.totalorder %s18, 1
    %p120 = por %p118, %p119
    %p121 = scmp.ne.s32.totalorder %s112, %s113
    %p122 = scmp.eq.s32.totalorder %s18, 0
    %p123 = por %p121, %p122
    %p124 = scmp.ne.s32.totalorder %s112, %s113
    %p125 = scmp.eq.s32.totalorder %s19, 1
    %p126 = por %p124, %p125
    %p128 = scmp.ne.s32.totalorder %s113, %s127
    %p129 = scmp.eq.s32.totalorder %s19, 0
    %p130 = por %p128, %p129
    %s132 = sadd.s32 %s131, 1
    %p135 = scmp.eq.s32.totalorder %s13, 1
    %p136 = scmp.ne.s32.totalorder %s131, %s133
    %p137 = scmp.eq.s32.totalorder %s13, 0
    %p138 = por %p136, %p137
    %p139 = scmp.ne.s32.totalorder %s131, %s133
    %p140 = scmp.eq.s32.totalorder %s18, 1
    %p141 = por %p139, %p140
    %p142 = scmp.ne.s32.totalorder %s133, %s134
    %p143 = scmp.eq.s32.totalorder %s18, 0
    %p144 = por %p142, %p143
    %p145 = scmp.ne.s32.totalorder %s133, %s134
    %p146 = scmp.eq.s32.totalorder %s19, 1
    %p147 = por %p145, %p146
    %p149 = scmp.ne.s32.totalorder %s134, %s148
    %p150 = scmp.eq.s32.totalorder %s19, 0
    %p151 = por %p149, %p150
    %s153 = sadd.s32 %s152, 1
    %p156 = scmp.eq.s32.totalorder %s13, 1
    %p157 = scmp.ne.s32.totalorder %s152, %s154
    %p158 = scmp.eq.s32.totalorder %s13, 0
    %p159 = por %p157, %p158
    %p160 = scmp.ne.s32.totalorder %s152, %s154
    %p161 = scmp.eq.s32.totalorder %s18, 1
    %p162 = por %p160, %p161
    %p163 = scmp.ne.s32.totalorder %s154, %s155
    %p164 = scmp.eq.s32.totalorder %s18, 0
    %p165 = por %p163, %p164
    %p166 = scmp.ne.s32.totalorder %s154, %s155
    %p167 = scmp.eq.s32.totalorder %s19, 1
    %p168 = por %p166, %p167
    %p170 = scmp.ne.s32.totalorder %s155, %s169
    %p171 = scmp.eq.s32.totalorder %s19, 0
    %p172 = por %p170, %p171
    %s173 = ssub.s32 %s13, %s20
    %p174 = scmp.eq.s32.totalorder %s173, 0
    %s176 = sadd.s32 %s175, 1
    %s177 = scalar_select %p174, %s175, %s176
    %p180 = pneg %p174
    %p181 = scmp.eq.s32.totalorder %s13, 1
    %p182 = por %p180, %p181
    %p183 = scmp.ne.s32.totalorder %s175, %s178
    %p184 = scmp.eq.s32.totalorder %s13, 0
    %p185 = por %p183, %p184
    %p186 = scmp.ne.s32.totalorder %s175, %s178
    %p187 = scmp.eq.s32.totalorder %s18, 1
    %p188 = por %p186, %p187
    %p189 = scmp.ne.s32.totalorder %s178, %s179
    %p190 = scmp.eq.s32.totalorder %s18, 0
    %p191 = por %p189, %p190
    %p192 = scmp.ne.s32.totalorder %s178, %s179
    %p193 = scmp.eq.s32.totalorder %s19, 1
    %p194 = por %p192, %p193
    %p196 = scmp.ne.s32.totalorder %s179, %s195
    %p197 = scmp.eq.s32.totalorder %s19, 0
    %p198 = por %p196, %p197
    %p199 = scmp.le.s32.totalorder 1, %s13
    %p200 = scmp.lt.s32.totalorder %s13, 3
    %p201 = pnand %p199, %p200
    %p202 = pneg %p201
    // Predicated region
    $region9: #{graphcast_forward.19} parent=5 // pred_check
      _
    $region10: #{graphcast_forward.19} parent=5 // pred_check_branch
      %204 = sbr.rel (%p201) target = $region12
    $region11: #{graphcast_forward.19} parent=5 // pred_region
      %s205 = ssub.s32 %s13, 1
      // Predicated region
      $region13: #{graphcast_forward.19} parent=11 // pred_check
        %p206 = pneg %p60
      $region14: #{graphcast_forward.19} parent=11 // pred_check_branch
        %208 = sbr.rel (%p206) target = $region16
      $region15: #{graphcast_forward.19} parent=11 // pred_region
        _
      $region16: #{graphcast_forward.19} parent=11 // pred_fallthru
        _
      // Predicated region
      $region17: #{graphcast_forward.19} parent=11 // pred_check
        %p209 = pneg %p81
      $region18: #{graphcast_forward.19} parent=11 // pred_check_branch
        %211 = sbr.rel (%p209) target = $region20
      $region19: #{graphcast_forward.19} parent=11 // pred_region
        _
      $region20: #{graphcast_forward.19} parent=11 // pred_fallthru
        _
      // Predicated region
      $region21: #{graphcast_forward.19} parent=11 // pred_check
        %p212 = pneg %p102
      $region22: #{graphcast_forward.19} parent=11 // pred_check_branch
        %214 = sbr.rel (%p212) target = $region24
      $region23: #{graphcast_forward.19} parent=11 // pred_region
        _
      $region24: #{graphcast_forward.19} parent=11 // pred_fallthru
        _
      // Predicated region
      $region25: #{graphcast_forward.19} parent=11 // pred_check
        %p215 = pneg %p123
      $region26: #{graphcast_forward.19} parent=11 // pred_check_branch
        %217 = sbr.rel (%p215) target = $region28
      $region27: #{graphcast_forward.19} parent=11 // pred_region
        _
      $region28: #{graphcast_forward.19} parent=11 // pred_fallthru
        _
      // Predicated region
      $region29: #{graphcast_forward.19} parent=11 // pred_check
        %p218 = pneg %p144
      $region30: #{graphcast_forward.19} parent=11 // pred_check_branch
        %220 = sbr.rel (%p218) target = $region32
      $region31: #{graphcast_forward.19} parent=11 // pred_region
        _
      $region32: #{graphcast_forward.19} parent=11 // pred_fallthru
        _
      // Predicated region
      $region33: #{graphcast_forward.19} parent=11 // pred_check
        %p221 = pneg %p165
      $region34: #{graphcast_forward.19} parent=11 // pred_check_branch
        %223 = sbr.rel (%p221) target = $region36
      $region35: #{graphcast_forward.19} parent=11 // pred_region
        _
      $region36: #{graphcast_forward.19} parent=11 // pred_fallthru
        _
    $region12: #{graphcast_forward.19} parent=5 // pred_fallthru
      _
    %p224 = scmp.lt.s32.totalorder %s13, 2
    // Predicated region
    $region37: #{graphcast_forward.19} parent=5 // pred_check
      %p225 = pneg %p224
    $region38: #{graphcast_forward.19} parent=5 // pred_check_branch
      %227 = sbr.rel (%p225) target = $region40
    $region39: #{graphcast_forward.19} parent=5 // pred_region
      // Predicated region
      $region41: #{graphcast_forward.19} parent=39 // pred_check
        %p228 = pneg %p33
      $region42: #{graphcast_forward.19} parent=39 // pred_check_branch
        %230 = sbr.rel (%p228) target = $region44
      $region43: #{graphcast_forward.19} parent=39 // pred_region
        %s231 = smul.u32 4, %s13
        %p232 = scmp.lt.s32.totalorder %s231, 7
        %s233 = scalar_select %p232, %s231, 7
        %s234 = smul.addr %s233, 8
        %s235 = scalar_lea.vmem %s0, %s234
        %s236 = smul.u32 4, %s13
      $region44: #{graphcast_forward.19} parent=39 // pred_fallthru
        _
    $region40: #{graphcast_forward.19} parent=5 // pred_fallthru
      _
    %p237 = scmp.le.s32.totalorder 1, %s13
    %p238 = scmp.lt.s32.totalorder %s13, 3
    %p239 = pnand %p237, %p238
    %p240 = pneg %p239
    // Predicated region
    $region45: #{graphcast_forward.19} parent=5 // pred_check
      _
    $region46: #{graphcast_forward.19} parent=5 // pred_check_branch
      %242 = sbr.rel (%p239) target = $region48
    $region47: #{graphcast_forward.19} parent=5 // pred_region
      %s243 = ssub.s32 %s13, 1
      %s244 = smul.u32 4, %s18
      %p245 = scmp.lt.s32.totalorder %s244, 7
      %s246 = scalar_select %p245, %s244, 7
      %s247 = smul.addr %s246, 8
      %s248 = scalar_lea.vmem %s0, %s247
      %p249 = pneg %p39
      %p250 = pneg %p36
      %p251 = pneg %p60
      %p252 = pneg %p57
      %p253 = pneg %p81
      %p254 = pneg %p78
      %p255 = pneg %p102
      %p256 = pneg %p99
      %p257 = pneg %p123
      %p258 = pneg %p120
      %p259 = pneg %p144
      %p260 = pneg %p141
      %p261 = pneg %p165
      %p262 = pneg %p162
      %p263 = pneg %p191
      %p264 = pneg %p188
      %s265 = smul.u32 4, %s18
      %p266 = scmp.lt.s32.totalorder %s265, 7
      %s267 = scalar_select %p266, %s265, 7
      %s268 = smul.addr %s267, 4
      %s269 = scalar_lea.vmem %s7, %s268
      %s270 = smul.u32 4, %s18
      %p271 = scmp.lt.s32.totalorder %s270, 7
      %s272 = scalar_select %p271, %s270, 7
      %s273 = smul.addr %s272, 8
      %s274 = scalar_lea.vmem %s0, %s273
      %s275 = smul.u32 4, %s18
      %s276 = smul.u32 4, %s18
      %p277 = scmp.lt.s32.totalorder %s276, 7
      %s278 = scalar_select %p277, %s276, 7
      %s279 = smul.addr %s278, 4
      %s280 = scalar_lea.vmem %s7, %s279
      %s281 = smul.u32 4, %s18
      %v283 = vld [vmem:[%s274] sm:$0xff]
      %v284 = vld [vmem:[%s274 + $0x8] sm:$0xff]
      %v285 = vld [vmem:[%s274 + $0x10] sm:$0xff]
      %v286 = vld [vmem:[%s274 + $0x18] sm:$0xff]
      %v287 = vpack.c.bf16 %v284, %v283
      %v288 = vpack.c.bf16 %v286, %v285
      %v289 = vld [vmem:[%s1] sm:$0xf]
      %v290 = vld [vmem:[%s1 + $0x4] sm:$0x1]
      %v291 = vld [vmem:[%s2] sm:$0x1]
      %v293 = vlaneseq
      %v294 = vshrl.u32 %v293, 7
      %v295 = vsub.s32 0, %v294
      %v296 = vrot.slane %v291, %v295
      %v300 = vunpack.c.l.b16 %v289
      %v301 = vunpack.c.l.b16 %v290
      %v302 = vpack.c.b16 %v301, %v300
      %vm303 = vcmask 80896
      %v305 = vsel %vm303, %v287, 0
      %v308 = vsel %vm303, %v288, 0
      %vm310 = vcmask 1044480
      %v312 = vsel %vm310, %v302, 0
      %314 = vmatprep.subr.bf16.mxu0 0
      %315 = vmatpush1.bf16.msra.mxu0 0
      %316 = vmatprep.subr.bf16.mxu0 0
      %317 = vmatpush1.bf16.msra.mxu0 0
      %318 = vmatprep.subr.bf16.mxu0 0
      %319 = vmatpush1.bf16.msra.mxu0 0
      %320 = vmatprep.subr.bf16.mxu0 0
      %321 = vmatpush1.bf16.msra.mxu0 0
      %322 = vmatprep.subr.bf16.mxu0 0
      %323 = vmatpush1.bf16.msra.mxu0 0
      %324 = vmatprep.subr.bf16.mxu0 0
      %325 = vmatpush1.bf16.msra.mxu0 0
      %326 = vmatprep.subr.bf16.mxu0 0
      %327 = vmatpush1.bf16.msra.mxu0 0
      %328 = vmatprep.subr.bf16.mxu0 0
      %329 = vmatpush1.bf16.msra.mxu0 %v312
      %330 = vmatprep.subr.bf16.mxu0 0
      %331 = vmatpush2.bf16.msra.mxu0 0
      %332 = vmatprep.subr.bf16.mxu0 0
      %333 = vmatpush2.bf16.msra.mxu0 0
      %334 = vmatprep.subr.bf16.mxu0 0
      %335 = vmatpush2.bf16.msra.mxu0 0
      %336 = vmatprep.subr.bf16.mxu0 0
      %337 = vmatpush2.bf16.msra.mxu0 0
      %338 = vmatprep.subr.bf16.mxu0 0
      %339 = vmatpush2.bf16.msra.mxu0 0
      %340 = vmatprep.subr.bf16.mxu0 0
      %341 = vmatpush2.bf16.msra.mxu0 0
      %342 = vmatprep.subr.bf16.mxu0 0
      %343 = vmatpush2.bf16.msra.mxu0 0
      %344 = vmatprep.subr.bf16.mxu0 0
      %345 = vmatpush2.bf16.msra.mxu0 0
      %346 = vmatprep.mubr.bf16.mxu0 0
      %347 = vmatmul.mubr.bf16.gmra.mxu0 %v305
      %v348 = vpop.f32.mrf.mxu0
      %v349 = vadd.f32 %v296, %v348
      %v350 = vpop.f32.mrf.mxu0
      %v351 = vpop.f32.mrf.mxu0
      %v352 = vadd.f32 %v296, %v351
      %v353 = vpop.f32.mrf.mxu0
      %354 = vmatprep.mubr.bf16.mxu0 0
      %355 = vmatmul.mubr.bf16.gmra.mxu0 %v308
      %v356 = vpop.f32.mrf.mxu0
      %v357 = vadd.f32 %v296, %v356
      %v358 = vpop.f32.mrf.mxu0
      %v359 = vpop.f32.mrf.mxu0
      %v360 = vadd.f32 %v296, %v359
      %v361 = vpop.f32.mrf.mxu0
      %362 = vdwg.mxu0
      %v363 = vxor.u32 %v349, 2147483648
      %v364 = vxor.u32 %v352, 2147483648
      %v365 = vxor.u32 %v357, 2147483648
      %v366 = vxor.u32 %v360, 2147483648
      %v367 = vmul.f32 %v363, 1.442695
      %v368 = vpow.pop %v367
      %v369 = vmul.f32 %v364, 1.442695
      %v370 = vpow.pop %v369
      %v371 = vmul.f32 %v365, 1.442695
      %v372 = vpow.pop %v371
      %v373 = vmul.f32 %v366, 1.442695
      %v374 = vpow.pop %v373
      %v375 = vadd.f32 %v368, 1.0
      %v376 = vadd.f32 %v370, 1.0
      %v377 = vadd.f32 %v372, 1.0
      %v378 = vadd.f32 %v374, 1.0
      %v379 = vrcp.pop %v375
      %v380 = vmul.f32 1.0, %v379
      %v381 = vrcp.pop %v376
      %v382 = vmul.f32 1.0, %v381
      %v383 = vrcp.pop %v377
      %v384 = vmul.f32 1.0, %v383
      %v385 = vrcp.pop %v378
      %v386 = vmul.f32 1.0, %v385
      %v387 = vmul.f32 %v349, %v380
      %v388 = vmul.f32 %v352, %v382
      %v389 = vmul.f32 %v357, %v384
      %v390 = vmul.f32 %v360, %v386
      %v391 = vpack.c.bf16 %v388, %v387
      %v392 = vpack.c.bf16 %v390, %v389
      %v393 = vld [vmem:[%s3] sm:$0xf]
      %v394 = vld [vmem:[%s3 + $0x4] sm:$0xf]
      %v395 = vld [vmem:[%s3 + $0x8] sm:$0xf]
      %v396 = vld [vmem:[%s3 + $0xc] sm:$0xf]
      %v397 = vld [vmem:[%s3 + $0x10] sm:$0xf]
      %v398 = vld [vmem:[%s3 + $0x14] sm:$0xf]
      %v399 = vld [vmem:[%s3 + $0x18] sm:$0xf]
      %v400 = vld [vmem:[%s3 + $0x1c] sm:$0xf]
      %v401 = vld [vmem:[%s3 + $0x20] sm:$0xf]
      %v402 = vld [vmem:[%s3 + $0x24] sm:$0xf]
      %v403 = vld [vmem:[%s3 + $0x28] sm:$0xf]
      %v404 = vld [vmem:[%s3 + $0x2c] sm:$0xf]
      %v405 = vld [vmem:[%s3 + $0x30] sm:$0xf]
      %v406 = vld [vmem:[%s3 + $0x34] sm:$0xf]
      %v407 = vld [vmem:[%s3 + $0x38] sm:$0xf]
      %v408 = vld [vmem:[%s3 + $0x3c] sm:$0xf]
      %v409 = vld [vmem:[%s4] sm:$0x1]
      %v411 = vlaneseq
      %v412 = vshrl.u32 %v411, 7
      %v413 = vsub.s32 0, %v412
      %v414 = vrot.slane %v409, %v413
      %v432 = vunpack.c.l.b16 %v393
      %v433 = vunpack.c.l.b16 %v394
      %v434 = vunpack.c.l.b16 %v395
      %v435 = vunpack.c.l.b16 %v396
      %v436 = vunpack.c.l.b16 %v397
      %v437 = vunpack.c.l.b16 %v398
      %v438 = vunpack.c.l.b16 %v399
      %v439 = vunpack.c.l.b16 %v400
      %v440 = vunpack.c.l.b16 %v401
      %v441 = vunpack.c.l.b16 %v402
      %v442 = vunpack.c.l.b16 %v403
      %v443 = vunpack.c.l.b16 %v404
      %v444 = vunpack.c.l.b16 %v405
      %v445 = vunpack.c.l.b16 %v406
      %v446 = vunpack.c.l.b16 %v407
      %v447 = vunpack.c.l.b16 %v408
      %v448 = vpack.c.b16 %v433, %v432
      %v449 = vpack.c.b16 %v435, %v434
      %v450 = vpack.c.b16 %v437, %v436
      %v451 = vpack.c.b16 %v439, %v438
      %v452 = vpack.c.b16 %v441, %v440
      %v453 = vpack.c.b16 %v443, %v442
      %v454 = vpack.c.b16 %v445, %v444
      %v455 = vpack.c.b16 %v447, %v446
      %464 = vmatprep.subr.bf16.mxu0 0
      %465 = vmatpush1.bf16.msra.mxu0 %v455
      %466 = vmatprep.subr.bf16.mxu0 0
      %467 = vmatpush1.bf16.msra.mxu0 %v454
      %468 = vmatprep.subr.bf16.mxu0 0
      %469 = vmatpush1.bf16.msra.mxu0 %v453
      %470 = vmatprep.subr.bf16.mxu0 0
      %471 = vmatpush1.bf16.msra.mxu0 %v452
      %472 = vmatprep.subr.bf16.mxu0 0
      %473 = vmatpush1.bf16.msra.mxu0 %v451
      %474 = vmatprep.subr.bf16.mxu0 0
      %475 = vmatpush1.bf16.msra.mxu0 %v450
      %476 = vmatprep.subr.bf16.mxu0 0
      %477 = vmatpush1.bf16.msra.mxu0 %v449
      %478 = vmatprep.subr.bf16.mxu0 0
      %479 = vmatpush1.bf16.msra.mxu0 %v448
      %480 = vmatprep.subr.bf16.mxu0 0
      %481 = vmatpush2.bf16.msra.mxu0 0
      %482 = vmatprep.subr.bf16.mxu0 0
      %483 = vmatpush2.bf16.msra.mxu0 0
      %484 = vmatprep.subr.bf16.mxu0 0
      %485 = vmatpush2.bf16.msra.mxu0 0
      %486 = vmatprep.subr.bf16.mxu0 0
      %487 = vmatpush2.bf16.msra.mxu0 0
      %488 = vmatprep.subr.bf16.mxu0 0
      %489 = vmatpush2.bf16.msra.mxu0 0
      %490 = vmatprep.subr.bf16.mxu0 0
      %491 = vmatpush2.bf16.msra.mxu0 0
      %492 = vmatprep.subr.bf16.mxu0 0
      %493 = vmatpush2.bf16.msra.mxu0 0
      %494 = vmatprep.subr.bf16.mxu0 0
      %495 = vmatpush2.bf16.msra.mxu0 0
      %496 = vmatprep.mubr.bf16.mxu0 0
      %497 = vmatmul.mubr.bf16.gmra.mxu0 %v391
      %v498 = vpop.f32.mrf.mxu0
      %v499 = vadd.f32 %v414, %v498
      %v500 = vpop.f32.mrf.mxu0
      %v501 = vpop.f32.mrf.mxu0
      %v502 = vadd.f32 %v414, %v501
      %v503 = vpop.f32.mrf.mxu0
      %504 = vmatprep.mubr.bf16.mxu0 0
      %505 = vmatmul.mubr.bf16.gmra.mxu0 %v392
      %v506 = vpop.f32.mrf.mxu0
      %v507 = vadd.f32 %v414, %v506
      %v508 = vpop.f32.mrf.mxu0
      %v509 = vpop.f32.mrf.mxu0
      %v510 = vadd.f32 %v414, %v509
      %v511 = vpop.f32.mrf.mxu0
      %512 = vdwg.mxu0
      %513 = vadd.xlane.f32.xlu0 %v499
      %v514 = vpop.xlane.xlu0 %513
      %515 = vadd.xlane.f32.xlu0 %v502
      %v516 = vpop.xlane.xlu0 %515
      %517 = vadd.xlane.f32.xlu0 %v507
      %v518 = vpop.xlane.xlu0 %517
      %519 = vadd.xlane.f32.xlu0 %v510
      %v520 = vpop.xlane.xlu0 %519
      %v521 = vmul.f32 %v514, 0.0078125
      %v522 = vmul.f32 %v516, 0.0078125
      %v523 = vmul.f32 %v518, 0.0078125
      %v524 = vmul.f32 %v520, 0.0078125
      %v525 = vsub.f32 %v499, %v521
      %v526 = vsub.f32 %v502, %v522
      %v527 = vsub.f32 %v507, %v523
      %v528 = vsub.f32 %v510, %v524
      %v529 = vmul.f32 %v525, %v525
      %v530 = vmul.f32 %v526, %v526
      %v531 = vmul.f32 %v527, %v527
      %v532 = vmul.f32 %v528, %v528
      %533 = vadd.xlane.f32.xlu0 %v529
      %v534 = vpop.xlane.xlu0 %533
      %535 = vadd.xlane.f32.xlu0 %v530
      %v536 = vpop.xlane.xlu0 %535
      %537 = vadd.xlane.f32.xlu0 %v531
      %v538 = vpop.xlane.xlu0 %537
      %539 = vadd.xlane.f32.xlu0 %v532
      %v540 = vpop.xlane.xlu0 %539
      %v541 = vmul.f32 %v534, 0.0078125
      %v542 = vmul.f32 %v536, 0.0078125
      %v543 = vmul.f32 %v538, 0.0078125
      %v544 = vmul.f32 %v540, 0.0078125
      %v545 = vadd.f32 %v541, 1e-05
      %v546 = vadd.f32 %v542, 1e-05
      %v547 = vadd.f32 %v543, 1e-05
      %v548 = vadd.f32 %v544, 1e-05
      %v549 = vrsqrt.pop %v545
      %v550 = vrsqrt.pop %v546
      %v551 = vrsqrt.pop %v547
      %v552 = vrsqrt.pop %v548
      %v553 = vmul.f32 %v525, %v549
      %v554 = vmul.f32 %v526, %v550
      %v555 = vmul.f32 %v527, %v551
      %v556 = vmul.f32 %v528, %v552
      %v557 = vld [vmem:[%s5] sm:$0x1]
      %v559 = vlaneseq
      %v560 = vshrl.u32 %v559, 7
      %v561 = vsub.s32 0, %v560
      %v562 = vrot.slane %v557, %v561
      %v564 = vmul.f32 %v553, %v562
      %v565 = vmul.f32 %v554, %v562
      %v566 = vmul.f32 %v555, %v562
      %v567 = vmul.f32 %v556, %v562
      %v568 = vld [vmem:[%s6] sm:$0x1]
      %v570 = vlaneseq
      %v571 = vshrl.u32 %v570, 7
      %v572 = vsub.s32 0, %v571
      %v573 = vrot.slane %v568, %v572
      %v575 = vadd.f32 %v564, %v573
      %v576 = vadd.f32 %v565, %v573
      %v577 = vadd.f32 %v566, %v573
      %v578 = vadd.f32 %v567, %v573
      %v579 = vpack.c.bf16 %v576, %v575
      %v580 = vpack.c.bf16 %v578, %v577
      %v583 = vunpack.c.l.b16 %v579
      %v584 = vunpack.c.h.b16 %v579
      %v585 = vunpack.c.l.b16 %v580
      %v586 = vunpack.c.h.b16 %v580
      %v587 = vpack.c.b16 %v583, %v583
      %v588 = vpack.c.b16 %v584, %v584
      %v589 = vpack.c.b16 %v585, %v585
      %v590 = vpack.c.b16 %v586, %v586
      %595 = vst [vmem:[%s280] sm:$0xf] %v587
      %596 = vst [vmem:[%s280 + $0x4] sm:$0xf] %v588
      %597 = vst [vmem:[%s280 + $0x8] sm:$0xf] %v589
      %598 = vst [vmem:[%s280 + $0xc] sm:$0xf] %v590
      %s599 = smul.u32 4, %s18
      %p600 = scmp.lt.s32.totalorder %s599, 7
      %s601 = scalar_select %p600, %s599, 7
      %s602 = smul.addr %s601, 4
      %s603 = scalar_lea.vmem %s7, %s602
      // Predicated region
      $region49: #{graphcast_forward.19} parent=47 // pred_check
        %p604 = pneg %p188
      $region50: #{graphcast_forward.19} parent=47 // pred_check_branch
        %606 = sbr.rel (%p604) target = $region52
      $region51: #{graphcast_forward.19} parent=47 // pred_region
        %s607 = smul.u32 4, %s18
      $region52: #{graphcast_forward.19} parent=47 // pred_fallthru
        _
    $region48: #{graphcast_forward.19} parent=5 // pred_fallthru
      _
    %p608 = scmp.le.s32.totalorder 2, %s13
    // Predicated region
    $region53: #{graphcast_forward.19} parent=5 // pred_check
      %p609 = pneg %p608
    $region54: #{graphcast_forward.19} parent=5 // pred_check_branch
      %611 = sbr.rel (%p609) target = $region56
    $region55: #{graphcast_forward.19} parent=5 // pred_region
      %s612 = ssub.s32 %s13, 2
      // Predicated region
      $region57: #{graphcast_forward.19} parent=55 // pred_check
        %p613 = pneg %p194
      $region58: #{graphcast_forward.19} parent=55 // pred_check_branch
        %615 = sbr.rel (%p613) target = $region60
      $region59: #{graphcast_forward.19} parent=55 // pred_region
        %s616 = smul.u32 4, %s19
        %p617 = scmp.lt.s32.totalorder %s616, 7
        %s618 = scalar_select %p617, %s616, 7
        %s619 = smul.addr %s618, 4
        %s620 = scalar_lea.vmem %s7, %s619
      $region60: #{graphcast_forward.19} parent=55 // pred_fallthru
        _
    $region56: #{graphcast_forward.19} parent=5 // pred_fallthru
      _
  $region6: #{graphcast_forward.19} parent=0 // loop_footer
    %s17 = sadd.s32 1, %s13
  $region7: #{graphcast_forward.19} parent=0 // loop_footer_branch
    %12 = sbr.rel target = $region3
  $region8: #{graphcast_forward.19} parent=0 // loop_exit
    _

// kernel: graphcast_forward.20
$region0: #{graphcast_forward.20}
  #allocation0 [shape = 'u32[]', space=smem, size = 0x4, offset = 0x4, fixed_abs, tag = 'smem constant byte address 0x4 - core index']
  #allocation1 [shape = 'u32[144,128]{1,0:T(1,128)}', space=vmem, size = 0x12000, scoped, tag = 'internal scratch']
  %s0 = inlined_call_operand.vmem [shape: f32[16,3], index: 0, kind: input, shape index: {}]
  %s1 = inlined_call_operand.vmem [shape: bf16[3,128], index: 1, kind: input, shape index: {}]
  %s2 = inlined_call_operand.vmem [shape: f32[1,128], index: 2, kind: input, shape index: {}]
  %s3 = inlined_call_operand.vmem [shape: bf16[128,128], index: 3, kind: input, shape index: {}]
  %s4 = inlined_call_operand.vmem [shape: f32[1,128], index: 4, kind: input, shape index: {}]
  %s5 = inlined_call_operand.vmem [shape: f32[1,128], index: 5, kind: input, shape index: {}]
  %s6 = inlined_call_operand.vmem [shape: f32[1,128], index: 6, kind: input, shape index: {}]
  %s7 = inlined_call_operand.vmem [shape: bf16[16,128], index: 7, kind: output, shape index: {}]
  %s8 = sld [smem:[#allocation0]]
  $region61: #{graphcast_forward.20} parent=0
    _
  %s10 = ssub.s32 1, %s8
  %s11 = scalar_select 0, %s10, %s8
  loop: start=0, step=1, limit=4
  $region2: #{graphcast_forward.20} parent=0 // loop_pre_header
    _
  $region3: #{graphcast_forward.20} parent=0 // loop_header
    %s13 = sphi 0, %s17
    %p14 = scmp.ge.s32.totalorder %s13, 4
    %s23 = sphi 0, %s25
    %s26 = sphi 0, %s23
    %s27 = sphi 0, %s26
    %s43 = sphi 0, %s27
    %s47 = sphi 0, %s47
    %s49 = sphi 0, %s47
    %s50 = sphi 0, %s49
    %s64 = sphi 0, %s50
    %s68 = sphi 0, %s68
    %s70 = sphi 0, %s68
    %s71 = sphi 0, %s70
    %s85 = sphi 0, %s71
    %s89 = sphi 0, %s89
    %s91 = sphi 0, %s89
    %s92 = sphi 0, %s91
    %s106 = sphi 0, %s92
    %s110 = sphi 0, %s110
    %s112 = sphi 0, %s110
    %s113 = sphi 0, %s112
    %s127 = sphi 0, %s113
    %s131 = sphi 0, %s131
    %s133 = sphi 0, %s131
    %s134 = sphi 0, %s133
    %s148 = sphi 0, %s134
    %s152 = sphi 0, %s152
    %s154 = sphi 0, %s152
    %s155 = sphi 0, %s154
    %s169 = sphi 0, %s155
    %s175 = sphi 0, %s177
    %s178 = sphi 0, %s175
    %s179 = sphi 0, %s178
    %s195 = sphi 0, %s179
  $region4: #{graphcast_forward.20} parent=0 // loop_header_branch
    %16 = sbr.rel (%p14) target = $region8
  $region5: #{graphcast_forward.20} parent=0 // loop_body
    %s18 = ssub.s32 %s13, 1
    %s19 = ssub.s32 %s13, 2
    %s20 = sadd.s32 %s13, 1
    %s21 = ssub.s32 %s13, %s20
    %p22 = scmp.eq.s32.totalorder %s21, 0
    %s24 = sadd.s32 %s23, 1
    %s25 = scalar_select %p22, %s23, %s24
    %p28 = pneg %p22
    %p29 = scmp.eq.s32.totalorder %s13, 1
    %p30 = por %p28, %p29
    %p31 = scmp.ne.s32.totalorder %s23, %s26
    %p32 = scmp.eq.s32.totalorder %s13, 0
    %p33 = por %p31, %p32
    %p34 = scmp.ne.s32.totalorder %s23, %s26
    %p35 = scmp.eq.s32.totalorder %s18, 1
    %p36 = por %p34, %p35
    %p37 = scmp.ne.s32.totalorder %s26, %s27
    %p38 = scmp.eq.s32.totalorder %s18, 0
    %p39 = por %p37, %p38
    %p40 = scmp.ne.s32.totalorder %s26, %s27
    %p41 = scmp.eq.s32.totalorder %s19, 1
    %p42 = por %p40, %p41
    %p44 = scmp.ne.s32.totalorder %s27, %s43
    %p45 = scmp.eq.s32.totalorder %s19, 0
    %p46 = por %p44, %p45
    %s48 = sadd.s32 %s47, 1
    %p51 = scmp.eq.s32.totalorder %s13, 1
    %p52 = scmp.ne.s32.totalorder %s47, %s49
    %p53 = scmp.eq.s32.totalorder %s13, 0
    %p54 = por %p52, %p53
    %p55 = scmp.ne.s32.totalorder %s47, %s49
    %p56 = scmp.eq.s32.totalorder %s18, 1
    %p57 = por %p55, %p56
    %p58 = scmp.ne.s32.totalorder %s49, %s50
    %p59 = scmp.eq.s32.totalorder %s18, 0
    %p60 = por %p58, %p59
    %p61 = scmp.ne.s32.totalorder %s49, %s50
    %p62 = scmp.eq.s32.totalorder %s19, 1
    %p63 = por %p61, %p62
    %p65 = scmp.ne.s32.totalorder %s50, %s64
    %p66 = scmp.eq.s32.totalorder %s19, 0
    %p67 = por %p65, %p66
    %s69 = sadd.s32 %s68, 1
    %p72 = scmp.eq.s32.totalorder %s13, 1
    %p73 = scmp.ne.s32.totalorder %s68, %s70
    %p74 = scmp.eq.s32.totalorder %s13, 0
    %p75 = por %p73, %p74
    %p76 = scmp.ne.s32.totalorder %s68, %s70
    %p77 = scmp.eq.s32.totalorder %s18, 1
    %p78 = por %p76, %p77
    %p79 = scmp.ne.s32.totalorder %s70, %s71
    %p80 = scmp.eq.s32.totalorder %s18, 0
    %p81 = por %p79, %p80
    %p82 = scmp.ne.s32.totalorder %s70, %s71
    %p83 = scmp.eq.s32.totalorder %s19, 1
    %p84 = por %p82, %p83
    %p86 = scmp.ne.s32.totalorder %s71, %s85
    %p87 = scmp.eq.s32.totalorder %s19, 0
    %p88 = por %p86, %p87
    %s90 = sadd.s32 %s89, 1
    %p93 = scmp.eq.s32.totalorder %s13, 1
    %p94 = scmp.ne.s32.totalorder %s89, %s91
    %p95 = scmp.eq.s32.totalorder %s13, 0
    %p96 = por %p94, %p95
    %p97 = scmp.ne.s32.totalorder %s89, %s91
    %p98 = scmp.eq.s32.totalorder %s18, 1
    %p99 = por %p97, %p98
    %p100 = scmp.ne.s32.totalorder %s91, %s92
    %p101 = scmp.eq.s32.totalorder %s18, 0
    %p102 = por %p100, %p101
    %p103 = scmp.ne.s32.totalorder %s91, %s92
    %p104 = scmp.eq.s32.totalorder %s19, 1
    %p105 = por %p103, %p104
    %p107 = scmp.ne.s32.totalorder %s92, %s106
    %p108 = scmp.eq.s32.totalorder %s19, 0
    %p109 = por %p107, %p108
    %s111 = sadd.s32 %s110, 1
    %p114 = scmp.eq.s32.totalorder %s13, 1
    %p115 = scmp.ne.s32.totalorder %s110, %s112
    %p116 = scmp.eq.s32.totalorder %s13, 0
    %p117 = por %p115, %p116
    %p118 = scmp.ne.s32.totalorder %s110, %s112
    %p119 = scmp.eq.s32.totalorder %s18, 1
    %p120 = por %p118, %p119
    %p121 = scmp.ne.s32.totalorder %s112, %s113
    %p122 = scmp.eq.s32.totalorder %s18, 0
    %p123 = por %p121, %p122
    %p124 = scmp.ne.s32.totalorder %s112, %s113
    %p125 = scmp.eq.s32.totalorder %s19, 1
    %p126 = por %p124, %p125
    %p128 = scmp.ne.s32.totalorder %s113, %s127
    %p129 = scmp.eq.s32.totalorder %s19, 0
    %p130 = por %p128, %p129
    %s132 = sadd.s32 %s131, 1
    %p135 = scmp.eq.s32.totalorder %s13, 1
    %p136 = scmp.ne.s32.totalorder %s131, %s133
    %p137 = scmp.eq.s32.totalorder %s13, 0
    %p138 = por %p136, %p137
    %p139 = scmp.ne.s32.totalorder %s131, %s133
    %p140 = scmp.eq.s32.totalorder %s18, 1
    %p141 = por %p139, %p140
    %p142 = scmp.ne.s32.totalorder %s133, %s134
    %p143 = scmp.eq.s32.totalorder %s18, 0
    %p144 = por %p142, %p143
    %p145 = scmp.ne.s32.totalorder %s133, %s134
    %p146 = scmp.eq.s32.totalorder %s19, 1
    %p147 = por %p145, %p146
    %p149 = scmp.ne.s32.totalorder %s134, %s148
    %p150 = scmp.eq.s32.totalorder %s19, 0
    %p151 = por %p149, %p150
    %s153 = sadd.s32 %s152, 1
    %p156 = scmp.eq.s32.totalorder %s13, 1
    %p157 = scmp.ne.s32.totalorder %s152, %s154
    %p158 = scmp.eq.s32.totalorder %s13, 0
    %p159 = por %p157, %p158
    %p160 = scmp.ne.s32.totalorder %s152, %s154
    %p161 = scmp.eq.s32.totalorder %s18, 1
    %p162 = por %p160, %p161
    %p163 = scmp.ne.s32.totalorder %s154, %s155
    %p164 = scmp.eq.s32.totalorder %s18, 0
    %p165 = por %p163, %p164
    %p166 = scmp.ne.s32.totalorder %s154, %s155
    %p167 = scmp.eq.s32.totalorder %s19, 1
    %p168 = por %p166, %p167
    %p170 = scmp.ne.s32.totalorder %s155, %s169
    %p171 = scmp.eq.s32.totalorder %s19, 0
    %p172 = por %p170, %p171
    %s173 = ssub.s32 %s13, %s20
    %p174 = scmp.eq.s32.totalorder %s173, 0
    %s176 = sadd.s32 %s175, 1
    %s177 = scalar_select %p174, %s175, %s176
    %p180 = pneg %p174
    %p181 = scmp.eq.s32.totalorder %s13, 1
    %p182 = por %p180, %p181
    %p183 = scmp.ne.s32.totalorder %s175, %s178
    %p184 = scmp.eq.s32.totalorder %s13, 0
    %p185 = por %p183, %p184
    %p186 = scmp.ne.s32.totalorder %s175, %s178
    %p187 = scmp.eq.s32.totalorder %s18, 1
    %p188 = por %p186, %p187
    %p189 = scmp.ne.s32.totalorder %s178, %s179
    %p190 = scmp.eq.s32.totalorder %s18, 0
    %p191 = por %p189, %p190
    %p192 = scmp.ne.s32.totalorder %s178, %s179
    %p193 = scmp.eq.s32.totalorder %s19, 1
    %p194 = por %p192, %p193
    %p196 = scmp.ne.s32.totalorder %s179, %s195
    %p197 = scmp.eq.s32.totalorder %s19, 0
    %p198 = por %p196, %p197
    %p199 = scmp.le.s32.totalorder 1, %s13
    %p200 = scmp.lt.s32.totalorder %s13, 3
    %p201 = pnand %p199, %p200
    %p202 = pneg %p201
    // Predicated region
    $region9: #{graphcast_forward.20} parent=5 // pred_check
      _
    $region10: #{graphcast_forward.20} parent=5 // pred_check_branch
      %204 = sbr.rel (%p201) target = $region12
    $region11: #{graphcast_forward.20} parent=5 // pred_region
      %s205 = ssub.s32 %s13, 1
      // Predicated region
      $region13: #{graphcast_forward.20} parent=11 // pred_check
        %p206 = pneg %p60
      $region14: #{graphcast_forward.20} parent=11 // pred_check_branch
        %208 = sbr.rel (%p206) target = $region16
      $region15: #{graphcast_forward.20} parent=11 // pred_region
        _
      $region16: #{graphcast_forward.20} parent=11 // pred_fallthru
        _
      // Predicated region
      $region17: #{graphcast_forward.20} parent=11 // pred_check
        %p209 = pneg %p81
      $region18: #{graphcast_forward.20} parent=11 // pred_check_branch
        %211 = sbr.rel (%p209) target = $region20
      $region19: #{graphcast_forward.20} parent=11 // pred_region
        _
      $region20: #{graphcast_forward.20} parent=11 // pred_fallthru
        _
      // Predicated region
      $region21: #{graphcast_forward.20} parent=11 // pred_check
        %p212 = pneg %p102
      $region22: #{graphcast_forward.20} parent=11 // pred_check_branch
        %214 = sbr.rel (%p212) target = $region24
      $region23: #{graphcast_forward.20} parent=11 // pred_region
        _
      $region24: #{graphcast_forward.20} parent=11 // pred_fallthru
        _
      // Predicated region
      $region25: #{graphcast_forward.20} parent=11 // pred_check
        %p215 = pneg %p123
      $region26: #{graphcast_forward.20} parent=11 // pred_check_branch
        %217 = sbr.rel (%p215) target = $region28
      $region27: #{graphcast_forward.20} parent=11 // pred_region
        _
      $region28: #{graphcast_forward.20} parent=11 // pred_fallthru
        _
      // Predicated region
      $region29: #{graphcast_forward.20} parent=11 // pred_check
        %p218 = pneg %p144
      $region30: #{graphcast_forward.20} parent=11 // pred_check_branch
        %220 = sbr.rel (%p218) target = $region32
      $region31: #{graphcast_forward.20} parent=11 // pred_region
        _
      $region32: #{graphcast_forward.20} parent=11 // pred_fallthru
        _
      // Predicated region
      $region33: #{graphcast_forward.20} parent=11 // pred_check
        %p221 = pneg %p165
      $region34: #{graphcast_forward.20} parent=11 // pred_check_branch
        %223 = sbr.rel (%p221) target = $region36
      $region35: #{graphcast_forward.20} parent=11 // pred_region
        _
      $region36: #{graphcast_forward.20} parent=11 // pred_fallthru
        _
    $region12: #{graphcast_forward.20} parent=5 // pred_fallthru
      _
    %p224 = scmp.lt.s32.totalorder %s13, 2
    // Predicated region
    $region37: #{graphcast_forward.20} parent=5 // pred_check
      %p225 = pneg %p224
    $region38: #{graphcast_forward.20} parent=5 // pred_check_branch
      %227 = sbr.rel (%p225) target = $region40
    $region39: #{graphcast_forward.20} parent=5 // pred_region
      // Predicated region
      $region41: #{graphcast_forward.20} parent=39 // pred_check
        %p228 = pneg %p33
      $region42: #{graphcast_forward.20} parent=39 // pred_check_branch
        %230 = sbr.rel (%p228) target = $region44
      $region43: #{graphcast_forward.20} parent=39 // pred_region
        %p231 = scmp.lt.s32.totalorder %s13, 1
        %s232 = scalar_select %p231, %s13, 1
        %s233 = smul.addr %s232, 8
        %s234 = scalar_lea.vmem %s0, %s233
      $region44: #{graphcast_forward.20} parent=39 // pred_fallthru
        _
    $region40: #{graphcast_forward.20} parent=5 // pred_fallthru
      _
    %p235 = scmp.le.s32.totalorder 1, %s13
    %p236 = scmp.lt.s32.totalorder %s13, 3
    %p237 = pnand %p235, %p236
    %p238 = pneg %p237
    // Predicated region
    $region45: #{graphcast_forward.20} parent=5 // pred_check
      _
    $region46: #{graphcast_forward.20} parent=5 // pred_check_branch
      %240 = sbr.rel (%p237) target = $region48
    $region47: #{graphcast_forward.20} parent=5 // pred_region
      %s241 = ssub.s32 %s13, 1
      %p242 = scmp.lt.s32.totalorder %s18, 1
      %s243 = scalar_select %p242, %s18, 1
      %s244 = smul.addr %s243, 8
      %s245 = scalar_lea.vmem %s0, %s244
      %p246 = pneg %p39
      %p247 = pneg %p36
      %p248 = pneg %p60
      %p249 = pneg %p57
      %p250 = pneg %p81
      %p251 = pneg %p78
      %p252 = pneg %p102
      %p253 = pneg %p99
      %p254 = pneg %p123
      %p255 = pneg %p120
      %p256 = pneg %p144
      %p257 = pneg %p141
      %p258 = pneg %p165
      %p259 = pneg %p162
      %p260 = pneg %p191
      %p261 = pneg %p188
      %p262 = scmp.lt.s32.totalorder %s18, 1
      %s263 = scalar_select %p262, %s18, 1
      %s264 = smul.addr %s263, 4
      %s265 = scalar_lea.vmem %s7, %s264
      %p266 = scmp.lt.s32.totalorder %s18, 1
      %s267 = scalar_select %p266, %s18, 1
      %s268 = smul.addr %s267, 8
      %s269 = scalar_lea.vmem %s0, %s268
      %p270 = scmp.lt.s32.totalorder %s18, 1
      %s271 = scalar_select %p270, %s18, 1
      %s272 = smul.addr %s271, 4
      %s273 = scalar_lea.vmem %s7, %s272
      %v275 = vld [vmem:[%s269] sm:$0xff]
      %v276 = vpack.c.bf16 %v275, %v275
      %v277 = vld [vmem:[%s1] sm:$0x3]
      %v278 = vld [vmem:[%s2] sm:$0x1]
      %v280 = vlaneseq
      %v281 = vshrl.u32 %v280, 7
      %v282 = vsub.s32 0, %v281
      %v283 = vrot.slane %v278, %v282
      %vm285 = vcmask 23552
      %v287 = vsel %vm285, %v276, 0
      %vm289 = vcmask 1040384
      %vm290 = vcmask 1041408
      %v291 = vsel %vm289, 4294967295, 65535
      %v292 = vsel %vm290, %v291, 0
      %v294 = vand.u32 %v277, %v292
      %296 = vmatprep.subr.bf16.mxu0 0
      %297 = vmatpush1.bf16.msra.mxu0 0
      %298 = vmatprep.subr.bf16.mxu0 0
      %299 = vmatpush1.bf16.msra.mxu0 0
      %300 = vmatprep.subr.bf16.mxu0 0
      %301 = vmatpush1.bf16.msra.mxu0 0
      %302 = vmatprep.subr.bf16.mxu0 0
      %303 = vmatpush1.bf16.msra.mxu0 0
      %304 = vmatprep.subr.bf16.mxu0 0
      %305 = vmatpush1.bf16.msra.mxu0 0
      %306 = vmatprep.subr.bf16.mxu0 0
      %307 = vmatpush1.bf16.msra.mxu0 0
      %308 = vmatprep.subr.bf16.mxu0 0
      %309 = vmatpush1.bf16.msra.mxu0 0
      %310 = vmatprep.subr.bf16.mxu0 0
      %311 = vmatpush1.bf16.msra.mxu0 %v294
      %312 = vmatprep.subr.bf16.mxu0 0
      %313 = vmatpush2.bf16.msra.mxu0 0
      %314 = vmatprep.subr.bf16.mxu0 0
      %315 = vmatpush2.bf16.msra.mxu0 0
      %316 = vmatprep.subr.bf16.mxu0 0
      %317 = vmatpush2.bf16.msra.mxu0 0
      %318 = vmatprep.subr.bf16.mxu0 0
      %319 = vmatpush2.bf16.msra.mxu0 0
      %320 = vmatprep.subr.bf16.mxu0 0
      %321 = vmatpush2.bf16.msra.mxu0 0
      %322 = vmatprep.subr.bf16.mxu0 0
      %323 = vmatpush2.bf16.msra.mxu0 0
      %324 = vmatprep.subr.bf16.mxu0 0
      %325 = vmatpush2.bf16.msra.mxu0 0
      %326 = vmatprep.subr.bf16.mxu0 0
      %327 = vmatpush2.bf16.msra.mxu0 0
      %328 = vmatprep.mubr.bf16.mxu0 0
      %329 = vmatmul.mubr.bf16.gmra.mxu0 %v287
      %v330 = vpop.f32.mrf.mxu0
      %v331 = vadd.f32 %v283, %v330
      %v332 = vpop.f32.mrf.mxu0
      %v333 = vpop.f32.mrf.mxu0
      %v334 = vpop.f32.mrf.mxu0
      %335 = vdwg.mxu0
      %v336 = vxor.u32 %v331, 2147483648
      %v337 = vmul.f32 %v336, 1.442695
      %v338 = vpow.pop %v337
      %v339 = vadd.f32 %v338, 1.0
      %v340 = vrcp.pop %v339
      %v341 = vmul.f32 1.0, %v340
      %v342 = vmul.f32 %v331, %v341
      %v343 = vpack.c.bf16 %v342, %v342
      %v344 = vld [vmem:[%s3] sm:$0xf]
      %v345 = vld [vmem:[%s3 + $0x4] sm:$0xf]
      %v346 = vld [vmem:[%s3 + $0x8] sm:$0xf]
      %v347 = vld [vmem:[%s3 + $0xc] sm:$0xf]
      %v348 = vld [vmem:[%s3 + $0x10] sm:$0xf]
      %v349 = vld [vmem:[%s3 + $0x14] sm:$0xf]
      %v350 = vld [vmem:[%s3 + $0x18] sm:$0xf]
      %v351 = vld [vmem:[%s3 + $0x1c] sm:$0xf]
      %v352 = vld [vmem:[%s3 + $0x20] sm:$0xf]
      %v353 = vld [vmem:[%s3 + $0x24] sm:$0xf]
      %v354 = vld [vmem:[%s3 + $0x28] sm:$0xf]
      %v355 = vld [vmem:[%s3 + $0x2c] sm:$0xf]
      %v356 = vld [vmem:[%s3 + $0x30] sm:$0xf]
      %v357 = vld [vmem:[%s3 + $0x34] sm:$0xf]
      %v358 = vld [vmem:[%s3 + $0x38] sm:$0xf]
      %v359 = vld [vmem:[%s3 + $0x3c] sm:$0xf]
      %v360 = vld [vmem:[%s4] sm:$0x1]
      %v362 = vlaneseq
      %v363 = vshrl.u32 %v362, 7
      %v364 = vsub.s32 0, %v363
      %v365 = vrot.slane %v360, %v364
      %v383 = vunpack.c.l.b16 %v344
      %v384 = vunpack.c.l.b16 %v345
      %v385 = vunpack.c.l.b16 %v346
      %v386 = vunpack.c.l.b16 %v347
      %v387 = vunpack.c.l.b16 %v348
      %v388 = vunpack.c.l.b16 %v349
      %v389 = vunpack.c.l.b16 %v350
      %v390 = vunpack.c.l.b16 %v351
      %v391 = vunpack.c.l.b16 %v352
      %v392 = vunpack.c.l.b16 %v353
      %v393 = vunpack.c.l.b16 %v354
      %v394 = vunpack.c.l.b16 %v355
      %v395 = vunpack.c.l.b16 %v356
      %v396 = vunpack.c.l.b16 %v357
      %v397 = vunpack.c.l.b16 %v358
      %v398 = vunpack.c.l.b16 %v359
      %v399 = vpack.c.b16 %v384, %v383
      %v400 = vpack.c.b16 %v386, %v385
      %v401 = vpack.c.b16 %v388, %v387
      %v402 = vpack.c.b16 %v390, %v389
      %v403 = vpack.c.b16 %v392, %v391
      %v404 = vpack.c.b16 %v394, %v393
      %v405 = vpack.c.b16 %v396, %v395
      %v406 = vpack.c.b16 %v398, %v397
      %415 = vmatprep.subr.bf16.mxu0 0
      %416 = vmatpush1.bf16.msra.mxu0 %v406
      %417 = vmatprep.subr.bf16.mxu0 0
      %418 = vmatpush1.bf16.msra.mxu0 %v405
      %419 = vmatprep.subr.bf16.mxu0 0
      %420 = vmatpush1.bf16.msra.mxu0 %v404
      %421 = vmatprep.subr.bf16.mxu0 0
      %422 = vmatpush1.bf16.msra.mxu0 %v403
      %423 = vmatprep.subr.bf16.mxu0 0
      %424 = vmatpush1.bf16.msra.mxu0 %v402
      %425 = vmatprep.subr.bf16.mxu0 0
      %426 = vmatpush1.bf16.msra.mxu0 %v401
      %427 = vmatprep.subr.bf16.mxu0 0
      %428 = vmatpush1.bf16.msra.mxu0 %v400
      %429 = vmatprep.subr.bf16.mxu0 0
      %430 = vmatpush1.bf16.msra.mxu0 %v399
      %431 = vmatprep.subr.bf16.mxu0 0
      %432 = vmatpush2.bf16.msra.mxu0 0
      %433 = vmatprep.subr.bf16.mxu0 0
      %434 = vmatpush2.bf16.msra.mxu0 0
      %435 = vmatprep.subr.bf16.mxu0 0
      %436 = vmatpush2.bf16.msra.mxu0 0
      %437 = vmatprep.subr.bf16.mxu0 0
      %438 = vmatpush2.bf16.msra.mxu0 0
      %439 = vmatprep.subr.bf16.mxu0 0
      %440 = vmatpush2.bf16.msra.mxu0 0
      %441 = vmatprep.subr.bf16.mxu0 0
      %442 = vmatpush2.bf16.msra.mxu0 0
      %443 = vmatprep.subr.bf16.mxu0 0
      %444 = vmatpush2.bf16.msra.mxu0 0
      %445 = vmatprep.subr.bf16.mxu0 0
      %446 = vmatpush2.bf16.msra.mxu0 0
      %447 = vmatprep.mubr.bf16.mxu0 0
      %448 = vmatmul.mubr.bf16.gmra.mxu0 %v343
      %v449 = vpop.f32.mrf.mxu0
      %v450 = vadd.f32 %v365, %v449
      %v451 = vpop.f32.mrf.mxu0
      %v452 = vpop.f32.mrf.mxu0
      %v453 = vpop.f32.mrf.mxu0
      %454 = vdwg.mxu0
      %455 = vadd.xlane.f32.xlu0 %v450
      %v456 = vpop.xlane.xlu0 %455
      %v457 = vmul.f32 %v456, 0.0078125
      %v458 = vsub.f32 %v450, %v457
      %v459 = vmul.f32 %v458, %v458
      %460 = vadd.xlane.f32.xlu0 %v459
      %v461 = vpop.xlane.xlu0 %460
      %v462 = vmul.f32 %v461, 0.0078125
      %v463 = vadd.f32 %v462, 1e-05
      %v464 = vrsqrt.pop %v463
      %v465 = vmul.f32 %v458, %v464
      %v466 = vld [vmem:[%s5] sm:$0x1]
      %v468 = vlaneseq
      %v469 = vshrl.u32 %v468, 7
      %v470 = vsub.s32 0, %v469
      %v471 = vrot.slane %v466, %v470
      %v473 = vmul.f32 %v465, %v471
      %v474 = vld [vmem:[%s6] sm:$0x1]
      %v476 = vlaneseq
      %v477 = vshrl.u32 %v476, 7
      %v478 = vsub.s32 0, %v477
      %v479 = vrot.slane %v474, %v478
      %v481 = vadd.f32 %v473, %v479
      %v482 = vpack.c.bf16 %v481, %v481
      %483 = vst [vmem:[%s273] sm:$0xf] %v482
      %p484 = scmp.lt.s32.totalorder %s18, 1
      %s485 = scalar_select %p484, %s18, 1
      %s486 = smul.addr %s485, 4
      %s487 = scalar_lea.vmem %s7, %s486
      // Predicated region
      $region49: #{graphcast_forward.20} parent=47 // pred_check
        %p488 = pneg %p188
      $region50: #{graphcast_forward.20} parent=47 // pred_check_branch
        %490 = sbr.rel (%p488) target = $region52
      $region51: #{graphcast_forward.20} parent=47 // pred_region
        _
      $region52: #{graphcast_forward.20} parent=47 // pred_fallthru
        _
    $region48: #{graphcast_forward.20} parent=5 // pred_fallthru
      _
    %p491 = scmp.le.s32.totalorder 2, %s13
    // Predicated region
    $region53: #{graphcast_forward.20} parent=5 // pred_check
      %p492 = pneg %p491
    $region54: #{graphcast_forward.20} parent=5 // pred_check_branch
      %494 = sbr.rel (%p492) target = $region56
    $region55: #{graphcast_forward.20} parent=5 // pred_region
      %s495 = ssub.s32 %s13, 2
      // Predicated region
      $region57: #{graphcast_forward.20} parent=55 // pred_check
        %p496 = pneg %p194
      $region58: #{graphcast_forward.20} parent=55 // pred_check_branch
        %498 = sbr.rel (%p496) target = $region60
      $region59: #{graphcast_forward.20} parent=55 // pred_region
        %p499 = scmp.lt.s32.totalorder %s19, 1
        %s500 = scalar_select %p499, %s19, 1
        %s501 = smul.addr %s500, 4
        %s502 = scalar_lea.vmem %s7, %s501
      $region60: #{graphcast_forward.20} parent=55 // pred_fallthru
        _
    $region56: #{graphcast_forward.20} parent=5 // pred_fallthru
      _
  $region6: #{graphcast_forward.20} parent=0 // loop_footer
    %s17 = sadd.s32 1, %s13
  $region7: #{graphcast_forward.20} parent=0 // loop_footer_branch
    %12 = sbr.rel target = $region3
  $region8: #{graphcast_forward.20} parent=0 // loop_exit
    _

// kernel: graphcast_forward.21
$region0: #{graphcast_forward.21}
  #allocation0 [shape = 'u32[]', space=smem, size = 0x4, offset = 0x4, fixed_abs, tag = 'smem constant byte address 0x4 - core index']
  #allocation1 [shape = 'u32[144,128]{1,0:T(1,128)}', space=vmem, size = 0x12000, scoped, tag = 'internal scratch']
  %s0 = inlined_call_operand.vmem [shape: f32[96,4], index: 0, kind: input, shape index: {}]
  %s1 = inlined_call_operand.vmem [shape: bf16[4,128], index: 1, kind: input, shape index: {}]
  %s2 = inlined_call_operand.vmem [shape: f32[1,128], index: 2, kind: input, shape index: {}]
  %s3 = inlined_call_operand.vmem [shape: bf16[128,128], index: 3, kind: input, shape index: {}]
  %s4 = inlined_call_operand.vmem [shape: f32[1,128], index: 4, kind: input, shape index: {}]
  %s5 = inlined_call_operand.vmem [shape: f32[1,128], index: 5, kind: input, shape index: {}]
  %s6 = inlined_call_operand.vmem [shape: f32[1,128], index: 6, kind: input, shape index: {}]
  %s7 = inlined_call_operand.vmem [shape: bf16[96,128], index: 7, kind: output, shape index: {}]
  %s8 = sld [smem:[#allocation0]]
  $region61: #{graphcast_forward.21} parent=0
    _
  %s10 = ssub.s32 1, %s8
  %s11 = scalar_select 0, %s10, %s8
  loop: start=0, step=1, limit=4
  $region2: #{graphcast_forward.21} parent=0 // loop_pre_header
    _
  $region3: #{graphcast_forward.21} parent=0 // loop_header
    %s13 = sphi 0, %s17
    %p14 = scmp.ge.s32.totalorder %s13, 4
    %s23 = sphi 0, %s25
    %s26 = sphi 0, %s23
    %s27 = sphi 0, %s26
    %s43 = sphi 0, %s27
    %s47 = sphi 0, %s47
    %s49 = sphi 0, %s47
    %s50 = sphi 0, %s49
    %s64 = sphi 0, %s50
    %s68 = sphi 0, %s68
    %s70 = sphi 0, %s68
    %s71 = sphi 0, %s70
    %s85 = sphi 0, %s71
    %s89 = sphi 0, %s89
    %s91 = sphi 0, %s89
    %s92 = sphi 0, %s91
    %s106 = sphi 0, %s92
    %s110 = sphi 0, %s110
    %s112 = sphi 0, %s110
    %s113 = sphi 0, %s112
    %s127 = sphi 0, %s113
    %s131 = sphi 0, %s131
    %s133 = sphi 0, %s131
    %s134 = sphi 0, %s133
    %s148 = sphi 0, %s134
    %s152 = sphi 0, %s152
    %s154 = sphi 0, %s152
    %s155 = sphi 0, %s154
    %s169 = sphi 0, %s155
    %s175 = sphi 0, %s177
    %s178 = sphi 0, %s175
    %s179 = sphi 0, %s178
    %s195 = sphi 0, %s179
  $region4: #{graphcast_forward.21} parent=0 // loop_header_branch
    %16 = sbr.rel (%p14) target = $region8
  $region5: #{graphcast_forward.21} parent=0 // loop_body
    %s18 = ssub.s32 %s13, 1
    %s19 = ssub.s32 %s13, 2
    %s20 = sadd.s32 %s13, 1
    %s21 = ssub.s32 %s13, %s20
    %p22 = scmp.eq.s32.totalorder %s21, 0
    %s24 = sadd.s32 %s23, 1
    %s25 = scalar_select %p22, %s23, %s24
    %p28 = pneg %p22
    %p29 = scmp.eq.s32.totalorder %s13, 1
    %p30 = por %p28, %p29
    %p31 = scmp.ne.s32.totalorder %s23, %s26
    %p32 = scmp.eq.s32.totalorder %s13, 0
    %p33 = por %p31, %p32
    %p34 = scmp.ne.s32.totalorder %s23, %s26
    %p35 = scmp.eq.s32.totalorder %s18, 1
    %p36 = por %p34, %p35
    %p37 = scmp.ne.s32.totalorder %s26, %s27
    %p38 = scmp.eq.s32.totalorder %s18, 0
    %p39 = por %p37, %p38
    %p40 = scmp.ne.s32.totalorder %s26, %s27
    %p41 = scmp.eq.s32.totalorder %s19, 1
    %p42 = por %p40, %p41
    %p44 = scmp.ne.s32.totalorder %s27, %s43
    %p45 = scmp.eq.s32.totalorder %s19, 0
    %p46 = por %p44, %p45
    %s48 = sadd.s32 %s47, 1
    %p51 = scmp.eq.s32.totalorder %s13, 1
    %p52 = scmp.ne.s32.totalorder %s47, %s49
    %p53 = scmp.eq.s32.totalorder %s13, 0
    %p54 = por %p52, %p53
    %p55 = scmp.ne.s32.totalorder %s47, %s49
    %p56 = scmp.eq.s32.totalorder %s18, 1
    %p57 = por %p55, %p56
    %p58 = scmp.ne.s32.totalorder %s49, %s50
    %p59 = scmp.eq.s32.totalorder %s18, 0
    %p60 = por %p58, %p59
    %p61 = scmp.ne.s32.totalorder %s49, %s50
    %p62 = scmp.eq.s32.totalorder %s19, 1
    %p63 = por %p61, %p62
    %p65 = scmp.ne.s32.totalorder %s50, %s64
    %p66 = scmp.eq.s32.totalorder %s19, 0
    %p67 = por %p65, %p66
    %s69 = sadd.s32 %s68, 1
    %p72 = scmp.eq.s32.totalorder %s13, 1
    %p73 = scmp.ne.s32.totalorder %s68, %s70
    %p74 = scmp.eq.s32.totalorder %s13, 0
    %p75 = por %p73, %p74
    %p76 = scmp.ne.s32.totalorder %s68, %s70
    %p77 = scmp.eq.s32.totalorder %s18, 1
    %p78 = por %p76, %p77
    %p79 = scmp.ne.s32.totalorder %s70, %s71
    %p80 = scmp.eq.s32.totalorder %s18, 0
    %p81 = por %p79, %p80
    %p82 = scmp.ne.s32.totalorder %s70, %s71
    %p83 = scmp.eq.s32.totalorder %s19, 1
    %p84 = por %p82, %p83
    %p86 = scmp.ne.s32.totalorder %s71, %s85
    %p87 = scmp.eq.s32.totalorder %s19, 0
    %p88 = por %p86, %p87
    %s90 = sadd.s32 %s89, 1
    %p93 = scmp.eq.s32.totalorder %s13, 1
    %p94 = scmp.ne.s32.totalorder %s89, %s91
    %p95 = scmp.eq.s32.totalorder %s13, 0
    %p96 = por %p94, %p95
    %p97 = scmp.ne.s32.totalorder %s89, %s91
    %p98 = scmp.eq.s32.totalorder %s18, 1
    %p99 = por %p97, %p98
    %p100 = scmp.ne.s32.totalorder %s91, %s92
    %p101 = scmp.eq.s32.totalorder %s18, 0
    %p102 = por %p100, %p101
    %p103 = scmp.ne.s32.totalorder %s91, %s92
    %p104 = scmp.eq.s32.totalorder %s19, 1
    %p105 = por %p103, %p104
    %p107 = scmp.ne.s32.totalorder %s92, %s106
    %p108 = scmp.eq.s32.totalorder %s19, 0
    %p109 = por %p107, %p108
    %s111 = sadd.s32 %s110, 1
    %p114 = scmp.eq.s32.totalorder %s13, 1
    %p115 = scmp.ne.s32.totalorder %s110, %s112
    %p116 = scmp.eq.s32.totalorder %s13, 0
    %p117 = por %p115, %p116
    %p118 = scmp.ne.s32.totalorder %s110, %s112
    %p119 = scmp.eq.s32.totalorder %s18, 1
    %p120 = por %p118, %p119
    %p121 = scmp.ne.s32.totalorder %s112, %s113
    %p122 = scmp.eq.s32.totalorder %s18, 0
    %p123 = por %p121, %p122
    %p124 = scmp.ne.s32.totalorder %s112, %s113
    %p125 = scmp.eq.s32.totalorder %s19, 1
    %p126 = por %p124, %p125
    %p128 = scmp.ne.s32.totalorder %s113, %s127
    %p129 = scmp.eq.s32.totalorder %s19, 0
    %p130 = por %p128, %p129
    %s132 = sadd.s32 %s131, 1
    %p135 = scmp.eq.s32.totalorder %s13, 1
    %p136 = scmp.ne.s32.totalorder %s131, %s133
    %p137 = scmp.eq.s32.totalorder %s13, 0
    %p138 = por %p136, %p137
    %p139 = scmp.ne.s32.totalorder %s131, %s133
    %p140 = scmp.eq.s32.totalorder %s18, 1
    %p141 = por %p139, %p140
    %p142 = scmp.ne.s32.totalorder %s133, %s134
    %p143 = scmp.eq.s32.totalorder %s18, 0
    %p144 = por %p142, %p143
    %p145 = scmp.ne.s32.totalorder %s133, %s134
    %p146 = scmp.eq.s32.totalorder %s19, 1
    %p147 = por %p145, %p146
    %p149 = scmp.ne.s32.totalorder %s134, %s148
    %p150 = scmp.eq.s32.totalorder %s19, 0
    %p151 = por %p149, %p150
    %s153 = sadd.s32 %s152, 1
    %p156 = scmp.eq.s32.totalorder %s13, 1
    %p157 = scmp.ne.s32.totalorder %s152, %s154
    %p158 = scmp.eq.s32.totalorder %s13, 0
    %p159 = por %p157, %p158
    %p160 = scmp.ne.s32.totalorder %s152, %s154
    %p161 = scmp.eq.s32.totalorder %s18, 1
    %p162 = por %p160, %p161
    %p163 = scmp.ne.s32.totalorder %s154, %s155
    %p164 = scmp.eq.s32.totalorder %s18, 0
    %p165 = por %p163, %p164
    %p166 = scmp.ne.s32.totalorder %s154, %s155
    %p167 = scmp.eq.s32.totalorder %s19, 1
    %p168 = por %p166, %p167
    %p170 = scmp.ne.s32.totalorder %s155, %s169
    %p171 = scmp.eq.s32.totalorder %s19, 0
    %p172 = por %p170, %p171
    %s173 = ssub.s32 %s13, %s20
    %p174 = scmp.eq.s32.totalorder %s173, 0
    %s176 = sadd.s32 %s175, 1
    %s177 = scalar_select %p174, %s175, %s176
    %p180 = pneg %p174
    %p181 = scmp.eq.s32.totalorder %s13, 1
    %p182 = por %p180, %p181
    %p183 = scmp.ne.s32.totalorder %s175, %s178
    %p184 = scmp.eq.s32.totalorder %s13, 0
    %p185 = por %p183, %p184
    %p186 = scmp.ne.s32.totalorder %s175, %s178
    %p187 = scmp.eq.s32.totalorder %s18, 1
    %p188 = por %p186, %p187
    %p189 = scmp.ne.s32.totalorder %s178, %s179
    %p190 = scmp.eq.s32.totalorder %s18, 0
    %p191 = por %p189, %p190
    %p192 = scmp.ne.s32.totalorder %s178, %s179
    %p193 = scmp.eq.s32.totalorder %s19, 1
    %p194 = por %p192, %p193
    %p196 = scmp.ne.s32.totalorder %s179, %s195
    %p197 = scmp.eq.s32.totalorder %s19, 0
    %p198 = por %p196, %p197
    %p199 = scmp.le.s32.totalorder 1, %s13
    %p200 = scmp.lt.s32.totalorder %s13, 3
    %p201 = pnand %p199, %p200
    %p202 = pneg %p201
    // Predicated region
    $region9: #{graphcast_forward.21} parent=5 // pred_check
      _
    $region10: #{graphcast_forward.21} parent=5 // pred_check_branch
      %204 = sbr.rel (%p201) target = $region12
    $region11: #{graphcast_forward.21} parent=5 // pred_region
      %s205 = ssub.s32 %s13, 1
      // Predicated region
      $region13: #{graphcast_forward.21} parent=11 // pred_check
        %p206 = pneg %p60
      $region14: #{graphcast_forward.21} parent=11 // pred_check_branch
        %208 = sbr.rel (%p206) target = $region16
      $region15: #{graphcast_forward.21} parent=11 // pred_region
        _
      $region16: #{graphcast_forward.21} parent=11 // pred_fallthru
        _
      // Predicated region
      $region17: #{graphcast_forward.21} parent=11 // pred_check
        %p209 = pneg %p81
      $region18: #{graphcast_forward.21} parent=11 // pred_check_branch
        %211 = sbr.rel (%p209) target = $region20
      $region19: #{graphcast_forward.21} parent=11 // pred_region
        _
      $region20: #{graphcast_forward.21} parent=11 // pred_fallthru
        _
      // Predicated region
      $region21: #{graphcast_forward.21} parent=11 // pred_check
        %p212 = pneg %p102
      $region22: #{graphcast_forward.21} parent=11 // pred_check_branch
        %214 = sbr.rel (%p212) target = $region24
      $region23: #{graphcast_forward.21} parent=11 // pred_region
        _
      $region24: #{graphcast_forward.21} parent=11 // pred_fallthru
        _
      // Predicated region
      $region25: #{graphcast_forward.21} parent=11 // pred_check
        %p215 = pneg %p123
      $region26: #{graphcast_forward.21} parent=11 // pred_check_branch
        %217 = sbr.rel (%p215) target = $region28
      $region27: #{graphcast_forward.21} parent=11 // pred_region
        _
      $region28: #{graphcast_forward.21} parent=11 // pred_fallthru
        _
      // Predicated region
      $region29: #{graphcast_forward.21} parent=11 // pred_check
        %p218 = pneg %p144
      $region30: #{graphcast_forward.21} parent=11 // pred_check_branch
        %220 = sbr.rel (%p218) target = $region32
      $region31: #{graphcast_forward.21} parent=11 // pred_region
        _
      $region32: #{graphcast_forward.21} parent=11 // pred_fallthru
        _
      // Predicated region
      $region33: #{graphcast_forward.21} parent=11 // pred_check
        %p221 = pneg %p165
      $region34: #{graphcast_forward.21} parent=11 // pred_check_branch
        %223 = sbr.rel (%p221) target = $region36
      $region35: #{graphcast_forward.21} parent=11 // pred_region
        _
      $region36: #{graphcast_forward.21} parent=11 // pred_fallthru
        _
    $region12: #{graphcast_forward.21} parent=5 // pred_fallthru
      _
    %p224 = scmp.lt.s32.totalorder %s13, 2
    // Predicated region
    $region37: #{graphcast_forward.21} parent=5 // pred_check
      %p225 = pneg %p224
    $region38: #{graphcast_forward.21} parent=5 // pred_check_branch
      %227 = sbr.rel (%p225) target = $region40
    $region39: #{graphcast_forward.21} parent=5 // pred_region
      // Predicated region
      $region41: #{graphcast_forward.21} parent=39 // pred_check
        %p228 = pneg %p33
      $region42: #{graphcast_forward.21} parent=39 // pred_check_branch
        %230 = sbr.rel (%p228) target = $region44
      $region43: #{graphcast_forward.21} parent=39 // pred_region
        %s231 = smul.u32 6, %s13
        %p232 = scmp.lt.s32.totalorder %s231, 11
        %s233 = scalar_select %p232, %s231, 11
        %s234 = smul.addr %s233, 8
        %s235 = scalar_lea.vmem %s0, %s234
        %s236 = smul.u32 6, %s13
      $region44: #{graphcast_forward.21} parent=39 // pred_fallthru
        _
    $region40: #{graphcast_forward.21} parent=5 // pred_fallthru
      _
    %p237 = scmp.le.s32.totalorder 1, %s13
    %p238 = scmp.lt.s32.totalorder %s13, 3
    %p239 = pnand %p237, %p238
    %p240 = pneg %p239
    // Predicated region
    $region45: #{graphcast_forward.21} parent=5 // pred_check
      _
    $region46: #{graphcast_forward.21} parent=5 // pred_check_branch
      %242 = sbr.rel (%p239) target = $region48
    $region47: #{graphcast_forward.21} parent=5 // pred_region
      %s243 = ssub.s32 %s13, 1
      %s244 = smul.u32 6, %s18
      %p245 = scmp.lt.s32.totalorder %s244, 11
      %s246 = scalar_select %p245, %s244, 11
      %s247 = smul.addr %s246, 8
      %s248 = scalar_lea.vmem %s0, %s247
      %p249 = pneg %p39
      %p250 = pneg %p36
      %p251 = pneg %p60
      %p252 = pneg %p57
      %p253 = pneg %p81
      %p254 = pneg %p78
      %p255 = pneg %p102
      %p256 = pneg %p99
      %p257 = pneg %p123
      %p258 = pneg %p120
      %p259 = pneg %p144
      %p260 = pneg %p141
      %p261 = pneg %p165
      %p262 = pneg %p162
      %p263 = pneg %p191
      %p264 = pneg %p188
      %s265 = smul.u32 6, %s18
      %p266 = scmp.lt.s32.totalorder %s265, 11
      %s267 = scalar_select %p266, %s265, 11
      %s268 = smul.addr %s267, 4
      %s269 = scalar_lea.vmem %s7, %s268
      %s270 = smul.u32 6, %s18
      %p271 = scmp.lt.s32.totalorder %s270, 11
      %s272 = scalar_select %p271, %s270, 11
      %s273 = smul.addr %s272, 8
      %s274 = scalar_lea.vmem %s0, %s273
      %s275 = smul.u32 6, %s18
      %s276 = smul.u32 6, %s18
      %p277 = scmp.lt.s32.totalorder %s276, 11
      %s278 = scalar_select %p277, %s276, 11
      %s279 = smul.addr %s278, 4
      %s280 = scalar_lea.vmem %s7, %s279
      %s281 = smul.u32 6, %s18
      %v283 = vld [vmem:[%s274] sm:$0xff]
      %v284 = vld [vmem:[%s274 + $0x8] sm:$0xff]
      %v285 = vld [vmem:[%s274 + $0x10] sm:$0xff]
      %v286 = vld [vmem:[%s274 + $0x18] sm:$0xff]
      %v287 = vld [vmem:[%s274 + $0x20] sm:$0xff]
      %v288 = vld [vmem:[%s274 + $0x28] sm:$0xff]
      %v289 = vpack.c.bf16 %v284, %v283
      %v290 = vpack.c.bf16 %v286, %v285
      %v291 = vpack.c.bf16 %v288, %v287
      %v292 = vld [vmem:[%s1] sm:$0x3]
      %v293 = vld [vmem:[%s2] sm:$0x1]
      %v295 = vlaneseq
      %v296 = vshrl.u32 %v295, 7
      %v297 = vsub.s32 0, %v296
      %v298 = vrot.slane %v293, %v297
      %vm300 = vcmask 31744
      %v302 = vsel %vm300, %v289, 0
      %v305 = vsel %vm300, %v290, 0
      %v308 = vsel %vm300, %v291, 0
      %vm310 = vcmask 1041408
      %v312 = vsel %vm310, %v292, 0
      %314 = vmatprep.subr.bf16.mxu0 0
      %315 = vmatpush1.bf16.msra.mxu0 0
      %316 = vmatprep.subr.bf16.mxu0 0
      %317 = vmatpush1.bf16.msra.mxu0 0
      %318 = vmatprep.subr.bf16.mxu0 0
      %319 = vmatpush1.bf16.msra.mxu0 0
      %320 = vmatprep.subr.bf16.mxu0 0
      %321 = vmatpush1.bf16.msra.mxu0 0
      %322 = vmatprep.subr.bf16.mxu0 0
      %323 = vmatpush1.bf16.msra.mxu0 0
      %324 = vmatprep.subr.bf16.mxu0 0
      %325 = vmatpush1.bf16.msra.mxu0 0
      %326 = vmatprep.subr.bf16.mxu0 0
      %327 = vmatpush1.bf16.msra.mxu0 0
      %328 = vmatprep.subr.bf16.mxu0 0
      %329 = vmatpush1.bf16.msra.mxu0 %v312
      %330 = vmatprep.subr.bf16.mxu0 0
      %331 = vmatpush2.bf16.msra.mxu0 0
      %332 = vmatprep.subr.bf16.mxu0 0
      %333 = vmatpush2.bf16.msra.mxu0 0
      %334 = vmatprep.subr.bf16.mxu0 0
      %335 = vmatpush2.bf16.msra.mxu0 0
      %336 = vmatprep.subr.bf16.mxu0 0
      %337 = vmatpush2.bf16.msra.mxu0 0
      %338 = vmatprep.subr.bf16.mxu0 0
      %339 = vmatpush2.bf16.msra.mxu0 0
      %340 = vmatprep.subr.bf16.mxu0 0
      %341 = vmatpush2.bf16.msra.mxu0 0
      %342 = vmatprep.subr.bf16.mxu0 0
      %343 = vmatpush2.bf16.msra.mxu0 0
      %344 = vmatprep.subr.bf16.mxu0 0
      %345 = vmatpush2.bf16.msra.mxu0 0
      %346 = vmatprep.mubr.bf16.mxu0 0
      %347 = vmatmul.mubr.bf16.gmra.mxu0 %v302
      %v348 = vpop.f32.mrf.mxu0
      %v349 = vadd.f32 %v298, %v348
      %v350 = vpop.f32.mrf.mxu0
      %v351 = vpop.f32.mrf.mxu0
      %v352 = vadd.f32 %v298, %v351
      %v353 = vpop.f32.mrf.mxu0
      %354 = vmatprep.mubr.bf16.mxu0 0
      %355 = vmatmul.mubr.bf16.gmra.mxu0 %v305
      %v356 = vpop.f32.mrf.mxu0
      %v357 = vadd.f32 %v298, %v356
      %v358 = vpop.f32.mrf.mxu0
      %v359 = vpop.f32.mrf.mxu0
      %v360 = vadd.f32 %v298, %v359
      %v361 = vpop.f32.mrf.mxu0
      %362 = vmatprep.mubr.bf16.mxu0 0
      %363 = vmatmul.mubr.bf16.gmra.mxu0 %v308
      %v364 = vpop.f32.mrf.mxu0
      %v365 = vadd.f32 %v298, %v364
      %v366 = vpop.f32.mrf.mxu0
      %v367 = vpop.f32.mrf.mxu0
      %v368 = vadd.f32 %v298, %v367
      %v369 = vpop.f32.mrf.mxu0
      %370 = vdwg.mxu0
      %v371 = vxor.u32 %v349, 2147483648
      %v372 = vxor.u32 %v352, 2147483648
      %v373 = vxor.u32 %v357, 2147483648
      %v374 = vxor.u32 %v360, 2147483648
      %v375 = vxor.u32 %v365, 2147483648
      %v376 = vxor.u32 %v368, 2147483648
      %v377 = vmul.f32 %v371, 1.442695
      %v378 = vpow.pop %v377
      %v379 = vmul.f32 %v372, 1.442695
      %v380 = vpow.pop %v379
      %v381 = vmul.f32 %v373, 1.442695
      %v382 = vpow.pop %v381
      %v383 = vmul.f32 %v374, 1.442695
      %v384 = vpow.pop %v383
      %v385 = vmul.f32 %v375, 1.442695
      %v386 = vpow.pop %v385
      %v387 = vmul.f32 %v376, 1.442695
      %v388 = vpow.pop %v387
      %v389 = vadd.f32 %v378, 1.0
      %v390 = vadd.f32 %v380, 1.0
      %v391 = vadd.f32 %v382, 1.0
      %v392 = vadd.f32 %v384, 1.0
      %v393 = vadd.f32 %v386, 1.0
      %v394 = vadd.f32 %v388, 1.0
      %v395 = vrcp.pop %v389
      %v396 = vmul.f32 1.0, %v395
      %v397 = vrcp.pop %v390
      %v398 = vmul.f32 1.0, %v397
      %v399 = vrcp.pop %v391
      %v400 = vmul.f32 1.0, %v399
      %v401 = vrcp.pop %v392
      %v402 = vmul.f32 1.0, %v401
      %v403 = vrcp.pop %v393
      %v404 = vmul.f32 1.0, %v403
      %v405 = vrcp.pop %v394
      %v406 = vmul.f32 1.0, %v405
      %v407 = vmul.f32 %v349, %v396
      %v408 = vmul.f32 %v352, %v398
      %v409 = vmul.f32 %v357, %v400
      %v410 = vmul.f32 %v360, %v402
      %v411 = vmul.f32 %v365, %v404
      %v412 = vmul.f32 %v368, %v406
      %v413 = vpack.c.bf16 %v408, %v407
      %v414 = vpack.c.bf16 %v410, %v409
      %v415 = vpack.c.bf16 %v412, %v411
      %v416 = vld [vmem:[%s3] sm:$0xf]
      %v417 = vld [vmem:[%s3 + $0x4] sm:$0xf]
      %v418 = vld [vmem:[%s3 + $0x8] sm:$0xf]
      %v419 = vld [vmem:[%s3 + $0xc] sm:$0xf]
      %v420 = vld [vmem:[%s3 + $0x10] sm:$0xf]
      %v421 = vld [vmem:[%s3 + $0x14] sm:$0xf]
      %v422 = vld [vmem:[%s3 + $0x18] sm:$0xf]
      %v423 = vld [vmem:[%s3 + $0x1c] sm:$0xf]
      %v424 = vld [vmem:[%s3 + $0x20] sm:$0xf]
      %v425 = vld [vmem:[%s3 + $0x24] sm:$0xf]
      %v426 = vld [vmem:[%s3 + $0x28] sm:$0xf]
      %v427 = vld [vmem:[%s3 + $0x2c] sm:$0xf]
      %v428 = vld [vmem:[%s3 + $0x30] sm:$0xf]
      %v429 = vld [vmem:[%s3 + $0x34] sm:$0xf]
      %v430 = vld [vmem:[%s3 + $0x38] sm:$0xf]
      %v431 = vld [vmem:[%s3 + $0x3c] sm:$0xf]
      %v432 = vld [vmem:[%s4] sm:$0x1]
      %v434 = vlaneseq
      %v435 = vshrl.u32 %v434, 7
      %v436 = vsub.s32 0, %v435
      %v437 = vrot.slane %v432, %v436
      %v455 = vunpack.c.l.b16 %v416
      %v456 = vunpack.c.l.b16 %v417
      %v457 = vunpack.c.l.b16 %v418
      %v458 = vunpack.c.l.b16 %v419
      %v459 = vunpack.c.l.b16 %v420
      %v460 = vunpack.c.l.b16 %v421
      %v461 = vunpack.c.l.b16 %v422
      %v462 = vunpack.c.l.b16 %v423
      %v463 = vunpack.c.l.b16 %v424
      %v464 = vunpack.c.l.b16 %v425
      %v465 = vunpack.c.l.b16 %v426
      %v466 = vunpack.c.l.b16 %v427
      %v467 = vunpack.c.l.b16 %v428
      %v468 = vunpack.c.l.b16 %v429
      %v469 = vunpack.c.l.b16 %v430
      %v470 = vunpack.c.l.b16 %v431
      %v471 = vpack.c.b16 %v456, %v455
      %v472 = vpack.c.b16 %v458, %v457
      %v473 = vpack.c.b16 %v460, %v459
      %v474 = vpack.c.b16 %v462, %v461
      %v475 = vpack.c.b16 %v464, %v463
      %v476 = vpack.c.b16 %v466, %v465
      %v477 = vpack.c.b16 %v468, %v467
      %v478 = vpack.c.b16 %v470, %v469
      %487 = vmatprep.subr.bf16.mxu0 0
      %488 = vmatpush1.bf16.msra.mxu0 %v478
      %489 = vmatprep.subr.bf16.mxu0 0
      %490 = vmatpush1.bf16.msra.mxu0 %v477
      %491 = vmatprep.subr.bf16.mxu0 0
      %492 = vmatpush1.bf16.msra.mxu0 %v476
      %493 = vmatprep.subr.bf16.mxu0 0
      %494 = vmatpush1.bf16.msra.mxu0 %v475
      %495 = vmatprep.subr.bf16.mxu0 0
      %496 = vmatpush1.bf16.msra.mxu0 %v474
      %497 = vmatprep.subr.bf16.mxu0 0
      %498 = vmatpush1.bf16.msra.mxu0 %v473
      %499 = vmatprep.subr.bf16.mxu0 0
      %500 = vmatpush1.bf16.msra.mxu0 %v472
      %501 = vmatprep.subr.bf16.mxu0 0
      %502 = vmatpush1.bf16.msra.mxu0 %v471
      %503 = vmatprep.subr.bf16.mxu0 0
      %504 = vmatpush2.bf16.msra.mxu0 0
      %505 = vmatprep.subr.bf16.mxu0 0
      %506 = vmatpush2.bf16.msra.mxu0 0
      %507 = vmatprep.subr.bf16.mxu0 0
      %508 = vmatpush2.bf16.msra.mxu0 0
      %509 = vmatprep.subr.bf16.mxu0 0
      %510 = vmatpush2.bf16.msra.mxu0 0
      %511 = vmatprep.subr.bf16.mxu0 0
      %512 = vmatpush2.bf16.msra.mxu0 0
      %513 = vmatprep.subr.bf16.mxu0 0
      %514 = vmatpush2.bf16.msra.mxu0 0
      %515 = vmatprep.subr.bf16.mxu0 0
      %516 = vmatpush2.bf16.msra.mxu0 0
      %517 = vmatprep.subr.bf16.mxu0 0
      %518 = vmatpush2.bf16.msra.mxu0 0
      %519 = vmatprep.mubr.bf16.mxu0 0
      %520 = vmatmul.mubr.bf16.gmra.mxu0 %v413
      %v521 = vpop.f32.mrf.mxu0
      %v522 = vadd.f32 %v437, %v521
      %v523 = vpop.f32.mrf.mxu0
      %v524 = vpop.f32.mrf.mxu0
      %v525 = vadd.f32 %v437, %v524
      %v526 = vpop.f32.mrf.mxu0
      %527 = vmatprep.mubr.bf16.mxu0 0
      %528 = vmatmul.mubr.bf16.gmra.mxu0 %v414
      %v529 = vpop.f32.mrf.mxu0
      %v530 = vadd.f32 %v437, %v529
      %v531 = vpop.f32.mrf.mxu0
      %v532 = vpop.f32.mrf.mxu0
      %v533 = vadd.f32 %v437, %v532
      %v534 = vpop.f32.mrf.mxu0
      %535 = vmatprep.mubr.bf16.mxu0 0
      %536 = vmatmul.mubr.bf16.gmra.mxu0 %v415
      %v537 = vpop.f32.mrf.mxu0
      %v538 = vadd.f32 %v437, %v537
      %v539 = vpop.f32.mrf.mxu0
      %v540 = vpop.f32.mrf.mxu0
      %v541 = vadd.f32 %v437, %v540
      %v542 = vpop.f32.mrf.mxu0
      %543 = vdwg.mxu0
      %544 = vadd.xlane.f32.xlu0 %v522
      %v545 = vpop.xlane.xlu0 %544
      %546 = vadd.xlane.f32.xlu0 %v525
      %v547 = vpop.xlane.xlu0 %546
      %548 = vadd.xlane.f32.xlu0 %v530
      %v549 = vpop.xlane.xlu0 %548
      %550 = vadd.xlane.f32.xlu0 %v533
      %v551 = vpop.xlane.xlu0 %550
      %552 = vadd.xlane.f32.xlu0 %v538
      %v553 = vpop.xlane.xlu0 %552
      %554 = vadd.xlane.f32.xlu0 %v541
      %v555 = vpop.xlane.xlu0 %554
      %v556 = vmul.f32 %v545, 0.0078125
      %v557 = vmul.f32 %v547, 0.0078125
      %v558 = vmul.f32 %v549, 0.0078125
      %v559 = vmul.f32 %v551, 0.0078125
      %v560 = vmul.f32 %v553, 0.0078125
      %v561 = vmul.f32 %v555, 0.0078125
      %v562 = vsub.f32 %v522, %v556
      %v563 = vsub.f32 %v525, %v557
      %v564 = vsub.f32 %v530, %v558
      %v565 = vsub.f32 %v533, %v559
      %v566 = vsub.f32 %v538, %v560
      %v567 = vsub.f32 %v541, %v561
      %v568 = vmul.f32 %v562, %v562
      %v569 = vmul.f32 %v563, %v563
      %v570 = vmul.f32 %v564, %v564
      %v571 = vmul.f32 %v565, %v565
      %v572 = vmul.f32 %v566, %v566
      %v573 = vmul.f32 %v567, %v567
      %574 = vadd.xlane.f32.xlu0 %v568
      %v575 = vpop.xlane.xlu0 %574
      %576 = vadd.xlane.f32.xlu0 %v569
      %v577 = vpop.xlane.xlu0 %576
      %578 = vadd.xlane.f32.xlu0 %v570
      %v579 = vpop.xlane.xlu0 %578
      %580 = vadd.xlane.f32.xlu0 %v571
      %v581 = vpop.xlane.xlu0 %580
      %582 = vadd.xlane.f32.xlu0 %v572
      %v583 = vpop.xlane.xlu0 %582
      %584 = vadd.xlane.f32.xlu0 %v573
      %v585 = vpop.xlane.xlu0 %584
      %v586 = vmul.f32 %v575, 0.0078125
      %v587 = vmul.f32 %v577, 0.0078125
      %v588 = vmul.f32 %v579, 0.0078125
      %v589 = vmul.f32 %v581, 0.0078125
      %v590 = vmul.f32 %v583, 0.0078125
      %v591 = vmul.f32 %v585, 0.0078125
      %v592 = vadd.f32 %v586, 1e-05
      %v593 = vadd.f32 %v587, 1e-05
      %v594 = vadd.f32 %v588, 1e-05
      %v595 = vadd.f32 %v589, 1e-05
      %v596 = vadd.f32 %v590, 1e-05
      %v597 = vadd.f32 %v591, 1e-05
      %v598 = vrsqrt.pop %v592
      %v599 = vrsqrt.pop %v593
      %v600 = vrsqrt.pop %v594
      %v601 = vrsqrt.pop %v595
      %v602 = vrsqrt.pop %v596
      %v603 = vrsqrt.pop %v597
      %v604 = vmul.f32 %v562, %v598
      %v605 = vmul.f32 %v563, %v599
      %v606 = vmul.f32 %v564, %v600
      %v607 = vmul.f32 %v565, %v601
      %v608 = vmul.f32 %v566, %v602
      %v609 = vmul.f32 %v567, %v603
      %v610 = vld [vmem:[%s5] sm:$0x1]
      %v612 = vlaneseq
      %v613 = vshrl.u32 %v612, 7
      %v614 = vsub.s32 0, %v613
      %v615 = vrot.slane %v610, %v614
      %v617 = vmul.f32 %v604, %v615
      %v618 = vmul.f32 %v605, %v615
      %v619 = vmul.f32 %v606, %v615
      %v620 = vmul.f32 %v607, %v615
      %v621 = vmul.f32 %v608, %v615
      %v622 = vmul.f32 %v609, %v615
      %v623 = vld [vmem:[%s6] sm:$0x1]
      %v625 = vlaneseq
      %v626 = vshrl.u32 %v625, 7
      %v627 = vsub.s32 0, %v626
      %v628 = vrot.slane %v623, %v627
      %v630 = vadd.f32 %v617, %v628
      %v631 = vadd.f32 %v618, %v628
      %v632 = vadd.f32 %v619, %v628
      %v633 = vadd.f32 %v620, %v628
      %v634 = vadd.f32 %v621, %v628
      %v635 = vadd.f32 %v622, %v628
      %v636 = vpack.c.bf16 %v631, %v630
      %v637 = vpack.c.bf16 %v633, %v632
      %v638 = vpack.c.bf16 %v635, %v634
      %v642 = vunpack.c.l.b16 %v636
      %v643 = vunpack.c.h.b16 %v636
      %v644 = vunpack.c.l.b16 %v637
      %v645 = vunpack.c.h.b16 %v637
      %v646 = vunpack.c.l.b16 %v638
      %v647 = vunpack.c.h.b16 %v638
      %v648 = vpack.c.b16 %v642, %v642
      %v649 = vpack.c.b16 %v643, %v643
      %v650 = vpack.c.b16 %v644, %v644
      %v651 = vpack.c.b16 %v645, %v645
      %v652 = vpack.c.b16 %v646, %v646
      %v653 = vpack.c.b16 %v647, %v647
      %660 = vst [vmem:[%s280] sm:$0xf] %v648
      %661 = vst [vmem:[%s280 + $0x4] sm:$0xf] %v649
      %662 = vst [vmem:[%s280 + $0x8] sm:$0xf] %v650
      %663 = vst [vmem:[%s280 + $0xc] sm:$0xf] %v651
      %664 = vst [vmem:[%s280 + $0x10] sm:$0xf] %v652
      %665 = vst [vmem:[%s280 + $0x14] sm:$0xf] %v653
      %s666 = smul.u32 6, %s18
      %p667 = scmp.lt.s32.totalorder %s666, 11
      %s668 = scalar_select %p667, %s666, 11
      %s669 = smul.addr %s668, 4
      %s670 = scalar_lea.vmem %s7, %s669
      // Predicated region
      $region49: #{graphcast_forward.21} parent=47 // pred_check
        %p671 = pneg %p188
      $region50: #{graphcast_forward.21} parent=47 // pred_check_branch
        %673 = sbr.rel (%p671) target = $region52
      $region51: #{graphcast_forward.21} parent=47 // pred_region
        %s674 = smul.u32 6, %s18
      $region52: #{graphcast_forward.21} parent=47 // pred_fallthru
        _
    $region48: #{graphcast_forward.21} parent=5 // pred_fallthru
      _
    %p675 = scmp.le.s32.totalorder 2, %s13
    // Predicated region
    $region53: #{graphcast_forward.21} parent=5 // pred_check
      %p676 = pneg %p675
    $region54: #{graphcast_forward.21} parent=5 // pred_check_branch
      %678 = sbr.rel (%p676) target = $region56
    $region55: #{graphcast_forward.21} parent=5 // pred_region
      %s679 = ssub.s32 %s13, 2
      // Predicated region
      $region57: #{graphcast_forward.21} parent=55 // pred_check
        %p680 = pneg %p194
      $region58: #{graphcast_forward.21} parent=55 // pred_check_branch
        %682 = sbr.rel (%p680) target = $region60
      $region59: #{graphcast_forward.21} parent=55 // pred_region
        %s683 = smul.u32 6, %s19
        %p684 = scmp.lt.s32.totalorder %s683, 11
        %s685 = scalar_select %p684, %s683, 11
        %s686 = smul.addr %s685, 4
        %s687 = scalar_lea.vmem %s7, %s686
      $region60: #{graphcast_forward.21} parent=55 // pred_fallthru
        _
    $region56: #{graphcast_forward.21} parent=5 // pred_fallthru
      _
  $region6: #{graphcast_forward.21} parent=0 // loop_footer
    %s17 = sadd.s32 1, %s13
  $region7: #{graphcast_forward.21} parent=0 // loop_footer_branch
    %12 = sbr.rel target = $region3
  $region8: #{graphcast_forward.21} parent=0 // loop_exit
    _

// kernel: graphcast_forward.23
$region0: #{graphcast_forward.23}
  #allocation0 [shape = 'u32[]', space=smem, size = 0x4, offset = 0x4, fixed_abs, tag = 'smem constant byte address 0x4 - core index']
  #allocation1 [shape = 'u32[144,128]{1,0:T(1,128)}', space=vmem, size = 0x12000, scoped, tag = 'internal scratch']
  %s0 = inlined_call_operand.vmem [shape: bf16[96,128], index: 0, kind: input, shape index: {}]
  %s1 = inlined_call_operand.vmem [shape: bf16[96,128], index: 1, kind: input, shape index: {}]
  %s2 = inlined_call_operand.vmem [shape: bf16[96,128], index: 2, kind: input, shape index: {}]
  %s3 = inlined_call_operand.vmem [shape: bf16[128,128], index: 3, kind: input, shape index: {}]
  %s4 = inlined_call_operand.vmem [shape: bf16[128,128], index: 4, kind: input, shape index: {}]
  %s5 = inlined_call_operand.vmem [shape: bf16[128,128], index: 5, kind: input, shape index: {}]
  %s6 = inlined_call_operand.vmem [shape: f32[1,128], index: 6, kind: input, shape index: {}]
  %s7 = inlined_call_operand.vmem [shape: bf16[128,128], index: 7, kind: input, shape index: {}]
  %s8 = inlined_call_operand.vmem [shape: f32[1,128], index: 8, kind: input, shape index: {}]
  %s9 = inlined_call_operand.vmem [shape: f32[1,128], index: 9, kind: input, shape index: {}]
  %s10 = inlined_call_operand.vmem [shape: f32[1,128], index: 10, kind: input, shape index: {}]
  %s11 = inlined_call_operand.vmem [shape: bf16[96,128], index: 11, kind: output, shape index: {}]
  %s12 = sld [smem:[#allocation0]]
  $region77: #{graphcast_forward.23} parent=0
    _
  %s14 = ssub.s32 1, %s12
  %s15 = scalar_select 0, %s14, %s12
  loop: start=0, step=1, limit=4
  $region2: #{graphcast_forward.23} parent=0 // loop_pre_header
    _
  $region3: #{graphcast_forward.23} parent=0 // loop_header
    %s17 = sphi 0, %s21
    %p18 = scmp.ge.s32.totalorder %s17, 4
    %s27 = sphi 0, %s29
    %s30 = sphi 0, %s27
    %s31 = sphi 0, %s30
    %s47 = sphi 0, %s31
    %s53 = sphi 0, %s55
    %s56 = sphi 0, %s53
    %s57 = sphi 0, %s56
    %s73 = sphi 0, %s57
    %s79 = sphi 0, %s81
    %s82 = sphi 0, %s79
    %s83 = sphi 0, %s82
    %s99 = sphi 0, %s83
    %s103 = sphi 0, %s103
    %s105 = sphi 0, %s103
    %s106 = sphi 0, %s105
    %s120 = sphi 0, %s106
    %s124 = sphi 0, %s124
    %s126 = sphi 0, %s124
    %s127 = sphi 0, %s126
    %s141 = sphi 0, %s127
    %s145 = sphi 0, %s145
    %s147 = sphi 0, %s145
    %s148 = sphi 0, %s147
    %s162 = sphi 0, %s148
    %s166 = sphi 0, %s166
    %s168 = sphi 0, %s166
    %s169 = sphi 0, %s168
    %s183 = sphi 0, %s169
    %s187 = sphi 0, %s187
    %s189 = sphi 0, %s187
    %s190 = sphi 0, %s189
    %s204 = sphi 0, %s190
    %s208 = sphi 0, %s208
    %s210 = sphi 0, %s208
    %s211 = sphi 0, %s210
    %s225 = sphi 0, %s211
    %s229 = sphi 0, %s229
    %s231 = sphi 0, %s229
    %s232 = sphi 0, %s231
    %s246 = sphi 0, %s232
    %s250 = sphi 0, %s250
    %s252 = sphi 0, %s250
    %s253 = sphi 0, %s252
    %s267 = sphi 0, %s253
    %s273 = sphi 0, %s275
    %s276 = sphi 0, %s273
    %s277 = sphi 0, %s276
    %s293 = sphi 0, %s277
  $region4: #{graphcast_forward.23} parent=0 // loop_header_branch
    %20 = sbr.rel (%p18) target = $region8
  $region5: #{graphcast_forward.23} parent=0 // loop_body
    %s22 = ssub.s32 %s17, 1
    %s23 = ssub.s32 %s17, 2
    %s24 = sadd.s32 %s17, 1
    %s25 = ssub.s32 %s17, %s24
    %p26 = scmp.eq.s32.totalorder %s25, 0
    %s28 = sadd.s32 %s27, 1
    %s29 = scalar_select %p26, %s27, %s28
    %p32 = pneg %p26
    %p33 = scmp.eq.s32.totalorder %s17, 1
    %p34 = por %p32, %p33
    %p35 = scmp.ne.s32.totalorder %s27, %s30
    %p36 = scmp.eq.s32.totalorder %s17, 0
    %p37 = por %p35, %p36
    %p38 = scmp.ne.s32.totalorder %s27, %s30
    %p39 = scmp.eq.s32.totalorder %s22, 1
    %p40 = por %p38, %p39
    %p41 = scmp.ne.s32.totalorder %s30, %s31
    %p42 = scmp.eq.s32.totalorder %s22, 0
    %p43 = por %p41, %p42
    %p44 = scmp.ne.s32.totalorder %s30, %s31
    %p45 = scmp.eq.s32.totalorder %s23, 1
    %p46 = por %p44, %p45
    %p48 = scmp.ne.s32.totalorder %s31, %s47
    %p49 = scmp.eq.s32.totalorder %s23, 0
    %p50 = por %p48, %p49
    %s51 = ssub.s32 %s17, %s24
    %p52 = scmp.eq.s32.totalorder %s51, 0
    %s54 = sadd.s32 %s53, 1
    %s55 = scalar_select %p52, %s53, %s54
    %p58 = pneg %p52
    %p59 = scmp.eq.s32.totalorder %s17, 1
    %p60 = por %p58, %p59
    %p61 = scmp.ne.s32.totalorder %s53, %s56
    %p62 = scmp.eq.s32.totalorder %s17, 0
    %p63 = por %p61, %p62
    %p64 = scmp.ne.s32.totalorder %s53, %s56
    %p65 = scmp.eq.s32.totalorder %s22, 1
    %p66 = por %p64, %p65
    %p67 = scmp.ne.s32.totalorder %s56, %s57
    %p68 = scmp.eq.s32.totalorder %s22, 0
    %p69 = por %p67, %p68
    %p70 = scmp.ne.s32.totalorder %s56, %s57
    %p71 = scmp.eq.s32.totalorder %s23, 1
    %p72 = por %p70, %p71
    %p74 = scmp.ne.s32.totalorder %s57, %s73
    %p75 = scmp.eq.s32.totalorder %s23, 0
    %p76 = por %p74, %p75
    %s77 = ssub.s32 %s17, %s24
    %p78 = scmp.eq.s32.totalorder %s77, 0
    %s80 = sadd.s32 %s79, 1
    %s81 = scalar_select %p78, %s79, %s80
    %p84 = pneg %p78
    %p85 = scmp.eq.s32.totalorder %s17, 1
    %p86 = por %p84, %p85
    %p87 = scmp.ne.s32.totalorder %s79, %s82
    %p88 = scmp.eq.s32.totalorder %s17, 0
    %p89 = por %p87, %p88
    %p90 = scmp.ne.s32.totalorder %s79, %s82
    %p91 = scmp.eq.s32.totalorder %s22, 1
    %p92 = por %p90, %p91
    %p93 = scmp.ne.s32.totalorder %s82, %s83
    %p94 = scmp.eq.s32.totalorder %s22, 0
    %p95 = por %p93, %p94
    %p96 = scmp.ne.s32.totalorder %s82, %s83
    %p97 = scmp.eq.s32.totalorder %s23, 1
    %p98 = por %p96, %p97
    %p100 = scmp.ne.s32.totalorder %s83, %s99
    %p101 = scmp.eq.s32.totalorder %s23, 0
    %p102 = por %p100, %p101
    %s104 = sadd.s32 %s103, 1
    %p107 = scmp.eq.s32.totalorder %s17, 1
    %p108 = scmp.ne.s32.totalorder %s103, %s105
    %p109 = scmp.eq.s32.totalorder %s17, 0
    %p110 = por %p108, %p109
    %p111 = scmp.ne.s32.totalorder %s103, %s105
    %p112 = scmp.eq.s32.totalorder %s22, 1
    %p113 = por %p111, %p112
    %p114 = scmp.ne.s32.totalorder %s105, %s106
    %p115 = scmp.eq.s32.totalorder %s22, 0
    %p116 = por %p114, %p115
    %p117 = scmp.ne.s32.totalorder %s105, %s106
    %p118 = scmp.eq.s32.totalorder %s23, 1
    %p119 = por %p117, %p118
    %p121 = scmp.ne.s32.totalorder %s106, %s120
    %p122 = scmp.eq.s32.totalorder %s23, 0
    %p123 = por %p121, %p122
    %s125 = sadd.s32 %s124, 1
    %p128 = scmp.eq.s32.totalorder %s17, 1
    %p129 = scmp.ne.s32.totalorder %s124, %s126
    %p130 = scmp.eq.s32.totalorder %s17, 0
    %p131 = por %p129, %p130
    %p132 = scmp.ne.s32.totalorder %s124, %s126
    %p133 = scmp.eq.s32.totalorder %s22, 1
    %p134 = por %p132, %p133
    %p135 = scmp.ne.s32.totalorder %s126, %s127
    %p136 = scmp.eq.s32.totalorder %s22, 0
    %p137 = por %p135, %p136
    %p138 = scmp.ne.s32.totalorder %s126, %s127
    %p139 = scmp.eq.s32.totalorder %s23, 1
    %p140 = por %p138, %p139
    %p142 = scmp.ne.s32.totalorder %s127, %s141
    %p143 = scmp.eq.s32.totalorder %s23, 0
    %p144 = por %p142, %p143
    %s146 = sadd.s32 %s145, 1
    %p149 = scmp.eq.s32.totalorder %s17, 1
    %p150 = scmp.ne.s32.totalorder %s145, %s147
    %p151 = scmp.eq.s32.totalorder %s17, 0
    %p152 = por %p150, %p151
    %p153 = scmp.ne.s32.totalorder %s145, %s147
    %p154 = scmp.eq.s32.totalorder %s22, 1
    %p155 = por %p153, %p154
    %p156 = scmp.ne.s32.totalorder %s147, %s148
    %p157 = scmp.eq.s32.totalorder %s22, 0
    %p158 = por %p156, %p157
    %p159 = scmp.ne.s32.totalorder %s147, %s148
    %p160 = scmp.eq.s32.totalorder %s23, 1
    %p161 = por %p159, %p160
    %p163 = scmp.ne.s32.totalorder %s148, %s162
    %p164 = scmp.eq.s32.totalorder %s23, 0
    %p165 = por %p163, %p164
    %s167 = sadd.s32 %s166, 1
    %p170 = scmp.eq.s32.totalorder %s17, 1
    %p171 = scmp.ne.s32.totalorder %s166, %s168
    %p172 = scmp.eq.s32.totalorder %s17, 0
    %p173 = por %p171, %p172
    %p174 = scmp.ne.s32.totalorder %s166, %s168
    %p175 = scmp.eq.s32.totalorder %s22, 1
    %p176 = por %p174, %p175
    %p177 = scmp.ne.s32.totalorder %s168, %s169
    %p178 = scmp.eq.s32.totalorder %s22, 0
    %p179 = por %p177, %p178
    %p180 = scmp.ne.s32.totalorder %s168, %s169
    %p181 = scmp.eq.s32.totalorder %s23, 1
    %p182 = por %p180, %p181
    %p184 = scmp.ne.s32.totalorder %s169, %s183
    %p185 = scmp.eq.s32.totalorder %s23, 0
    %p186 = por %p184, %p185
    %s188 = sadd.s32 %s187, 1
    %p191 = scmp.eq.s32.totalorder %s17, 1
    %p192 = scmp.ne.s32.totalorder %s187, %s189
    %p193 = scmp.eq.s32.totalorder %s17, 0
    %p194 = por %p192, %p193
    %p195 = scmp.ne.s32.totalorder %s187, %s189
    %p196 = scmp.eq.s32.totalorder %s22, 1
    %p197 = por %p195, %p196
    %p198 = scmp.ne.s32.totalorder %s189, %s190
    %p199 = scmp.eq.s32.totalorder %s22, 0
    %p200 = por %p198, %p199
    %p201 = scmp.ne.s32.totalorder %s189, %s190
    %p202 = scmp.eq.s32.totalorder %s23, 1
    %p203 = por %p201, %p202
    %p205 = scmp.ne.s32.totalorder %s190, %s204
    %p206 = scmp.eq.s32.totalorder %s23, 0
    %p207 = por %p205, %p206
    %s209 = sadd.s32 %s208, 1
    %p212 = scmp.eq.s32.totalorder %s17, 1
    %p213 = scmp.ne.s32.totalorder %s208, %s210
    %p214 = scmp.eq.s32.totalorder %s17, 0
    %p215 = por %p213, %p214
    %p216 = scmp.ne.s32.totalorder %s208, %s210
    %p217 = scmp.eq.s32.totalorder %s22, 1
    %p218 = por %p216, %p217
    %p219 = scmp.ne.s32.totalorder %s210, %s211
    %p220 = scmp.eq.s32.totalorder %s22, 0
    %p221 = por %p219, %p220
    %p222 = scmp.ne.s32.totalorder %s210, %s211
    %p223 = scmp.eq.s32.totalorder %s23, 1
    %p224 = por %p222, %p223
    %p226 = scmp.ne.s32.totalorder %s211, %s225
    %p227 = scmp.eq.s32.totalorder %s23, 0
    %p228 = por %p226, %p227
    %s230 = sadd.s32 %s229, 1
    %p233 = scmp.eq.s32.totalorder %s17, 1
    %p234 = scmp.ne.s32.totalorder %s229, %s231
    %p235 = scmp.eq.s32.totalorder %s17, 0
    %p236 = por %p234, %p235
    %p237 = scmp.ne.s32.totalorder %s229, %s231
    %p238 = scmp.eq.s32.totalorder %s22, 1
    %p239 = por %p237, %p238
    %p240 = scmp.ne.s32.totalorder %s231, %s232
    %p241 = scmp.eq.s32.totalorder %s22, 0
    %p242 = por %p240, %p241
    %p243 = scmp.ne.s32.totalorder %s231, %s232
    %p244 = scmp.eq.s32.totalorder %s23, 1
    %p245 = por %p243, %p244
    %p247 = scmp.ne.s32.totalorder %s232, %s246
    %p248 = scmp.eq.s32.totalorder %s23, 0
    %p249 = por %p247, %p248
    %s251 = sadd.s32 %s250, 1
    %p254 = scmp.eq.s32.totalorder %s17, 1
    %p255 = scmp.ne.s32.totalorder %s250, %s252
    %p256 = scmp.eq.s32.totalorder %s17, 0
    %p257 = por %p255, %p256
    %p258 = scmp.ne.s32.totalorder %s250, %s252
    %p259 = scmp.eq.s32.totalorder %s22, 1
    %p260 = por %p258, %p259
    %p261 = scmp.ne.s32.totalorder %s252, %s253
    %p262 = scmp.eq.s32.totalorder %s22, 0
    %p263 = por %p261, %p262
    %p264 = scmp.ne.s32.totalorder %s252, %s253
    %p265 = scmp.eq.s32.totalorder %s23, 1
    %p266 = por %p264, %p265
    %p268 = scmp.ne.s32.totalorder %s253, %s267
    %p269 = scmp.eq.s32.totalorder %s23, 0
    %p270 = por %p268, %p269
    %s271 = ssub.s32 %s17, %s24
    %p272 = scmp.eq.s32.totalorder %s271, 0
    %s274 = sadd.s32 %s273, 1
    %s275 = scalar_select %p272, %s273, %s274
    %p278 = pneg %p272
    %p279 = scmp.eq.s32.totalorder %s17, 1
    %p280 = por %p278, %p279
    %p281 = scmp.ne.s32.totalorder %s273, %s276
    %p282 = scmp.eq.s32.totalorder %s17, 0
    %p283 = por %p281, %p282
    %p284 = scmp.ne.s32.totalorder %s273, %s276
    %p285 = scmp.eq.s32.totalorder %s22, 1
    %p286 = por %p284, %p285
    %p287 = scmp.ne.s32.totalorder %s276, %s277
    %p288 = scmp.eq.s32.totalorder %s22, 0
    %p289 = por %p287, %p288
    %p290 = scmp.ne.s32.totalorder %s276, %s277
    %p291 = scmp.eq.s32.totalorder %s23, 1
    %p292 = por %p290, %p291
    %p294 = scmp.ne.s32.totalorder %s277, %s293
    %p295 = scmp.eq.s32.totalorder %s23, 0
    %p296 = por %p294, %p295
    %p297 = scmp.le.s32.totalorder 1, %s17
    %p298 = scmp.lt.s32.totalorder %s17, 3
    %p299 = pnand %p297, %p298
    %p300 = pneg %p299
    // Predicated region
    $region9: #{graphcast_forward.23} parent=5 // pred_check
      _
    $region10: #{graphcast_forward.23} parent=5 // pred_check_branch
      %302 = sbr.rel (%p299) target = $region12
    $region11: #{graphcast_forward.23} parent=5 // pred_region
      %s303 = ssub.s32 %s17, 1
      // Predicated region
      $region13: #{graphcast_forward.23} parent=11 // pred_check
        %p304 = pneg %p116
      $region14: #{graphcast_forward.23} parent=11 // pred_check_branch
        %306 = sbr.rel (%p304) target = $region16
      $region15: #{graphcast_forward.23} parent=11 // pred_region
        _
      $region16: #{graphcast_forward.23} parent=11 // pred_fallthru
        _
      // Predicated region
      $region17: #{graphcast_forward.23} parent=11 // pred_check
        %p307 = pneg %p137
      $region18: #{graphcast_forward.23} parent=11 // pred_check_branch
        %309 = sbr.rel (%p307) target = $region20
      $region19: #{graphcast_forward.23} parent=11 // pred_region
        _
      $region20: #{graphcast_forward.23} parent=11 // pred_fallthru
        _
      // Predicated region
      $region21: #{graphcast_forward.23} parent=11 // pred_check
        %p310 = pneg %p158
      $region22: #{graphcast_forward.23} parent=11 // pred_check_branch
        %312 = sbr.rel (%p310) target = $region24
      $region23: #{graphcast_forward.23} parent=11 // pred_region
        _
      $region24: #{graphcast_forward.23} parent=11 // pred_fallthru
        _
      // Predicated region
      $region25: #{graphcast_forward.23} parent=11 // pred_check
        %p313 = pneg %p179
      $region26: #{graphcast_forward.23} parent=11 // pred_check_branch
        %315 = sbr.rel (%p313) target = $region28
      $region27: #{graphcast_forward.23} parent=11 // pred_region
        _
      $region28: #{graphcast_forward.23} parent=11 // pred_fallthru
        _
      // Predicated region
      $region29: #{graphcast_forward.23} parent=11 // pred_check
        %p316 = pneg %p200
      $region30: #{graphcast_forward.23} parent=11 // pred_check_branch
        %318 = sbr.rel (%p316) target = $region32
      $region31: #{graphcast_forward.23} parent=11 // pred_region
        _
      $region32: #{graphcast_forward.23} parent=11 // pred_fallthru
        _
      // Predicated region
      $region33: #{graphcast_forward.23} parent=11 // pred_check
        %p319 = pneg %p221
      $region34: #{graphcast_forward.23} parent=11 // pred_check_branch
        %321 = sbr.rel (%p319) target = $region36
      $region35: #{graphcast_forward.23} parent=11 // pred_region
        _
      $region36: #{graphcast_forward.23} parent=11 // pred_fallthru
        _
      // Predicated region
      $region37: #{graphcast_forward.23} parent=11 // pred_check
        %p322 = pneg %p242
      $region38: #{graphcast_forward.23} parent=11 // pred_check_branch
        %324 = sbr.rel (%p322) target = $region40
      $region39: #{graphcast_forward.23} parent=11 // pred_region
        _
      $region40: #{graphcast_forward.23} parent=11 // pred_fallthru
        _
      // Predicated region
      $region41: #{graphcast_forward.23} parent=11 // pred_check
        %p325 = pneg %p263
      $region42: #{graphcast_forward.23} parent=11 // pred_check_branch
        %327 = sbr.rel (%p325) target = $region44
      $region43: #{graphcast_forward.23} parent=11 // pred_region
        _
      $region44: #{graphcast_forward.23} parent=11 // pred_fallthru
        _
    $region12: #{graphcast_forward.23} parent=5 // pred_fallthru
      _
    %p328 = scmp.lt.s32.totalorder %s17, 2
    // Predicated region
    $region45: #{graphcast_forward.23} parent=5 // pred_check
      %p329 = pneg %p328
    $region46: #{graphcast_forward.23} parent=5 // pred_check_branch
      %331 = sbr.rel (%p329) target = $region48
    $region47: #{graphcast_forward.23} parent=5 // pred_region
      // Predicated region
      $region49: #{graphcast_forward.23} parent=47 // pred_check
        %p332 = pneg %p37
      $region50: #{graphcast_forward.23} parent=47 // pred_check_branch
        %334 = sbr.rel (%p332) target = $region52
      $region51: #{graphcast_forward.23} parent=47 // pred_region
        %s335 = smul.u32 6, %s17
        %p336 = scmp.lt.s32.totalorder %s335, 11
        %s337 = scalar_select %p336, %s335, 11
        %s338 = smul.addr %s337, 4
        %s339 = scalar_lea.vmem %s0, %s338
        %s340 = smul.u32 6, %s17
      $region52: #{graphcast_forward.23} parent=47 // pred_fallthru
        _
      // Predicated region
      $region53: #{graphcast_forward.23} parent=47 // pred_check
        %p341 = pneg %p63
      $region54: #{graphcast_forward.23} parent=47 // pred_check_branch
        %343 = sbr.rel (%p341) target = $region56
      $region55: #{graphcast_forward.23} parent=47 // pred_region
        %s344 = smul.u32 6, %s17
        %p345 = scmp.lt.s32.totalorder %s344, 11
        %s346 = scalar_select %p345, %s344, 11
        %s347 = smul.addr %s346, 4
        %s348 = scalar_lea.vmem %s1, %s347
        %s349 = smul.u32 6, %s17
      $region56: #{graphcast_forward.23} parent=47 // pred_fallthru
        _
      // Predicated region
      $region57: #{graphcast_forward.23} parent=47 // pred_check
        %p350 = pneg %p89
      $region58: #{graphcast_forward.23} parent=47 // pred_check_branch
        %352 = sbr.rel (%p350) target = $region60
      $region59: #{graphcast_forward.23} parent=47 // pred_region
        %s353 = smul.u32 6, %s17
        %p354 = scmp.lt.s32.totalorder %s353, 11
        %s355 = scalar_select %p354, %s353, 11
        %s356 = smul.addr %s355, 4
        %s357 = scalar_lea.vmem %s2, %s356
        %s358 = smul.u32 6, %s17
      $region60: #{graphcast_forward.23} parent=47 // pred_fallthru
        _
    $region48: #{graphcast_forward.23} parent=5 // pred_fallthru
      _
    %p359 = scmp.le.s32.totalorder 1, %s17
    %p360 = scmp.lt.s32.totalorder %s17, 3
    %p361 = pnand %p359, %p360
    %p362 = pneg %p361
    // Predicated region
    $region61: #{graphcast_forward.23} parent=5 // pred_check
      _
    $region62: #{graphcast_forward.23} parent=5 // pred_check_branch
      %364 = sbr.rel (%p361) target = $region64
    $region63: #{graphcast_forward.23} parent=5 // pred_region
      %s365 = ssub.s32 %s17, 1
      %s366 = smul.u32 6, %s22
      %p367 = scmp.lt.s32.totalorder %s366, 11
      %s368 = scalar_select %p367, %s366, 11
      %s369 = smul.addr %s368, 4
      %s370 = scalar_lea.vmem %s0, %s369
      %p371 = pneg %p43
      %p372 = pneg %p40
      %s373 = smul.u32 6, %s22
      %p374 = scmp.lt.s32.totalorder %s373, 11
      %s375 = scalar_select %p374, %s373, 11
      %s376 = smul.addr %s375, 4
      %s377 = scalar_lea.vmem %s1, %s376
      %p378 = pneg %p69
      %p379 = pneg %p66
      %s380 = smul.u32 6, %s22
      %p381 = scmp.lt.s32.totalorder %s380, 11
      %s382 = scalar_select %p381, %s380, 11
      %s383 = smul.addr %s382, 4
      %s384 = scalar_lea.vmem %s2, %s383
      %p385 = pneg %p95
      %p386 = pneg %p92
      %p387 = pneg %p116
      %p388 = pneg %p113
      %p389 = pneg %p137
      %p390 = pneg %p134
      %p391 = pneg %p158
      %p392 = pneg %p155
      %p393 = pneg %p179
      %p394 = pneg %p176
      %p395 = pneg %p200
      %p396 = pneg %p197
      %p397 = pneg %p221
      %p398 = pneg %p218
      %p399 = pneg %p242
      %p400 = pneg %p239
      %p401 = pneg %p263
      %p402 = pneg %p260
      %p403 = pneg %p289
      %p404 = pneg %p286
      %s405 = smul.u32 6, %s22
      %p406 = scmp.lt.s32.totalorder %s405, 11
      %s407 = scalar_select %p406, %s405, 11
      %s408 = smul.addr %s407, 4
      %s409 = scalar_lea.vmem %s11, %s408
      %s410 = smul.u32 6, %s22
      %p411 = scmp.lt.s32.totalorder %s410, 11
      %s412 = scalar_select %p411, %s410, 11
      %s413 = smul.addr %s412, 4
      %s414 = scalar_lea.vmem %s0, %s413
      %s415 = smul.u32 6, %s22
      %s416 = smul.u32 6, %s22
      %p417 = scmp.lt.s32.totalorder %s416, 11
      %s418 = scalar_select %p417, %s416, 11
      %s419 = smul.addr %s418, 4
      %s420 = scalar_lea.vmem %s1, %s419
      %s421 = smul.u32 6, %s22
      %s422 = smul.u32 6, %s22
      %p423 = scmp.lt.s32.totalorder %s422, 11
      %s424 = scalar_select %p423, %s422, 11
      %s425 = smul.addr %s424, 4
      %s426 = scalar_lea.vmem %s2, %s425
      %s427 = smul.u32 6, %s22
      %s428 = smul.u32 6, %s22
      %p429 = scmp.lt.s32.totalorder %s428, 11
      %s430 = scalar_select %p429, %s428, 11
      %s431 = smul.addr %s430, 4
      %s432 = scalar_lea.vmem %s11, %s431
      %s433 = smul.u32 6, %s22
      %v435 = vld [vmem:[%s414] sm:$0xf]
      %v436 = vld [vmem:[%s414 + $0x4] sm:$0xf]
      %v437 = vld [vmem:[%s414 + $0x8] sm:$0xf]
      %v438 = vld [vmem:[%s414 + $0xc] sm:$0xf]
      %v439 = vld [vmem:[%s414 + $0x10] sm:$0xf]
      %v440 = vld [vmem:[%s414 + $0x14] sm:$0xf]
      %v441 = vld [vmem:[%s3] sm:$0xf]
      %v442 = vld [vmem:[%s3 + $0x4] sm:$0xf]
      %v443 = vld [vmem:[%s3 + $0x8] sm:$0xf]
      %v444 = vld [vmem:[%s3 + $0xc] sm:$0xf]
      %v445 = vld [vmem:[%s3 + $0x10] sm:$0xf]
      %v446 = vld [vmem:[%s3 + $0x14] sm:$0xf]
      %v447 = vld [vmem:[%s3 + $0x18] sm:$0xf]
      %v448 = vld [vmem:[%s3 + $0x1c] sm:$0xf]
      %v449 = vld [vmem:[%s3 + $0x20] sm:$0xf]
      %v450 = vld [vmem:[%s3 + $0x24] sm:$0xf]
      %v451 = vld [vmem:[%s3 + $0x28] sm:$0xf]
      %v452 = vld [vmem:[%s3 + $0x2c] sm:$0xf]
      %v453 = vld [vmem:[%s3 + $0x30] sm:$0xf]
      %v454 = vld [vmem:[%s3 + $0x34] sm:$0xf]
      %v455 = vld [vmem:[%s3 + $0x38] sm:$0xf]
      %v456 = vld [vmem:[%s3 + $0x3c] sm:$0xf]
      %v457 = vld [vmem:[%s420] sm:$0xf]
      %v458 = vld [vmem:[%s420 + $0x4] sm:$0xf]
      %v459 = vld [vmem:[%s420 + $0x8] sm:$0xf]
      %v460 = vld [vmem:[%s420 + $0xc] sm:$0xf]
      %v461 = vld [vmem:[%s420 + $0x10] sm:$0xf]
      %v462 = vld [vmem:[%s420 + $0x14] sm:$0xf]
      %v463 = vld [vmem:[%s4] sm:$0xf]
      %v464 = vld [vmem:[%s4 + $0x4] sm:$0xf]
      %v465 = vld [vmem:[%s4 + $0x8] sm:$0xf]
      %v466 = vld [vmem:[%s4 + $0xc] sm:$0xf]
      %v467 = vld [vmem:[%s4 + $0x10] sm:$0xf]
      %v468 = vld [vmem:[%s4 + $0x14] sm:$0xf]
      %v469 = vld [vmem:[%s4 + $0x18] sm:$0xf]
      %v470 = vld [vmem:[%s4 + $0x1c] sm:$0xf]
      %v471 = vld [vmem:[%s4 + $0x20] sm:$0xf]
      %v472 = vld [vmem:[%s4 + $0x24] sm:$0xf]
      %v473 = vld [vmem:[%s4 + $0x28] sm:$0xf]
      %v474 = vld [vmem:[%s4 + $0x2c] sm:$0xf]
      %v475 = vld [vmem:[%s4 + $0x30] sm:$0xf]
      %v476 = vld [vmem:[%s4 + $0x34] sm:$0xf]
      %v477 = vld [vmem:[%s4 + $0x38] sm:$0xf]
      %v478 = vld [vmem:[%s4 + $0x3c] sm:$0xf]
      %v485 = vunpack.c.l.b16 %v457
      %v486 = vunpack.c.l.b16 %v458
      %v487 = vunpack.c.l.b16 %v459
      %v488 = vunpack.c.l.b16 %v460
      %v489 = vunpack.c.l.b16 %v461
      %v490 = vunpack.c.l.b16 %v462
      %v491 = vpack.c.b16 %v486, %v485
      %v492 = vpack.c.b16 %v488, %v487
      %v493 = vpack.c.b16 %v490, %v489
      %v513 = vunpack.c.l.b16 %v463
      %v514 = vunpack.c.l.b16 %v464
      %v515 = vunpack.c.l.b16 %v465
      %v516 = vunpack.c.l.b16 %v466
      %v517 = vunpack.c.l.b16 %v467
      %v518 = vunpack.c.l.b16 %v468
      %v519 = vunpack.c.l.b16 %v469
      %v520 = vunpack.c.l.b16 %v470
      %v521 = vunpack.c.l.b16 %v471
      %v522 = vunpack.c.l.b16 %v472
      %v523 = vunpack.c.l.b16 %v473
      %v524 = vunpack.c.l.b16 %v474
      %v525 = vunpack.c.l.b16 %v475
      %v526 = vunpack.c.l.b16 %v476
      %v527 = vunpack.c.l.b16 %v477
      %v528 = vunpack.c.l.b16 %v478
      %v529 = vpack.c.b16 %v514, %v513
      %v530 = vpack.c.b16 %v516, %v515
      %v531 = vpack.c.b16 %v518, %v517
      %v532 = vpack.c.b16 %v520, %v519
      %v533 = vpack.c.b16 %v522, %v521
      %v534 = vpack.c.b16 %v524, %v523
      %v535 = vpack.c.b16 %v526, %v525
      %v536 = vpack.c.b16 %v528, %v527
      %545 = vmatprep.subr.bf16.mxu0 0
      %546 = vmatpush1.bf16.msra.mxu0 %v536
      %547 = vmatprep.subr.bf16.mxu0 0
      %548 = vmatpush1.bf16.msra.mxu0 %v535
      %549 = vmatprep.subr.bf16.mxu0 0
      %550 = vmatpush1.bf16.msra.mxu0 %v534
      %551 = vmatprep.subr.bf16.mxu0 0
      %552 = vmatpush1.bf16.msra.mxu0 %v533
      %553 = vmatprep.subr.bf16.mxu0 0
      %554 = vmatpush1.bf16.msra.mxu0 %v532
      %555 = vmatprep.subr.bf16.mxu0 0
      %556 = vmatpush1.bf16.msra.mxu0 %v531
      %557 = vmatprep.subr.bf16.mxu0 0
      %558 = vmatpush1.bf16.msra.mxu0 %v530
      %559 = vmatprep.subr.bf16.mxu0 0
      %560 = vmatpush1.bf16.msra.mxu0 %v529
      %561 = vmatprep.subr.bf16.mxu0 0
      %562 = vmatpush2.bf16.msra.mxu0 0
      %563 = vmatprep.subr.bf16.mxu0 0
      %564 = vmatpush2.bf16.msra.mxu0 0
      %565 = vmatprep.subr.bf16.mxu0 0
      %566 = vmatpush2.bf16.msra.mxu0 0
      %567 = vmatprep.subr.bf16.mxu0 0
      %568 = vmatpush2.bf16.msra.mxu0 0
      %569 = vmatprep.subr.bf16.mxu0 0
      %570 = vmatpush2.bf16.msra.mxu0 0
      %571 = vmatprep.subr.bf16.mxu0 0
      %572 = vmatpush2.bf16.msra.mxu0 0
      %573 = vmatprep.subr.bf16.mxu0 0
      %574 = vmatpush2.bf16.msra.mxu0 0
      %575 = vmatprep.subr.bf16.mxu0 0
      %576 = vmatpush2.bf16.msra.mxu0 0
      %577 = vmatprep.mubr.bf16.mxu0 0
      %578 = vmatmul.mubr.bf16.gmra.mxu0 %v491
      %v579 = vpop.f32.mrf.mxu0
      %v580 = vadd.f32 0.0, %v579
      %v581 = vpop.f32.mrf.mxu0
      %v582 = vpop.f32.mrf.mxu0
      %v583 = vadd.f32 0.0, %v582
      %v584 = vpop.f32.mrf.mxu0
      %585 = vmatprep.mubr.bf16.mxu0 0
      %586 = vmatmul.mubr.bf16.gmra.mxu0 %v492
      %v587 = vpop.f32.mrf.mxu0
      %v588 = vadd.f32 0.0, %v587
      %v589 = vpop.f32.mrf.mxu0
      %v590 = vpop.f32.mrf.mxu0
      %v591 = vadd.f32 0.0, %v590
      %v592 = vpop.f32.mrf.mxu0
      %593 = vmatprep.mubr.bf16.mxu0 0
      %594 = vmatmul.mubr.bf16.gmra.mxu0 %v493
      %v595 = vpop.f32.mrf.mxu0
      %v596 = vadd.f32 0.0, %v595
      %v597 = vpop.f32.mrf.mxu0
      %v598 = vpop.f32.mrf.mxu0
      %v599 = vadd.f32 0.0, %v598
      %v600 = vpop.f32.mrf.mxu0
      %601 = vdwg.mxu0
      %v608 = vunpack.c.l.b16 %v435
      %v609 = vunpack.c.l.b16 %v436
      %v610 = vunpack.c.l.b16 %v437
      %v611 = vunpack.c.l.b16 %v438
      %v612 = vunpack.c.l.b16 %v439
      %v613 = vunpack.c.l.b16 %v440
      %v614 = vpack.c.b16 %v609, %v608
      %v615 = vpack.c.b16 %v611, %v610
      %v616 = vpack.c.b16 %v613, %v612
      %v636 = vunpack.c.l.b16 %v441
      %v637 = vunpack.c.l.b16 %v442
      %v638 = vunpack.c.l.b16 %v443
      %v639 = vunpack.c.l.b16 %v444
      %v640 = vunpack.c.l.b16 %v445
      %v641 = vunpack.c.l.b16 %v446
      %v642 = vunpack.c.l.b16 %v447
      %v643 = vunpack.c.l.b16 %v448
      %v644 = vunpack.c.l.b16 %v449
      %v645 = vunpack.c.l.b16 %v450
      %v646 = vunpack.c.l.b16 %v451
      %v647 = vunpack.c.l.b16 %v452
      %v648 = vunpack.c.l.b16 %v453
      %v649 = vunpack.c.l.b16 %v454
      %v650 = vunpack.c.l.b16 %v455
      %v651 = vunpack.c.l.b16 %v456
      %v652 = vpack.c.b16 %v637, %v636
      %v653 = vpack.c.b16 %v639, %v638
      %v654 = vpack.c.b16 %v641, %v640
      %v655 = vpack.c.b16 %v643, %v642
      %v656 = vpack.c.b16 %v645, %v644
      %v657 = vpack.c.b16 %v647, %v646
      %v658 = vpack.c.b16 %v649, %v648
      %v659 = vpack.c.b16 %v651, %v650
      %668 = vmatprep.subr.bf16.mxu0 0
      %669 = vmatpush1.bf16.msra.mxu0 %v659
      %670 = vmatprep.subr.bf16.mxu0 0
      %671 = vmatpush1.bf16.msra.mxu0 %v658
      %672 = vmatprep.subr.bf16.mxu0 0
      %673 = vmatpush1.bf16.msra.mxu0 %v657
      %674 = vmatprep.subr.bf16.mxu0 0
      %675 = vmatpush1.bf16.msra.mxu0 %v656
      %676 = vmatprep.subr.bf16.mxu0 0
      %677 = vmatpush1.bf16.msra.mxu0 %v655
      %678 = vmatprep.subr.bf16.mxu0 0
      %679 = vmatpush1.bf16.msra.mxu0 %v654
      %680 = vmatprep.subr.bf16.mxu0 0
      %681 = vmatpush1.bf16.msra.mxu0 %v653
      %682 = vmatprep.subr.bf16.mxu0 0
      %683 = vmatpush1.bf16.msra.mxu0 %v652
      %684 = vmatprep.subr.bf16.mxu0 0
      %685 = vmatpush2.bf16.msra.mxu0 0
      %686 = vmatprep.subr.bf16.mxu0 0
      %687 = vmatpush2.bf16.msra.mxu0 0
      %688 = vmatprep.subr.bf16.mxu0 0
      %689 = vmatpush2.bf16.msra.mxu0 0
      %690 = vmatprep.subr.bf16.mxu0 0
      %691 = vmatpush2.bf16.msra.mxu0 0
      %692 = vmatprep.subr.bf16.mxu0 0
      %693 = vmatpush2.bf16.msra.mxu0 0
      %694 = vmatprep.subr.bf16.mxu0 0
      %695 = vmatpush2.bf16.msra.mxu0 0
      %696 = vmatprep.subr.bf16.mxu0 0
      %697 = vmatpush2.bf16.msra.mxu0 0
      %698 = vmatprep.subr.bf16.mxu0 0
      %699 = vmatpush2.bf16.msra.mxu0 0
      %700 = vmatprep.mubr.bf16.mxu0 0
      %701 = vmatmul.mubr.bf16.gmra.mxu0 %v614
      %v702 = vpop.f32.mrf.mxu0
      %v703 = vadd.f32 %v580, %v702
      %v704 = vpop.f32.mrf.mxu0
      %v705 = vpop.f32.mrf.mxu0
      %v706 = vadd.f32 %v583, %v705
      %v707 = vpop.f32.mrf.mxu0
      %708 = vmatprep.mubr.bf16.mxu0 0
      %709 = vmatmul.mubr.bf16.gmra.mxu0 %v615
      %v710 = vpop.f32.mrf.mxu0
      %v711 = vadd.f32 %v588, %v710
      %v712 = vpop.f32.mrf.mxu0
      %v713 = vpop.f32.mrf.mxu0
      %v714 = vadd.f32 %v591, %v713
      %v715 = vpop.f32.mrf.mxu0
      %716 = vmatprep.mubr.bf16.mxu0 0
      %717 = vmatmul.mubr.bf16.gmra.mxu0 %v616
      %v718 = vpop.f32.mrf.mxu0
      %v719 = vadd.f32 %v596, %v718
      %v720 = vpop.f32.mrf.mxu0
      %v721 = vpop.f32.mrf.mxu0
      %v722 = vadd.f32 %v599, %v721
      %v723 = vpop.f32.mrf.mxu0
      %724 = vdwg.mxu0
      %v725 = vld [vmem:[%s426] sm:$0xf]
      %v726 = vld [vmem:[%s426 + $0x4] sm:$0xf]
      %v727 = vld [vmem:[%s426 + $0x8] sm:$0xf]
      %v728 = vld [vmem:[%s426 + $0xc] sm:$0xf]
      %v729 = vld [vmem:[%s426 + $0x10] sm:$0xf]
      %v730 = vld [vmem:[%s426 + $0x14] sm:$0xf]
      %v731 = vld [vmem:[%s5] sm:$0xf]
      %v732 = vld [vmem:[%s5 + $0x4] sm:$0xf]
      %v733 = vld [vmem:[%s5 + $0x8] sm:$0xf]
      %v734 = vld [vmem:[%s5 + $0xc] sm:$0xf]
      %v735 = vld [vmem:[%s5 + $0x10] sm:$0xf]
      %v736 = vld [vmem:[%s5 + $0x14] sm:$0xf]
      %v737 = vld [vmem:[%s5 + $0x18] sm:$0xf]
      %v738 = vld [vmem:[%s5 + $0x1c] sm:$0xf]
      %v739 = vld [vmem:[%s5 + $0x20] sm:$0xf]
      %v740 = vld [vmem:[%s5 + $0x24] sm:$0xf]
      %v741 = vld [vmem:[%s5 + $0x28] sm:$0xf]
      %v742 = vld [vmem:[%s5 + $0x2c] sm:$0xf]
      %v743 = vld [vmem:[%s5 + $0x30] sm:$0xf]
      %v744 = vld [vmem:[%s5 + $0x34] sm:$0xf]
      %v745 = vld [vmem:[%s5 + $0x38] sm:$0xf]
      %v746 = vld [vmem:[%s5 + $0x3c] sm:$0xf]
      %v753 = vunpack.c.l.b16 %v725
      %v754 = vunpack.c.l.b16 %v726
      %v755 = vunpack.c.l.b16 %v727
      %v756 = vunpack.c.l.b16 %v728
      %v757 = vunpack.c.l.b16 %v729
      %v758 = vunpack.c.l.b16 %v730
      %v759 = vpack.c.b16 %v754, %v753
      %v760 = vpack.c.b16 %v756, %v755
      %v761 = vpack.c.b16 %v758, %v757
      %v781 = vunpack.c.l.b16 %v731
      %v782 = vunpack.c.l.b16 %v732
      %v783 = vunpack.c.l.b16 %v733
      %v784 = vunpack.c.l.b16 %v734
      %v785 = vunpack.c.l.b16 %v735
      %v786 = vunpack.c.l.b16 %v736
      %v787 = vunpack.c.l.b16 %v737
      %v788 = vunpack.c.l.b16 %v738
      %v789 = vunpack.c.l.b16 %v739
      %v790 = vunpack.c.l.b16 %v740
      %v791 = vunpack.c.l.b16 %v741
      %v792 = vunpack.c.l.b16 %v742
      %v793 = vunpack.c.l.b16 %v743
      %v794 = vunpack.c.l.b16 %v744
      %v795 = vunpack.c.l.b16 %v745
      %v796 = vunpack.c.l.b16 %v746
      %v797 = vpack.c.b16 %v782, %v781
      %v798 = vpack.c.b16 %v784, %v783
      %v799 = vpack.c.b16 %v786, %v785
      %v800 = vpack.c.b16 %v788, %v787
      %v801 = vpack.c.b16 %v790, %v789
      %v802 = vpack.c.b16 %v792, %v791
      %v803 = vpack.c.b16 %v794, %v793
      %v804 = vpack.c.b16 %v796, %v795
      %813 = vmatprep.subr.bf16.mxu0 0
      %814 = vmatpush1.bf16.msra.mxu0 %v804
      %815 = vmatprep.subr.bf16.mxu0 0
      %816 = vmatpush1.bf16.msra.mxu0 %v803
      %817 = vmatprep.subr.bf16.mxu0 0
      %818 = vmatpush1.bf16.msra.mxu0 %v802
      %819 = vmatprep.subr.bf16.mxu0 0
      %820 = vmatpush1.bf16.msra.mxu0 %v801
      %821 = vmatprep.subr.bf16.mxu0 0
      %822 = vmatpush1.bf16.msra.mxu0 %v800
      %823 = vmatprep.subr.bf16.mxu0 0
      %824 = vmatpush1.bf16.msra.mxu0 %v799
      %825 = vmatprep.subr.bf16.mxu0 0
      %826 = vmatpush1.bf16.msra.mxu0 %v798
      %827 = vmatprep.subr.bf16.mxu0 0
      %828 = vmatpush1.bf16.msra.mxu0 %v797
      %829 = vmatprep.subr.bf16.mxu0 0
      %830 = vmatpush2.bf16.msra.mxu0 0
      %831 = vmatprep.subr.bf16.mxu0 0
      %832 = vmatpush2.bf16.msra.mxu0 0
      %833 = vmatprep.subr.bf16.mxu0 0
      %834 = vmatpush2.bf16.msra.mxu0 0
      %835 = vmatprep.subr.bf16.mxu0 0
      %836 = vmatpush2.bf16.msra.mxu0 0
      %837 = vmatprep.subr.bf16.mxu0 0
      %838 = vmatpush2.bf16.msra.mxu0 0
      %839 = vmatprep.subr.bf16.mxu0 0
      %840 = vmatpush2.bf16.msra.mxu0 0
      %841 = vmatprep.subr.bf16.mxu0 0
      %842 = vmatpush2.bf16.msra.mxu0 0
      %843 = vmatprep.subr.bf16.mxu0 0
      %844 = vmatpush2.bf16.msra.mxu0 0
      %845 = vmatprep.mubr.bf16.mxu0 0
      %846 = vmatmul.mubr.bf16.gmra.mxu0 %v759
      %v847 = vpop.f32.mrf.mxu0
      %v848 = vadd.f32 0.0, %v847
      %v849 = vpop.f32.mrf.mxu0
      %v850 = vpop.f32.mrf.mxu0
      %v851 = vadd.f32 0.0, %v850
      %v852 = vpop.f32.mrf.mxu0
      %853 = vmatprep.mubr.bf16.mxu0 0
      %854 = vmatmul.mubr.bf16.gmra.mxu0 %v760
      %v855 = vpop.f32.mrf.mxu0
      %v856 = vadd.f32 0.0, %v855
      %v857 = vpop.f32.mrf.mxu0
      %v858 = vpop.f32.mrf.mxu0
      %v859 = vadd.f32 0.0, %v858
      %v860 = vpop.f32.mrf.mxu0
      %861 = vmatprep.mubr.bf16.mxu0 0
      %862 = vmatmul.mubr.bf16.gmra.mxu0 %v761
      %v863 = vpop.f32.mrf.mxu0
      %v864 = vadd.f32 0.0, %v863
      %v865 = vpop.f32.mrf.mxu0
      %v866 = vpop.f32.mrf.mxu0
      %v867 = vadd.f32 0.0, %v866
      %v868 = vpop.f32.mrf.mxu0
      %869 = vdwg.mxu0
      %v870 = vadd.f32 %v703, %v848
      %v871 = vadd.f32 %v706, %v851
      %v872 = vadd.f32 %v711, %v856
      %v873 = vadd.f32 %v714, %v859
      %v874 = vadd.f32 %v719, %v864
      %v875 = vadd.f32 %v722, %v867
      %v876 = vld [vmem:[%s6] sm:$0x1]
      %v878 = vlaneseq
      %v879 = vshrl.u32 %v878, 7
      %v880 = vsub.s32 0, %v879
      %v881 = vrot.slane %v876, %v880
      %v883 = vadd.f32 %v870, %v881
      %v884 = vadd.f32 %v871, %v881
      %v885 = vadd.f32 %v872, %v881
      %v886 = vadd.f32 %v873, %v881
      %v887 = vadd.f32 %v874, %v881
      %v888 = vadd.f32 %v875, %v881
      %v889 = vxor.u32 %v883, 2147483648
      %v890 = vxor.u32 %v884, 2147483648
      %v891 = vxor.u32 %v885, 2147483648
      %v892 = vxor.u32 %v886, 2147483648
      %v893 = vxor.u32 %v887, 2147483648
      %v894 = vxor.u32 %v888, 2147483648
      %v895 = vmul.f32 %v889, 1.442695
      %v896 = vpow.pop %v895
      %v897 = vmul.f32 %v890, 1.442695
      %v898 = vpow.pop %v897
      %v899 = vmul.f32 %v891, 1.442695
      %v900 = vpow.pop %v899
      %v901 = vmul.f32 %v892, 1.442695
      %v902 = vpow.pop %v901
      %v903 = vmul.f32 %v893, 1.442695
      %v904 = vpow.pop %v903
      %v905 = vmul.f32 %v894, 1.442695
      %v906 = vpow.pop %v905
      %v907 = vadd.f32 %v896, 1.0
      %v908 = vadd.f32 %v898, 1.0
      %v909 = vadd.f32 %v900, 1.0
      %v910 = vadd.f32 %v902, 1.0
      %v911 = vadd.f32 %v904, 1.0
      %v912 = vadd.f32 %v906, 1.0
      %v913 = vrcp.pop %v907
      %v914 = vmul.f32 1.0, %v913
      %v915 = vrcp.pop %v908
      %v916 = vmul.f32 1.0, %v915
      %v917 = vrcp.pop %v909
      %v918 = vmul.f32 1.0, %v917
      %v919 = vrcp.pop %v910
      %v920 = vmul.f32 1.0, %v919
      %v921 = vrcp.pop %v911
      %v922 = vmul.f32 1.0, %v921
      %v923 = vrcp.pop %v912
      %v924 = vmul.f32 1.0, %v923
      %v925 = vmul.f32 %v883, %v914
      %v926 = vmul.f32 %v884, %v916
      %v927 = vmul.f32 %v885, %v918
      %v928 = vmul.f32 %v886, %v920
      %v929 = vmul.f32 %v887, %v922
      %v930 = vmul.f32 %v888, %v924
      %v931 = vpack.c.bf16 %v926, %v925
      %v932 = vpack.c.bf16 %v928, %v927
      %v933 = vpack.c.bf16 %v930, %v929
      %v934 = vld [vmem:[%s7] sm:$0xf]
      %v935 = vld [vmem:[%s7 + $0x4] sm:$0xf]
      %v936 = vld [vmem:[%s7 + $0x8] sm:$0xf]
      %v937 = vld [vmem:[%s7 + $0xc] sm:$0xf]
      %v938 = vld [vmem:[%s7 + $0x10] sm:$0xf]
      %v939 = vld [vmem:[%s7 + $0x14] sm:$0xf]
      %v940 = vld [vmem:[%s7 + $0x18] sm:$0xf]
      %v941 = vld [vmem:[%s7 + $0x1c] sm:$0xf]
      %v942 = vld [vmem:[%s7 + $0x20] sm:$0xf]
      %v943 = vld [vmem:[%s7 + $0x24] sm:$0xf]
      %v944 = vld [vmem:[%s7 + $0x28] sm:$0xf]
      %v945 = vld [vmem:[%s7 + $0x2c] sm:$0xf]
      %v946 = vld [vmem:[%s7 + $0x30] sm:$0xf]
      %v947 = vld [vmem:[%s7 + $0x34] sm:$0xf]
      %v948 = vld [vmem:[%s7 + $0x38] sm:$0xf]
      %v949 = vld [vmem:[%s7 + $0x3c] sm:$0xf]
      %v950 = vld [vmem:[%s8] sm:$0x1]
      %v952 = vlaneseq
      %v953 = vshrl.u32 %v952, 7
      %v954 = vsub.s32 0, %v953
      %v955 = vrot.slane %v950, %v954
      %v973 = vunpack.c.l.b16 %v934
      %v974 = vunpack.c.l.b16 %v935
      %v975 = vunpack.c.l.b16 %v936
      %v976 = vunpack.c.l.b16 %v937
      %v977 = vunpack.c.l.b16 %v938
      %v978 = vunpack.c.l.b16 %v939
      %v979 = vunpack.c.l.b16 %v940
      %v980 = vunpack.c.l.b16 %v941
      %v981 = vunpack.c.l.b16 %v942
      %v982 = vunpack.c.l.b16 %v943
      %v983 = vunpack.c.l.b16 %v944
      %v984 = vunpack.c.l.b16 %v945
      %v985 = vunpack.c.l.b16 %v946
      %v986 = vunpack.c.l.b16 %v947
      %v987 = vunpack.c.l.b16 %v948
      %v988 = vunpack.c.l.b16 %v949
      %v989 = vpack.c.b16 %v974, %v973
      %v990 = vpack.c.b16 %v976, %v975
      %v991 = vpack.c.b16 %v978, %v977
      %v992 = vpack.c.b16 %v980, %v979
      %v993 = vpack.c.b16 %v982, %v981
      %v994 = vpack.c.b16 %v984, %v983
      %v995 = vpack.c.b16 %v986, %v985
      %v996 = vpack.c.b16 %v988, %v987
      %1005 = vmatprep.subr.bf16.mxu0 0
      %1006 = vmatpush1.bf16.msra.mxu0 %v996
      %1007 = vmatprep.subr.bf16.mxu0 0
      %1008 = vmatpush1.bf16.msra.mxu0 %v995
      %1009 = vmatprep.subr.bf16.mxu0 0
      %1010 = vmatpush1.bf16.msra.mxu0 %v994
      %1011 = vmatprep.subr.bf16.mxu0 0
      %1012 = vmatpush1.bf16.msra.mxu0 %v993
      %1013 = vmatprep.subr.bf16.mxu0 0
      %1014 = vmatpush1.bf16.msra.mxu0 %v992
      %1015 = vmatprep.subr.bf16.mxu0 0
      %1016 = vmatpush1.bf16.msra.mxu0 %v991
      %1017 = vmatprep.subr.bf16.mxu0 0
      %1018 = vmatpush1.bf16.msra.mxu0 %v990
      %1019 = vmatprep.subr.bf16.mxu0 0
      %1020 = vmatpush1.bf16.msra.mxu0 %v989
      %1021 = vmatprep.subr.bf16.mxu0 0
      %1022 = vmatpush2.bf16.msra.mxu0 0
      %1023 = vmatprep.subr.bf16.mxu0 0
      %1024 = vmatpush2.bf16.msra.mxu0 0
      %1025 = vmatprep.subr.bf16.mxu0 0
      %1026 = vmatpush2.bf16.msra.mxu0 0
      %1027 = vmatprep.subr.bf16.mxu0 0
      %1028 = vmatpush2.bf16.msra.mxu0 0
      %1029 = vmatprep.subr.bf16.mxu0 0
      %1030 = vmatpush2.bf16.msra.mxu0 0
      %1031 = vmatprep.subr.bf16.mxu0 0
      %1032 = vmatpush2.bf16.msra.mxu0 0
      %1033 = vmatprep.subr.bf16.mxu0 0
      %1034 = vmatpush2.bf16.msra.mxu0 0
      %1035 = vmatprep.subr.bf16.mxu0 0
      %1036 = vmatpush2.bf16.msra.mxu0 0
      %1037 = vmatprep.mubr.bf16.mxu0 0
      %1038 = vmatmul.mubr.bf16.gmra.mxu0 %v931
      %v1039 = vpop.f32.mrf.mxu0
      %v1040 = vadd.f32 %v955, %v1039
      %v1041 = vpop.f32.mrf.mxu0
      %v1042 = vpop.f32.mrf.mxu0
      %v1043 = vadd.f32 %v955, %v1042
      %v1044 = vpop.f32.mrf.mxu0
      %1045 = vmatprep.mubr.bf16.mxu0 0
      %1046 = vmatmul.mubr.bf16.gmra.mxu0 %v932
      %v1047 = vpop.f32.mrf.mxu0
      %v1048 = vadd.f32 %v955, %v1047
      %v1049 = vpop.f32.mrf.mxu0
      %v1050 = vpop.f32.mrf.mxu0
      %v1051 = vadd.f32 %v955, %v1050
      %v1052 = vpop.f32.mrf.mxu0
      %1053 = vmatprep.mubr.bf16.mxu0 0
      %1054 = vmatmul.mubr.bf16.gmra.mxu0 %v933
      %v1055 = vpop.f32.mrf.mxu0
      %v1056 = vadd.f32 %v955, %v1055
      %v1057 = vpop.f32.mrf.mxu0
      %v1058 = vpop.f32.mrf.mxu0
      %v1059 = vadd.f32 %v955, %v1058
      %v1060 = vpop.f32.mrf.mxu0
      %1061 = vdwg.mxu0
      %1062 = vadd.xlane.f32.xlu0 %v1040
      %v1063 = vpop.xlane.xlu0 %1062
      %1064 = vadd.xlane.f32.xlu0 %v1043
      %v1065 = vpop.xlane.xlu0 %1064
      %1066 = vadd.xlane.f32.xlu0 %v1048
      %v1067 = vpop.xlane.xlu0 %1066
      %1068 = vadd.xlane.f32.xlu0 %v1051
      %v1069 = vpop.xlane.xlu0 %1068
      %1070 = vadd.xlane.f32.xlu0 %v1056
      %v1071 = vpop.xlane.xlu0 %1070
      %1072 = vadd.xlane.f32.xlu0 %v1059
      %v1073 = vpop.xlane.xlu0 %1072
      %v1074 = vmul.f32 %v1063, 0.0078125
      %v1075 = vmul.f32 %v1065, 0.0078125
      %v1076 = vmul.f32 %v1067, 0.0078125
      %v1077 = vmul.f32 %v1069, 0.0078125
      %v1078 = vmul.f32 %v1071, 0.0078125
      %v1079 = vmul.f32 %v1073, 0.0078125
      %v1080 = vsub.f32 %v1040, %v1074
      %v1081 = vsub.f32 %v1043, %v1075
      %v1082 = vsub.f32 %v1048, %v1076
      %v1083 = vsub.f32 %v1051, %v1077
      %v1084 = vsub.f32 %v1056, %v1078
      %v1085 = vsub.f32 %v1059, %v1079
      %v1086 = vmul.f32 %v1080, %v1080
      %v1087 = vmul.f32 %v1081, %v1081
      %v1088 = vmul.f32 %v1082, %v1082
      %v1089 = vmul.f32 %v1083, %v1083
      %v1090 = vmul.f32 %v1084, %v1084
      %v1091 = vmul.f32 %v1085, %v1085
      %1092 = vadd.xlane.f32.xlu0 %v1086
      %v1093 = vpop.xlane.xlu0 %1092
      %1094 = vadd.xlane.f32.xlu0 %v1087
      %v1095 = vpop.xlane.xlu0 %1094
      %1096 = vadd.xlane.f32.xlu0 %v1088
      %v1097 = vpop.xlane.xlu0 %1096
      %1098 = vadd.xlane.f32.xlu0 %v1089
      %v1099 = vpop.xlane.xlu0 %1098
      %1100 = vadd.xlane.f32.xlu0 %v1090
      %v1101 = vpop.xlane.xlu0 %1100
      %1102 = vadd.xlane.f32.xlu0 %v1091
      %v1103 = vpop.xlane.xlu0 %1102
      %v1104 = vmul.f32 %v1093, 0.0078125
      %v1105 = vmul.f32 %v1095, 0.0078125
      %v1106 = vmul.f32 %v1097, 0.0078125
      %v1107 = vmul.f32 %v1099, 0.0078125
      %v1108 = vmul.f32 %v1101, 0.0078125
      %v1109 = vmul.f32 %v1103, 0.0078125
      %v1110 = vadd.f32 %v1104, 1e-05
      %v1111 = vadd.f32 %v1105, 1e-05
      %v1112 = vadd.f32 %v1106, 1e-05
      %v1113 = vadd.f32 %v1107, 1e-05
      %v1114 = vadd.f32 %v1108, 1e-05
      %v1115 = vadd.f32 %v1109, 1e-05
      %v1116 = vrsqrt.pop %v1110
      %v1117 = vrsqrt.pop %v1111
      %v1118 = vrsqrt.pop %v1112
      %v1119 = vrsqrt.pop %v1113
      %v1120 = vrsqrt.pop %v1114
      %v1121 = vrsqrt.pop %v1115
      %v1122 = vmul.f32 %v1080, %v1116
      %v1123 = vmul.f32 %v1081, %v1117
      %v1124 = vmul.f32 %v1082, %v1118
      %v1125 = vmul.f32 %v1083, %v1119
      %v1126 = vmul.f32 %v1084, %v1120
      %v1127 = vmul.f32 %v1085, %v1121
      %v1128 = vld [vmem:[%s9] sm:$0x1]
      %v1130 = vlaneseq
      %v1131 = vshrl.u32 %v1130, 7
      %v1132 = vsub.s32 0, %v1131
      %v1133 = vrot.slane %v1128, %v1132
      %v1135 = vmul.f32 %v1122, %v1133
      %v1136 = vmul.f32 %v1123, %v1133
      %v1137 = vmul.f32 %v1124, %v1133
      %v1138 = vmul.f32 %v1125, %v1133
      %v1139 = vmul.f32 %v1126, %v1133
      %v1140 = vmul.f32 %v1127, %v1133
      %v1141 = vld [vmem:[%s10] sm:$0x1]
      %v1143 = vlaneseq
      %v1144 = vshrl.u32 %v1143, 7
      %v1145 = vsub.s32 0, %v1144
      %v1146 = vrot.slane %v1141, %v1145
      %v1148 = vadd.f32 %v1135, %v1146
      %v1149 = vadd.f32 %v1136, %v1146
      %v1150 = vadd.f32 %v1137, %v1146
      %v1151 = vadd.f32 %v1138, %v1146
      %v1152 = vadd.f32 %v1139, %v1146
      %v1153 = vadd.f32 %v1140, %v1146
      %v1154 = vpack.c.bf16 %v1149, %v1148
      %v1155 = vpack.c.bf16 %v1151, %v1150
      %v1156 = vpack.c.bf16 %v1153, %v1152
      %v1160 = vunpack.c.l.b16 %v1154
      %v1161 = vunpack.c.h.b16 %v1154
      %v1162 = vunpack.c.l.b16 %v1155
      %v1163 = vunpack.c.h.b16 %v1155
      %v1164 = vunpack.c.l.b16 %v1156
      %v1165 = vunpack.c.h.b16 %v1156
      %v1166 = vpack.c.b16 %v1160, %v1160
      %v1167 = vpack.c.b16 %v1161, %v1161
      %v1168 = vpack.c.b16 %v1162, %v1162
      %v1169 = vpack.c.b16 %v1163, %v1163
      %v1170 = vpack.c.b16 %v1164, %v1164
      %v1171 = vpack.c.b16 %v1165, %v1165
      %1178 = vst [vmem:[%s432] sm:$0xf] %v1166
      %1179 = vst [vmem:[%s432 + $0x4] sm:$0xf] %v1167
      %1180 = vst [vmem:[%s432 + $0x8] sm:$0xf] %v1168
      %1181 = vst [vmem:[%s432 + $0xc] sm:$0xf] %v1169
      %1182 = vst [vmem:[%s432 + $0x10] sm:$0xf] %v1170
      %1183 = vst [vmem:[%s432 + $0x14] sm:$0xf] %v1171
      %s1184 = smul.u32 6, %s22
      %p1185 = scmp.lt.s32.totalorder %s1184, 11
      %s1186 = scalar_select %p1185, %s1184, 11
      %s1187 = smul.addr %s1186, 4
      %s1188 = scalar_lea.vmem %s11, %s1187
      // Predicated region
      $region65: #{graphcast_forward.23} parent=63 // pred_check
        %p1189 = pneg %p286
      $region66: #{graphcast_forward.23} parent=63 // pred_check_branch
        %1191 = sbr.rel (%p1189) target = $region68
      $region67: #{graphcast_forward.23} parent=63 // pred_region
        %s1192 = smul.u32 6, %s22
      $region68: #{graphcast_forward.23} parent=63 // pred_fallthru
        _
    $region64: #{graphcast_forward.23} parent=5 // pred_fallthru
      _
    %p1193 = scmp.le.s32.totalorder 2, %s17
    // Predicated region
    $region69: #{graphcast_forward.23} parent=5 // pred_check
      %p1194 = pneg %p1193
    $region70: #{graphcast_forward.23} parent=5 // pred_check_branch
      %1196 = sbr.rel (%p1194) target = $region72
    $region71: #{graphcast_forward.23} parent=5 // pred_region
      %s1197 = ssub.s32 %s17, 2
      // Predicated region
      $region73: #{graphcast_forward.23} parent=71 // pred_check
        %p1198 = pneg %p292
      $region74: #{graphcast_forward.23} parent=71 // pred_check_branch
        %1200 = sbr.rel (%p1198) target = $region76
      $region75: #{graphcast_forward.23} parent=71 // pred_region
        %s1201 = smul.u32 6, %s23
        %p1202 = scmp.lt.s32.totalorder %s1201, 11
        %s1203 = scalar_select %p1202, %s1201, 11
        %s1204 = smul.addr %s1203, 4
        %s1205 = scalar_lea.vmem %s11, %s1204
      $region76: #{graphcast_forward.23} parent=71 // pred_fallthru
        _
    $region72: #{graphcast_forward.23} parent=5 // pred_fallthru
      _
  $region6: #{graphcast_forward.23} parent=0 // loop_footer
    %s21 = sadd.s32 1, %s17
  $region7: #{graphcast_forward.23} parent=0 // loop_footer_branch
    %16 = sbr.rel target = $region3
  $region8: #{graphcast_forward.23} parent=0 // loop_exit
    _

// kernel: graphcast_forward.24
$region0: #{graphcast_forward.24}
  #allocation0 [shape = 'u32[]', space=smem, size = 0x4, offset = 0x4, fixed_abs, tag = 'smem constant byte address 0x4 - core index']
  #allocation1 [shape = 'u32[144,128]{1,0:T(1,128)}', space=vmem, size = 0x12000, scoped, tag = 'internal scratch']
  %s0 = inlined_call_operand.vmem [shape: bf16[16,128], index: 0, kind: input, shape index: {}]
  %s1 = inlined_call_operand.vmem [shape: bf16[16,128], index: 1, kind: input, shape index: {}, may-alias: {1,9}]
  %s2 = inlined_call_operand.vmem [shape: bf16[128,128], index: 2, kind: input, shape index: {}]
  %s3 = inlined_call_operand.vmem [shape: bf16[128,128], index: 3, kind: input, shape index: {}]
  %s4 = inlined_call_operand.vmem [shape: f32[1,128], index: 4, kind: input, shape index: {}]
  %s5 = inlined_call_operand.vmem [shape: bf16[128,128], index: 5, kind: input, shape index: {}]
  %s6 = inlined_call_operand.vmem [shape: f32[1,128], index: 6, kind: input, shape index: {}]
  %s7 = inlined_call_operand.vmem [shape: f32[1,128], index: 7, kind: input, shape index: {}]
  %s8 = inlined_call_operand.vmem [shape: f32[1,128], index: 8, kind: input, shape index: {}]
  %s9 = inlined_call_operand.vmem [shape: bf16[16,128], index: 9, kind: input, shape index: {}, may-alias: {1,9}]
  %s10 = inlined_call_operand.vmem [shape: bf16[16,128], index: 10, kind: output, shape index: {}]
  %s11 = sld [smem:[#allocation0]]
  $region73: #{graphcast_forward.24} parent=0
    _
  %s13 = ssub.s32 1, %s11
  %s14 = scalar_select 0, %s13, %s11
  loop: start=0, step=1, limit=4
  $region2: #{graphcast_forward.24} parent=0 // loop_pre_header
    _
  $region3: #{graphcast_forward.24} parent=0 // loop_header
    %s16 = sphi 0, %s20
    %p17 = scmp.ge.s32.totalorder %s16, 4
    %s26 = sphi 0, %s28
    %s29 = sphi 0, %s26
    %s30 = sphi 0, %s29
    %s46 = sphi 0, %s30
    %s52 = sphi 0, %s54
    %s55 = sphi 0, %s52
    %s56 = sphi 0, %s55
    %s72 = sphi 0, %s56
    %s76 = sphi 0, %s76
    %s78 = sphi 0, %s76
    %s79 = sphi 0, %s78
    %s93 = sphi 0, %s79
    %s97 = sphi 0, %s97
    %s99 = sphi 0, %s97
    %s100 = sphi 0, %s99
    %s114 = sphi 0, %s100
    %s118 = sphi 0, %s118
    %s120 = sphi 0, %s118
    %s121 = sphi 0, %s120
    %s135 = sphi 0, %s121
    %s139 = sphi 0, %s139
    %s141 = sphi 0, %s139
    %s142 = sphi 0, %s141
    %s156 = sphi 0, %s142
    %s160 = sphi 0, %s160
    %s162 = sphi 0, %s160
    %s163 = sphi 0, %s162
    %s177 = sphi 0, %s163
    %s181 = sphi 0, %s181
    %s183 = sphi 0, %s181
    %s184 = sphi 0, %s183
    %s198 = sphi 0, %s184
    %s202 = sphi 0, %s202
    %s204 = sphi 0, %s202
    %s205 = sphi 0, %s204
    %s219 = sphi 0, %s205
    %s225 = sphi 0, %s227
    %s228 = sphi 0, %s225
    %s229 = sphi 0, %s228
    %s245 = sphi 0, %s229
    %s251 = sphi 0, %s253
    %s254 = sphi 0, %s251
    %s255 = sphi 0, %s254
    %s271 = sphi 0, %s255
  $region4: #{graphcast_forward.24} parent=0 // loop_header_branch
    %19 = sbr.rel (%p17) target = $region8
  $region5: #{graphcast_forward.24} parent=0 // loop_body
    %s21 = ssub.s32 %s16, 1
    %s22 = ssub.s32 %s16, 2
    %s23 = sadd.s32 %s16, 1
    %s24 = ssub.s32 %s16, %s23
    %p25 = scmp.eq.s32.totalorder %s24, 0
    %s27 = sadd.s32 %s26, 1
    %s28 = scalar_select %p25, %s26, %s27
    %p31 = pneg %p25
    %p32 = scmp.eq.s32.totalorder %s16, 1
    %p33 = por %p31, %p32
    %p34 = scmp.ne.s32.totalorder %s26, %s29
    %p35 = scmp.eq.s32.totalorder %s16, 0
    %p36 = por %p34, %p35
    %p37 = scmp.ne.s32.totalorder %s26, %s29
    %p38 = scmp.eq.s32.totalorder %s21, 1
    %p39 = por %p37, %p38
    %p40 = scmp.ne.s32.totalorder %s29, %s30
    %p41 = scmp.eq.s32.totalorder %s21, 0
    %p42 = por %p40, %p41
    %p43 = scmp.ne.s32.totalorder %s29, %s30
    %p44 = scmp.eq.s32.totalorder %s22, 1
    %p45 = por %p43, %p44
    %p47 = scmp.ne.s32.totalorder %s30, %s46
    %p48 = scmp.eq.s32.totalorder %s22, 0
    %p49 = por %p47, %p48
    %s50 = ssub.s32 %s16, %s23
    %p51 = scmp.eq.s32.totalorder %s50, 0
    %s53 = sadd.s32 %s52, 1
    %s54 = scalar_select %p51, %s52, %s53
    %p57 = pneg %p51
    %p58 = scmp.eq.s32.totalorder %s16, 1
    %p59 = por %p57, %p58
    %p60 = scmp.ne.s32.totalorder %s52, %s55
    %p61 = scmp.eq.s32.totalorder %s16, 0
    %p62 = por %p60, %p61
    %p63 = scmp.ne.s32.totalorder %s52, %s55
    %p64 = scmp.eq.s32.totalorder %s21, 1
    %p65 = por %p63, %p64
    %p66 = scmp.ne.s32.totalorder %s55, %s56
    %p67 = scmp.eq.s32.totalorder %s21, 0
    %p68 = por %p66, %p67
    %p69 = scmp.ne.s32.totalorder %s55, %s56
    %p70 = scmp.eq.s32.totalorder %s22, 1
    %p71 = por %p69, %p70
    %p73 = scmp.ne.s32.totalorder %s56, %s72
    %p74 = scmp.eq.s32.totalorder %s22, 0
    %p75 = por %p73, %p74
    %s77 = sadd.s32 %s76, 1
    %p80 = scmp.eq.s32.totalorder %s16, 1
    %p81 = scmp.ne.s32.totalorder %s76, %s78
    %p82 = scmp.eq.s32.totalorder %s16, 0
    %p83 = por %p81, %p82
    %p84 = scmp.ne.s32.totalorder %s76, %s78
    %p85 = scmp.eq.s32.totalorder %s21, 1
    %p86 = por %p84, %p85
    %p87 = scmp.ne.s32.totalorder %s78, %s79
    %p88 = scmp.eq.s32.totalorder %s21, 0
    %p89 = por %p87, %p88
    %p90 = scmp.ne.s32.totalorder %s78, %s79
    %p91 = scmp.eq.s32.totalorder %s22, 1
    %p92 = por %p90, %p91
    %p94 = scmp.ne.s32.totalorder %s79, %s93
    %p95 = scmp.eq.s32.totalorder %s22, 0
    %p96 = por %p94, %p95
    %s98 = sadd.s32 %s97, 1
    %p101 = scmp.eq.s32.totalorder %s16, 1
    %p102 = scmp.ne.s32.totalorder %s97, %s99
    %p103 = scmp.eq.s32.totalorder %s16, 0
    %p104 = por %p102, %p103
    %p105 = scmp.ne.s32.totalorder %s97, %s99
    %p106 = scmp.eq.s32.totalorder %s21, 1
    %p107 = por %p105, %p106
    %p108 = scmp.ne.s32.totalorder %s99, %s100
    %p109 = scmp.eq.s32.totalorder %s21, 0
    %p110 = por %p108, %p109
    %p111 = scmp.ne.s32.totalorder %s99, %s100
    %p112 = scmp.eq.s32.totalorder %s22, 1
    %p113 = por %p111, %p112
    %p115 = scmp.ne.s32.totalorder %s100, %s114
    %p116 = scmp.eq.s32.totalorder %s22, 0
    %p117 = por %p115, %p116
    %s119 = sadd.s32 %s118, 1
    %p122 = scmp.eq.s32.totalorder %s16, 1
    %p123 = scmp.ne.s32.totalorder %s118, %s120
    %p124 = scmp.eq.s32.totalorder %s16, 0
    %p125 = por %p123, %p124
    %p126 = scmp.ne.s32.totalorder %s118, %s120
    %p127 = scmp.eq.s32.totalorder %s21, 1
    %p128 = por %p126, %p127
    %p129 = scmp.ne.s32.totalorder %s120, %s121
    %p130 = scmp.eq.s32.totalorder %s21, 0
    %p131 = por %p129, %p130
    %p132 = scmp.ne.s32.totalorder %s120, %s121
    %p133 = scmp.eq.s32.totalorder %s22, 1
    %p134 = por %p132, %p133
    %p136 = scmp.ne.s32.totalorder %s121, %s135
    %p137 = scmp.eq.s32.totalorder %s22, 0
    %p138 = por %p136, %p137
    %s140 = sadd.s32 %s139, 1
    %p143 = scmp.eq.s32.totalorder %s16, 1
    %p144 = scmp.ne.s32.totalorder %s139, %s141
    %p145 = scmp.eq.s32.totalorder %s16, 0
    %p146 = por %p144, %p145
    %p147 = scmp.ne.s32.totalorder %s139, %s141
    %p148 = scmp.eq.s32.totalorder %s21, 1
    %p149 = por %p147, %p148
    %p150 = scmp.ne.s32.totalorder %s141, %s142
    %p151 = scmp.eq.s32.totalorder %s21, 0
    %p152 = por %p150, %p151
    %p153 = scmp.ne.s32.totalorder %s141, %s142
    %p154 = scmp.eq.s32.totalorder %s22, 1
    %p155 = por %p153, %p154
    %p157 = scmp.ne.s32.totalorder %s142, %s156
    %p158 = scmp.eq.s32.totalorder %s22, 0
    %p159 = por %p157, %p158
    %s161 = sadd.s32 %s160, 1
    %p164 = scmp.eq.s32.totalorder %s16, 1
    %p165 = scmp.ne.s32.totalorder %s160, %s162
    %p166 = scmp.eq.s32.totalorder %s16, 0
    %p167 = por %p165, %p166
    %p168 = scmp.ne.s32.totalorder %s160, %s162
    %p169 = scmp.eq.s32.totalorder %s21, 1
    %p170 = por %p168, %p169
    %p171 = scmp.ne.s32.totalorder %s162, %s163
    %p172 = scmp.eq.s32.totalorder %s21, 0
    %p173 = por %p171, %p172
    %p174 = scmp.ne.s32.totalorder %s162, %s163
    %p175 = scmp.eq.s32.totalorder %s22, 1
    %p176 = por %p174, %p175
    %p178 = scmp.ne.s32.totalorder %s163, %s177
    %p179 = scmp.eq.s32.totalorder %s22, 0
    %p180 = por %p178, %p179
    %s182 = sadd.s32 %s181, 1
    %p185 = scmp.eq.s32.totalorder %s16, 1
    %p186 = scmp.ne.s32.totalorder %s181, %s183
    %p187 = scmp.eq.s32.totalorder %s16, 0
    %p188 = por %p186, %p187
    %p189 = scmp.ne.s32.totalorder %s181, %s183
    %p190 = scmp.eq.s32.totalorder %s21, 1
    %p191 = por %p189, %p190
    %p192 = scmp.ne.s32.totalorder %s183, %s184
    %p193 = scmp.eq.s32.totalorder %s21, 0
    %p194 = por %p192, %p193
    %p195 = scmp.ne.s32.totalorder %s183, %s184
    %p196 = scmp.eq.s32.totalorder %s22, 1
    %p197 = por %p195, %p196
    %p199 = scmp.ne.s32.totalorder %s184, %s198
    %p200 = scmp.eq.s32.totalorder %s22, 0
    %p201 = por %p199, %p200
    %s203 = sadd.s32 %s202, 1
    %p206 = scmp.eq.s32.totalorder %s16, 1
    %p207 = scmp.ne.s32.totalorder %s202, %s204
    %p208 = scmp.eq.s32.totalorder %s16, 0
    %p209 = por %p207, %p208
    %p210 = scmp.ne.s32.totalorder %s202, %s204
    %p211 = scmp.eq.s32.totalorder %s21, 1
    %p212 = por %p210, %p211
    %p213 = scmp.ne.s32.totalorder %s204, %s205
    %p214 = scmp.eq.s32.totalorder %s21, 0
    %p215 = por %p213, %p214
    %p216 = scmp.ne.s32.totalorder %s204, %s205
    %p217 = scmp.eq.s32.totalorder %s22, 1
    %p218 = por %p216, %p217
    %p220 = scmp.ne.s32.totalorder %s205, %s219
    %p221 = scmp.eq.s32.totalorder %s22, 0
    %p222 = por %p220, %p221
    %s223 = ssub.s32 %s16, %s23
    %p224 = scmp.eq.s32.totalorder %s223, 0
    %s226 = sadd.s32 %s225, 1
    %s227 = scalar_select %p224, %s225, %s226
    %p230 = pneg %p224
    %p231 = scmp.eq.s32.totalorder %s16, 1
    %p232 = por %p230, %p231
    %p233 = scmp.ne.s32.totalorder %s225, %s228
    %p234 = scmp.eq.s32.totalorder %s16, 0
    %p235 = por %p233, %p234
    %p236 = scmp.ne.s32.totalorder %s225, %s228
    %p237 = scmp.eq.s32.totalorder %s21, 1
    %p238 = por %p236, %p237
    %p239 = scmp.ne.s32.totalorder %s228, %s229
    %p240 = scmp.eq.s32.totalorder %s21, 0
    %p241 = por %p239, %p240
    %p242 = scmp.ne.s32.totalorder %s228, %s229
    %p243 = scmp.eq.s32.totalorder %s22, 1
    %p244 = por %p242, %p243
    %p246 = scmp.ne.s32.totalorder %s229, %s245
    %p247 = scmp.eq.s32.totalorder %s22, 0
    %p248 = por %p246, %p247
    %s249 = ssub.s32 %s16, %s23
    %p250 = scmp.eq.s32.totalorder %s249, 0
    %s252 = sadd.s32 %s251, 1
    %s253 = scalar_select %p250, %s251, %s252
    %p256 = pneg %p250
    %p257 = scmp.eq.s32.totalorder %s16, 1
    %p258 = por %p256, %p257
    %p259 = scmp.ne.s32.totalorder %s251, %s254
    %p260 = scmp.eq.s32.totalorder %s16, 0
    %p261 = por %p259, %p260
    %p262 = scmp.ne.s32.totalorder %s251, %s254
    %p263 = scmp.eq.s32.totalorder %s21, 1
    %p264 = por %p262, %p263
    %p265 = scmp.ne.s32.totalorder %s254, %s255
    %p266 = scmp.eq.s32.totalorder %s21, 0
    %p267 = por %p265, %p266
    %p268 = scmp.ne.s32.totalorder %s254, %s255
    %p269 = scmp.eq.s32.totalorder %s22, 1
    %p270 = por %p268, %p269
    %p272 = scmp.ne.s32.totalorder %s255, %s271
    %p273 = scmp.eq.s32.totalorder %s22, 0
    %p274 = por %p272, %p273
    %p275 = scmp.le.s32.totalorder 1, %s16
    %p276 = scmp.lt.s32.totalorder %s16, 3
    %p277 = pnand %p275, %p276
    %p278 = pneg %p277
    // Predicated region
    $region9: #{graphcast_forward.24} parent=5 // pred_check
      _
    $region10: #{graphcast_forward.24} parent=5 // pred_check_branch
      %280 = sbr.rel (%p277) target = $region12
    $region11: #{graphcast_forward.24} parent=5 // pred_region
      %s281 = ssub.s32 %s16, 1
      // Predicated region
      $region13: #{graphcast_forward.24} parent=11 // pred_check
        %p282 = pneg %p89
      $region14: #{graphcast_forward.24} parent=11 // pred_check_branch
        %284 = sbr.rel (%p282) target = $region16
      $region15: #{graphcast_forward.24} parent=11 // pred_region
        _
      $region16: #{graphcast_forward.24} parent=11 // pred_fallthru
        _
      // Predicated region
      $region17: #{graphcast_forward.24} parent=11 // pred_check
        %p285 = pneg %p110
      $region18: #{graphcast_forward.24} parent=11 // pred_check_branch
        %287 = sbr.rel (%p285) target = $region20
      $region19: #{graphcast_forward.24} parent=11 // pred_region
        _
      $region20: #{graphcast_forward.24} parent=11 // pred_fallthru
        _
      // Predicated region
      $region21: #{graphcast_forward.24} parent=11 // pred_check
        %p288 = pneg %p131
      $region22: #{graphcast_forward.24} parent=11 // pred_check_branch
        %290 = sbr.rel (%p288) target = $region24
      $region23: #{graphcast_forward.24} parent=11 // pred_region
        _
      $region24: #{graphcast_forward.24} parent=11 // pred_fallthru
        _
      // Predicated region
      $region25: #{graphcast_forward.24} parent=11 // pred_check
        %p291 = pneg %p152
      $region26: #{graphcast_forward.24} parent=11 // pred_check_branch
        %293 = sbr.rel (%p291) target = $region28
      $region27: #{graphcast_forward.24} parent=11 // pred_region
        _
      $region28: #{graphcast_forward.24} parent=11 // pred_fallthru
        _
      // Predicated region
      $region29: #{graphcast_forward.24} parent=11 // pred_check
        %p294 = pneg %p173
      $region30: #{graphcast_forward.24} parent=11 // pred_check_branch
        %296 = sbr.rel (%p294) target = $region32
      $region31: #{graphcast_forward.24} parent=11 // pred_region
        _
      $region32: #{graphcast_forward.24} parent=11 // pred_fallthru
        _
      // Predicated region
      $region33: #{graphcast_forward.24} parent=11 // pred_check
        %p297 = pneg %p194
      $region34: #{graphcast_forward.24} parent=11 // pred_check_branch
        %299 = sbr.rel (%p297) target = $region36
      $region35: #{graphcast_forward.24} parent=11 // pred_region
        _
      $region36: #{graphcast_forward.24} parent=11 // pred_fallthru
        _
      // Predicated region
      $region37: #{graphcast_forward.24} parent=11 // pred_check
        %p300 = pneg %p215
      $region38: #{graphcast_forward.24} parent=11 // pred_check_branch
        %302 = sbr.rel (%p300) target = $region40
      $region39: #{graphcast_forward.24} parent=11 // pred_region
        _
      $region40: #{graphcast_forward.24} parent=11 // pred_fallthru
        _
    $region12: #{graphcast_forward.24} parent=5 // pred_fallthru
      _
    %p303 = scmp.lt.s32.totalorder %s16, 2
    // Predicated region
    $region41: #{graphcast_forward.24} parent=5 // pred_check
      %p304 = pneg %p303
    $region42: #{graphcast_forward.24} parent=5 // pred_check_branch
      %306 = sbr.rel (%p304) target = $region44
    $region43: #{graphcast_forward.24} parent=5 // pred_region
      // Predicated region
      $region45: #{graphcast_forward.24} parent=43 // pred_check
        %p307 = pneg %p36
      $region46: #{graphcast_forward.24} parent=43 // pred_check_branch
        %309 = sbr.rel (%p307) target = $region48
      $region47: #{graphcast_forward.24} parent=43 // pred_region
        %p310 = scmp.lt.s32.totalorder %s16, 1
        %s311 = scalar_select %p310, %s16, 1
        %s312 = smul.addr %s311, 4
        %s313 = scalar_lea.vmem %s0, %s312
      $region48: #{graphcast_forward.24} parent=43 // pred_fallthru
        _
      // Predicated region
      $region49: #{graphcast_forward.24} parent=43 // pred_check
        %p314 = pneg %p62
      $region50: #{graphcast_forward.24} parent=43 // pred_check_branch
        %316 = sbr.rel (%p314) target = $region52
      $region51: #{graphcast_forward.24} parent=43 // pred_region
        %p317 = scmp.lt.s32.totalorder %s16, 1
        %s318 = scalar_select %p317, %s16, 1
        %s319 = smul.addr %s318, 4
        %s320 = scalar_lea.vmem %s1, %s319
      $region52: #{graphcast_forward.24} parent=43 // pred_fallthru
        _
      // Predicated region
      $region53: #{graphcast_forward.24} parent=43 // pred_check
        %p321 = pneg %p235
      $region54: #{graphcast_forward.24} parent=43 // pred_check_branch
        %323 = sbr.rel (%p321) target = $region56
      $region55: #{graphcast_forward.24} parent=43 // pred_region
        %p324 = scmp.lt.s32.totalorder %s16, 1
        %s325 = scalar_select %p324, %s16, 1
        %s326 = smul.addr %s325, 4
        %s327 = scalar_lea.vmem %s9, %s326
      $region56: #{graphcast_forward.24} parent=43 // pred_fallthru
        _
    $region44: #{graphcast_forward.24} parent=5 // pred_fallthru
      _
    %p328 = scmp.le.s32.totalorder 1, %s16
    %p329 = scmp.lt.s32.totalorder %s16, 3
    %p330 = pnand %p328, %p329
    %p331 = pneg %p330
    // Predicated region
    $region57: #{graphcast_forward.24} parent=5 // pred_check
      _
    $region58: #{graphcast_forward.24} parent=5 // pred_check_branch
      %333 = sbr.rel (%p330) target = $region60
    $region59: #{graphcast_forward.24} parent=5 // pred_region
      %s334 = ssub.s32 %s16, 1
      %p335 = scmp.lt.s32.totalorder %s21, 1
      %s336 = scalar_select %p335, %s21, 1
      %s337 = smul.addr %s336, 4
      %s338 = scalar_lea.vmem %s0, %s337
      %p339 = pneg %p42
      %p340 = pneg %p39
      %p341 = scmp.lt.s32.totalorder %s21, 1
      %s342 = scalar_select %p341, %s21, 1
      %s343 = smul.addr %s342, 4
      %s344 = scalar_lea.vmem %s1, %s343
      %p345 = pneg %p68
      %p346 = pneg %p65
      %p347 = pneg %p89
      %p348 = pneg %p86
      %p349 = pneg %p110
      %p350 = pneg %p107
      %p351 = pneg %p131
      %p352 = pneg %p128
      %p353 = pneg %p152
      %p354 = pneg %p149
      %p355 = pneg %p173
      %p356 = pneg %p170
      %p357 = pneg %p194
      %p358 = pneg %p191
      %p359 = pneg %p215
      %p360 = pneg %p212
      %p361 = scmp.lt.s32.totalorder %s21, 1
      %s362 = scalar_select %p361, %s21, 1
      %s363 = smul.addr %s362, 4
      %s364 = scalar_lea.vmem %s9, %s363
      %p365 = pneg %p241
      %p366 = pneg %p238
      %p367 = pneg %p267
      %p368 = pneg %p264
      %p369 = scmp.lt.s32.totalorder %s21, 1
      %s370 = scalar_select %p369, %s21, 1
      %s371 = smul.addr %s370, 4
      %s372 = scalar_lea.vmem %s10, %s371
      %p373 = scmp.lt.s32.totalorder %s21, 1
      %s374 = scalar_select %p373, %s21, 1
      %s375 = smul.addr %s374, 4
      %s376 = scalar_lea.vmem %s0, %s375
      %p377 = scmp.lt.s32.totalorder %s21, 1
      %s378 = scalar_select %p377, %s21, 1
      %s379 = smul.addr %s378, 4
      %s380 = scalar_lea.vmem %s1, %s379
      %p381 = scmp.lt.s32.totalorder %s21, 1
      %s382 = scalar_select %p381, %s21, 1
      %s383 = smul.addr %s382, 4
      %s384 = scalar_lea.vmem %s9, %s383
      %p385 = scmp.lt.s32.totalorder %s21, 1
      %s386 = scalar_select %p385, %s21, 1
      %s387 = smul.addr %s386, 4
      %s388 = scalar_lea.vmem %s10, %s387
      %v390 = vld [vmem:[%s376] sm:$0xf]
      %v391 = vld [vmem:[%s2] sm:$0xf]
      %v392 = vld [vmem:[%s2 + $0x4] sm:$0xf]
      %v393 = vld [vmem:[%s2 + $0x8] sm:$0xf]
      %v394 = vld [vmem:[%s2 + $0xc] sm:$0xf]
      %v395 = vld [vmem:[%s2 + $0x10] sm:$0xf]
      %v396 = vld [vmem:[%s2 + $0x14] sm:$0xf]
      %v397 = vld [vmem:[%s2 + $0x18] sm:$0xf]
      %v398 = vld [vmem:[%s2 + $0x1c] sm:$0xf]
      %v399 = vld [vmem:[%s2 + $0x20] sm:$0xf]
      %v400 = vld [vmem:[%s2 + $0x24] sm:$0xf]
      %v401 = vld [vmem:[%s2 + $0x28] sm:$0xf]
      %v402 = vld [vmem:[%s2 + $0x2c] sm:$0xf]
      %v403 = vld [vmem:[%s2 + $0x30] sm:$0xf]
      %v404 = vld [vmem:[%s2 + $0x34] sm:$0xf]
      %v405 = vld [vmem:[%s2 + $0x38] sm:$0xf]
      %v406 = vld [vmem:[%s2 + $0x3c] sm:$0xf]
      %v407 = vld [vmem:[%s380] sm:$0xf]
      %v408 = vld [vmem:[%s3] sm:$0xf]
      %v409 = vld [vmem:[%s3 + $0x4] sm:$0xf]
      %v410 = vld [vmem:[%s3 + $0x8] sm:$0xf]
      %v411 = vld [vmem:[%s3 + $0xc] sm:$0xf]
      %v412 = vld [vmem:[%s3 + $0x10] sm:$0xf]
      %v413 = vld [vmem:[%s3 + $0x14] sm:$0xf]
      %v414 = vld [vmem:[%s3 + $0x18] sm:$0xf]
      %v415 = vld [vmem:[%s3 + $0x1c] sm:$0xf]
      %v416 = vld [vmem:[%s3 + $0x20] sm:$0xf]
      %v417 = vld [vmem:[%s3 + $0x24] sm:$0xf]
      %v418 = vld [vmem:[%s3 + $0x28] sm:$0xf]
      %v419 = vld [vmem:[%s3 + $0x2c] sm:$0xf]
      %v420 = vld [vmem:[%s3 + $0x30] sm:$0xf]
      %v421 = vld [vmem:[%s3 + $0x34] sm:$0xf]
      %v422 = vld [vmem:[%s3 + $0x38] sm:$0xf]
      %v423 = vld [vmem:[%s3 + $0x3c] sm:$0xf]
      %v440 = vunpack.c.l.b16 %v408
      %v441 = vunpack.c.l.b16 %v409
      %v442 = vunpack.c.l.b16 %v410
      %v443 = vunpack.c.l.b16 %v411
      %v444 = vunpack.c.l.b16 %v412
      %v445 = vunpack.c.l.b16 %v413
      %v446 = vunpack.c.l.b16 %v414
      %v447 = vunpack.c.l.b16 %v415
      %v448 = vunpack.c.l.b16 %v416
      %v449 = vunpack.c.l.b16 %v417
      %v450 = vunpack.c.l.b16 %v418
      %v451 = vunpack.c.l.b16 %v419
      %v452 = vunpack.c.l.b16 %v420
      %v453 = vunpack.c.l.b16 %v421
      %v454 = vunpack.c.l.b16 %v422
      %v455 = vunpack.c.l.b16 %v423
      %v456 = vpack.c.b16 %v441, %v440
      %v457 = vpack.c.b16 %v443, %v442
      %v458 = vpack.c.b16 %v445, %v444
      %v459 = vpack.c.b16 %v447, %v446
      %v460 = vpack.c.b16 %v449, %v448
      %v461 = vpack.c.b16 %v451, %v450
      %v462 = vpack.c.b16 %v453, %v452
      %v463 = vpack.c.b16 %v455, %v454
      %472 = vmatprep.subr.bf16.mxu0 0
      %473 = vmatpush1.bf16.msra.mxu0 %v463
      %474 = vmatprep.subr.bf16.mxu0 0
      %475 = vmatpush1.bf16.msra.mxu0 %v462
      %476 = vmatprep.subr.bf16.mxu0 0
      %477 = vmatpush1.bf16.msra.mxu0 %v461
      %478 = vmatprep.subr.bf16.mxu0 0
      %479 = vmatpush1.bf16.msra.mxu0 %v460
      %480 = vmatprep.subr.bf16.mxu0 0
      %481 = vmatpush1.bf16.msra.mxu0 %v459
      %482 = vmatprep.subr.bf16.mxu0 0
      %483 = vmatpush1.bf16.msra.mxu0 %v458
      %484 = vmatprep.subr.bf16.mxu0 0
      %485 = vmatpush1.bf16.msra.mxu0 %v457
      %486 = vmatprep.subr.bf16.mxu0 0
      %487 = vmatpush1.bf16.msra.mxu0 %v456
      %488 = vmatprep.subr.bf16.mxu0 0
      %489 = vmatpush2.bf16.msra.mxu0 0
      %490 = vmatprep.subr.bf16.mxu0 0
      %491 = vmatpush2.bf16.msra.mxu0 0
      %492 = vmatprep.subr.bf16.mxu0 0
      %493 = vmatpush2.bf16.msra.mxu0 0
      %494 = vmatprep.subr.bf16.mxu0 0
      %495 = vmatpush2.bf16.msra.mxu0 0
      %496 = vmatprep.subr.bf16.mxu0 0
      %497 = vmatpush2.bf16.msra.mxu0 0
      %498 = vmatprep.subr.bf16.mxu0 0
      %499 = vmatpush2.bf16.msra.mxu0 0
      %500 = vmatprep.subr.bf16.mxu0 0
      %501 = vmatpush2.bf16.msra.mxu0 0
      %502 = vmatprep.subr.bf16.mxu0 0
      %503 = vmatpush2.bf16.msra.mxu0 0
      %504 = vmatprep.mubr.bf16.mxu0 0
      %505 = vmatmul.mubr.bf16.gmra.mxu0 %v407
      %v506 = vpop.f32.mrf.mxu0
      %v507 = vadd.f32 0.0, %v506
      %v508 = vpop.f32.mrf.mxu0
      %v509 = vpop.f32.mrf.mxu0
      %v510 = vpop.f32.mrf.mxu0
      %511 = vdwg.mxu0
      %v528 = vunpack.c.l.b16 %v391
      %v529 = vunpack.c.l.b16 %v392
      %v530 = vunpack.c.l.b16 %v393
      %v531 = vunpack.c.l.b16 %v394
      %v532 = vunpack.c.l.b16 %v395
      %v533 = vunpack.c.l.b16 %v396
      %v534 = vunpack.c.l.b16 %v397
      %v535 = vunpack.c.l.b16 %v398
      %v536 = vunpack.c.l.b16 %v399
      %v537 = vunpack.c.l.b16 %v400
      %v538 = vunpack.c.l.b16 %v401
      %v539 = vunpack.c.l.b16 %v402
      %v540 = vunpack.c.l.b16 %v403
      %v541 = vunpack.c.l.b16 %v404
      %v542 = vunpack.c.l.b16 %v405
      %v543 = vunpack.c.l.b16 %v406
      %v544 = vpack.c.b16 %v529, %v528
      %v545 = vpack.c.b16 %v531, %v530
      %v546 = vpack.c.b16 %v533, %v532
      %v547 = vpack.c.b16 %v535, %v534
      %v548 = vpack.c.b16 %v537, %v536
      %v549 = vpack.c.b16 %v539, %v538
      %v550 = vpack.c.b16 %v541, %v540
      %v551 = vpack.c.b16 %v543, %v542
      %560 = vmatprep.subr.bf16.mxu0 0
      %561 = vmatpush1.bf16.msra.mxu0 %v551
      %562 = vmatprep.subr.bf16.mxu0 0
      %563 = vmatpush1.bf16.msra.mxu0 %v550
      %564 = vmatprep.subr.bf16.mxu0 0
      %565 = vmatpush1.bf16.msra.mxu0 %v549
      %566 = vmatprep.subr.bf16.mxu0 0
      %567 = vmatpush1.bf16.msra.mxu0 %v548
      %568 = vmatprep.subr.bf16.mxu0 0
      %569 = vmatpush1.bf16.msra.mxu0 %v547
      %570 = vmatprep.subr.bf16.mxu0 0
      %571 = vmatpush1.bf16.msra.mxu0 %v546
      %572 = vmatprep.subr.bf16.mxu0 0
      %573 = vmatpush1.bf16.msra.mxu0 %v545
      %574 = vmatprep.subr.bf16.mxu0 0
      %575 = vmatpush1.bf16.msra.mxu0 %v544
      %576 = vmatprep.subr.bf16.mxu0 0
      %577 = vmatpush2.bf16.msra.mxu0 0
      %578 = vmatprep.subr.bf16.mxu0 0
      %579 = vmatpush2.bf16.msra.mxu0 0
      %580 = vmatprep.subr.bf16.mxu0 0
      %581 = vmatpush2.bf16.msra.mxu0 0
      %582 = vmatprep.subr.bf16.mxu0 0
      %583 = vmatpush2.bf16.msra.mxu0 0
      %584 = vmatprep.subr.bf16.mxu0 0
      %585 = vmatpush2.bf16.msra.mxu0 0
      %586 = vmatprep.subr.bf16.mxu0 0
      %587 = vmatpush2.bf16.msra.mxu0 0
      %588 = vmatprep.subr.bf16.mxu0 0
      %589 = vmatpush2.bf16.msra.mxu0 0
      %590 = vmatprep.subr.bf16.mxu0 0
      %591 = vmatpush2.bf16.msra.mxu0 0
      %592 = vmatprep.mubr.bf16.mxu0 0
      %593 = vmatmul.mubr.bf16.gmra.mxu0 %v390
      %v594 = vpop.f32.mrf.mxu0
      %v595 = vadd.f32 %v507, %v594
      %v596 = vpop.f32.mrf.mxu0
      %v597 = vpop.f32.mrf.mxu0
      %v598 = vpop.f32.mrf.mxu0
      %599 = vdwg.mxu0
      %v600 = vld [vmem:[%s4] sm:$0x1]
      %v602 = vlaneseq
      %v603 = vshrl.u32 %v602, 7
      %v604 = vsub.s32 0, %v603
      %v605 = vrot.slane %v600, %v604
      %v607 = vadd.f32 %v595, %v605
      %v608 = vxor.u32 %v607, 2147483648
      %v609 = vmul.f32 %v608, 1.442695
      %v610 = vpow.pop %v609
      %v611 = vadd.f32 %v610, 1.0
      %v612 = vrcp.pop %v611
      %v613 = vmul.f32 1.0, %v612
      %v614 = vmul.f32 %v607, %v613
      %v615 = vpack.c.bf16 %v614, %v614
      %v616 = vld [vmem:[%s5] sm:$0xf]
      %v617 = vld [vmem:[%s5 + $0x4] sm:$0xf]
      %v618 = vld [vmem:[%s5 + $0x8] sm:$0xf]
      %v619 = vld [vmem:[%s5 + $0xc] sm:$0xf]
      %v620 = vld [vmem:[%s5 + $0x10] sm:$0xf]
      %v621 = vld [vmem:[%s5 + $0x14] sm:$0xf]
      %v622 = vld [vmem:[%s5 + $0x18] sm:$0xf]
      %v623 = vld [vmem:[%s5 + $0x1c] sm:$0xf]
      %v624 = vld [vmem:[%s5 + $0x20] sm:$0xf]
      %v625 = vld [vmem:[%s5 + $0x24] sm:$0xf]
      %v626 = vld [vmem:[%s5 + $0x28] sm:$0xf]
      %v627 = vld [vmem:[%s5 + $0x2c] sm:$0xf]
      %v628 = vld [vmem:[%s5 + $0x30] sm:$0xf]
      %v629 = vld [vmem:[%s5 + $0x34] sm:$0xf]
      %v630 = vld [vmem:[%s5 + $0x38] sm:$0xf]
      %v631 = vld [vmem:[%s5 + $0x3c] sm:$0xf]
      %v632 = vld [vmem:[%s6] sm:$0x1]
      %v634 = vlaneseq
      %v635 = vshrl.u32 %v634, 7
      %v636 = vsub.s32 0, %v635
      %v637 = vrot.slane %v632, %v636
      %v655 = vunpack.c.l.b16 %v616
      %v656 = vunpack.c.l.b16 %v617
      %v657 = vunpack.c.l.b16 %v618
      %v658 = vunpack.c.l.b16 %v619
      %v659 = vunpack.c.l.b16 %v620
      %v660 = vunpack.c.l.b16 %v621
      %v661 = vunpack.c.l.b16 %v622
      %v662 = vunpack.c.l.b16 %v623
      %v663 = vunpack.c.l.b16 %v624
      %v664 = vunpack.c.l.b16 %v625
      %v665 = vunpack.c.l.b16 %v626
      %v666 = vunpack.c.l.b16 %v627
      %v667 = vunpack.c.l.b16 %v628
      %v668 = vunpack.c.l.b16 %v629
      %v669 = vunpack.c.l.b16 %v630
      %v670 = vunpack.c.l.b16 %v631
      %v671 = vpack.c.b16 %v656, %v655
      %v672 = vpack.c.b16 %v658, %v657
      %v673 = vpack.c.b16 %v660, %v659
      %v674 = vpack.c.b16 %v662, %v661
      %v675 = vpack.c.b16 %v664, %v663
      %v676 = vpack.c.b16 %v666, %v665
      %v677 = vpack.c.b16 %v668, %v667
      %v678 = vpack.c.b16 %v670, %v669
      %687 = vmatprep.subr.bf16.mxu0 0
      %688 = vmatpush1.bf16.msra.mxu0 %v678
      %689 = vmatprep.subr.bf16.mxu0 0
      %690 = vmatpush1.bf16.msra.mxu0 %v677
      %691 = vmatprep.subr.bf16.mxu0 0
      %692 = vmatpush1.bf16.msra.mxu0 %v676
      %693 = vmatprep.subr.bf16.mxu0 0
      %694 = vmatpush1.bf16.msra.mxu0 %v675
      %695 = vmatprep.subr.bf16.mxu0 0
      %696 = vmatpush1.bf16.msra.mxu0 %v674
      %697 = vmatprep.subr.bf16.mxu0 0
      %698 = vmatpush1.bf16.msra.mxu0 %v673
      %699 = vmatprep.subr.bf16.mxu0 0
      %700 = vmatpush1.bf16.msra.mxu0 %v672
      %701 = vmatprep.subr.bf16.mxu0 0
      %702 = vmatpush1.bf16.msra.mxu0 %v671
      %703 = vmatprep.subr.bf16.mxu0 0
      %704 = vmatpush2.bf16.msra.mxu0 0
      %705 = vmatprep.subr.bf16.mxu0 0
      %706 = vmatpush2.bf16.msra.mxu0 0
      %707 = vmatprep.subr.bf16.mxu0 0
      %708 = vmatpush2.bf16.msra.mxu0 0
      %709 = vmatprep.subr.bf16.mxu0 0
      %710 = vmatpush2.bf16.msra.mxu0 0
      %711 = vmatprep.subr.bf16.mxu0 0
      %712 = vmatpush2.bf16.msra.mxu0 0
      %713 = vmatprep.subr.bf16.mxu0 0
      %714 = vmatpush2.bf16.msra.mxu0 0
      %715 = vmatprep.subr.bf16.mxu0 0
      %716 = vmatpush2.bf16.msra.mxu0 0
      %717 = vmatprep.subr.bf16.mxu0 0
      %718 = vmatpush2.bf16.msra.mxu0 0
      %719 = vmatprep.mubr.bf16.mxu0 0
      %720 = vmatmul.mubr.bf16.gmra.mxu0 %v615
      %v721 = vpop.f32.mrf.mxu0
      %v722 = vadd.f32 %v637, %v721
      %v723 = vpop.f32.mrf.mxu0
      %v724 = vpop.f32.mrf.mxu0
      %v725 = vpop.f32.mrf.mxu0
      %726 = vdwg.mxu0
      %727 = vadd.xlane.f32.xlu0 %v722
      %v728 = vpop.xlane.xlu0 %727
      %v729 = vmul.f32 %v728, 0.0078125
      %v730 = vsub.f32 %v722, %v729
      %v731 = vmul.f32 %v730, %v730
      %732 = vadd.xlane.f32.xlu0 %v731
      %v733 = vpop.xlane.xlu0 %732
      %v734 = vmul.f32 %v733, 0.0078125
      %v735 = vadd.f32 %v734, 1e-05
      %v736 = vrsqrt.pop %v735
      %v737 = vmul.f32 %v730, %v736
      %v738 = vld [vmem:[%s7] sm:$0x1]
      %v740 = vlaneseq
      %v741 = vshrl.u32 %v740, 7
      %v742 = vsub.s32 0, %v741
      %v743 = vrot.slane %v738, %v742
      %v745 = vmul.f32 %v737, %v743
      %v746 = vld [vmem:[%s8] sm:$0x1]
      %v748 = vlaneseq
      %v749 = vshrl.u32 %v748, 7
      %v750 = vsub.s32 0, %v749
      %v751 = vrot.slane %v746, %v750
      %v753 = vadd.f32 %v745, %v751
      %v754 = vld [vmem:[%s384] sm:$0xf]
      %v755 = vunpack.c.l.bf16 %v754
      %v756 = vadd.f32 %v753, %v755
      %v757 = vpack.c.bf16 %v756, %v756
      %758 = vst [vmem:[%s388] sm:$0xf] %v757
      %p759 = scmp.lt.s32.totalorder %s21, 1
      %s760 = scalar_select %p759, %s21, 1
      %s761 = smul.addr %s760, 4
      %s762 = scalar_lea.vmem %s10, %s761
      // Predicated region
      $region61: #{graphcast_forward.24} parent=59 // pred_check
        %p763 = pneg %p264
      $region62: #{graphcast_forward.24} parent=59 // pred_check_branch
        %765 = sbr.rel (%p763) target = $region64
      $region63: #{graphcast_forward.24} parent=59 // pred_region
        _
      $region64: #{graphcast_forward.24} parent=59 // pred_fallthru
        _
    $region60: #{graphcast_forward.24} parent=5 // pred_fallthru
      _
    %p766 = scmp.le.s32.totalorder 2, %s16
    // Predicated region
    $region65: #{graphcast_forward.24} parent=5 // pred_check
      %p767 = pneg %p766
    $region66: #{graphcast_forward.24} parent=5 // pred_check_branch
      %769 = sbr.rel (%p767) target = $region68
    $region67: #{graphcast_forward.24} parent=5 // pred_region
      %s770 = ssub.s32 %s16, 2
      // Predicated region
      $region69: #{graphcast_forward.24} parent=67 // pred_check
        %p771 = pneg %p270
      $region70: #{graphcast_forward.24} parent=67 // pred_check_branch
        %773 = sbr.rel (%p771) target = $region72
      $region71: #{graphcast_forward.24} parent=67 // pred_region
        %p774 = scmp.lt.s32.totalorder %s22, 1
        %s775 = scalar_select %p774, %s22, 1
        %s776 = smul.addr %s775, 4
        %s777 = scalar_lea.vmem %s10, %s776
      $region72: #{graphcast_forward.24} parent=67 // pred_fallthru
        _
    $region68: #{graphcast_forward.24} parent=5 // pred_fallthru
      _
  $region6: #{graphcast_forward.24} parent=0 // loop_footer
    %s20 = sadd.s32 1, %s16
  $region7: #{graphcast_forward.24} parent=0 // loop_footer_branch
    %15 = sbr.rel target = $region3
  $region8: #{graphcast_forward.24} parent=0 // loop_exit
    _

// kernel: graphcast_forward.22
$region0: #{graphcast_forward.22}
  #allocation0 [shape = 'u32[]', space=smem, size = 0x4, offset = 0x4, fixed_abs, tag = 'smem constant byte address 0x4 - core index']
  #allocation1 [shape = 'u32[144,128]{1,0:T(1,128)}', space=vmem, size = 0x12000, scoped, tag = 'internal scratch']
  %s0 = inlined_call_operand.vmem [shape: f32[48,4], index: 0, kind: input, shape index: {}]
  %s1 = inlined_call_operand.vmem [shape: bf16[4,128], index: 1, kind: input, shape index: {}]
  %s2 = inlined_call_operand.vmem [shape: f32[1,128], index: 2, kind: input, shape index: {}]
  %s3 = inlined_call_operand.vmem [shape: bf16[128,128], index: 3, kind: input, shape index: {}]
  %s4 = inlined_call_operand.vmem [shape: f32[1,128], index: 4, kind: input, shape index: {}]
  %s5 = inlined_call_operand.vmem [shape: f32[1,128], index: 5, kind: input, shape index: {}]
  %s6 = inlined_call_operand.vmem [shape: f32[1,128], index: 6, kind: input, shape index: {}]
  %s7 = inlined_call_operand.vmem [shape: bf16[48,128], index: 7, kind: output, shape index: {}]
  %s8 = sld [smem:[#allocation0]]
  $region61: #{graphcast_forward.22} parent=0
    _
  %s10 = ssub.s32 1, %s8
  %s11 = scalar_select 0, %s10, %s8
  loop: start=0, step=1, limit=4
  $region2: #{graphcast_forward.22} parent=0 // loop_pre_header
    _
  $region3: #{graphcast_forward.22} parent=0 // loop_header
    %s13 = sphi 0, %s17
    %p14 = scmp.ge.s32.totalorder %s13, 4
    %s23 = sphi 0, %s25
    %s26 = sphi 0, %s23
    %s27 = sphi 0, %s26
    %s43 = sphi 0, %s27
    %s47 = sphi 0, %s47
    %s49 = sphi 0, %s47
    %s50 = sphi 0, %s49
    %s64 = sphi 0, %s50
    %s68 = sphi 0, %s68
    %s70 = sphi 0, %s68
    %s71 = sphi 0, %s70
    %s85 = sphi 0, %s71
    %s89 = sphi 0, %s89
    %s91 = sphi 0, %s89
    %s92 = sphi 0, %s91
    %s106 = sphi 0, %s92
    %s110 = sphi 0, %s110
    %s112 = sphi 0, %s110
    %s113 = sphi 0, %s112
    %s127 = sphi 0, %s113
    %s131 = sphi 0, %s131
    %s133 = sphi 0, %s131
    %s134 = sphi 0, %s133
    %s148 = sphi 0, %s134
    %s152 = sphi 0, %s152
    %s154 = sphi 0, %s152
    %s155 = sphi 0, %s154
    %s169 = sphi 0, %s155
    %s175 = sphi 0, %s177
    %s178 = sphi 0, %s175
    %s179 = sphi 0, %s178
    %s195 = sphi 0, %s179
  $region4: #{graphcast_forward.22} parent=0 // loop_header_branch
    %16 = sbr.rel (%p14) target = $region8
  $region5: #{graphcast_forward.22} parent=0 // loop_body
    %s18 = ssub.s32 %s13, 1
    %s19 = ssub.s32 %s13, 2
    %s20 = sadd.s32 %s13, 1
    %s21 = ssub.s32 %s13, %s20
    %p22 = scmp.eq.s32.totalorder %s21, 0
    %s24 = sadd.s32 %s23, 1
    %s25 = scalar_select %p22, %s23, %s24
    %p28 = pneg %p22
    %p29 = scmp.eq.s32.totalorder %s13, 1
    %p30 = por %p28, %p29
    %p31 = scmp.ne.s32.totalorder %s23, %s26
    %p32 = scmp.eq.s32.totalorder %s13, 0
    %p33 = por %p31, %p32
    %p34 = scmp.ne.s32.totalorder %s23, %s26
    %p35 = scmp.eq.s32.totalorder %s18, 1
    %p36 = por %p34, %p35
    %p37 = scmp.ne.s32.totalorder %s26, %s27
    %p38 = scmp.eq.s32.totalorder %s18, 0
    %p39 = por %p37, %p38
    %p40 = scmp.ne.s32.totalorder %s26, %s27
    %p41 = scmp.eq.s32.totalorder %s19, 1
    %p42 = por %p40, %p41
    %p44 = scmp.ne.s32.totalorder %s27, %s43
    %p45 = scmp.eq.s32.totalorder %s19, 0
    %p46 = por %p44, %p45
    %s48 = sadd.s32 %s47, 1
    %p51 = scmp.eq.s32.totalorder %s13, 1
    %p52 = scmp.ne.s32.totalorder %s47, %s49
    %p53 = scmp.eq.s32.totalorder %s13, 0
    %p54 = por %p52, %p53
    %p55 = scmp.ne.s32.totalorder %s47, %s49
    %p56 = scmp.eq.s32.totalorder %s18, 1
    %p57 = por %p55, %p56
    %p58 = scmp.ne.s32.totalorder %s49, %s50
    %p59 = scmp.eq.s32.totalorder %s18, 0
    %p60 = por %p58, %p59
    %p61 = scmp.ne.s32.totalorder %s49, %s50
    %p62 = scmp.eq.s32.totalorder %s19, 1
    %p63 = por %p61, %p62
    %p65 = scmp.ne.s32.totalorder %s50, %s64
    %p66 = scmp.eq.s32.totalorder %s19, 0
    %p67 = por %p65, %p66
    %s69 = sadd.s32 %s68, 1
    %p72 = scmp.eq.s32.totalorder %s13, 1
    %p73 = scmp.ne.s32.totalorder %s68, %s70
    %p74 = scmp.eq.s32.totalorder %s13, 0
    %p75 = por %p73, %p74
    %p76 = scmp.ne.s32.totalorder %s68, %s70
    %p77 = scmp.eq.s32.totalorder %s18, 1
    %p78 = por %p76, %p77
    %p79 = scmp.ne.s32.totalorder %s70, %s71
    %p80 = scmp.eq.s32.totalorder %s18, 0
    %p81 = por %p79, %p80
    %p82 = scmp.ne.s32.totalorder %s70, %s71
    %p83 = scmp.eq.s32.totalorder %s19, 1
    %p84 = por %p82, %p83
    %p86 = scmp.ne.s32.totalorder %s71, %s85
    %p87 = scmp.eq.s32.totalorder %s19, 0
    %p88 = por %p86, %p87
    %s90 = sadd.s32 %s89, 1
    %p93 = scmp.eq.s32.totalorder %s13, 1
    %p94 = scmp.ne.s32.totalorder %s89, %s91
    %p95 = scmp.eq.s32.totalorder %s13, 0
    %p96 = por %p94, %p95
    %p97 = scmp.ne.s32.totalorder %s89, %s91
    %p98 = scmp.eq.s32.totalorder %s18, 1
    %p99 = por %p97, %p98
    %p100 = scmp.ne.s32.totalorder %s91, %s92
    %p101 = scmp.eq.s32.totalorder %s18, 0
    %p102 = por %p100, %p101
    %p103 = scmp.ne.s32.totalorder %s91, %s92
    %p104 = scmp.eq.s32.totalorder %s19, 1
    %p105 = por %p103, %p104
    %p107 = scmp.ne.s32.totalorder %s92, %s106
    %p108 = scmp.eq.s32.totalorder %s19, 0
    %p109 = por %p107, %p108
    %s111 = sadd.s32 %s110, 1
    %p114 = scmp.eq.s32.totalorder %s13, 1
    %p115 = scmp.ne.s32.totalorder %s110, %s112
    %p116 = scmp.eq.s32.totalorder %s13, 0
    %p117 = por %p115, %p116
    %p118 = scmp.ne.s32.totalorder %s110, %s112
    %p119 = scmp.eq.s32.totalorder %s18, 1
    %p120 = por %p118, %p119
    %p121 = scmp.ne.s32.totalorder %s112, %s113
    %p122 = scmp.eq.s32.totalorder %s18, 0
    %p123 = por %p121, %p122
    %p124 = scmp.ne.s32.totalorder %s112, %s113
    %p125 = scmp.eq.s32.totalorder %s19, 1
    %p126 = por %p124, %p125
    %p128 = scmp.ne.s32.totalorder %s113, %s127
    %p129 = scmp.eq.s32.totalorder %s19, 0
    %p130 = por %p128, %p129
    %s132 = sadd.s32 %s131, 1
    %p135 = scmp.eq.s32.totalorder %s13, 1
    %p136 = scmp.ne.s32.totalorder %s131, %s133
    %p137 = scmp.eq.s32.totalorder %s13, 0
    %p138 = por %p136, %p137
    %p139 = scmp.ne.s32.totalorder %s131, %s133
    %p140 = scmp.eq.s32.totalorder %s18, 1
    %p141 = por %p139, %p140
    %p142 = scmp.ne.s32.totalorder %s133, %s134
    %p143 = scmp.eq.s32.totalorder %s18, 0
    %p144 = por %p142, %p143
    %p145 = scmp.ne.s32.totalorder %s133, %s134
    %p146 = scmp.eq.s32.totalorder %s19, 1
    %p147 = por %p145, %p146
    %p149 = scmp.ne.s32.totalorder %s134, %s148
    %p150 = scmp.eq.s32.totalorder %s19, 0
    %p151 = por %p149, %p150
    %s153 = sadd.s32 %s152, 1
    %p156 = scmp.eq.s32.totalorder %s13, 1
    %p157 = scmp.ne.s32.totalorder %s152, %s154
    %p158 = scmp.eq.s32.totalorder %s13, 0
    %p159 = por %p157, %p158
    %p160 = scmp.ne.s32.totalorder %s152, %s154
    %p161 = scmp.eq.s32.totalorder %s18, 1
    %p162 = por %p160, %p161
    %p163 = scmp.ne.s32.totalorder %s154, %s155
    %p164 = scmp.eq.s32.totalorder %s18, 0
    %p165 = por %p163, %p164
    %p166 = scmp.ne.s32.totalorder %s154, %s155
    %p167 = scmp.eq.s32.totalorder %s19, 1
    %p168 = por %p166, %p167
    %p170 = scmp.ne.s32.totalorder %s155, %s169
    %p171 = scmp.eq.s32.totalorder %s19, 0
    %p172 = por %p170, %p171
    %s173 = ssub.s32 %s13, %s20
    %p174 = scmp.eq.s32.totalorder %s173, 0
    %s176 = sadd.s32 %s175, 1
    %s177 = scalar_select %p174, %s175, %s176
    %p180 = pneg %p174
    %p181 = scmp.eq.s32.totalorder %s13, 1
    %p182 = por %p180, %p181
    %p183 = scmp.ne.s32.totalorder %s175, %s178
    %p184 = scmp.eq.s32.totalorder %s13, 0
    %p185 = por %p183, %p184
    %p186 = scmp.ne.s32.totalorder %s175, %s178
    %p187 = scmp.eq.s32.totalorder %s18, 1
    %p188 = por %p186, %p187
    %p189 = scmp.ne.s32.totalorder %s178, %s179
    %p190 = scmp.eq.s32.totalorder %s18, 0
    %p191 = por %p189, %p190
    %p192 = scmp.ne.s32.totalorder %s178, %s179
    %p193 = scmp.eq.s32.totalorder %s19, 1
    %p194 = por %p192, %p193
    %p196 = scmp.ne.s32.totalorder %s179, %s195
    %p197 = scmp.eq.s32.totalorder %s19, 0
    %p198 = por %p196, %p197
    %p199 = scmp.le.s32.totalorder 1, %s13
    %p200 = scmp.lt.s32.totalorder %s13, 3
    %p201 = pnand %p199, %p200
    %p202 = pneg %p201
    // Predicated region
    $region9: #{graphcast_forward.22} parent=5 // pred_check
      _
    $region10: #{graphcast_forward.22} parent=5 // pred_check_branch
      %204 = sbr.rel (%p201) target = $region12
    $region11: #{graphcast_forward.22} parent=5 // pred_region
      %s205 = ssub.s32 %s13, 1
      // Predicated region
      $region13: #{graphcast_forward.22} parent=11 // pred_check
        %p206 = pneg %p60
      $region14: #{graphcast_forward.22} parent=11 // pred_check_branch
        %208 = sbr.rel (%p206) target = $region16
      $region15: #{graphcast_forward.22} parent=11 // pred_region
        _
      $region16: #{graphcast_forward.22} parent=11 // pred_fallthru
        _
      // Predicated region
      $region17: #{graphcast_forward.22} parent=11 // pred_check
        %p209 = pneg %p81
      $region18: #{graphcast_forward.22} parent=11 // pred_check_branch
        %211 = sbr.rel (%p209) target = $region20
      $region19: #{graphcast_forward.22} parent=11 // pred_region
        _
      $region20: #{graphcast_forward.22} parent=11 // pred_fallthru
        _
      // Predicated region
      $region21: #{graphcast_forward.22} parent=11 // pred_check
        %p212 = pneg %p102
      $region22: #{graphcast_forward.22} parent=11 // pred_check_branch
        %214 = sbr.rel (%p212) target = $region24
      $region23: #{graphcast_forward.22} parent=11 // pred_region
        _
      $region24: #{graphcast_forward.22} parent=11 // pred_fallthru
        _
      // Predicated region
      $region25: #{graphcast_forward.22} parent=11 // pred_check
        %p215 = pneg %p123
      $region26: #{graphcast_forward.22} parent=11 // pred_check_branch
        %217 = sbr.rel (%p215) target = $region28
      $region27: #{graphcast_forward.22} parent=11 // pred_region
        _
      $region28: #{graphcast_forward.22} parent=11 // pred_fallthru
        _
      // Predicated region
      $region29: #{graphcast_forward.22} parent=11 // pred_check
        %p218 = pneg %p144
      $region30: #{graphcast_forward.22} parent=11 // pred_check_branch
        %220 = sbr.rel (%p218) target = $region32
      $region31: #{graphcast_forward.22} parent=11 // pred_region
        _
      $region32: #{graphcast_forward.22} parent=11 // pred_fallthru
        _
      // Predicated region
      $region33: #{graphcast_forward.22} parent=11 // pred_check
        %p221 = pneg %p165
      $region34: #{graphcast_forward.22} parent=11 // pred_check_branch
        %223 = sbr.rel (%p221) target = $region36
      $region35: #{graphcast_forward.22} parent=11 // pred_region
        _
      $region36: #{graphcast_forward.22} parent=11 // pred_fallthru
        _
    $region12: #{graphcast_forward.22} parent=5 // pred_fallthru
      _
    %p224 = scmp.lt.s32.totalorder %s13, 2
    // Predicated region
    $region37: #{graphcast_forward.22} parent=5 // pred_check
      %p225 = pneg %p224
    $region38: #{graphcast_forward.22} parent=5 // pred_check_branch
      %227 = sbr.rel (%p225) target = $region40
    $region39: #{graphcast_forward.22} parent=5 // pred_region
      // Predicated region
      $region41: #{graphcast_forward.22} parent=39 // pred_check
        %p228 = pneg %p33
      $region42: #{graphcast_forward.22} parent=39 // pred_check_branch
        %230 = sbr.rel (%p228) target = $region44
      $region43: #{graphcast_forward.22} parent=39 // pred_region
        %s231 = smul.u32 3, %s13
        %p232 = scmp.lt.s32.totalorder %s231, 5
        %s233 = scalar_select %p232, %s231, 5
        %s234 = smul.addr %s233, 8
        %s235 = scalar_lea.vmem %s0, %s234
        %s236 = smul.u32 3, %s13
      $region44: #{graphcast_forward.22} parent=39 // pred_fallthru
        _
    $region40: #{graphcast_forward.22} parent=5 // pred_fallthru
      _
    %p237 = scmp.le.s32.totalorder 1, %s13
    %p238 = scmp.lt.s32.totalorder %s13, 3
    %p239 = pnand %p237, %p238
    %p240 = pneg %p239
    // Predicated region
    $region45: #{graphcast_forward.22} parent=5 // pred_check
      _
    $region46: #{graphcast_forward.22} parent=5 // pred_check_branch
      %242 = sbr.rel (%p239) target = $region48
    $region47: #{graphcast_forward.22} parent=5 // pred_region
      %s243 = ssub.s32 %s13, 1
      %s244 = smul.u32 3, %s18
      %p245 = scmp.lt.s32.totalorder %s244, 5
      %s246 = scalar_select %p245, %s244, 5
      %s247 = smul.addr %s246, 8
      %s248 = scalar_lea.vmem %s0, %s247
      %p249 = pneg %p39
      %p250 = pneg %p36
      %p251 = pneg %p60
      %p252 = pneg %p57
      %p253 = pneg %p81
      %p254 = pneg %p78
      %p255 = pneg %p102
      %p256 = pneg %p99
      %p257 = pneg %p123
      %p258 = pneg %p120
      %p259 = pneg %p144
      %p260 = pneg %p141
      %p261 = pneg %p165
      %p262 = pneg %p162
      %p263 = pneg %p191
      %p264 = pneg %p188
      %s265 = smul.u32 3, %s18
      %p266 = scmp.lt.s32.totalorder %s265, 5
      %s267 = scalar_select %p266, %s265, 5
      %s268 = smul.addr %s267, 4
      %s269 = scalar_lea.vmem %s7, %s268
      %s270 = smul.u32 3, %s18
      %p271 = scmp.lt.s32.totalorder %s270, 5
      %s272 = scalar_select %p271, %s270, 5
      %s273 = smul.addr %s272, 8
      %s274 = scalar_lea.vmem %s0, %s273
      %s275 = smul.u32 3, %s18
      %s276 = smul.u32 3, %s18
      %p277 = scmp.lt.s32.totalorder %s276, 5
      %s278 = scalar_select %p277, %s276, 5
      %s279 = smul.addr %s278, 4
      %s280 = scalar_lea.vmem %s7, %s279
      %s281 = smul.u32 3, %s18
      %v283 = vld [vmem:[%s274] sm:$0xff]
      %v284 = vld [vmem:[%s274 + $0x8] sm:$0xff]
      %v285 = vld [vmem:[%s274 + $0x10] sm:$0xff]
      %v286 = vpack.c.bf16 %v284, %v283
      %v287 = vpack.c.bf16 %v285, %v285
      %v288 = vld [vmem:[%s1] sm:$0x3]
      %v289 = vld [vmem:[%s2] sm:$0x1]
      %v291 = vlaneseq
      %v292 = vshrl.u32 %v291, 7
      %v293 = vsub.s32 0, %v292
      %v294 = vrot.slane %v289, %v293
      %vm296 = vcmask 31744
      %v298 = vsel %vm296, %v286, 0
      %v301 = vsel %vm296, %v287, 0
      %vm303 = vcmask 1041408
      %v305 = vsel %vm303, %v288, 0
      %307 = vmatprep.subr.bf16.mxu0 0
      %308 = vmatpush1.bf16.msra.mxu0 0
      %309 = vmatprep.subr.bf16.mxu0 0
      %310 = vmatpush1.bf16.msra.mxu0 0
      %311 = vmatprep.subr.bf16.mxu0 0
      %312 = vmatpush1.bf16.msra.mxu0 0
      %313 = vmatprep.subr.bf16.mxu0 0
      %314 = vmatpush1.bf16.msra.mxu0 0
      %315 = vmatprep.subr.bf16.mxu0 0
      %316 = vmatpush1.bf16.msra.mxu0 0
      %317 = vmatprep.subr.bf16.mxu0 0
      %318 = vmatpush1.bf16.msra.mxu0 0
      %319 = vmatprep.subr.bf16.mxu0 0
      %320 = vmatpush1.bf16.msra.mxu0 0
      %321 = vmatprep.subr.bf16.mxu0 0
      %322 = vmatpush1.bf16.msra.mxu0 %v305
      %323 = vmatprep.subr.bf16.mxu0 0
      %324 = vmatpush2.bf16.msra.mxu0 0
      %325 = vmatprep.subr.bf16.mxu0 0
      %326 = vmatpush2.bf16.msra.mxu0 0
      %327 = vmatprep.subr.bf16.mxu0 0
      %328 = vmatpush2.bf16.msra.mxu0 0
      %329 = vmatprep.subr.bf16.mxu0 0
      %330 = vmatpush2.bf16.msra.mxu0 0
      %331 = vmatprep.subr.bf16.mxu0 0
      %332 = vmatpush2.bf16.msra.mxu0 0
      %333 = vmatprep.subr.bf16.mxu0 0
      %334 = vmatpush2.bf16.msra.mxu0 0
      %335 = vmatprep.subr.bf16.mxu0 0
      %336 = vmatpush2.bf16.msra.mxu0 0
      %337 = vmatprep.subr.bf16.mxu0 0
      %338 = vmatpush2.bf16.msra.mxu0 0
      %339 = vmatprep.mubr.bf16.mxu0 0
      %340 = vmatmul.mubr.bf16.gmra.mxu0 %v298
      %v341 = vpop.f32.mrf.mxu0
      %v342 = vadd.f32 %v294, %v341
      %v343 = vpop.f32.mrf.mxu0
      %v344 = vpop.f32.mrf.mxu0
      %v345 = vadd.f32 %v294, %v344
      %v346 = vpop.f32.mrf.mxu0
      %347 = vmatprep.mubr.bf16.mxu0 0
      %348 = vmatmul.mubr.bf16.gmra.mxu0 %v301
      %v349 = vpop.f32.mrf.mxu0
      %v350 = vadd.f32 %v294, %v349
      %v351 = vpop.f32.mrf.mxu0
      %v352 = vpop.f32.mrf.mxu0
      %v353 = vpop.f32.mrf.mxu0
      %354 = vdwg.mxu0
      %v355 = vxor.u32 %v342, 2147483648
      %v356 = vxor.u32 %v345, 2147483648
      %v357 = vxor.u32 %v350, 2147483648
      %v358 = vmul.f32 %v355, 1.442695
      %v359 = vpow.pop %v358
      %v360 = vmul.f32 %v356, 1.442695
      %v361 = vpow.pop %v360
      %v362 = vmul.f32 %v357, 1.442695
      %v363 = vpow.pop %v362
      %v364 = vadd.f32 %v359, 1.0
      %v365 = vadd.f32 %v361, 1.0
      %v366 = vadd.f32 %v363, 1.0
      %v367 = vrcp.pop %v364
      %v368 = vmul.f32 1.0, %v367
      %v369 = vrcp.pop %v365
      %v370 = vmul.f32 1.0, %v369
      %v371 = vrcp.pop %v366
      %v372 = vmul.f32 1.0, %v371
      %v373 = vmul.f32 %v342, %v368
      %v374 = vmul.f32 %v345, %v370
      %v375 = vmul.f32 %v350, %v372
      %v376 = vpack.c.bf16 %v374, %v373
      %v377 = vpack.c.bf16 %v375, %v375
      %v378 = vld [vmem:[%s3] sm:$0xf]
      %v379 = vld [vmem:[%s3 + $0x4] sm:$0xf]
      %v380 = vld [vmem:[%s3 + $0x8] sm:$0xf]
      %v381 = vld [vmem:[%s3 + $0xc] sm:$0xf]
      %v382 = vld [vmem:[%s3 + $0x10] sm:$0xf]
      %v383 = vld [vmem:[%s3 + $0x14] sm:$0xf]
      %v384 = vld [vmem:[%s3 + $0x18] sm:$0xf]
      %v385 = vld [vmem:[%s3 + $0x1c] sm:$0xf]
      %v386 = vld [vmem:[%s3 + $0x20] sm:$0xf]
      %v387 = vld [vmem:[%s3 + $0x24] sm:$0xf]
      %v388 = vld [vmem:[%s3 + $0x28] sm:$0xf]
      %v389 = vld [vmem:[%s3 + $0x2c] sm:$0xf]
      %v390 = vld [vmem:[%s3 + $0x30] sm:$0xf]
      %v391 = vld [vmem:[%s3 + $0x34] sm:$0xf]
      %v392 = vld [vmem:[%s3 + $0x38] sm:$0xf]
      %v393 = vld [vmem:[%s3 + $0x3c] sm:$0xf]
      %v394 = vld [vmem:[%s4] sm:$0x1]
      %v396 = vlaneseq
      %v397 = vshrl.u32 %v396, 7
      %v398 = vsub.s32 0, %v397
      %v399 = vrot.slane %v394, %v398
      %v417 = vunpack.c.l.b16 %v378
      %v418 = vunpack.c.l.b16 %v379
      %v419 = vunpack.c.l.b16 %v380
      %v420 = vunpack.c.l.b16 %v381
      %v421 = vunpack.c.l.b16 %v382
      %v422 = vunpack.c.l.b16 %v383
      %v423 = vunpack.c.l.b16 %v384
      %v424 = vunpack.c.l.b16 %v385
      %v425 = vunpack.c.l.b16 %v386
      %v426 = vunpack.c.l.b16 %v387
      %v427 = vunpack.c.l.b16 %v388
      %v428 = vunpack.c.l.b16 %v389
      %v429 = vunpack.c.l.b16 %v390
      %v430 = vunpack.c.l.b16 %v391
      %v431 = vunpack.c.l.b16 %v392
      %v432 = vunpack.c.l.b16 %v393
      %v433 = vpack.c.b16 %v418, %v417
      %v434 = vpack.c.b16 %v420, %v419
      %v435 = vpack.c.b16 %v422, %v421
      %v436 = vpack.c.b16 %v424, %v423
      %v437 = vpack.c.b16 %v426, %v425
      %v438 = vpack.c.b16 %v428, %v427
      %v439 = vpack.c.b16 %v430, %v429
      %v440 = vpack.c.b16 %v432, %v431
      %449 = vmatprep.subr.bf16.mxu0 0
      %450 = vmatpush1.bf16.msra.mxu0 %v440
      %451 = vmatprep.subr.bf16.mxu0 0
      %452 = vmatpush1.bf16.msra.mxu0 %v439
      %453 = vmatprep.subr.bf16.mxu0 0
      %454 = vmatpush1.bf16.msra.mxu0 %v438
      %455 = vmatprep.subr.bf16.mxu0 0
      %456 = vmatpush1.bf16.msra.mxu0 %v437
      %457 = vmatprep.subr.bf16.mxu0 0
      %458 = vmatpush1.bf16.msra.mxu0 %v436
      %459 = vmatprep.subr.bf16.mxu0 0
      %460 = vmatpush1.bf16.msra.mxu0 %v435
      %461 = vmatprep.subr.bf16.mxu0 0
      %462 = vmatpush1.bf16.msra.mxu0 %v434
      %463 = vmatprep.subr.bf16.mxu0 0
      %464 = vmatpush1.bf16.msra.mxu0 %v433
      %465 = vmatprep.subr.bf16.mxu0 0
      %466 = vmatpush2.bf16.msra.mxu0 0
      %467 = vmatprep.subr.bf16.mxu0 0
      %468 = vmatpush2.bf16.msra.mxu0 0
      %469 = vmatprep.subr.bf16.mxu0 0
      %470 = vmatpush2.bf16.msra.mxu0 0
      %471 = vmatprep.subr.bf16.mxu0 0
      %472 = vmatpush2.bf16.msra.mxu0 0
      %473 = vmatprep.subr.bf16.mxu0 0
      %474 = vmatpush2.bf16.msra.mxu0 0
      %475 = vmatprep.subr.bf16.mxu0 0
      %476 = vmatpush2.bf16.msra.mxu0 0
      %477 = vmatprep.subr.bf16.mxu0 0
      %478 = vmatpush2.bf16.msra.mxu0 0
      %479 = vmatprep.subr.bf16.mxu0 0
      %480 = vmatpush2.bf16.msra.mxu0 0
      %481 = vmatprep.mubr.bf16.mxu0 0
      %482 = vmatmul.mubr.bf16.gmra.mxu0 %v376
      %v483 = vpop.f32.mrf.mxu0
      %v484 = vadd.f32 %v399, %v483
      %v485 = vpop.f32.mrf.mxu0
      %v486 = vpop.f32.mrf.mxu0
      %v487 = vadd.f32 %v399, %v486
      %v488 = vpop.f32.mrf.mxu0
      %489 = vmatprep.mubr.bf16.mxu0 0
      %490 = vmatmul.mubr.bf16.gmra.mxu0 %v377
      %v491 = vpop.f32.mrf.mxu0
      %v492 = vadd.f32 %v399, %v491
      %v493 = vpop.f32.mrf.mxu0
      %v494 = vpop.f32.mrf.mxu0
      %v495 = vpop.f32.mrf.mxu0
      %496 = vdwg.mxu0
      %497 = vadd.xlane.f32.xlu0 %v484
      %v498 = vpop.xlane.xlu0 %497
      %499 = vadd.xlane.f32.xlu0 %v487
      %v500 = vpop.xlane.xlu0 %499
      %501 = vadd.xlane.f32.xlu0 %v492
      %v502 = vpop.xlane.xlu0 %501
      %v503 = vmul.f32 %v498, 0.0078125
      %v504 = vmul.f32 %v500, 0.0078125
      %v505 = vmul.f32 %v502, 0.0078125
      %v506 = vsub.f32 %v484, %v503
      %v507 = vsub.f32 %v487, %v504
      %v508 = vsub.f32 %v492, %v505
      %v509 = vmul.f32 %v506, %v506
      %v510 = vmul.f32 %v507, %v507
      %v511 = vmul.f32 %v508, %v508
      %512 = vadd.xlane.f32.xlu0 %v509
      %v513 = vpop.xlane.xlu0 %512
      %514 = vadd.xlane.f32.xlu0 %v510
      %v515 = vpop.xlane.xlu0 %514
      %516 = vadd.xlane.f32.xlu0 %v511
      %v517 = vpop.xlane.xlu0 %516
      %v518 = vmul.f32 %v513, 0.0078125
      %v519 = vmul.f32 %v515, 0.0078125
      %v520 = vmul.f32 %v517, 0.0078125
      %v521 = vadd.f32 %v518, 1e-05
      %v522 = vadd.f32 %v519, 1e-05
      %v523 = vadd.f32 %v520, 1e-05
      %v524 = vrsqrt.pop %v521
      %v525 = vrsqrt.pop %v522
      %v526 = vrsqrt.pop %v523
      %v527 = vmul.f32 %v506, %v524
      %v528 = vmul.f32 %v507, %v525
      %v529 = vmul.f32 %v508, %v526
      %v530 = vld [vmem:[%s5] sm:$0x1]
      %v532 = vlaneseq
      %v533 = vshrl.u32 %v532, 7
      %v534 = vsub.s32 0, %v533
      %v535 = vrot.slane %v530, %v534
      %v537 = vmul.f32 %v527, %v535
      %v538 = vmul.f32 %v528, %v535
      %v539 = vmul.f32 %v529, %v535
      %v540 = vld [vmem:[%s6] sm:$0x1]
      %v542 = vlaneseq
      %v543 = vshrl.u32 %v542, 7
      %v544 = vsub.s32 0, %v543
      %v545 = vrot.slane %v540, %v544
      %v547 = vadd.f32 %v537, %v545
      %v548 = vadd.f32 %v538, %v545
      %v549 = vadd.f32 %v539, %v545
      %v550 = vpack.c.bf16 %v548, %v547
      %v551 = vpack.c.bf16 %v549, %v549
      %v554 = vunpack.c.l.b16 %v550
      %v555 = vunpack.c.h.b16 %v550
      %v556 = vunpack.c.l.b16 %v551
      %v557 = vpack.c.b16 %v554, %v554
      %v558 = vpack.c.b16 %v555, %v555
      %v559 = vpack.c.b16 %v556, %v556
      %563 = vst [vmem:[%s280] sm:$0xf] %v557
      %564 = vst [vmem:[%s280 + $0x4] sm:$0xf] %v558
      %565 = vst [vmem:[%s280 + $0x8] sm:$0xf] %v559
      %s566 = smul.u32 3, %s18
      %p567 = scmp.lt.s32.totalorder %s566, 5
      %s568 = scalar_select %p567, %s566, 5
      %s569 = smul.addr %s568, 4
      %s570 = scalar_lea.vmem %s7, %s569
      // Predicated region
      $region49: #{graphcast_forward.22} parent=47 // pred_check
        %p571 = pneg %p188
      $region50: #{graphcast_forward.22} parent=47 // pred_check_branch
        %573 = sbr.rel (%p571) target = $region52
      $region51: #{graphcast_forward.22} parent=47 // pred_region
        %s574 = smul.u32 3, %s18
      $region52: #{graphcast_forward.22} parent=47 // pred_fallthru
        _
    $region48: #{graphcast_forward.22} parent=5 // pred_fallthru
      _
    %p575 = scmp.le.s32.totalorder 2, %s13
    // Predicated region
    $region53: #{graphcast_forward.22} parent=5 // pred_check
      %p576 = pneg %p575
    $region54: #{graphcast_forward.22} parent=5 // pred_check_branch
      %578 = sbr.rel (%p576) target = $region56
    $region55: #{graphcast_forward.22} parent=5 // pred_region
      %s579 = ssub.s32 %s13, 2
      // Predicated region
      $region57: #{graphcast_forward.22} parent=55 // pred_check
        %p580 = pneg %p194
      $region58: #{graphcast_forward.22} parent=55 // pred_check_branch
        %582 = sbr.rel (%p580) target = $region60
      $region59: #{graphcast_forward.22} parent=55 // pred_region
        %s583 = smul.u32 3, %s19
        %p584 = scmp.lt.s32.totalorder %s583, 5
        %s585 = scalar_select %p584, %s583, 5
        %s586 = smul.addr %s585, 4
        %s587 = scalar_lea.vmem %s7, %s586
      $region60: #{graphcast_forward.22} parent=55 // pred_fallthru
        _
    $region56: #{graphcast_forward.22} parent=5 // pred_fallthru
      _
  $region6: #{graphcast_forward.22} parent=0 // loop_footer
    %s17 = sadd.s32 1, %s13
  $region7: #{graphcast_forward.22} parent=0 // loop_footer_branch
    %12 = sbr.rel target = $region3
  $region8: #{graphcast_forward.22} parent=0 // loop_exit
    _

// kernel: graphcast_forward.26
$region0: #{graphcast_forward.26}
  #allocation0 [shape = 'u32[]', space=smem, size = 0x4, offset = 0x4, fixed_abs, tag = 'smem constant byte address 0x4 - core index']
  #allocation1 [shape = 'u32[144,128]{1,0:T(1,128)}', space=vmem, size = 0x12000, scoped, tag = 'internal scratch']
  %s0 = inlined_call_operand.vmem [shape: bf16[48,128], index: 0, kind: input, shape index: {}, may-alias: {0,11}]
  %s1 = inlined_call_operand.vmem [shape: bf16[48,128], index: 1, kind: input, shape index: {}]
  %s2 = inlined_call_operand.vmem [shape: bf16[48,128], index: 2, kind: input, shape index: {}]
  %s3 = inlined_call_operand.vmem [shape: bf16[128,128], index: 3, kind: input, shape index: {}]
  %s4 = inlined_call_operand.vmem [shape: bf16[128,128], index: 4, kind: input, shape index: {}]
  %s5 = inlined_call_operand.vmem [shape: bf16[128,128], index: 5, kind: input, shape index: {}]
  %s6 = inlined_call_operand.vmem [shape: f32[1,128], index: 6, kind: input, shape index: {}]
  %s7 = inlined_call_operand.vmem [shape: bf16[128,128], index: 7, kind: input, shape index: {}]
  %s8 = inlined_call_operand.vmem [shape: f32[1,128], index: 8, kind: input, shape index: {}]
  %s9 = inlined_call_operand.vmem [shape: f32[1,128], index: 9, kind: input, shape index: {}]
  %s10 = inlined_call_operand.vmem [shape: f32[1,128], index: 10, kind: input, shape index: {}]
  %s11 = inlined_call_operand.vmem [shape: bf16[48,128], index: 11, kind: input, shape index: {}, may-alias: {0,11}]
  %s12 = inlined_call_operand.vmem [shape: bf16[48,128], index: 12, kind: output, shape index: {}]
  %s13 = sld [smem:[#allocation0]]
  $region81: #{graphcast_forward.26} parent=0
    _
  %s15 = ssub.s32 1, %s13
  %s16 = scalar_select 0, %s15, %s13
  loop: start=0, step=1, limit=4
  $region2: #{graphcast_forward.26} parent=0 // loop_pre_header
    _
  $region3: #{graphcast_forward.26} parent=0 // loop_header
    %s18 = sphi 0, %s22
    %p19 = scmp.ge.s32.totalorder %s18, 4
    %s28 = sphi 0, %s30
    %s31 = sphi 0, %s28
    %s32 = sphi 0, %s31
    %s48 = sphi 0, %s32
    %s54 = sphi 0, %s56
    %s57 = sphi 0, %s54
    %s58 = sphi 0, %s57
    %s74 = sphi 0, %s58
    %s80 = sphi 0, %s82
    %s83 = sphi 0, %s80
    %s84 = sphi 0, %s83
    %s100 = sphi 0, %s84
    %s104 = sphi 0, %s104
    %s106 = sphi 0, %s104
    %s107 = sphi 0, %s106
    %s121 = sphi 0, %s107
    %s125 = sphi 0, %s125
    %s127 = sphi 0, %s125
    %s128 = sphi 0, %s127
    %s142 = sphi 0, %s128
    %s146 = sphi 0, %s146
    %s148 = sphi 0, %s146
    %s149 = sphi 0, %s148
    %s163 = sphi 0, %s149
    %s167 = sphi 0, %s167
    %s169 = sphi 0, %s167
    %s170 = sphi 0, %s169
    %s184 = sphi 0, %s170
    %s188 = sphi 0, %s188
    %s190 = sphi 0, %s188
    %s191 = sphi 0, %s190
    %s205 = sphi 0, %s191
    %s209 = sphi 0, %s209
    %s211 = sphi 0, %s209
    %s212 = sphi 0, %s211
    %s226 = sphi 0, %s212
    %s230 = sphi 0, %s230
    %s232 = sphi 0, %s230
    %s233 = sphi 0, %s232
    %s247 = sphi 0, %s233
    %s251 = sphi 0, %s251
    %s253 = sphi 0, %s251
    %s254 = sphi 0, %s253
    %s268 = sphi 0, %s254
    %s274 = sphi 0, %s276
    %s277 = sphi 0, %s274
    %s278 = sphi 0, %s277
    %s294 = sphi 0, %s278
    %s300 = sphi 0, %s302
    %s303 = sphi 0, %s300
    %s304 = sphi 0, %s303
    %s320 = sphi 0, %s304
  $region4: #{graphcast_forward.26} parent=0 // loop_header_branch
    %21 = sbr.rel (%p19) target = $region8
  $region5: #{graphcast_forward.26} parent=0 // loop_body
    %s23 = ssub.s32 %s18, 1
    %s24 = ssub.s32 %s18, 2
    %s25 = sadd.s32 %s18, 1
    %s26 = ssub.s32 %s18, %s25
    %p27 = scmp.eq.s32.totalorder %s26, 0
    %s29 = sadd.s32 %s28, 1
    %s30 = scalar_select %p27, %s28, %s29
    %p33 = pneg %p27
    %p34 = scmp.eq.s32.totalorder %s18, 1
    %p35 = por %p33, %p34
    %p36 = scmp.ne.s32.totalorder %s28, %s31
    %p37 = scmp.eq.s32.totalorder %s18, 0
    %p38 = por %p36, %p37
    %p39 = scmp.ne.s32.totalorder %s28, %s31
    %p40 = scmp.eq.s32.totalorder %s23, 1
    %p41 = por %p39, %p40
    %p42 = scmp.ne.s32.totalorder %s31, %s32
    %p43 = scmp.eq.s32.totalorder %s23, 0
    %p44 = por %p42, %p43
    %p45 = scmp.ne.s32.totalorder %s31, %s32
    %p46 = scmp.eq.s32.totalorder %s24, 1
    %p47 = por %p45, %p46
    %p49 = scmp.ne.s32.totalorder %s32, %s48
    %p50 = scmp.eq.s32.totalorder %s24, 0
    %p51 = por %p49, %p50
    %s52 = ssub.s32 %s18, %s25
    %p53 = scmp.eq.s32.totalorder %s52, 0
    %s55 = sadd.s32 %s54, 1
    %s56 = scalar_select %p53, %s54, %s55
    %p59 = pneg %p53
    %p60 = scmp.eq.s32.totalorder %s18, 1
    %p61 = por %p59, %p60
    %p62 = scmp.ne.s32.totalorder %s54, %s57
    %p63 = scmp.eq.s32.totalorder %s18, 0
    %p64 = por %p62, %p63
    %p65 = scmp.ne.s32.totalorder %s54, %s57
    %p66 = scmp.eq.s32.totalorder %s23, 1
    %p67 = por %p65, %p66
    %p68 = scmp.ne.s32.totalorder %s57, %s58
    %p69 = scmp.eq.s32.totalorder %s23, 0
    %p70 = por %p68, %p69
    %p71 = scmp.ne.s32.totalorder %s57, %s58
    %p72 = scmp.eq.s32.totalorder %s24, 1
    %p73 = por %p71, %p72
    %p75 = scmp.ne.s32.totalorder %s58, %s74
    %p76 = scmp.eq.s32.totalorder %s24, 0
    %p77 = por %p75, %p76
    %s78 = ssub.s32 %s18, %s25
    %p79 = scmp.eq.s32.totalorder %s78, 0
    %s81 = sadd.s32 %s80, 1
    %s82 = scalar_select %p79, %s80, %s81
    %p85 = pneg %p79
    %p86 = scmp.eq.s32.totalorder %s18, 1
    %p87 = por %p85, %p86
    %p88 = scmp.ne.s32.totalorder %s80, %s83
    %p89 = scmp.eq.s32.totalorder %s18, 0
    %p90 = por %p88, %p89
    %p91 = scmp.ne.s32.totalorder %s80, %s83
    %p92 = scmp.eq.s32.totalorder %s23, 1
    %p93 = por %p91, %p92
    %p94 = scmp.ne.s32.totalorder %s83, %s84
    %p95 = scmp.eq.s32.totalorder %s23, 0
    %p96 = por %p94, %p95
    %p97 = scmp.ne.s32.totalorder %s83, %s84
    %p98 = scmp.eq.s32.totalorder %s24, 1
    %p99 = por %p97, %p98
    %p101 = scmp.ne.s32.totalorder %s84, %s100
    %p102 = scmp.eq.s32.totalorder %s24, 0
    %p103 = por %p101, %p102
    %s105 = sadd.s32 %s104, 1
    %p108 = scmp.eq.s32.totalorder %s18, 1
    %p109 = scmp.ne.s32.totalorder %s104, %s106
    %p110 = scmp.eq.s32.totalorder %s18, 0
    %p111 = por %p109, %p110
    %p112 = scmp.ne.s32.totalorder %s104, %s106
    %p113 = scmp.eq.s32.totalorder %s23, 1
    %p114 = por %p112, %p113
    %p115 = scmp.ne.s32.totalorder %s106, %s107
    %p116 = scmp.eq.s32.totalorder %s23, 0
    %p117 = por %p115, %p116
    %p118 = scmp.ne.s32.totalorder %s106, %s107
    %p119 = scmp.eq.s32.totalorder %s24, 1
    %p120 = por %p118, %p119
    %p122 = scmp.ne.s32.totalorder %s107, %s121
    %p123 = scmp.eq.s32.totalorder %s24, 0
    %p124 = por %p122, %p123
    %s126 = sadd.s32 %s125, 1
    %p129 = scmp.eq.s32.totalorder %s18, 1
    %p130 = scmp.ne.s32.totalorder %s125, %s127
    %p131 = scmp.eq.s32.totalorder %s18, 0
    %p132 = por %p130, %p131
    %p133 = scmp.ne.s32.totalorder %s125, %s127
    %p134 = scmp.eq.s32.totalorder %s23, 1
    %p135 = por %p133, %p134
    %p136 = scmp.ne.s32.totalorder %s127, %s128
    %p137 = scmp.eq.s32.totalorder %s23, 0
    %p138 = por %p136, %p137
    %p139 = scmp.ne.s32.totalorder %s127, %s128
    %p140 = scmp.eq.s32.totalorder %s24, 1
    %p141 = por %p139, %p140
    %p143 = scmp.ne.s32.totalorder %s128, %s142
    %p144 = scmp.eq.s32.totalorder %s24, 0
    %p145 = por %p143, %p144
    %s147 = sadd.s32 %s146, 1
    %p150 = scmp.eq.s32.totalorder %s18, 1
    %p151 = scmp.ne.s32.totalorder %s146, %s148
    %p152 = scmp.eq.s32.totalorder %s18, 0
    %p153 = por %p151, %p152
    %p154 = scmp.ne.s32.totalorder %s146, %s148
    %p155 = scmp.eq.s32.totalorder %s23, 1
    %p156 = por %p154, %p155
    %p157 = scmp.ne.s32.totalorder %s148, %s149
    %p158 = scmp.eq.s32.totalorder %s23, 0
    %p159 = por %p157, %p158
    %p160 = scmp.ne.s32.totalorder %s148, %s149
    %p161 = scmp.eq.s32.totalorder %s24, 1
    %p162 = por %p160, %p161
    %p164 = scmp.ne.s32.totalorder %s149, %s163
    %p165 = scmp.eq.s32.totalorder %s24, 0
    %p166 = por %p164, %p165
    %s168 = sadd.s32 %s167, 1
    %p171 = scmp.eq.s32.totalorder %s18, 1
    %p172 = scmp.ne.s32.totalorder %s167, %s169
    %p173 = scmp.eq.s32.totalorder %s18, 0
    %p174 = por %p172, %p173
    %p175 = scmp.ne.s32.totalorder %s167, %s169
    %p176 = scmp.eq.s32.totalorder %s23, 1
    %p177 = por %p175, %p176
    %p178 = scmp.ne.s32.totalorder %s169, %s170
    %p179 = scmp.eq.s32.totalorder %s23, 0
    %p180 = por %p178, %p179
    %p181 = scmp.ne.s32.totalorder %s169, %s170
    %p182 = scmp.eq.s32.totalorder %s24, 1
    %p183 = por %p181, %p182
    %p185 = scmp.ne.s32.totalorder %s170, %s184
    %p186 = scmp.eq.s32.totalorder %s24, 0
    %p187 = por %p185, %p186
    %s189 = sadd.s32 %s188, 1
    %p192 = scmp.eq.s32.totalorder %s18, 1
    %p193 = scmp.ne.s32.totalorder %s188, %s190
    %p194 = scmp.eq.s32.totalorder %s18, 0
    %p195 = por %p193, %p194
    %p196 = scmp.ne.s32.totalorder %s188, %s190
    %p197 = scmp.eq.s32.totalorder %s23, 1
    %p198 = por %p196, %p197
    %p199 = scmp.ne.s32.totalorder %s190, %s191
    %p200 = scmp.eq.s32.totalorder %s23, 0
    %p201 = por %p199, %p200
    %p202 = scmp.ne.s32.totalorder %s190, %s191
    %p203 = scmp.eq.s32.totalorder %s24, 1
    %p204 = por %p202, %p203
    %p206 = scmp.ne.s32.totalorder %s191, %s205
    %p207 = scmp.eq.s32.totalorder %s24, 0
    %p208 = por %p206, %p207
    %s210 = sadd.s32 %s209, 1
    %p213 = scmp.eq.s32.totalorder %s18, 1
    %p214 = scmp.ne.s32.totalorder %s209, %s211
    %p215 = scmp.eq.s32.totalorder %s18, 0
    %p216 = por %p214, %p215
    %p217 = scmp.ne.s32.totalorder %s209, %s211
    %p218 = scmp.eq.s32.totalorder %s23, 1
    %p219 = por %p217, %p218
    %p220 = scmp.ne.s32.totalorder %s211, %s212
    %p221 = scmp.eq.s32.totalorder %s23, 0
    %p222 = por %p220, %p221
    %p223 = scmp.ne.s32.totalorder %s211, %s212
    %p224 = scmp.eq.s32.totalorder %s24, 1
    %p225 = por %p223, %p224
    %p227 = scmp.ne.s32.totalorder %s212, %s226
    %p228 = scmp.eq.s32.totalorder %s24, 0
    %p229 = por %p227, %p228
    %s231 = sadd.s32 %s230, 1
    %p234 = scmp.eq.s32.totalorder %s18, 1
    %p235 = scmp.ne.s32.totalorder %s230, %s232
    %p236 = scmp.eq.s32.totalorder %s18, 0
    %p237 = por %p235, %p236
    %p238 = scmp.ne.s32.totalorder %s230, %s232
    %p239 = scmp.eq.s32.totalorder %s23, 1
    %p240 = por %p238, %p239
    %p241 = scmp.ne.s32.totalorder %s232, %s233
    %p242 = scmp.eq.s32.totalorder %s23, 0
    %p243 = por %p241, %p242
    %p244 = scmp.ne.s32.totalorder %s232, %s233
    %p245 = scmp.eq.s32.totalorder %s24, 1
    %p246 = por %p244, %p245
    %p248 = scmp.ne.s32.totalorder %s233, %s247
    %p249 = scmp.eq.s32.totalorder %s24, 0
    %p250 = por %p248, %p249
    %s252 = sadd.s32 %s251, 1
    %p255 = scmp.eq.s32.totalorder %s18, 1
    %p256 = scmp.ne.s32.totalorder %s251, %s253
    %p257 = scmp.eq.s32.totalorder %s18, 0
    %p258 = por %p256, %p257
    %p259 = scmp.ne.s32.totalorder %s251, %s253
    %p260 = scmp.eq.s32.totalorder %s23, 1
    %p261 = por %p259, %p260
    %p262 = scmp.ne.s32.totalorder %s253, %s254
    %p263 = scmp.eq.s32.totalorder %s23, 0
    %p264 = por %p262, %p263
    %p265 = scmp.ne.s32.totalorder %s253, %s254
    %p266 = scmp.eq.s32.totalorder %s24, 1
    %p267 = por %p265, %p266
    %p269 = scmp.ne.s32.totalorder %s254, %s268
    %p270 = scmp.eq.s32.totalorder %s24, 0
    %p271 = por %p269, %p270
    %s272 = ssub.s32 %s18, %s25
    %p273 = scmp.eq.s32.totalorder %s272, 0
    %s275 = sadd.s32 %s274, 1
    %s276 = scalar_select %p273, %s274, %s275
    %p279 = pneg %p273
    %p280 = scmp.eq.s32.totalorder %s18, 1
    %p281 = por %p279, %p280
    %p282 = scmp.ne.s32.totalorder %s274, %s277
    %p283 = scmp.eq.s32.totalorder %s18, 0
    %p284 = por %p282, %p283
    %p285 = scmp.ne.s32.totalorder %s274, %s277
    %p286 = scmp.eq.s32.totalorder %s23, 1
    %p287 = por %p285, %p286
    %p288 = scmp.ne.s32.totalorder %s277, %s278
    %p289 = scmp.eq.s32.totalorder %s23, 0
    %p290 = por %p288, %p289
    %p291 = scmp.ne.s32.totalorder %s277, %s278
    %p292 = scmp.eq.s32.totalorder %s24, 1
    %p293 = por %p291, %p292
    %p295 = scmp.ne.s32.totalorder %s278, %s294
    %p296 = scmp.eq.s32.totalorder %s24, 0
    %p297 = por %p295, %p296
    %s298 = ssub.s32 %s18, %s25
    %p299 = scmp.eq.s32.totalorder %s298, 0
    %s301 = sadd.s32 %s300, 1
    %s302 = scalar_select %p299, %s300, %s301
    %p305 = pneg %p299
    %p306 = scmp.eq.s32.totalorder %s18, 1
    %p307 = por %p305, %p306
    %p308 = scmp.ne.s32.totalorder %s300, %s303
    %p309 = scmp.eq.s32.totalorder %s18, 0
    %p310 = por %p308, %p309
    %p311 = scmp.ne.s32.totalorder %s300, %s303
    %p312 = scmp.eq.s32.totalorder %s23, 1
    %p313 = por %p311, %p312
    %p314 = scmp.ne.s32.totalorder %s303, %s304
    %p315 = scmp.eq.s32.totalorder %s23, 0
    %p316 = por %p314, %p315
    %p317 = scmp.ne.s32.totalorder %s303, %s304
    %p318 = scmp.eq.s32.totalorder %s24, 1
    %p319 = por %p317, %p318
    %p321 = scmp.ne.s32.totalorder %s304, %s320
    %p322 = scmp.eq.s32.totalorder %s24, 0
    %p323 = por %p321, %p322
    %p324 = scmp.le.s32.totalorder 1, %s18
    %p325 = scmp.lt.s32.totalorder %s18, 3
    %p326 = pnand %p324, %p325
    %p327 = pneg %p326
    // Predicated region
    $region9: #{graphcast_forward.26} parent=5 // pred_check
      _
    $region10: #{graphcast_forward.26} parent=5 // pred_check_branch
      %329 = sbr.rel (%p326) target = $region12
    $region11: #{graphcast_forward.26} parent=5 // pred_region
      %s330 = ssub.s32 %s18, 1
      // Predicated region
      $region13: #{graphcast_forward.26} parent=11 // pred_check
        %p331 = pneg %p117
      $region14: #{graphcast_forward.26} parent=11 // pred_check_branch
        %333 = sbr.rel (%p331) target = $region16
      $region15: #{graphcast_forward.26} parent=11 // pred_region
        _
      $region16: #{graphcast_forward.26} parent=11 // pred_fallthru
        _
      // Predicated region
      $region17: #{graphcast_forward.26} parent=11 // pred_check
        %p334 = pneg %p138
      $region18: #{graphcast_forward.26} parent=11 // pred_check_branch
        %336 = sbr.rel (%p334) target = $region20
      $region19: #{graphcast_forward.26} parent=11 // pred_region
        _
      $region20: #{graphcast_forward.26} parent=11 // pred_fallthru
        _
      // Predicated region
      $region21: #{graphcast_forward.26} parent=11 // pred_check
        %p337 = pneg %p159
      $region22: #{graphcast_forward.26} parent=11 // pred_check_branch
        %339 = sbr.rel (%p337) target = $region24
      $region23: #{graphcast_forward.26} parent=11 // pred_region
        _
      $region24: #{graphcast_forward.26} parent=11 // pred_fallthru
        _
      // Predicated region
      $region25: #{graphcast_forward.26} parent=11 // pred_check
        %p340 = pneg %p180
      $region26: #{graphcast_forward.26} parent=11 // pred_check_branch
        %342 = sbr.rel (%p340) target = $region28
      $region27: #{graphcast_forward.26} parent=11 // pred_region
        _
      $region28: #{graphcast_forward.26} parent=11 // pred_fallthru
        _
      // Predicated region
      $region29: #{graphcast_forward.26} parent=11 // pred_check
        %p343 = pneg %p201
      $region30: #{graphcast_forward.26} parent=11 // pred_check_branch
        %345 = sbr.rel (%p343) target = $region32
      $region31: #{graphcast_forward.26} parent=11 // pred_region
        _
      $region32: #{graphcast_forward.26} parent=11 // pred_fallthru
        _
      // Predicated region
      $region33: #{graphcast_forward.26} parent=11 // pred_check
        %p346 = pneg %p222
      $region34: #{graphcast_forward.26} parent=11 // pred_check_branch
        %348 = sbr.rel (%p346) target = $region36
      $region35: #{graphcast_forward.26} parent=11 // pred_region
        _
      $region36: #{graphcast_forward.26} parent=11 // pred_fallthru
        _
      // Predicated region
      $region37: #{graphcast_forward.26} parent=11 // pred_check
        %p349 = pneg %p243
      $region38: #{graphcast_forward.26} parent=11 // pred_check_branch
        %351 = sbr.rel (%p349) target = $region40
      $region39: #{graphcast_forward.26} parent=11 // pred_region
        _
      $region40: #{graphcast_forward.26} parent=11 // pred_fallthru
        _
      // Predicated region
      $region41: #{graphcast_forward.26} parent=11 // pred_check
        %p352 = pneg %p264
      $region42: #{graphcast_forward.26} parent=11 // pred_check_branch
        %354 = sbr.rel (%p352) target = $region44
      $region43: #{graphcast_forward.26} parent=11 // pred_region
        _
      $region44: #{graphcast_forward.26} parent=11 // pred_fallthru
        _
    $region12: #{graphcast_forward.26} parent=5 // pred_fallthru
      _
    %p355 = scmp.lt.s32.totalorder %s18, 2
    // Predicated region
    $region45: #{graphcast_forward.26} parent=5 // pred_check
      %p356 = pneg %p355
    $region46: #{graphcast_forward.26} parent=5 // pred_check_branch
      %358 = sbr.rel (%p356) target = $region48
    $region47: #{graphcast_forward.26} parent=5 // pred_region
      // Predicated region
      $region49: #{graphcast_forward.26} parent=47 // pred_check
        %p359 = pneg %p38
      $region50: #{graphcast_forward.26} parent=47 // pred_check_branch
        %361 = sbr.rel (%p359) target = $region52
      $region51: #{graphcast_forward.26} parent=47 // pred_region
        %s362 = smul.u32 3, %s18
        %p363 = scmp.lt.s32.totalorder %s362, 5
        %s364 = scalar_select %p363, %s362, 5
        %s365 = smul.addr %s364, 4
        %s366 = scalar_lea.vmem %s0, %s365
        %s367 = smul.u32 3, %s18
      $region52: #{graphcast_forward.26} parent=47 // pred_fallthru
        _
      // Predicated region
      $region53: #{graphcast_forward.26} parent=47 // pred_check
        %p368 = pneg %p64
      $region54: #{graphcast_forward.26} parent=47 // pred_check_branch
        %370 = sbr.rel (%p368) target = $region56
      $region55: #{graphcast_forward.26} parent=47 // pred_region
        %s371 = smul.u32 3, %s18
        %p372 = scmp.lt.s32.totalorder %s371, 5
        %s373 = scalar_select %p372, %s371, 5
        %s374 = smul.addr %s373, 4
        %s375 = scalar_lea.vmem %s1, %s374
        %s376 = smul.u32 3, %s18
      $region56: #{graphcast_forward.26} parent=47 // pred_fallthru
        _
      // Predicated region
      $region57: #{graphcast_forward.26} parent=47 // pred_check
        %p377 = pneg %p90
      $region58: #{graphcast_forward.26} parent=47 // pred_check_branch
        %379 = sbr.rel (%p377) target = $region60
      $region59: #{graphcast_forward.26} parent=47 // pred_region
        %s380 = smul.u32 3, %s18
        %p381 = scmp.lt.s32.totalorder %s380, 5
        %s382 = scalar_select %p381, %s380, 5
        %s383 = smul.addr %s382, 4
        %s384 = scalar_lea.vmem %s2, %s383
        %s385 = smul.u32 3, %s18
      $region60: #{graphcast_forward.26} parent=47 // pred_fallthru
        _
      // Predicated region
      $region61: #{graphcast_forward.26} parent=47 // pred_check
        %p386 = pneg %p284
      $region62: #{graphcast_forward.26} parent=47 // pred_check_branch
        %388 = sbr.rel (%p386) target = $region64
      $region63: #{graphcast_forward.26} parent=47 // pred_region
        %s389 = smul.u32 3, %s18
        %p390 = scmp.lt.s32.totalorder %s389, 5
        %s391 = scalar_select %p390, %s389, 5
        %s392 = smul.addr %s391, 4
        %s393 = scalar_lea.vmem %s11, %s392
        %s394 = smul.u32 3, %s18
      $region64: #{graphcast_forward.26} parent=47 // pred_fallthru
        _
    $region48: #{graphcast_forward.26} parent=5 // pred_fallthru
      _
    %p395 = scmp.le.s32.totalorder 1, %s18
    %p396 = scmp.lt.s32.totalorder %s18, 3
    %p397 = pnand %p395, %p396
    %p398 = pneg %p397
    // Predicated region
    $region65: #{graphcast_forward.26} parent=5 // pred_check
      _
    $region66: #{graphcast_forward.26} parent=5 // pred_check_branch
      %400 = sbr.rel (%p397) target = $region68
    $region67: #{graphcast_forward.26} parent=5 // pred_region
      %s401 = ssub.s32 %s18, 1
      %s402 = smul.u32 3, %s23
      %p403 = scmp.lt.s32.totalorder %s402, 5
      %s404 = scalar_select %p403, %s402, 5
      %s405 = smul.addr %s404, 4
      %s406 = scalar_lea.vmem %s0, %s405
      %p407 = pneg %p44
      %p408 = pneg %p41
      %s409 = smul.u32 3, %s23
      %p410 = scmp.lt.s32.totalorder %s409, 5
      %s411 = scalar_select %p410, %s409, 5
      %s412 = smul.addr %s411, 4
      %s413 = scalar_lea.vmem %s1, %s412
      %p414 = pneg %p70
      %p415 = pneg %p67
      %s416 = smul.u32 3, %s23
      %p417 = scmp.lt.s32.totalorder %s416, 5
      %s418 = scalar_select %p417, %s416, 5
      %s419 = smul.addr %s418, 4
      %s420 = scalar_lea.vmem %s2, %s419
      %p421 = pneg %p96
      %p422 = pneg %p93
      %p423 = pneg %p117
      %p424 = pneg %p114
      %p425 = pneg %p138
      %p426 = pneg %p135
      %p427 = pneg %p159
      %p428 = pneg %p156
      %p429 = pneg %p180
      %p430 = pneg %p177
      %p431 = pneg %p201
      %p432 = pneg %p198
      %p433 = pneg %p222
      %p434 = pneg %p219
      %p435 = pneg %p243
      %p436 = pneg %p240
      %p437 = pneg %p264
      %p438 = pneg %p261
      %s439 = smul.u32 3, %s23
      %p440 = scmp.lt.s32.totalorder %s439, 5
      %s441 = scalar_select %p440, %s439, 5
      %s442 = smul.addr %s441, 4
      %s443 = scalar_lea.vmem %s11, %s442
      %p444 = pneg %p290
      %p445 = pneg %p287
      %p446 = pneg %p316
      %p447 = pneg %p313
      %s448 = smul.u32 3, %s23
      %p449 = scmp.lt.s32.totalorder %s448, 5
      %s450 = scalar_select %p449, %s448, 5
      %s451 = smul.addr %s450, 4
      %s452 = scalar_lea.vmem %s12, %s451
      %s453 = smul.u32 3, %s23
      %p454 = scmp.lt.s32.totalorder %s453, 5
      %s455 = scalar_select %p454, %s453, 5
      %s456 = smul.addr %s455, 4
      %s457 = scalar_lea.vmem %s0, %s456
      %s458 = smul.u32 3, %s23
      %s459 = smul.u32 3, %s23
      %p460 = scmp.lt.s32.totalorder %s459, 5
      %s461 = scalar_select %p460, %s459, 5
      %s462 = smul.addr %s461, 4
      %s463 = scalar_lea.vmem %s1, %s462
      %s464 = smul.u32 3, %s23
      %s465 = smul.u32 3, %s23
      %p466 = scmp.lt.s32.totalorder %s465, 5
      %s467 = scalar_select %p466, %s465, 5
      %s468 = smul.addr %s467, 4
      %s469 = scalar_lea.vmem %s2, %s468
      %s470 = smul.u32 3, %s23
      %s471 = smul.u32 3, %s23
      %p472 = scmp.lt.s32.totalorder %s471, 5
      %s473 = scalar_select %p472, %s471, 5
      %s474 = smul.addr %s473, 4
      %s475 = scalar_lea.vmem %s11, %s474
      %s476 = smul.u32 3, %s23
      %s477 = smul.u32 3, %s23
      %p478 = scmp.lt.s32.totalorder %s477, 5
      %s479 = scalar_select %p478, %s477, 5
      %s480 = smul.addr %s479, 4
      %s481 = scalar_lea.vmem %s12, %s480
      %s482 = smul.u32 3, %s23
      %v484 = vld [vmem:[%s457] sm:$0xf]
      %v485 = vld [vmem:[%s457 + $0x4] sm:$0xf]
      %v486 = vld [vmem:[%s457 + $0x8] sm:$0xf]
      %v487 = vld [vmem:[%s3] sm:$0xf]
      %v488 = vld [vmem:[%s3 + $0x4] sm:$0xf]
      %v489 = vld [vmem:[%s3 + $0x8] sm:$0xf]
      %v490 = vld [vmem:[%s3 + $0xc] sm:$0xf]
      %v491 = vld [vmem:[%s3 + $0x10] sm:$0xf]
      %v492 = vld [vmem:[%s3 + $0x14] sm:$0xf]
      %v493 = vld [vmem:[%s3 + $0x18] sm:$0xf]
      %v494 = vld [vmem:[%s3 + $0x1c] sm:$0xf]
      %v495 = vld [vmem:[%s3 + $0x20] sm:$0xf]
      %v496 = vld [vmem:[%s3 + $0x24] sm:$0xf]
      %v497 = vld [vmem:[%s3 + $0x28] sm:$0xf]
      %v498 = vld [vmem:[%s3 + $0x2c] sm:$0xf]
      %v499 = vld [vmem:[%s3 + $0x30] sm:$0xf]
      %v500 = vld [vmem:[%s3 + $0x34] sm:$0xf]
      %v501 = vld [vmem:[%s3 + $0x38] sm:$0xf]
      %v502 = vld [vmem:[%s3 + $0x3c] sm:$0xf]
      %v503 = vld [vmem:[%s463] sm:$0xf]
      %v504 = vld [vmem:[%s463 + $0x4] sm:$0xf]
      %v505 = vld [vmem:[%s463 + $0x8] sm:$0xf]
      %v506 = vld [vmem:[%s4] sm:$0xf]
      %v507 = vld [vmem:[%s4 + $0x4] sm:$0xf]
      %v508 = vld [vmem:[%s4 + $0x8] sm:$0xf]
      %v509 = vld [vmem:[%s4 + $0xc] sm:$0xf]
      %v510 = vld [vmem:[%s4 + $0x10] sm:$0xf]
      %v511 = vld [vmem:[%s4 + $0x14] sm:$0xf]
      %v512 = vld [vmem:[%s4 + $0x18] sm:$0xf]
      %v513 = vld [vmem:[%s4 + $0x1c] sm:$0xf]
      %v514 = vld [vmem:[%s4 + $0x20] sm:$0xf]
      %v515 = vld [vmem:[%s4 + $0x24] sm:$0xf]
      %v516 = vld [vmem:[%s4 + $0x28] sm:$0xf]
      %v517 = vld [vmem:[%s4 + $0x2c] sm:$0xf]
      %v518 = vld [vmem:[%s4 + $0x30] sm:$0xf]
      %v519 = vld [vmem:[%s4 + $0x34] sm:$0xf]
      %v520 = vld [vmem:[%s4 + $0x38] sm:$0xf]
      %v521 = vld [vmem:[%s4 + $0x3c] sm:$0xf]
      %v525 = vunpack.c.l.b16 %v503
      %v526 = vunpack.c.l.b16 %v504
      %v527 = vunpack.c.l.b16 %v505
      %v528 = vpack.c.b16 %v526, %v525
      %v529 = vpack.c.b16 %v527, %v527
      %v548 = vunpack.c.l.b16 %v506
      %v549 = vunpack.c.l.b16 %v507
      %v550 = vunpack.c.l.b16 %v508
      %v551 = vunpack.c.l.b16 %v509
      %v552 = vunpack.c.l.b16 %v510
      %v553 = vunpack.c.l.b16 %v511
      %v554 = vunpack.c.l.b16 %v512
      %v555 = vunpack.c.l.b16 %v513
      %v556 = vunpack.c.l.b16 %v514
      %v557 = vunpack.c.l.b16 %v515
      %v558 = vunpack.c.l.b16 %v516
      %v559 = vunpack.c.l.b16 %v517
      %v560 = vunpack.c.l.b16 %v518
      %v561 = vunpack.c.l.b16 %v519
      %v562 = vunpack.c.l.b16 %v520
      %v563 = vunpack.c.l.b16 %v521
      %v564 = vpack.c.b16 %v549, %v548
      %v565 = vpack.c.b16 %v551, %v550
      %v566 = vpack.c.b16 %v553, %v552
      %v567 = vpack.c.b16 %v555, %v554
      %v568 = vpack.c.b16 %v557, %v556
      %v569 = vpack.c.b16 %v559, %v558
      %v570 = vpack.c.b16 %v561, %v560
      %v571 = vpack.c.b16 %v563, %v562
      %580 = vmatprep.subr.bf16.mxu0 0
      %581 = vmatpush1.bf16.msra.mxu0 %v571
      %582 = vmatprep.subr.bf16.mxu0 0
      %583 = vmatpush1.bf16.msra.mxu0 %v570
      %584 = vmatprep.subr.bf16.mxu0 0
      %585 = vmatpush1.bf16.msra.mxu0 %v569
      %586 = vmatprep.subr.bf16.mxu0 0
      %587 = vmatpush1.bf16.msra.mxu0 %v568
      %588 = vmatprep.subr.bf16.mxu0 0
      %589 = vmatpush1.bf16.msra.mxu0 %v567
      %590 = vmatprep.subr.bf16.mxu0 0
      %591 = vmatpush1.bf16.msra.mxu0 %v566
      %592 = vmatprep.subr.bf16.mxu0 0
      %593 = vmatpush1.bf16.msra.mxu0 %v565
      %594 = vmatprep.subr.bf16.mxu0 0
      %595 = vmatpush1.bf16.msra.mxu0 %v564
      %596 = vmatprep.subr.bf16.mxu0 0
      %597 = vmatpush2.bf16.msra.mxu0 0
      %598 = vmatprep.subr.bf16.mxu0 0
      %599 = vmatpush2.bf16.msra.mxu0 0
      %600 = vmatprep.subr.bf16.mxu0 0
      %601 = vmatpush2.bf16.msra.mxu0 0
      %602 = vmatprep.subr.bf16.mxu0 0
      %603 = vmatpush2.bf16.msra.mxu0 0
      %604 = vmatprep.subr.bf16.mxu0 0
      %605 = vmatpush2.bf16.msra.mxu0 0
      %606 = vmatprep.subr.bf16.mxu0 0
      %607 = vmatpush2.bf16.msra.mxu0 0
      %608 = vmatprep.subr.bf16.mxu0 0
      %609 = vmatpush2.bf16.msra.mxu0 0
      %610 = vmatprep.subr.bf16.mxu0 0
      %611 = vmatpush2.bf16.msra.mxu0 0
      %612 = vmatprep.mubr.bf16.mxu0 0
      %613 = vmatmul.mubr.bf16.gmra.mxu0 %v528
      %v614 = vpop.f32.mrf.mxu0
      %v615 = vadd.f32 0.0, %v614
      %v616 = vpop.f32.mrf.mxu0
      %v617 = vpop.f32.mrf.mxu0
      %v618 = vadd.f32 0.0, %v617
      %v619 = vpop.f32.mrf.mxu0
      %620 = vmatprep.mubr.bf16.mxu0 0
      %621 = vmatmul.mubr.bf16.gmra.mxu0 %v529
      %v622 = vpop.f32.mrf.mxu0
      %v623 = vadd.f32 0.0, %v622
      %v624 = vpop.f32.mrf.mxu0
      %v625 = vpop.f32.mrf.mxu0
      %v626 = vpop.f32.mrf.mxu0
      %627 = vdwg.mxu0
      %v631 = vunpack.c.l.b16 %v484
      %v632 = vunpack.c.l.b16 %v485
      %v633 = vunpack.c.l.b16 %v486
      %v634 = vpack.c.b16 %v632, %v631
      %v635 = vpack.c.b16 %v633, %v633
      %v654 = vunpack.c.l.b16 %v487
      %v655 = vunpack.c.l.b16 %v488
      %v656 = vunpack.c.l.b16 %v489
      %v657 = vunpack.c.l.b16 %v490
      %v658 = vunpack.c.l.b16 %v491
      %v659 = vunpack.c.l.b16 %v492
      %v660 = vunpack.c.l.b16 %v493
      %v661 = vunpack.c.l.b16 %v494
      %v662 = vunpack.c.l.b16 %v495
      %v663 = vunpack.c.l.b16 %v496
      %v664 = vunpack.c.l.b16 %v497
      %v665 = vunpack.c.l.b16 %v498
      %v666 = vunpack.c.l.b16 %v499
      %v667 = vunpack.c.l.b16 %v500
      %v668 = vunpack.c.l.b16 %v501
      %v669 = vunpack.c.l.b16 %v502
      %v670 = vpack.c.b16 %v655, %v654
      %v671 = vpack.c.b16 %v657, %v656
      %v672 = vpack.c.b16 %v659, %v658
      %v673 = vpack.c.b16 %v661, %v660
      %v674 = vpack.c.b16 %v663, %v662
      %v675 = vpack.c.b16 %v665, %v664
      %v676 = vpack.c.b16 %v667, %v666
      %v677 = vpack.c.b16 %v669, %v668
      %686 = vmatprep.subr.bf16.mxu0 0
      %687 = vmatpush1.bf16.msra.mxu0 %v677
      %688 = vmatprep.subr.bf16.mxu0 0
      %689 = vmatpush1.bf16.msra.mxu0 %v676
      %690 = vmatprep.subr.bf16.mxu0 0
      %691 = vmatpush1.bf16.msra.mxu0 %v675
      %692 = vmatprep.subr.bf16.mxu0 0
      %693 = vmatpush1.bf16.msra.mxu0 %v674
      %694 = vmatprep.subr.bf16.mxu0 0
      %695 = vmatpush1.bf16.msra.mxu0 %v673
      %696 = vmatprep.subr.bf16.mxu0 0
      %697 = vmatpush1.bf16.msra.mxu0 %v672
      %698 = vmatprep.subr.bf16.mxu0 0
      %699 = vmatpush1.bf16.msra.mxu0 %v671
      %700 = vmatprep.subr.bf16.mxu0 0
      %701 = vmatpush1.bf16.msra.mxu0 %v670
      %702 = vmatprep.subr.bf16.mxu0 0
      %703 = vmatpush2.bf16.msra.mxu0 0
      %704 = vmatprep.subr.bf16.mxu0 0
      %705 = vmatpush2.bf16.msra.mxu0 0
      %706 = vmatprep.subr.bf16.mxu0 0
      %707 = vmatpush2.bf16.msra.mxu0 0
      %708 = vmatprep.subr.bf16.mxu0 0
      %709 = vmatpush2.bf16.msra.mxu0 0
      %710 = vmatprep.subr.bf16.mxu0 0
      %711 = vmatpush2.bf16.msra.mxu0 0
      %712 = vmatprep.subr.bf16.mxu0 0
      %713 = vmatpush2.bf16.msra.mxu0 0
      %714 = vmatprep.subr.bf16.mxu0 0
      %715 = vmatpush2.bf16.msra.mxu0 0
      %716 = vmatprep.subr.bf16.mxu0 0
      %717 = vmatpush2.bf16.msra.mxu0 0
      %718 = vmatprep.mubr.bf16.mxu0 0
      %719 = vmatmul.mubr.bf16.gmra.mxu0 %v634
      %v720 = vpop.f32.mrf.mxu0
      %v721 = vadd.f32 %v615, %v720
      %v722 = vpop.f32.mrf.mxu0
      %v723 = vpop.f32.mrf.mxu0
      %v724 = vadd.f32 %v618, %v723
      %v725 = vpop.f32.mrf.mxu0
      %726 = vmatprep.mubr.bf16.mxu0 0
      %727 = vmatmul.mubr.bf16.gmra.mxu0 %v635
      %v728 = vpop.f32.mrf.mxu0
      %v729 = vadd.f32 %v623, %v728
      %v730 = vpop.f32.mrf.mxu0
      %v731 = vpop.f32.mrf.mxu0
      %v732 = vpop.f32.mrf.mxu0
      %733 = vdwg.mxu0
      %v734 = vld [vmem:[%s469] sm:$0xf]
      %v735 = vld [vmem:[%s469 + $0x4] sm:$0xf]
      %v736 = vld [vmem:[%s469 + $0x8] sm:$0xf]
      %v737 = vld [vmem:[%s5] sm:$0xf]
      %v738 = vld [vmem:[%s5 + $0x4] sm:$0xf]
      %v739 = vld [vmem:[%s5 + $0x8] sm:$0xf]
      %v740 = vld [vmem:[%s5 + $0xc] sm:$0xf]
      %v741 = vld [vmem:[%s5 + $0x10] sm:$0xf]
      %v742 = vld [vmem:[%s5 + $0x14] sm:$0xf]
      %v743 = vld [vmem:[%s5 + $0x18] sm:$0xf]
      %v744 = vld [vmem:[%s5 + $0x1c] sm:$0xf]
      %v745 = vld [vmem:[%s5 + $0x20] sm:$0xf]
      %v746 = vld [vmem:[%s5 + $0x24] sm:$0xf]
      %v747 = vld [vmem:[%s5 + $0x28] sm:$0xf]
      %v748 = vld [vmem:[%s5 + $0x2c] sm:$0xf]
      %v749 = vld [vmem:[%s5 + $0x30] sm:$0xf]
      %v750 = vld [vmem:[%s5 + $0x34] sm:$0xf]
      %v751 = vld [vmem:[%s5 + $0x38] sm:$0xf]
      %v752 = vld [vmem:[%s5 + $0x3c] sm:$0xf]
      %v756 = vunpack.c.l.b16 %v734
      %v757 = vunpack.c.l.b16 %v735
      %v758 = vunpack.c.l.b16 %v736
      %v759 = vpack.c.b16 %v757, %v756
      %v760 = vpack.c.b16 %v758, %v758
      %v779 = vunpack.c.l.b16 %v737
      %v780 = vunpack.c.l.b16 %v738
      %v781 = vunpack.c.l.b16 %v739
      %v782 = vunpack.c.l.b16 %v740
      %v783 = vunpack.c.l.b16 %v741
      %v784 = vunpack.c.l.b16 %v742
      %v785 = vunpack.c.l.b16 %v743
      %v786 = vunpack.c.l.b16 %v744
      %v787 = vunpack.c.l.b16 %v745
      %v788 = vunpack.c.l.b16 %v746
      %v789 = vunpack.c.l.b16 %v747
      %v790 = vunpack.c.l.b16 %v748
      %v791 = vunpack.c.l.b16 %v749
      %v792 = vunpack.c.l.b16 %v750
      %v793 = vunpack.c.l.b16 %v751
      %v794 = vunpack.c.l.b16 %v752
      %v795 = vpack.c.b16 %v780, %v779
      %v796 = vpack.c.b16 %v782, %v781
      %v797 = vpack.c.b16 %v784, %v783
      %v798 = vpack.c.b16 %v786, %v785
      %v799 = vpack.c.b16 %v788, %v787
      %v800 = vpack.c.b16 %v790, %v789
      %v801 = vpack.c.b16 %v792, %v791
      %v802 = vpack.c.b16 %v794, %v793
      %811 = vmatprep.subr.bf16.mxu0 0
      %812 = vmatpush1.bf16.msra.mxu0 %v802
      %813 = vmatprep.subr.bf16.mxu0 0
      %814 = vmatpush1.bf16.msra.mxu0 %v801
      %815 = vmatprep.subr.bf16.mxu0 0
      %816 = vmatpush1.bf16.msra.mxu0 %v800
      %817 = vmatprep.subr.bf16.mxu0 0
      %818 = vmatpush1.bf16.msra.mxu0 %v799
      %819 = vmatprep.subr.bf16.mxu0 0
      %820 = vmatpush1.bf16.msra.mxu0 %v798
      %821 = vmatprep.subr.bf16.mxu0 0
      %822 = vmatpush1.bf16.msra.mxu0 %v797
      %823 = vmatprep.subr.bf16.mxu0 0
      %824 = vmatpush1.bf16.msra.mxu0 %v796
      %825 = vmatprep.subr.bf16.mxu0 0
      %826 = vmatpush1.bf16.msra.mxu0 %v795
      %827 = vmatprep.subr.bf16.mxu0 0
      %828 = vmatpush2.bf16.msra.mxu0 0
      %829 = vmatprep.subr.bf16.mxu0 0
      %830 = vmatpush2.bf16.msra.mxu0 0
      %831 = vmatprep.subr.bf16.mxu0 0
      %832 = vmatpush2.bf16.msra.mxu0 0
      %833 = vmatprep.subr.bf16.mxu0 0
      %834 = vmatpush2.bf16.msra.mxu0 0
      %835 = vmatprep.subr.bf16.mxu0 0
      %836 = vmatpush2.bf16.msra.mxu0 0
      %837 = vmatprep.subr.bf16.mxu0 0
      %838 = vmatpush2.bf16.msra.mxu0 0
      %839 = vmatprep.subr.bf16.mxu0 0
      %840 = vmatpush2.bf16.msra.mxu0 0
      %841 = vmatprep.subr.bf16.mxu0 0
      %842 = vmatpush2.bf16.msra.mxu0 0
      %843 = vmatprep.mubr.bf16.mxu0 0
      %844 = vmatmul.mubr.bf16.gmra.mxu0 %v759
      %v845 = vpop.f32.mrf.mxu0
      %v846 = vadd.f32 0.0, %v845
      %v847 = vpop.f32.mrf.mxu0
      %v848 = vpop.f32.mrf.mxu0
      %v849 = vadd.f32 0.0, %v848
      %v850 = vpop.f32.mrf.mxu0
      %851 = vmatprep.mubr.bf16.mxu0 0
      %852 = vmatmul.mubr.bf16.gmra.mxu0 %v760
      %v853 = vpop.f32.mrf.mxu0
      %v854 = vadd.f32 0.0, %v853
      %v855 = vpop.f32.mrf.mxu0
      %v856 = vpop.f32.mrf.mxu0
      %v857 = vpop.f32.mrf.mxu0
      %858 = vdwg.mxu0
      %v859 = vadd.f32 %v721, %v846
      %v860 = vadd.f32 %v724, %v849
      %v861 = vadd.f32 %v729, %v854
      %v862 = vld [vmem:[%s6] sm:$0x1]
      %v864 = vlaneseq
      %v865 = vshrl.u32 %v864, 7
      %v866 = vsub.s32 0, %v865
      %v867 = vrot.slane %v862, %v866
      %v869 = vadd.f32 %v859, %v867
      %v870 = vadd.f32 %v860, %v867
      %v871 = vadd.f32 %v861, %v867
      %v872 = vxor.u32 %v869, 2147483648
      %v873 = vxor.u32 %v870, 2147483648
      %v874 = vxor.u32 %v871, 2147483648
      %v875 = vmul.f32 %v872, 1.442695
      %v876 = vpow.pop %v875
      %v877 = vmul.f32 %v873, 1.442695
      %v878 = vpow.pop %v877
      %v879 = vmul.f32 %v874, 1.442695
      %v880 = vpow.pop %v879
      %v881 = vadd.f32 %v876, 1.0
      %v882 = vadd.f32 %v878, 1.0
      %v883 = vadd.f32 %v880, 1.0
      %v884 = vrcp.pop %v881
      %v885 = vmul.f32 1.0, %v884
      %v886 = vrcp.pop %v882
      %v887 = vmul.f32 1.0, %v886
      %v888 = vrcp.pop %v883
      %v889 = vmul.f32 1.0, %v888
      %v890 = vmul.f32 %v869, %v885
      %v891 = vmul.f32 %v870, %v887
      %v892 = vmul.f32 %v871, %v889
      %v893 = vpack.c.bf16 %v891, %v890
      %v894 = vpack.c.bf16 %v892, %v892
      %v895 = vld [vmem:[%s7] sm:$0xf]
      %v896 = vld [vmem:[%s7 + $0x4] sm:$0xf]
      %v897 = vld [vmem:[%s7 + $0x8] sm:$0xf]
      %v898 = vld [vmem:[%s7 + $0xc] sm:$0xf]
      %v899 = vld [vmem:[%s7 + $0x10] sm:$0xf]
      %v900 = vld [vmem:[%s7 + $0x14] sm:$0xf]
      %v901 = vld [vmem:[%s7 + $0x18] sm:$0xf]
      %v902 = vld [vmem:[%s7 + $0x1c] sm:$0xf]
      %v903 = vld [vmem:[%s7 + $0x20] sm:$0xf]
      %v904 = vld [vmem:[%s7 + $0x24] sm:$0xf]
      %v905 = vld [vmem:[%s7 + $0x28] sm:$0xf]
      %v906 = vld [vmem:[%s7 + $0x2c] sm:$0xf]
      %v907 = vld [vmem:[%s7 + $0x30] sm:$0xf]
      %v908 = vld [vmem:[%s7 + $0x34] sm:$0xf]
      %v909 = vld [vmem:[%s7 + $0x38] sm:$0xf]
      %v910 = vld [vmem:[%s7 + $0x3c] sm:$0xf]
      %v911 = vld [vmem:[%s8] sm:$0x1]
      %v913 = vlaneseq
      %v914 = vshrl.u32 %v913, 7
      %v915 = vsub.s32 0, %v914
      %v916 = vrot.slane %v911, %v915
      %v934 = vunpack.c.l.b16 %v895
      %v935 = vunpack.c.l.b16 %v896
      %v936 = vunpack.c.l.b16 %v897
      %v937 = vunpack.c.l.b16 %v898
      %v938 = vunpack.c.l.b16 %v899
      %v939 = vunpack.c.l.b16 %v900
      %v940 = vunpack.c.l.b16 %v901
      %v941 = vunpack.c.l.b16 %v902
      %v942 = vunpack.c.l.b16 %v903
      %v943 = vunpack.c.l.b16 %v904
      %v944 = vunpack.c.l.b16 %v905
      %v945 = vunpack.c.l.b16 %v906
      %v946 = vunpack.c.l.b16 %v907
      %v947 = vunpack.c.l.b16 %v908
      %v948 = vunpack.c.l.b16 %v909
      %v949 = vunpack.c.l.b16 %v910
      %v950 = vpack.c.b16 %v935, %v934
      %v951 = vpack.c.b16 %v937, %v936
      %v952 = vpack.c.b16 %v939, %v938
      %v953 = vpack.c.b16 %v941, %v940
      %v954 = vpack.c.b16 %v943, %v942
      %v955 = vpack.c.b16 %v945, %v944
      %v956 = vpack.c.b16 %v947, %v946
      %v957 = vpack.c.b16 %v949, %v948
      %966 = vmatprep.subr.bf16.mxu0 0
      %967 = vmatpush1.bf16.msra.mxu0 %v957
      %968 = vmatprep.subr.bf16.mxu0 0
      %969 = vmatpush1.bf16.msra.mxu0 %v956
      %970 = vmatprep.subr.bf16.mxu0 0
      %971 = vmatpush1.bf16.msra.mxu0 %v955
      %972 = vmatprep.subr.bf16.mxu0 0
      %973 = vmatpush1.bf16.msra.mxu0 %v954
      %974 = vmatprep.subr.bf16.mxu0 0
      %975 = vmatpush1.bf16.msra.mxu0 %v953
      %976 = vmatprep.subr.bf16.mxu0 0
      %977 = vmatpush1.bf16.msra.mxu0 %v952
      %978 = vmatprep.subr.bf16.mxu0 0
      %979 = vmatpush1.bf16.msra.mxu0 %v951
      %980 = vmatprep.subr.bf16.mxu0 0
      %981 = vmatpush1.bf16.msra.mxu0 %v950
      %982 = vmatprep.subr.bf16.mxu0 0
      %983 = vmatpush2.bf16.msra.mxu0 0
      %984 = vmatprep.subr.bf16.mxu0 0
      %985 = vmatpush2.bf16.msra.mxu0 0
      %986 = vmatprep.subr.bf16.mxu0 0
      %987 = vmatpush2.bf16.msra.mxu0 0
      %988 = vmatprep.subr.bf16.mxu0 0
      %989 = vmatpush2.bf16.msra.mxu0 0
      %990 = vmatprep.subr.bf16.mxu0 0
      %991 = vmatpush2.bf16.msra.mxu0 0
      %992 = vmatprep.subr.bf16.mxu0 0
      %993 = vmatpush2.bf16.msra.mxu0 0
      %994 = vmatprep.subr.bf16.mxu0 0
      %995 = vmatpush2.bf16.msra.mxu0 0
      %996 = vmatprep.subr.bf16.mxu0 0
      %997 = vmatpush2.bf16.msra.mxu0 0
      %998 = vmatprep.mubr.bf16.mxu0 0
      %999 = vmatmul.mubr.bf16.gmra.mxu0 %v893
      %v1000 = vpop.f32.mrf.mxu0
      %v1001 = vadd.f32 %v916, %v1000
      %v1002 = vpop.f32.mrf.mxu0
      %v1003 = vpop.f32.mrf.mxu0
      %v1004 = vadd.f32 %v916, %v1003
      %v1005 = vpop.f32.mrf.mxu0
      %1006 = vmatprep.mubr.bf16.mxu0 0
      %1007 = vmatmul.mubr.bf16.gmra.mxu0 %v894
      %v1008 = vpop.f32.mrf.mxu0
      %v1009 = vadd.f32 %v916, %v1008
      %v1010 = vpop.f32.mrf.mxu0
      %v1011 = vpop.f32.mrf.mxu0
      %v1012 = vpop.f32.mrf.mxu0
      %1013 = vdwg.mxu0
      %1014 = vadd.xlane.f32.xlu0 %v1001
      %v1015 = vpop.xlane.xlu0 %1014
      %1016 = vadd.xlane.f32.xlu0 %v1004
      %v1017 = vpop.xlane.xlu0 %1016
      %1018 = vadd.xlane.f32.xlu0 %v1009
      %v1019 = vpop.xlane.xlu0 %1018
      %v1020 = vmul.f32 %v1015, 0.0078125
      %v1021 = vmul.f32 %v1017, 0.0078125
      %v1022 = vmul.f32 %v1019, 0.0078125
      %v1023 = vsub.f32 %v1001, %v1020
      %v1024 = vsub.f32 %v1004, %v1021
      %v1025 = vsub.f32 %v1009, %v1022
      %v1026 = vmul.f32 %v1023, %v1023
      %v1027 = vmul.f32 %v1024, %v1024
      %v1028 = vmul.f32 %v1025, %v1025
      %1029 = vadd.xlane.f32.xlu0 %v1026
      %v1030 = vpop.xlane.xlu0 %1029
      %1031 = vadd.xlane.f32.xlu0 %v1027
      %v1032 = vpop.xlane.xlu0 %1031
      %1033 = vadd.xlane.f32.xlu0 %v1028
      %v1034 = vpop.xlane.xlu0 %1033
      %v1035 = vmul.f32 %v1030, 0.0078125
      %v1036 = vmul.f32 %v1032, 0.0078125
      %v1037 = vmul.f32 %v1034, 0.0078125
      %v1038 = vadd.f32 %v1035, 1e-05
      %v1039 = vadd.f32 %v1036, 1e-05
      %v1040 = vadd.f32 %v1037, 1e-05
      %v1041 = vrsqrt.pop %v1038
      %v1042 = vrsqrt.pop %v1039
      %v1043 = vrsqrt.pop %v1040
      %v1044 = vmul.f32 %v1023, %v1041
      %v1045 = vmul.f32 %v1024, %v1042
      %v1046 = vmul.f32 %v1025, %v1043
      %v1047 = vld [vmem:[%s9] sm:$0x1]
      %v1049 = vlaneseq
      %v1050 = vshrl.u32 %v1049, 7
      %v1051 = vsub.s32 0, %v1050
      %v1052 = vrot.slane %v1047, %v1051
      %v1054 = vmul.f32 %v1044, %v1052
      %v1055 = vmul.f32 %v1045, %v1052
      %v1056 = vmul.f32 %v1046, %v1052
      %v1057 = vld [vmem:[%s10] sm:$0x1]
      %v1059 = vlaneseq
      %v1060 = vshrl.u32 %v1059, 7
      %v1061 = vsub.s32 0, %v1060
      %v1062 = vrot.slane %v1057, %v1061
      %v1064 = vadd.f32 %v1054, %v1062
      %v1065 = vadd.f32 %v1055, %v1062
      %v1066 = vadd.f32 %v1056, %v1062
      %v1067 = vld [vmem:[%s475] sm:$0xf]
      %v1068 = vld [vmem:[%s475 + $0x4] sm:$0xf]
      %v1069 = vld [vmem:[%s475 + $0x8] sm:$0xf]
      %v1070 = vunpack.c.l.bf16 %v1067
      %v1071 = vunpack.c.l.bf16 %v1068
      %v1072 = vunpack.c.l.bf16 %v1069
      %v1073 = vadd.f32 %v1064, %v1070
      %v1074 = vadd.f32 %v1065, %v1071
      %v1075 = vadd.f32 %v1066, %v1072
      %v1076 = vpack.c.bf16 %v1074, %v1073
      %v1077 = vpack.c.bf16 %v1075, %v1075
      %v1080 = vunpack.c.l.b16 %v1076
      %v1081 = vunpack.c.h.b16 %v1076
      %v1082 = vunpack.c.l.b16 %v1077
      %v1083 = vpack.c.b16 %v1080, %v1080
      %v1084 = vpack.c.b16 %v1081, %v1081
      %v1085 = vpack.c.b16 %v1082, %v1082
      %1089 = vst [vmem:[%s481] sm:$0xf] %v1083
      %1090 = vst [vmem:[%s481 + $0x4] sm:$0xf] %v1084
      %1091 = vst [vmem:[%s481 + $0x8] sm:$0xf] %v1085
      %s1092 = smul.u32 3, %s23
      %p1093 = scmp.lt.s32.totalorder %s1092, 5
      %s1094 = scalar_select %p1093, %s1092, 5
      %s1095 = smul.addr %s1094, 4
      %s1096 = scalar_lea.vmem %s12, %s1095
      // Predicated region
      $region69: #{graphcast_forward.26} parent=67 // pred_check
        %p1097 = pneg %p313
      $region70: #{graphcast_forward.26} parent=67 // pred_check_branch
        %1099 = sbr.rel (%p1097) target = $region72
      $region71: #{graphcast_forward.26} parent=67 // pred_region
        %s1100 = smul.u32 3, %s23
      $region72: #{graphcast_forward.26} parent=67 // pred_fallthru
        _
    $region68: #{graphcast_forward.26} parent=5 // pred_fallthru
      _
    %p1101 = scmp.le.s32.totalorder 2, %s18
    // Predicated region
    $region73: #{graphcast_forward.26} parent=5 // pred_check
      %p1102 = pneg %p1101
    $region74: #{graphcast_forward.26} parent=5 // pred_check_branch
      %1104 = sbr.rel (%p1102) target = $region76
    $region75: #{graphcast_forward.26} parent=5 // pred_region
      %s1105 = ssub.s32 %s18, 2
      // Predicated region
      $region77: #{graphcast_forward.26} parent=75 // pred_check
        %p1106 = pneg %p319
      $region78: #{graphcast_forward.26} parent=75 // pred_check_branch
        %1108 = sbr.rel (%p1106) target = $region80
      $region79: #{graphcast_forward.26} parent=75 // pred_region
        %s1109 = smul.u32 3, %s24
        %p1110 = scmp.lt.s32.totalorder %s1109, 5
        %s1111 = scalar_select %p1110, %s1109, 5
        %s1112 = smul.addr %s1111, 4
        %s1113 = scalar_lea.vmem %s12, %s1112
      $region80: #{graphcast_forward.26} parent=75 // pred_fallthru
        _
    $region76: #{graphcast_forward.26} parent=5 // pred_fallthru
      _
  $region6: #{graphcast_forward.26} parent=0 // loop_footer
    %s22 = sadd.s32 1, %s18
  $region7: #{graphcast_forward.26} parent=0 // loop_footer_branch
    %17 = sbr.rel target = $region3
  $region8: #{graphcast_forward.26} parent=0 // loop_exit
    _

// kernel: graphcast_forward.25
$region0: #{graphcast_forward.25}
  #allocation0 [shape = 'u32[]', space=smem, size = 0x4, offset = 0x4, fixed_abs, tag = 'smem constant byte address 0x4 - core index']
  #allocation1 [shape = 'u32[144,128]{1,0:T(1,128)}', space=vmem, size = 0x12000, scoped, tag = 'internal scratch']
  %s0 = inlined_call_operand.vmem [shape: bf16[64,128], index: 0, kind: input, shape index: {}, may-alias: {0,7}]
  %s1 = inlined_call_operand.vmem [shape: bf16[128,128], index: 1, kind: input, shape index: {}]
  %s2 = inlined_call_operand.vmem [shape: f32[1,128], index: 2, kind: input, shape index: {}]
  %s3 = inlined_call_operand.vmem [shape: bf16[128,128], index: 3, kind: input, shape index: {}]
  %s4 = inlined_call_operand.vmem [shape: f32[1,128], index: 4, kind: input, shape index: {}]
  %s5 = inlined_call_operand.vmem [shape: f32[1,128], index: 5, kind: input, shape index: {}]
  %s6 = inlined_call_operand.vmem [shape: f32[1,128], index: 6, kind: input, shape index: {}]
  %s7 = inlined_call_operand.vmem [shape: bf16[64,128], index: 7, kind: input, shape index: {}, may-alias: {0,7}]
  %s8 = inlined_call_operand.vmem [shape: bf16[64,128], index: 8, kind: output, shape index: {}]
  %s9 = sld [smem:[#allocation0]]
  $region65: #{graphcast_forward.25} parent=0
    _
  %s11 = ssub.s32 1, %s9
  %s12 = scalar_select 0, %s11, %s9
  loop: start=0, step=1, limit=4
  $region2: #{graphcast_forward.25} parent=0 // loop_pre_header
    _
  $region3: #{graphcast_forward.25} parent=0 // loop_header
    %s14 = sphi 0, %s18
    %p15 = scmp.ge.s32.totalorder %s14, 4
    %s24 = sphi 0, %s26
    %s27 = sphi 0, %s24
    %s28 = sphi 0, %s27
    %s44 = sphi 0, %s28
    %s48 = sphi 0, %s48
    %s50 = sphi 0, %s48
    %s51 = sphi 0, %s50
    %s65 = sphi 0, %s51
    %s69 = sphi 0, %s69
    %s71 = sphi 0, %s69
    %s72 = sphi 0, %s71
    %s86 = sphi 0, %s72
    %s90 = sphi 0, %s90
    %s92 = sphi 0, %s90
    %s93 = sphi 0, %s92
    %s107 = sphi 0, %s93
    %s111 = sphi 0, %s111
    %s113 = sphi 0, %s111
    %s114 = sphi 0, %s113
    %s128 = sphi 0, %s114
    %s132 = sphi 0, %s132
    %s134 = sphi 0, %s132
    %s135 = sphi 0, %s134
    %s149 = sphi 0, %s135
    %s153 = sphi 0, %s153
    %s155 = sphi 0, %s153
    %s156 = sphi 0, %s155
    %s170 = sphi 0, %s156
    %s176 = sphi 0, %s178
    %s179 = sphi 0, %s176
    %s180 = sphi 0, %s179
    %s196 = sphi 0, %s180
    %s202 = sphi 0, %s204
    %s205 = sphi 0, %s202
    %s206 = sphi 0, %s205
    %s222 = sphi 0, %s206
  $region4: #{graphcast_forward.25} parent=0 // loop_header_branch
    %17 = sbr.rel (%p15) target = $region8
  $region5: #{graphcast_forward.25} parent=0 // loop_body
    %s19 = ssub.s32 %s14, 1
    %s20 = ssub.s32 %s14, 2
    %s21 = sadd.s32 %s14, 1
    %s22 = ssub.s32 %s14, %s21
    %p23 = scmp.eq.s32.totalorder %s22, 0
    %s25 = sadd.s32 %s24, 1
    %s26 = scalar_select %p23, %s24, %s25
    %p29 = pneg %p23
    %p30 = scmp.eq.s32.totalorder %s14, 1
    %p31 = por %p29, %p30
    %p32 = scmp.ne.s32.totalorder %s24, %s27
    %p33 = scmp.eq.s32.totalorder %s14, 0
    %p34 = por %p32, %p33
    %p35 = scmp.ne.s32.totalorder %s24, %s27
    %p36 = scmp.eq.s32.totalorder %s19, 1
    %p37 = por %p35, %p36
    %p38 = scmp.ne.s32.totalorder %s27, %s28
    %p39 = scmp.eq.s32.totalorder %s19, 0
    %p40 = por %p38, %p39
    %p41 = scmp.ne.s32.totalorder %s27, %s28
    %p42 = scmp.eq.s32.totalorder %s20, 1
    %p43 = por %p41, %p42
    %p45 = scmp.ne.s32.totalorder %s28, %s44
    %p46 = scmp.eq.s32.totalorder %s20, 0
    %p47 = por %p45, %p46
    %s49 = sadd.s32 %s48, 1
    %p52 = scmp.eq.s32.totalorder %s14, 1
    %p53 = scmp.ne.s32.totalorder %s48, %s50
    %p54 = scmp.eq.s32.totalorder %s14, 0
    %p55 = por %p53, %p54
    %p56 = scmp.ne.s32.totalorder %s48, %s50
    %p57 = scmp.eq.s32.totalorder %s19, 1
    %p58 = por %p56, %p57
    %p59 = scmp.ne.s32.totalorder %s50, %s51
    %p60 = scmp.eq.s32.totalorder %s19, 0
    %p61 = por %p59, %p60
    %p62 = scmp.ne.s32.totalorder %s50, %s51
    %p63 = scmp.eq.s32.totalorder %s20, 1
    %p64 = por %p62, %p63
    %p66 = scmp.ne.s32.totalorder %s51, %s65
    %p67 = scmp.eq.s32.totalorder %s20, 0
    %p68 = por %p66, %p67
    %s70 = sadd.s32 %s69, 1
    %p73 = scmp.eq.s32.totalorder %s14, 1
    %p74 = scmp.ne.s32.totalorder %s69, %s71
    %p75 = scmp.eq.s32.totalorder %s14, 0
    %p76 = por %p74, %p75
    %p77 = scmp.ne.s32.totalorder %s69, %s71
    %p78 = scmp.eq.s32.totalorder %s19, 1
    %p79 = por %p77, %p78
    %p80 = scmp.ne.s32.totalorder %s71, %s72
    %p81 = scmp.eq.s32.totalorder %s19, 0
    %p82 = por %p80, %p81
    %p83 = scmp.ne.s32.totalorder %s71, %s72
    %p84 = scmp.eq.s32.totalorder %s20, 1
    %p85 = por %p83, %p84
    %p87 = scmp.ne.s32.totalorder %s72, %s86
    %p88 = scmp.eq.s32.totalorder %s20, 0
    %p89 = por %p87, %p88
    %s91 = sadd.s32 %s90, 1
    %p94 = scmp.eq.s32.totalorder %s14, 1
    %p95 = scmp.ne.s32.totalorder %s90, %s92
    %p96 = scmp.eq.s32.totalorder %s14, 0
    %p97 = por %p95, %p96
    %p98 = scmp.ne.s32.totalorder %s90, %s92
    %p99 = scmp.eq.s32.totalorder %s19, 1
    %p100 = por %p98, %p99
    %p101 = scmp.ne.s32.totalorder %s92, %s93
    %p102 = scmp.eq.s32.totalorder %s19, 0
    %p103 = por %p101, %p102
    %p104 = scmp.ne.s32.totalorder %s92, %s93
    %p105 = scmp.eq.s32.totalorder %s20, 1
    %p106 = por %p104, %p105
    %p108 = scmp.ne.s32.totalorder %s93, %s107
    %p109 = scmp.eq.s32.totalorder %s20, 0
    %p110 = por %p108, %p109
    %s112 = sadd.s32 %s111, 1
    %p115 = scmp.eq.s32.totalorder %s14, 1
    %p116 = scmp.ne.s32.totalorder %s111, %s113
    %p117 = scmp.eq.s32.totalorder %s14, 0
    %p118 = por %p116, %p117
    %p119 = scmp.ne.s32.totalorder %s111, %s113
    %p120 = scmp.eq.s32.totalorder %s19, 1
    %p121 = por %p119, %p120
    %p122 = scmp.ne.s32.totalorder %s113, %s114
    %p123 = scmp.eq.s32.totalorder %s19, 0
    %p124 = por %p122, %p123
    %p125 = scmp.ne.s32.totalorder %s113, %s114
    %p126 = scmp.eq.s32.totalorder %s20, 1
    %p127 = por %p125, %p126
    %p129 = scmp.ne.s32.totalorder %s114, %s128
    %p130 = scmp.eq.s32.totalorder %s20, 0
    %p131 = por %p129, %p130
    %s133 = sadd.s32 %s132, 1
    %p136 = scmp.eq.s32.totalorder %s14, 1
    %p137 = scmp.ne.s32.totalorder %s132, %s134
    %p138 = scmp.eq.s32.totalorder %s14, 0
    %p139 = por %p137, %p138
    %p140 = scmp.ne.s32.totalorder %s132, %s134
    %p141 = scmp.eq.s32.totalorder %s19, 1
    %p142 = por %p140, %p141
    %p143 = scmp.ne.s32.totalorder %s134, %s135
    %p144 = scmp.eq.s32.totalorder %s19, 0
    %p145 = por %p143, %p144
    %p146 = scmp.ne.s32.totalorder %s134, %s135
    %p147 = scmp.eq.s32.totalorder %s20, 1
    %p148 = por %p146, %p147
    %p150 = scmp.ne.s32.totalorder %s135, %s149
    %p151 = scmp.eq.s32.totalorder %s20, 0
    %p152 = por %p150, %p151
    %s154 = sadd.s32 %s153, 1
    %p157 = scmp.eq.s32.totalorder %s14, 1
    %p158 = scmp.ne.s32.totalorder %s153, %s155
    %p159 = scmp.eq.s32.totalorder %s14, 0
    %p160 = por %p158, %p159
    %p161 = scmp.ne.s32.totalorder %s153, %s155
    %p162 = scmp.eq.s32.totalorder %s19, 1
    %p163 = por %p161, %p162
    %p164 = scmp.ne.s32.totalorder %s155, %s156
    %p165 = scmp.eq.s32.totalorder %s19, 0
    %p166 = por %p164, %p165
    %p167 = scmp.ne.s32.totalorder %s155, %s156
    %p168 = scmp.eq.s32.totalorder %s20, 1
    %p169 = por %p167, %p168
    %p171 = scmp.ne.s32.totalorder %s156, %s170
    %p172 = scmp.eq.s32.totalorder %s20, 0
    %p173 = por %p171, %p172
    %s174 = ssub.s32 %s14, %s21
    %p175 = scmp.eq.s32.totalorder %s174, 0
    %s177 = sadd.s32 %s176, 1
    %s178 = scalar_select %p175, %s176, %s177
    %p181 = pneg %p175
    %p182 = scmp.eq.s32.totalorder %s14, 1
    %p183 = por %p181, %p182
    %p184 = scmp.ne.s32.totalorder %s176, %s179
    %p185 = scmp.eq.s32.totalorder %s14, 0
    %p186 = por %p184, %p185
    %p187 = scmp.ne.s32.totalorder %s176, %s179
    %p188 = scmp.eq.s32.totalorder %s19, 1
    %p189 = por %p187, %p188
    %p190 = scmp.ne.s32.totalorder %s179, %s180
    %p191 = scmp.eq.s32.totalorder %s19, 0
    %p192 = por %p190, %p191
    %p193 = scmp.ne.s32.totalorder %s179, %s180
    %p194 = scmp.eq.s32.totalorder %s20, 1
    %p195 = por %p193, %p194
    %p197 = scmp.ne.s32.totalorder %s180, %s196
    %p198 = scmp.eq.s32.totalorder %s20, 0
    %p199 = por %p197, %p198
    %s200 = ssub.s32 %s14, %s21
    %p201 = scmp.eq.s32.totalorder %s200, 0
    %s203 = sadd.s32 %s202, 1
    %s204 = scalar_select %p201, %s202, %s203
    %p207 = pneg %p201
    %p208 = scmp.eq.s32.totalorder %s14, 1
    %p209 = por %p207, %p208
    %p210 = scmp.ne.s32.totalorder %s202, %s205
    %p211 = scmp.eq.s32.totalorder %s14, 0
    %p212 = por %p210, %p211
    %p213 = scmp.ne.s32.totalorder %s202, %s205
    %p214 = scmp.eq.s32.totalorder %s19, 1
    %p215 = por %p213, %p214
    %p216 = scmp.ne.s32.totalorder %s205, %s206
    %p217 = scmp.eq.s32.totalorder %s19, 0
    %p218 = por %p216, %p217
    %p219 = scmp.ne.s32.totalorder %s205, %s206
    %p220 = scmp.eq.s32.totalorder %s20, 1
    %p221 = por %p219, %p220
    %p223 = scmp.ne.s32.totalorder %s206, %s222
    %p224 = scmp.eq.s32.totalorder %s20, 0
    %p225 = por %p223, %p224
    %p226 = scmp.le.s32.totalorder 1, %s14
    %p227 = scmp.lt.s32.totalorder %s14, 3
    %p228 = pnand %p226, %p227
    %p229 = pneg %p228
    // Predicated region
    $region9: #{graphcast_forward.25} parent=5 // pred_check
      _
    $region10: #{graphcast_forward.25} parent=5 // pred_check_branch
      %231 = sbr.rel (%p228) target = $region12
    $region11: #{graphcast_forward.25} parent=5 // pred_region
      %s232 = ssub.s32 %s14, 1
      // Predicated region
      $region13: #{graphcast_forward.25} parent=11 // pred_check
        %p233 = pneg %p61
      $region14: #{graphcast_forward.25} parent=11 // pred_check_branch
        %235 = sbr.rel (%p233) target = $region16
      $region15: #{graphcast_forward.25} parent=11 // pred_region
        _
      $region16: #{graphcast_forward.25} parent=11 // pred_fallthru
        _
      // Predicated region
      $region17: #{graphcast_forward.25} parent=11 // pred_check
        %p236 = pneg %p82
      $region18: #{graphcast_forward.25} parent=11 // pred_check_branch
        %238 = sbr.rel (%p236) target = $region20
      $region19: #{graphcast_forward.25} parent=11 // pred_region
        _
      $region20: #{graphcast_forward.25} parent=11 // pred_fallthru
        _
      // Predicated region
      $region21: #{graphcast_forward.25} parent=11 // pred_check
        %p239 = pneg %p103
      $region22: #{graphcast_forward.25} parent=11 // pred_check_branch
        %241 = sbr.rel (%p239) target = $region24
      $region23: #{graphcast_forward.25} parent=11 // pred_region
        _
      $region24: #{graphcast_forward.25} parent=11 // pred_fallthru
        _
      // Predicated region
      $region25: #{graphcast_forward.25} parent=11 // pred_check
        %p242 = pneg %p124
      $region26: #{graphcast_forward.25} parent=11 // pred_check_branch
        %244 = sbr.rel (%p242) target = $region28
      $region27: #{graphcast_forward.25} parent=11 // pred_region
        _
      $region28: #{graphcast_forward.25} parent=11 // pred_fallthru
        _
      // Predicated region
      $region29: #{graphcast_forward.25} parent=11 // pred_check
        %p245 = pneg %p145
      $region30: #{graphcast_forward.25} parent=11 // pred_check_branch
        %247 = sbr.rel (%p245) target = $region32
      $region31: #{graphcast_forward.25} parent=11 // pred_region
        _
      $region32: #{graphcast_forward.25} parent=11 // pred_fallthru
        _
      // Predicated region
      $region33: #{graphcast_forward.25} parent=11 // pred_check
        %p248 = pneg %p166
      $region34: #{graphcast_forward.25} parent=11 // pred_check_branch
        %250 = sbr.rel (%p248) target = $region36
      $region35: #{graphcast_forward.25} parent=11 // pred_region
        _
      $region36: #{graphcast_forward.25} parent=11 // pred_fallthru
        _
    $region12: #{graphcast_forward.25} parent=5 // pred_fallthru
      _
    %p251 = scmp.lt.s32.totalorder %s14, 2
    // Predicated region
    $region37: #{graphcast_forward.25} parent=5 // pred_check
      %p252 = pneg %p251
    $region38: #{graphcast_forward.25} parent=5 // pred_check_branch
      %254 = sbr.rel (%p252) target = $region40
    $region39: #{graphcast_forward.25} parent=5 // pred_region
      // Predicated region
      $region41: #{graphcast_forward.25} parent=39 // pred_check
        %p255 = pneg %p34
      $region42: #{graphcast_forward.25} parent=39 // pred_check_branch
        %257 = sbr.rel (%p255) target = $region44
      $region43: #{graphcast_forward.25} parent=39 // pred_region
        %s258 = smul.u32 4, %s14
        %p259 = scmp.lt.s32.totalorder %s258, 7
        %s260 = scalar_select %p259, %s258, 7
        %s261 = smul.addr %s260, 4
        %s262 = scalar_lea.vmem %s0, %s261
        %s263 = smul.u32 4, %s14
      $region44: #{graphcast_forward.25} parent=39 // pred_fallthru
        _
      // Predicated region
      $region45: #{graphcast_forward.25} parent=39 // pred_check
        %p264 = pneg %p186
      $region46: #{graphcast_forward.25} parent=39 // pred_check_branch
        %266 = sbr.rel (%p264) target = $region48
      $region47: #{graphcast_forward.25} parent=39 // pred_region
        %s267 = smul.u32 4, %s14
        %p268 = scmp.lt.s32.totalorder %s267, 7
        %s269 = scalar_select %p268, %s267, 7
        %s270 = smul.addr %s269, 4
        %s271 = scalar_lea.vmem %s7, %s270
        %s272 = smul.u32 4, %s14
      $region48: #{graphcast_forward.25} parent=39 // pred_fallthru
        _
    $region40: #{graphcast_forward.25} parent=5 // pred_fallthru
      _
    %p273 = scmp.le.s32.totalorder 1, %s14
    %p274 = scmp.lt.s32.totalorder %s14, 3
    %p275 = pnand %p273, %p274
    %p276 = pneg %p275
    // Predicated region
    $region49: #{graphcast_forward.25} parent=5 // pred_check
      _
    $region50: #{graphcast_forward.25} parent=5 // pred_check_branch
      %278 = sbr.rel (%p275) target = $region52
    $region51: #{graphcast_forward.25} parent=5 // pred_region
      %s279 = ssub.s32 %s14, 1
      %s280 = smul.u32 4, %s19
      %p281 = scmp.lt.s32.totalorder %s280, 7
      %s282 = scalar_select %p281, %s280, 7
      %s283 = smul.addr %s282, 4
      %s284 = scalar_lea.vmem %s0, %s283
      %p285 = pneg %p40
      %p286 = pneg %p37
      %p287 = pneg %p61
      %p288 = pneg %p58
      %p289 = pneg %p82
      %p290 = pneg %p79
      %p291 = pneg %p103
      %p292 = pneg %p100
      %p293 = pneg %p124
      %p294 = pneg %p121
      %p295 = pneg %p145
      %p296 = pneg %p142
      %p297 = pneg %p166
      %p298 = pneg %p163
      %s299 = smul.u32 4, %s19
      %p300 = scmp.lt.s32.totalorder %s299, 7
      %s301 = scalar_select %p300, %s299, 7
      %s302 = smul.addr %s301, 4
      %s303 = scalar_lea.vmem %s7, %s302
      %p304 = pneg %p192
      %p305 = pneg %p189
      %p306 = pneg %p218
      %p307 = pneg %p215
      %s308 = smul.u32 4, %s19
      %p309 = scmp.lt.s32.totalorder %s308, 7
      %s310 = scalar_select %p309, %s308, 7
      %s311 = smul.addr %s310, 4
      %s312 = scalar_lea.vmem %s8, %s311
      %s313 = smul.u32 4, %s19
      %p314 = scmp.lt.s32.totalorder %s313, 7
      %s315 = scalar_select %p314, %s313, 7
      %s316 = smul.addr %s315, 4
      %s317 = scalar_lea.vmem %s0, %s316
      %s318 = smul.u32 4, %s19
      %s319 = smul.u32 4, %s19
      %p320 = scmp.lt.s32.totalorder %s319, 7
      %s321 = scalar_select %p320, %s319, 7
      %s322 = smul.addr %s321, 4
      %s323 = scalar_lea.vmem %s7, %s322
      %s324 = smul.u32 4, %s19
      %s325 = smul.u32 4, %s19
      %p326 = scmp.lt.s32.totalorder %s325, 7
      %s327 = scalar_select %p326, %s325, 7
      %s328 = smul.addr %s327, 4
      %s329 = scalar_lea.vmem %s8, %s328
      %s330 = smul.u32 4, %s19
      %v332 = vld [vmem:[%s317] sm:$0xf]
      %v333 = vld [vmem:[%s317 + $0x4] sm:$0xf]
      %v334 = vld [vmem:[%s317 + $0x8] sm:$0xf]
      %v335 = vld [vmem:[%s317 + $0xc] sm:$0xf]
      %v336 = vld [vmem:[%s1] sm:$0xf]
      %v337 = vld [vmem:[%s1 + $0x4] sm:$0xf]
      %v338 = vld [vmem:[%s1 + $0x8] sm:$0xf]
      %v339 = vld [vmem:[%s1 + $0xc] sm:$0xf]
      %v340 = vld [vmem:[%s1 + $0x10] sm:$0xf]
      %v341 = vld [vmem:[%s1 + $0x14] sm:$0xf]
      %v342 = vld [vmem:[%s1 + $0x18] sm:$0xf]
      %v343 = vld [vmem:[%s1 + $0x1c] sm:$0xf]
      %v344 = vld [vmem:[%s1 + $0x20] sm:$0xf]
      %v345 = vld [vmem:[%s1 + $0x24] sm:$0xf]
      %v346 = vld [vmem:[%s1 + $0x28] sm:$0xf]
      %v347 = vld [vmem:[%s1 + $0x2c] sm:$0xf]
      %v348 = vld [vmem:[%s1 + $0x30] sm:$0xf]
      %v349 = vld [vmem:[%s1 + $0x34] sm:$0xf]
      %v350 = vld [vmem:[%s1 + $0x38] sm:$0xf]
      %v351 = vld [vmem:[%s1 + $0x3c] sm:$0xf]
      %v352 = vld [vmem:[%s2] sm:$0x1]
      %v354 = vlaneseq
      %v355 = vshrl.u32 %v354, 7
      %v356 = vsub.s32 0, %v355
      %v357 = vrot.slane %v352, %v356
      %v363 = vunpack.c.l.b16 %v332
      %v364 = vunpack.c.l.b16 %v333
      %v365 = vunpack.c.l.b16 %v334
      %v366 = vunpack.c.l.b16 %v335
      %v367 = vpack.c.b16 %v364, %v363
      %v368 = vpack.c.b16 %v366, %v365
      %v387 = vunpack.c.l.b16 %v336
      %v388 = vunpack.c.l.b16 %v337
      %v389 = vunpack.c.l.b16 %v338
      %v390 = vunpack.c.l.b16 %v339
      %v391 = vunpack.c.l.b16 %v340
      %v392 = vunpack.c.l.b16 %v341
      %v393 = vunpack.c.l.b16 %v342
      %v394 = vunpack.c.l.b16 %v343
      %v395 = vunpack.c.l.b16 %v344
      %v396 = vunpack.c.l.b16 %v345
      %v397 = vunpack.c.l.b16 %v346
      %v398 = vunpack.c.l.b16 %v347
      %v399 = vunpack.c.l.b16 %v348
      %v400 = vunpack.c.l.b16 %v349
      %v401 = vunpack.c.l.b16 %v350
      %v402 = vunpack.c.l.b16 %v351
      %v403 = vpack.c.b16 %v388, %v387
      %v404 = vpack.c.b16 %v390, %v389
      %v405 = vpack.c.b16 %v392, %v391
      %v406 = vpack.c.b16 %v394, %v393
      %v407 = vpack.c.b16 %v396, %v395
      %v408 = vpack.c.b16 %v398, %v397
      %v409 = vpack.c.b16 %v400, %v399
      %v410 = vpack.c.b16 %v402, %v401
      %419 = vmatprep.subr.bf16.mxu0 0
      %420 = vmatpush1.bf16.msra.mxu0 %v410
      %421 = vmatprep.subr.bf16.mxu0 0
      %422 = vmatpush1.bf16.msra.mxu0 %v409
      %423 = vmatprep.subr.bf16.mxu0 0
      %424 = vmatpush1.bf16.msra.mxu0 %v408
      %425 = vmatprep.subr.bf16.mxu0 0
      %426 = vmatpush1.bf16.msra.mxu0 %v407
      %427 = vmatprep.subr.bf16.mxu0 0
      %428 = vmatpush1.bf16.msra.mxu0 %v406
      %429 = vmatprep.subr.bf16.mxu0 0
      %430 = vmatpush1.bf16.msra.mxu0 %v405
      %431 = vmatprep.subr.bf16.mxu0 0
      %432 = vmatpush1.bf16.msra.mxu0 %v404
      %433 = vmatprep.subr.bf16.mxu0 0
      %434 = vmatpush1.bf16.msra.mxu0 %v403
      %435 = vmatprep.subr.bf16.mxu0 0
      %436 = vmatpush2.bf16.msra.mxu0 0
      %437 = vmatprep.subr.bf16.mxu0 0
      %438 = vmatpush2.bf16.msra.mxu0 0
      %439 = vmatprep.subr.bf16.mxu0 0
      %440 = vmatpush2.bf16.msra.mxu0 0
      %441 = vmatprep.subr.bf16.mxu0 0
      %442 = vmatpush2.bf16.msra.mxu0 0
      %443 = vmatprep.subr.bf16.mxu0 0
      %444 = vmatpush2.bf16.msra.mxu0 0
      %445 = vmatprep.subr.bf16.mxu0 0
      %446 = vmatpush2.bf16.msra.mxu0 0
      %447 = vmatprep.subr.bf16.mxu0 0
      %448 = vmatpush2.bf16.msra.mxu0 0
      %449 = vmatprep.subr.bf16.mxu0 0
      %450 = vmatpush2.bf16.msra.mxu0 0
      %451 = vmatprep.mubr.bf16.mxu0 0
      %452 = vmatmul.mubr.bf16.gmra.mxu0 %v367
      %v453 = vpop.f32.mrf.mxu0
      %v454 = vadd.f32 %v357, %v453
      %v455 = vpop.f32.mrf.mxu0
      %v456 = vpop.f32.mrf.mxu0
      %v457 = vadd.f32 %v357, %v456
      %v458 = vpop.f32.mrf.mxu0
      %459 = vmatprep.mubr.bf16.mxu0 0
      %460 = vmatmul.mubr.bf16.gmra.mxu0 %v368
      %v461 = vpop.f32.mrf.mxu0
      %v462 = vadd.f32 %v357, %v461
      %v463 = vpop.f32.mrf.mxu0
      %v464 = vpop.f32.mrf.mxu0
      %v465 = vadd.f32 %v357, %v464
      %v466 = vpop.f32.mrf.mxu0
      %467 = vdwg.mxu0
      %v468 = vxor.u32 %v454, 2147483648
      %v469 = vxor.u32 %v457, 2147483648
      %v470 = vxor.u32 %v462, 2147483648
      %v471 = vxor.u32 %v465, 2147483648
      %v472 = vmul.f32 %v468, 1.442695
      %v473 = vpow.pop %v472
      %v474 = vmul.f32 %v469, 1.442695
      %v475 = vpow.pop %v474
      %v476 = vmul.f32 %v470, 1.442695
      %v477 = vpow.pop %v476
      %v478 = vmul.f32 %v471, 1.442695
      %v479 = vpow.pop %v478
      %v480 = vadd.f32 %v473, 1.0
      %v481 = vadd.f32 %v475, 1.0
      %v482 = vadd.f32 %v477, 1.0
      %v483 = vadd.f32 %v479, 1.0
      %v484 = vrcp.pop %v480
      %v485 = vmul.f32 1.0, %v484
      %v486 = vrcp.pop %v481
      %v487 = vmul.f32 1.0, %v486
      %v488 = vrcp.pop %v482
      %v489 = vmul.f32 1.0, %v488
      %v490 = vrcp.pop %v483
      %v491 = vmul.f32 1.0, %v490
      %v492 = vmul.f32 %v454, %v485
      %v493 = vmul.f32 %v457, %v487
      %v494 = vmul.f32 %v462, %v489
      %v495 = vmul.f32 %v465, %v491
      %v496 = vpack.c.bf16 %v493, %v492
      %v497 = vpack.c.bf16 %v495, %v494
      %v498 = vld [vmem:[%s3] sm:$0xf]
      %v499 = vld [vmem:[%s3 + $0x4] sm:$0xf]
      %v500 = vld [vmem:[%s3 + $0x8] sm:$0xf]
      %v501 = vld [vmem:[%s3 + $0xc] sm:$0xf]
      %v502 = vld [vmem:[%s3 + $0x10] sm:$0xf]
      %v503 = vld [vmem:[%s3 + $0x14] sm:$0xf]
      %v504 = vld [vmem:[%s3 + $0x18] sm:$0xf]
      %v505 = vld [vmem:[%s3 + $0x1c] sm:$0xf]
      %v506 = vld [vmem:[%s3 + $0x20] sm:$0xf]
      %v507 = vld [vmem:[%s3 + $0x24] sm:$0xf]
      %v508 = vld [vmem:[%s3 + $0x28] sm:$0xf]
      %v509 = vld [vmem:[%s3 + $0x2c] sm:$0xf]
      %v510 = vld [vmem:[%s3 + $0x30] sm:$0xf]
      %v511 = vld [vmem:[%s3 + $0x34] sm:$0xf]
      %v512 = vld [vmem:[%s3 + $0x38] sm:$0xf]
      %v513 = vld [vmem:[%s3 + $0x3c] sm:$0xf]
      %v514 = vld [vmem:[%s4] sm:$0x1]
      %v516 = vlaneseq
      %v517 = vshrl.u32 %v516, 7
      %v518 = vsub.s32 0, %v517
      %v519 = vrot.slane %v514, %v518
      %v537 = vunpack.c.l.b16 %v498
      %v538 = vunpack.c.l.b16 %v499
      %v539 = vunpack.c.l.b16 %v500
      %v540 = vunpack.c.l.b16 %v501
      %v541 = vunpack.c.l.b16 %v502
      %v542 = vunpack.c.l.b16 %v503
      %v543 = vunpack.c.l.b16 %v504
      %v544 = vunpack.c.l.b16 %v505
      %v545 = vunpack.c.l.b16 %v506
      %v546 = vunpack.c.l.b16 %v507
      %v547 = vunpack.c.l.b16 %v508
      %v548 = vunpack.c.l.b16 %v509
      %v549 = vunpack.c.l.b16 %v510
      %v550 = vunpack.c.l.b16 %v511
      %v551 = vunpack.c.l.b16 %v512
      %v552 = vunpack.c.l.b16 %v513
      %v553 = vpack.c.b16 %v538, %v537
      %v554 = vpack.c.b16 %v540, %v539
      %v555 = vpack.c.b16 %v542, %v541
      %v556 = vpack.c.b16 %v544, %v543
      %v557 = vpack.c.b16 %v546, %v545
      %v558 = vpack.c.b16 %v548, %v547
      %v559 = vpack.c.b16 %v550, %v549
      %v560 = vpack.c.b16 %v552, %v551
      %569 = vmatprep.subr.bf16.mxu0 0
      %570 = vmatpush1.bf16.msra.mxu0 %v560
      %571 = vmatprep.subr.bf16.mxu0 0
      %572 = vmatpush1.bf16.msra.mxu0 %v559
      %573 = vmatprep.subr.bf16.mxu0 0
      %574 = vmatpush1.bf16.msra.mxu0 %v558
      %575 = vmatprep.subr.bf16.mxu0 0
      %576 = vmatpush1.bf16.msra.mxu0 %v557
      %577 = vmatprep.subr.bf16.mxu0 0
      %578 = vmatpush1.bf16.msra.mxu0 %v556
      %579 = vmatprep.subr.bf16.mxu0 0
      %580 = vmatpush1.bf16.msra.mxu0 %v555
      %581 = vmatprep.subr.bf16.mxu0 0
      %582 = vmatpush1.bf16.msra.mxu0 %v554
      %583 = vmatprep.subr.bf16.mxu0 0
      %584 = vmatpush1.bf16.msra.mxu0 %v553
      %585 = vmatprep.subr.bf16.mxu0 0
      %586 = vmatpush2.bf16.msra.mxu0 0
      %587 = vmatprep.subr.bf16.mxu0 0
      %588 = vmatpush2.bf16.msra.mxu0 0
      %589 = vmatprep.subr.bf16.mxu0 0
      %590 = vmatpush2.bf16.msra.mxu0 0
      %591 = vmatprep.subr.bf16.mxu0 0
      %592 = vmatpush2.bf16.msra.mxu0 0
      %593 = vmatprep.subr.bf16.mxu0 0
      %594 = vmatpush2.bf16.msra.mxu0 0
      %595 = vmatprep.subr.bf16.mxu0 0
      %596 = vmatpush2.bf16.msra.mxu0 0
      %597 = vmatprep.subr.bf16.mxu0 0
      %598 = vmatpush2.bf16.msra.mxu0 0
      %599 = vmatprep.subr.bf16.mxu0 0
      %600 = vmatpush2.bf16.msra.mxu0 0
      %601 = vmatprep.mubr.bf16.mxu0 0
      %602 = vmatmul.mubr.bf16.gmra.mxu0 %v496
      %v603 = vpop.f32.mrf.mxu0
      %v604 = vadd.f32 %v519, %v603
      %v605 = vpop.f32.mrf.mxu0
      %v606 = vpop.f32.mrf.mxu0
      %v607 = vadd.f32 %v519, %v606
      %v608 = vpop.f32.mrf.mxu0
      %609 = vmatprep.mubr.bf16.mxu0 0
      %610 = vmatmul.mubr.bf16.gmra.mxu0 %v497
      %v611 = vpop.f32.mrf.mxu0
      %v612 = vadd.f32 %v519, %v611
      %v613 = vpop.f32.mrf.mxu0
      %v614 = vpop.f32.mrf.mxu0
      %v615 = vadd.f32 %v519, %v614
      %v616 = vpop.f32.mrf.mxu0
      %617 = vdwg.mxu0
      %618 = vadd.xlane.f32.xlu0 %v604
      %v619 = vpop.xlane.xlu0 %618
      %620 = vadd.xlane.f32.xlu0 %v607
      %v621 = vpop.xlane.xlu0 %620
      %622 = vadd.xlane.f32.xlu0 %v612
      %v623 = vpop.xlane.xlu0 %622
      %624 = vadd.xlane.f32.xlu0 %v615
      %v625 = vpop.xlane.xlu0 %624
      %v626 = vmul.f32 %v619, 0.0078125
      %v627 = vmul.f32 %v621, 0.0078125
      %v628 = vmul.f32 %v623, 0.0078125
      %v629 = vmul.f32 %v625, 0.0078125
      %v630 = vsub.f32 %v604, %v626
      %v631 = vsub.f32 %v607, %v627
      %v632 = vsub.f32 %v612, %v628
      %v633 = vsub.f32 %v615, %v629
      %v634 = vmul.f32 %v630, %v630
      %v635 = vmul.f32 %v631, %v631
      %v636 = vmul.f32 %v632, %v632
      %v637 = vmul.f32 %v633, %v633
      %638 = vadd.xlane.f32.xlu0 %v634
      %v639 = vpop.xlane.xlu0 %638
      %640 = vadd.xlane.f32.xlu0 %v635
      %v641 = vpop.xlane.xlu0 %640
      %642 = vadd.xlane.f32.xlu0 %v636
      %v643 = vpop.xlane.xlu0 %642
      %644 = vadd.xlane.f32.xlu0 %v637
      %v645 = vpop.xlane.xlu0 %644
      %v646 = vmul.f32 %v639, 0.0078125
      %v647 = vmul.f32 %v641, 0.0078125
      %v648 = vmul.f32 %v643, 0.0078125
      %v649 = vmul.f32 %v645, 0.0078125
      %v650 = vadd.f32 %v646, 1e-05
      %v651 = vadd.f32 %v647, 1e-05
      %v652 = vadd.f32 %v648, 1e-05
      %v653 = vadd.f32 %v649, 1e-05
      %v654 = vrsqrt.pop %v650
      %v655 = vrsqrt.pop %v651
      %v656 = vrsqrt.pop %v652
      %v657 = vrsqrt.pop %v653
      %v658 = vmul.f32 %v630, %v654
      %v659 = vmul.f32 %v631, %v655
      %v660 = vmul.f32 %v632, %v656
      %v661 = vmul.f32 %v633, %v657
      %v662 = vld [vmem:[%s5] sm:$0x1]
      %v664 = vlaneseq
      %v665 = vshrl.u32 %v664, 7
      %v666 = vsub.s32 0, %v665
      %v667 = vrot.slane %v662, %v666
      %v669 = vmul.f32 %v658, %v667
      %v670 = vmul.f32 %v659, %v667
      %v671 = vmul.f32 %v660, %v667
      %v672 = vmul.f32 %v661, %v667
      %v673 = vld [vmem:[%s6] sm:$0x1]
      %v675 = vlaneseq
      %v676 = vshrl.u32 %v675, 7
      %v677 = vsub.s32 0, %v676
      %v678 = vrot.slane %v673, %v677
      %v680 = vadd.f32 %v669, %v678
      %v681 = vadd.f32 %v670, %v678
      %v682 = vadd.f32 %v671, %v678
      %v683 = vadd.f32 %v672, %v678
      %v684 = vld [vmem:[%s323] sm:$0xf]
      %v685 = vld [vmem:[%s323 + $0x4] sm:$0xf]
      %v686 = vld [vmem:[%s323 + $0x8] sm:$0xf]
      %v687 = vld [vmem:[%s323 + $0xc] sm:$0xf]
      %v688 = vunpack.c.l.bf16 %v684
      %v689 = vunpack.c.l.bf16 %v685
      %v690 = vunpack.c.l.bf16 %v686
      %v691 = vunpack.c.l.bf16 %v687
      %v692 = vadd.f32 %v680, %v688
      %v693 = vadd.f32 %v681, %v689
      %v694 = vadd.f32 %v682, %v690
      %v695 = vadd.f32 %v683, %v691
      %v696 = vpack.c.bf16 %v693, %v692
      %v697 = vpack.c.bf16 %v695, %v694
      %v700 = vunpack.c.l.b16 %v696
      %v701 = vunpack.c.h.b16 %v696
      %v702 = vunpack.c.l.b16 %v697
      %v703 = vunpack.c.h.b16 %v697
      %v704 = vpack.c.b16 %v700, %v700
      %v705 = vpack.c.b16 %v701, %v701
      %v706 = vpack.c.b16 %v702, %v702
      %v707 = vpack.c.b16 %v703, %v703
      %712 = vst [vmem:[%s329] sm:$0xf] %v704
      %713 = vst [vmem:[%s329 + $0x4] sm:$0xf] %v705
      %714 = vst [vmem:[%s329 + $0x8] sm:$0xf] %v706
      %715 = vst [vmem:[%s329 + $0xc] sm:$0xf] %v707
      %s716 = smul.u32 4, %s19
      %p717 = scmp.lt.s32.totalorder %s716, 7
      %s718 = scalar_select %p717, %s716, 7
      %s719 = smul.addr %s718, 4
      %s720 = scalar_lea.vmem %s8, %s719
      // Predicated region
      $region53: #{graphcast_forward.25} parent=51 // pred_check
        %p721 = pneg %p215
      $region54: #{graphcast_forward.25} parent=51 // pred_check_branch
        %723 = sbr.rel (%p721) target = $region56
      $region55: #{graphcast_forward.25} parent=51 // pred_region
        %s724 = smul.u32 4, %s19
      $region56: #{graphcast_forward.25} parent=51 // pred_fallthru
        _
    $region52: #{graphcast_forward.25} parent=5 // pred_fallthru
      _
    %p725 = scmp.le.s32.totalorder 2, %s14
    // Predicated region
    $region57: #{graphcast_forward.25} parent=5 // pred_check
      %p726 = pneg %p725
    $region58: #{graphcast_forward.25} parent=5 // pred_check_branch
      %728 = sbr.rel (%p726) target = $region60
    $region59: #{graphcast_forward.25} parent=5 // pred_region
      %s729 = ssub.s32 %s14, 2
      // Predicated region
      $region61: #{graphcast_forward.25} parent=59 // pred_check
        %p730 = pneg %p221
      $region62: #{graphcast_forward.25} parent=59 // pred_check_branch
        %732 = sbr.rel (%p730) target = $region64
      $region63: #{graphcast_forward.25} parent=59 // pred_region
        %s733 = smul.u32 4, %s20
        %p734 = scmp.lt.s32.totalorder %s733, 7
        %s735 = scalar_select %p734, %s733, 7
        %s736 = smul.addr %s735, 4
        %s737 = scalar_lea.vmem %s8, %s736
      $region64: #{graphcast_forward.25} parent=59 // pred_fallthru
        _
    $region60: #{graphcast_forward.25} parent=5 // pred_fallthru
      _
  $region6: #{graphcast_forward.25} parent=0 // loop_footer
    %s18 = sadd.s32 1, %s14
  $region7: #{graphcast_forward.25} parent=0 // loop_footer_branch
    %13 = sbr.rel target = $region3
  $region8: #{graphcast_forward.25} parent=0 // loop_exit
    _

// kernel: graphcast_forward.37
$region0: #{graphcast_forward.37}
  #allocation0 [shape = 'u32[]', space=smem, size = 0x4, offset = 0x4, fixed_abs, tag = 'smem constant byte address 0x4 - core index']
  #allocation1 [shape = 'u32[144,128]{1,0:T(1,128)}', space=vmem, size = 0x12000, scoped, tag = 'internal scratch']
  %s0 = inlined_call_operand.vmem [shape: bf16[64,128], index: 0, kind: input, shape index: {}]
  %s1 = inlined_call_operand.vmem [shape: bf16[128,128], index: 1, kind: input, shape index: {}]
  %s2 = inlined_call_operand.vmem [shape: f32[1,128], index: 2, kind: input, shape index: {}]
  %s3 = inlined_call_operand.vmem [shape: bf16[128,128], index: 3, kind: input, shape index: {}]
  %s4 = inlined_call_operand.vmem [shape: f32[1,128], index: 4, kind: input, shape index: {}]
  %s5 = inlined_call_operand.vmem [shape: f32[64,128], index: 5, kind: output, shape index: {}]
  %s6 = sld [smem:[#allocation0]]
  $region53: #{graphcast_forward.37} parent=0
    _
  %s8 = ssub.s32 1, %s6
  %s9 = scalar_select 0, %s8, %s6
  loop: start=0, step=1, limit=4
  $region2: #{graphcast_forward.37} parent=0 // loop_pre_header
    _
  $region3: #{graphcast_forward.37} parent=0 // loop_header
    %s11 = sphi 0, %s15
    %p12 = scmp.ge.s32.totalorder %s11, 4
    %s21 = sphi 0, %s23
    %s24 = sphi 0, %s21
    %s25 = sphi 0, %s24
    %s41 = sphi 0, %s25
    %s45 = sphi 0, %s45
    %s47 = sphi 0, %s45
    %s48 = sphi 0, %s47
    %s62 = sphi 0, %s48
    %s66 = sphi 0, %s66
    %s68 = sphi 0, %s66
    %s69 = sphi 0, %s68
    %s83 = sphi 0, %s69
    %s87 = sphi 0, %s87
    %s89 = sphi 0, %s87
    %s90 = sphi 0, %s89
    %s104 = sphi 0, %s90
    %s108 = sphi 0, %s108
    %s110 = sphi 0, %s108
    %s111 = sphi 0, %s110
    %s125 = sphi 0, %s111
    %s131 = sphi 0, %s133
    %s134 = sphi 0, %s131
    %s135 = sphi 0, %s134
    %s151 = sphi 0, %s135
  $region4: #{graphcast_forward.37} parent=0 // loop_header_branch
    %14 = sbr.rel (%p12) target = $region8
  $region5: #{graphcast_forward.37} parent=0 // loop_body
    %s16 = ssub.s32 %s11, 1
    %s17 = ssub.s32 %s11, 2
    %s18 = sadd.s32 %s11, 1
    %s19 = ssub.s32 %s11, %s18
    %p20 = scmp.eq.s32.totalorder %s19, 0
    %s22 = sadd.s32 %s21, 1
    %s23 = scalar_select %p20, %s21, %s22
    %p26 = pneg %p20
    %p27 = scmp.eq.s32.totalorder %s11, 1
    %p28 = por %p26, %p27
    %p29 = scmp.ne.s32.totalorder %s21, %s24
    %p30 = scmp.eq.s32.totalorder %s11, 0
    %p31 = por %p29, %p30
    %p32 = scmp.ne.s32.totalorder %s21, %s24
    %p33 = scmp.eq.s32.totalorder %s16, 1
    %p34 = por %p32, %p33
    %p35 = scmp.ne.s32.totalorder %s24, %s25
    %p36 = scmp.eq.s32.totalorder %s16, 0
    %p37 = por %p35, %p36
    %p38 = scmp.ne.s32.totalorder %s24, %s25
    %p39 = scmp.eq.s32.totalorder %s17, 1
    %p40 = por %p38, %p39
    %p42 = scmp.ne.s32.totalorder %s25, %s41
    %p43 = scmp.eq.s32.totalorder %s17, 0
    %p44 = por %p42, %p43
    %s46 = sadd.s32 %s45, 1
    %p49 = scmp.eq.s32.totalorder %s11, 1
    %p50 = scmp.ne.s32.totalorder %s45, %s47
    %p51 = scmp.eq.s32.totalorder %s11, 0
    %p52 = por %p50, %p51
    %p53 = scmp.ne.s32.totalorder %s45, %s47
    %p54 = scmp.eq.s32.totalorder %s16, 1
    %p55 = por %p53, %p54
    %p56 = scmp.ne.s32.totalorder %s47, %s48
    %p57 = scmp.eq.s32.totalorder %s16, 0
    %p58 = por %p56, %p57
    %p59 = scmp.ne.s32.totalorder %s47, %s48
    %p60 = scmp.eq.s32.totalorder %s17, 1
    %p61 = por %p59, %p60
    %p63 = scmp.ne.s32.totalorder %s48, %s62
    %p64 = scmp.eq.s32.totalorder %s17, 0
    %p65 = por %p63, %p64
    %s67 = sadd.s32 %s66, 1
    %p70 = scmp.eq.s32.totalorder %s11, 1
    %p71 = scmp.ne.s32.totalorder %s66, %s68
    %p72 = scmp.eq.s32.totalorder %s11, 0
    %p73 = por %p71, %p72
    %p74 = scmp.ne.s32.totalorder %s66, %s68
    %p75 = scmp.eq.s32.totalorder %s16, 1
    %p76 = por %p74, %p75
    %p77 = scmp.ne.s32.totalorder %s68, %s69
    %p78 = scmp.eq.s32.totalorder %s16, 0
    %p79 = por %p77, %p78
    %p80 = scmp.ne.s32.totalorder %s68, %s69
    %p81 = scmp.eq.s32.totalorder %s17, 1
    %p82 = por %p80, %p81
    %p84 = scmp.ne.s32.totalorder %s69, %s83
    %p85 = scmp.eq.s32.totalorder %s17, 0
    %p86 = por %p84, %p85
    %s88 = sadd.s32 %s87, 1
    %p91 = scmp.eq.s32.totalorder %s11, 1
    %p92 = scmp.ne.s32.totalorder %s87, %s89
    %p93 = scmp.eq.s32.totalorder %s11, 0
    %p94 = por %p92, %p93
    %p95 = scmp.ne.s32.totalorder %s87, %s89
    %p96 = scmp.eq.s32.totalorder %s16, 1
    %p97 = por %p95, %p96
    %p98 = scmp.ne.s32.totalorder %s89, %s90
    %p99 = scmp.eq.s32.totalorder %s16, 0
    %p100 = por %p98, %p99
    %p101 = scmp.ne.s32.totalorder %s89, %s90
    %p102 = scmp.eq.s32.totalorder %s17, 1
    %p103 = por %p101, %p102
    %p105 = scmp.ne.s32.totalorder %s90, %s104
    %p106 = scmp.eq.s32.totalorder %s17, 0
    %p107 = por %p105, %p106
    %s109 = sadd.s32 %s108, 1
    %p112 = scmp.eq.s32.totalorder %s11, 1
    %p113 = scmp.ne.s32.totalorder %s108, %s110
    %p114 = scmp.eq.s32.totalorder %s11, 0
    %p115 = por %p113, %p114
    %p116 = scmp.ne.s32.totalorder %s108, %s110
    %p117 = scmp.eq.s32.totalorder %s16, 1
    %p118 = por %p116, %p117
    %p119 = scmp.ne.s32.totalorder %s110, %s111
    %p120 = scmp.eq.s32.totalorder %s16, 0
    %p121 = por %p119, %p120
    %p122 = scmp.ne.s32.totalorder %s110, %s111
    %p123 = scmp.eq.s32.totalorder %s17, 1
    %p124 = por %p122, %p123
    %p126 = scmp.ne.s32.totalorder %s111, %s125
    %p127 = scmp.eq.s32.totalorder %s17, 0
    %p128 = por %p126, %p127
    %s129 = ssub.s32 %s11, %s18
    %p130 = scmp.eq.s32.totalorder %s129, 0
    %s132 = sadd.s32 %s131, 1
    %s133 = scalar_select %p130, %s131, %s132
    %p136 = pneg %p130
    %p137 = scmp.eq.s32.totalorder %s11, 1
    %p138 = por %p136, %p137
    %p139 = scmp.ne.s32.totalorder %s131, %s134
    %p140 = scmp.eq.s32.totalorder %s11, 0
    %p141 = por %p139, %p140
    %p142 = scmp.ne.s32.totalorder %s131, %s134
    %p143 = scmp.eq.s32.totalorder %s16, 1
    %p144 = por %p142, %p143
    %p145 = scmp.ne.s32.totalorder %s134, %s135
    %p146 = scmp.eq.s32.totalorder %s16, 0
    %p147 = por %p145, %p146
    %p148 = scmp.ne.s32.totalorder %s134, %s135
    %p149 = scmp.eq.s32.totalorder %s17, 1
    %p150 = por %p148, %p149
    %p152 = scmp.ne.s32.totalorder %s135, %s151
    %p153 = scmp.eq.s32.totalorder %s17, 0
    %p154 = por %p152, %p153
    %p155 = scmp.le.s32.totalorder 1, %s11
    %p156 = scmp.lt.s32.totalorder %s11, 3
    %p157 = pnand %p155, %p156
    %p158 = pneg %p157
    // Predicated region
    $region9: #{graphcast_forward.37} parent=5 // pred_check
      _
    $region10: #{graphcast_forward.37} parent=5 // pred_check_branch
      %160 = sbr.rel (%p157) target = $region12
    $region11: #{graphcast_forward.37} parent=5 // pred_region
      %s161 = ssub.s32 %s11, 1
      // Predicated region
      $region13: #{graphcast_forward.37} parent=11 // pred_check
        %p162 = pneg %p58
      $region14: #{graphcast_forward.37} parent=11 // pred_check_branch
        %164 = sbr.rel (%p162) target = $region16
      $region15: #{graphcast_forward.37} parent=11 // pred_region
        _
      $region16: #{graphcast_forward.37} parent=11 // pred_fallthru
        _
      // Predicated region
      $region17: #{graphcast_forward.37} parent=11 // pred_check
        %p165 = pneg %p79
      $region18: #{graphcast_forward.37} parent=11 // pred_check_branch
        %167 = sbr.rel (%p165) target = $region20
      $region19: #{graphcast_forward.37} parent=11 // pred_region
        _
      $region20: #{graphcast_forward.37} parent=11 // pred_fallthru
        _
      // Predicated region
      $region21: #{graphcast_forward.37} parent=11 // pred_check
        %p168 = pneg %p100
      $region22: #{graphcast_forward.37} parent=11 // pred_check_branch
        %170 = sbr.rel (%p168) target = $region24
      $region23: #{graphcast_forward.37} parent=11 // pred_region
        _
      $region24: #{graphcast_forward.37} parent=11 // pred_fallthru
        _
      // Predicated region
      $region25: #{graphcast_forward.37} parent=11 // pred_check
        %p171 = pneg %p121
      $region26: #{graphcast_forward.37} parent=11 // pred_check_branch
        %173 = sbr.rel (%p171) target = $region28
      $region27: #{graphcast_forward.37} parent=11 // pred_region
        _
      $region28: #{graphcast_forward.37} parent=11 // pred_fallthru
        _
    $region12: #{graphcast_forward.37} parent=5 // pred_fallthru
      _
    %p174 = scmp.lt.s32.totalorder %s11, 2
    // Predicated region
    $region29: #{graphcast_forward.37} parent=5 // pred_check
      %p175 = pneg %p174
    $region30: #{graphcast_forward.37} parent=5 // pred_check_branch
      %177 = sbr.rel (%p175) target = $region32
    $region31: #{graphcast_forward.37} parent=5 // pred_region
      // Predicated region
      $region33: #{graphcast_forward.37} parent=31 // pred_check
        %p178 = pneg %p31
      $region34: #{graphcast_forward.37} parent=31 // pred_check_branch
        %180 = sbr.rel (%p178) target = $region36
      $region35: #{graphcast_forward.37} parent=31 // pred_region
        %s181 = smul.u32 4, %s11
        %p182 = scmp.lt.s32.totalorder %s181, 7
        %s183 = scalar_select %p182, %s181, 7
        %s184 = smul.addr %s183, 4
        %s185 = scalar_lea.vmem %s0, %s184
        %s186 = smul.u32 4, %s11
      $region36: #{graphcast_forward.37} parent=31 // pred_fallthru
        _
    $region32: #{graphcast_forward.37} parent=5 // pred_fallthru
      _
    %p187 = scmp.le.s32.totalorder 1, %s11
    %p188 = scmp.lt.s32.totalorder %s11, 3
    %p189 = pnand %p187, %p188
    %p190 = pneg %p189
    // Predicated region
    $region37: #{graphcast_forward.37} parent=5 // pred_check
      _
    $region38: #{graphcast_forward.37} parent=5 // pred_check_branch
      %192 = sbr.rel (%p189) target = $region40
    $region39: #{graphcast_forward.37} parent=5 // pred_region
      %s193 = ssub.s32 %s11, 1
      %s194 = smul.u32 4, %s16
      %p195 = scmp.lt.s32.totalorder %s194, 7
      %s196 = scalar_select %p195, %s194, 7
      %s197 = smul.addr %s196, 4
      %s198 = scalar_lea.vmem %s0, %s197
      %p199 = pneg %p37
      %p200 = pneg %p34
      %p201 = pneg %p58
      %p202 = pneg %p55
      %p203 = pneg %p79
      %p204 = pneg %p76
      %p205 = pneg %p100
      %p206 = pneg %p97
      %p207 = pneg %p121
      %p208 = pneg %p118
      %p209 = pneg %p147
      %p210 = pneg %p144
      %s211 = smul.u32 4, %s16
      %p212 = scmp.lt.s32.totalorder %s211, 7
      %s213 = scalar_select %p212, %s211, 7
      %s214 = smul.addr %s213, 8
      %s215 = scalar_lea.vmem %s5, %s214
      %s216 = smul.u32 4, %s16
      %p217 = scmp.lt.s32.totalorder %s216, 7
      %s218 = scalar_select %p217, %s216, 7
      %s219 = smul.addr %s218, 4
      %s220 = scalar_lea.vmem %s0, %s219
      %s221 = smul.u32 4, %s16
      %s222 = smul.u32 4, %s16
      %p223 = scmp.lt.s32.totalorder %s222, 7
      %s224 = scalar_select %p223, %s222, 7
      %s225 = smul.addr %s224, 8
      %s226 = scalar_lea.vmem %s5, %s225
      %s227 = smul.u32 4, %s16
      %v229 = vld [vmem:[%s220] sm:$0xf]
      %v230 = vld [vmem:[%s220 + $0x4] sm:$0xf]
      %v231 = vld [vmem:[%s220 + $0x8] sm:$0xf]
      %v232 = vld [vmem:[%s220 + $0xc] sm:$0xf]
      %v233 = vld [vmem:[%s1] sm:$0xf]
      %v234 = vld [vmem:[%s1 + $0x4] sm:$0xf]
      %v235 = vld [vmem:[%s1 + $0x8] sm:$0xf]
      %v236 = vld [vmem:[%s1 + $0xc] sm:$0xf]
      %v237 = vld [vmem:[%s1 + $0x10] sm:$0xf]
      %v238 = vld [vmem:[%s1 + $0x14] sm:$0xf]
      %v239 = vld [vmem:[%s1 + $0x18] sm:$0xf]
      %v240 = vld [vmem:[%s1 + $0x1c] sm:$0xf]
      %v241 = vld [vmem:[%s1 + $0x20] sm:$0xf]
      %v242 = vld [vmem:[%s1 + $0x24] sm:$0xf]
      %v243 = vld [vmem:[%s1 + $0x28] sm:$0xf]
      %v244 = vld [vmem:[%s1 + $0x2c] sm:$0xf]
      %v245 = vld [vmem:[%s1 + $0x30] sm:$0xf]
      %v246 = vld [vmem:[%s1 + $0x34] sm:$0xf]
      %v247 = vld [vmem:[%s1 + $0x38] sm:$0xf]
      %v248 = vld [vmem:[%s1 + $0x3c] sm:$0xf]
      %v249 = vld [vmem:[%s2] sm:$0x1]
      %v251 = vlaneseq
      %v252 = vshrl.u32 %v251, 7
      %v253 = vsub.s32 0, %v252
      %v254 = vrot.slane %v249, %v253
      %v260 = vunpack.c.l.b16 %v229
      %v261 = vunpack.c.l.b16 %v230
      %v262 = vunpack.c.l.b16 %v231
      %v263 = vunpack.c.l.b16 %v232
      %v264 = vpack.c.b16 %v261, %v260
      %v265 = vpack.c.b16 %v263, %v262
      %v284 = vunpack.c.l.b16 %v233
      %v285 = vunpack.c.l.b16 %v234
      %v286 = vunpack.c.l.b16 %v235
      %v287 = vunpack.c.l.b16 %v236
      %v288 = vunpack.c.l.b16 %v237
      %v289 = vunpack.c.l.b16 %v238
      %v290 = vunpack.c.l.b16 %v239
      %v291 = vunpack.c.l.b16 %v240
      %v292 = vunpack.c.l.b16 %v241
      %v293 = vunpack.c.l.b16 %v242
      %v294 = vunpack.c.l.b16 %v243
      %v295 = vunpack.c.l.b16 %v244
      %v296 = vunpack.c.l.b16 %v245
      %v297 = vunpack.c.l.b16 %v246
      %v298 = vunpack.c.l.b16 %v247
      %v299 = vunpack.c.l.b16 %v248
      %v300 = vpack.c.b16 %v285, %v284
      %v301 = vpack.c.b16 %v287, %v286
      %v302 = vpack.c.b16 %v289, %v288
      %v303 = vpack.c.b16 %v291, %v290
      %v304 = vpack.c.b16 %v293, %v292
      %v305 = vpack.c.b16 %v295, %v294
      %v306 = vpack.c.b16 %v297, %v296
      %v307 = vpack.c.b16 %v299, %v298
      %316 = vmatprep.subr.bf16.mxu0 0
      %317 = vmatpush1.bf16.msra.mxu0 %v307
      %318 = vmatprep.subr.bf16.mxu0 0
      %319 = vmatpush1.bf16.msra.mxu0 %v306
      %320 = vmatprep.subr.bf16.mxu0 0
      %321 = vmatpush1.bf16.msra.mxu0 %v305
      %322 = vmatprep.subr.bf16.mxu0 0
      %323 = vmatpush1.bf16.msra.mxu0 %v304
      %324 = vmatprep.subr.bf16.mxu0 0
      %325 = vmatpush1.bf16.msra.mxu0 %v303
      %326 = vmatprep.subr.bf16.mxu0 0
      %327 = vmatpush1.bf16.msra.mxu0 %v302
      %328 = vmatprep.subr.bf16.mxu0 0
      %329 = vmatpush1.bf16.msra.mxu0 %v301
      %330 = vmatprep.subr.bf16.mxu0 0
      %331 = vmatpush1.bf16.msra.mxu0 %v300
      %332 = vmatprep.subr.bf16.mxu0 0
      %333 = vmatpush2.bf16.msra.mxu0 0
      %334 = vmatprep.subr.bf16.mxu0 0
      %335 = vmatpush2.bf16.msra.mxu0 0
      %336 = vmatprep.subr.bf16.mxu0 0
      %337 = vmatpush2.bf16.msra.mxu0 0
      %338 = vmatprep.subr.bf16.mxu0 0
      %339 = vmatpush2.bf16.msra.mxu0 0
      %340 = vmatprep.subr.bf16.mxu0 0
      %341 = vmatpush2.bf16.msra.mxu0 0
      %342 = vmatprep.subr.bf16.mxu0 0
      %343 = vmatpush2.bf16.msra.mxu0 0
      %344 = vmatprep.subr.bf16.mxu0 0
      %345 = vmatpush2.bf16.msra.mxu0 0
      %346 = vmatprep.subr.bf16.mxu0 0
      %347 = vmatpush2.bf16.msra.mxu0 0
      %348 = vmatprep.mubr.bf16.mxu0 0
      %349 = vmatmul.mubr.bf16.gmra.mxu0 %v264
      %v350 = vpop.f32.mrf.mxu0
      %v351 = vadd.f32 %v254, %v350
      %v352 = vpop.f32.mrf.mxu0
      %v353 = vpop.f32.mrf.mxu0
      %v354 = vadd.f32 %v254, %v353
      %v355 = vpop.f32.mrf.mxu0
      %356 = vmatprep.mubr.bf16.mxu0 0
      %357 = vmatmul.mubr.bf16.gmra.mxu0 %v265
      %v358 = vpop.f32.mrf.mxu0
      %v359 = vadd.f32 %v254, %v358
      %v360 = vpop.f32.mrf.mxu0
      %v361 = vpop.f32.mrf.mxu0
      %v362 = vadd.f32 %v254, %v361
      %v363 = vpop.f32.mrf.mxu0
      %364 = vdwg.mxu0
      %v365 = vxor.u32 %v351, 2147483648
      %v366 = vxor.u32 %v354, 2147483648
      %v367 = vxor.u32 %v359, 2147483648
      %v368 = vxor.u32 %v362, 2147483648
      %v369 = vmul.f32 %v365, 1.442695
      %v370 = vpow.pop %v369
      %v371 = vmul.f32 %v366, 1.442695
      %v372 = vpow.pop %v371
      %v373 = vmul.f32 %v367, 1.442695
      %v374 = vpow.pop %v373
      %v375 = vmul.f32 %v368, 1.442695
      %v376 = vpow.pop %v375
      %v377 = vadd.f32 %v370, 1.0
      %v378 = vadd.f32 %v372, 1.0
      %v379 = vadd.f32 %v374, 1.0
      %v380 = vadd.f32 %v376, 1.0
      %v381 = vrcp.pop %v377
      %v382 = vmul.f32 1.0, %v381
      %v383 = vrcp.pop %v378
      %v384 = vmul.f32 1.0, %v383
      %v385 = vrcp.pop %v379
      %v386 = vmul.f32 1.0, %v385
      %v387 = vrcp.pop %v380
      %v388 = vmul.f32 1.0, %v387
      %v389 = vmul.f32 %v351, %v382
      %v390 = vmul.f32 %v354, %v384
      %v391 = vmul.f32 %v359, %v386
      %v392 = vmul.f32 %v362, %v388
      %v393 = vpack.c.bf16 %v390, %v389
      %v394 = vpack.c.bf16 %v392, %v391
      %v395 = vld [vmem:[%s3] sm:$0xf]
      %v396 = vld [vmem:[%s3 + $0x4] sm:$0xf]
      %v397 = vld [vmem:[%s3 + $0x8] sm:$0xf]
      %v398 = vld [vmem:[%s3 + $0xc] sm:$0xf]
      %v399 = vld [vmem:[%s3 + $0x10] sm:$0xf]
      %v400 = vld [vmem:[%s3 + $0x14] sm:$0xf]
      %v401 = vld [vmem:[%s3 + $0x18] sm:$0xf]
      %v402 = vld [vmem:[%s3 + $0x1c] sm:$0xf]
      %v403 = vld [vmem:[%s3 + $0x20] sm:$0xf]
      %v404 = vld [vmem:[%s3 + $0x24] sm:$0xf]
      %v405 = vld [vmem:[%s3 + $0x28] sm:$0xf]
      %v406 = vld [vmem:[%s3 + $0x2c] sm:$0xf]
      %v407 = vld [vmem:[%s3 + $0x30] sm:$0xf]
      %v408 = vld [vmem:[%s3 + $0x34] sm:$0xf]
      %v409 = vld [vmem:[%s3 + $0x38] sm:$0xf]
      %v410 = vld [vmem:[%s3 + $0x3c] sm:$0xf]
      %v411 = vld [vmem:[%s4] sm:$0x1]
      %v413 = vlaneseq
      %v414 = vshrl.u32 %v413, 7
      %v415 = vsub.s32 0, %v414
      %v416 = vrot.slane %v411, %v415
      %v434 = vunpack.c.l.b16 %v395
      %v435 = vunpack.c.l.b16 %v396
      %v436 = vunpack.c.l.b16 %v397
      %v437 = vunpack.c.l.b16 %v398
      %v438 = vunpack.c.l.b16 %v399
      %v439 = vunpack.c.l.b16 %v400
      %v440 = vunpack.c.l.b16 %v401
      %v441 = vunpack.c.l.b16 %v402
      %v442 = vunpack.c.l.b16 %v403
      %v443 = vunpack.c.l.b16 %v404
      %v444 = vunpack.c.l.b16 %v405
      %v445 = vunpack.c.l.b16 %v406
      %v446 = vunpack.c.l.b16 %v407
      %v447 = vunpack.c.l.b16 %v408
      %v448 = vunpack.c.l.b16 %v409
      %v449 = vunpack.c.l.b16 %v410
      %v450 = vpack.c.b16 %v435, %v434
      %v451 = vpack.c.b16 %v437, %v436
      %v452 = vpack.c.b16 %v439, %v438
      %v453 = vpack.c.b16 %v441, %v440
      %v454 = vpack.c.b16 %v443, %v442
      %v455 = vpack.c.b16 %v445, %v444
      %v456 = vpack.c.b16 %v447, %v446
      %v457 = vpack.c.b16 %v449, %v448
      %466 = vmatprep.subr.bf16.mxu0 0
      %467 = vmatpush1.bf16.msra.mxu0 %v457
      %468 = vmatprep.subr.bf16.mxu0 0
      %469 = vmatpush1.bf16.msra.mxu0 %v456
      %470 = vmatprep.subr.bf16.mxu0 0
      %471 = vmatpush1.bf16.msra.mxu0 %v455
      %472 = vmatprep.subr.bf16.mxu0 0
      %473 = vmatpush1.bf16.msra.mxu0 %v454
      %474 = vmatprep.subr.bf16.mxu0 0
      %475 = vmatpush1.bf16.msra.mxu0 %v453
      %476 = vmatprep.subr.bf16.mxu0 0
      %477 = vmatpush1.bf16.msra.mxu0 %v452
      %478 = vmatprep.subr.bf16.mxu0 0
      %479 = vmatpush1.bf16.msra.mxu0 %v451
      %480 = vmatprep.subr.bf16.mxu0 0
      %481 = vmatpush1.bf16.msra.mxu0 %v450
      %482 = vmatprep.subr.bf16.mxu0 0
      %483 = vmatpush2.bf16.msra.mxu0 0
      %484 = vmatprep.subr.bf16.mxu0 0
      %485 = vmatpush2.bf16.msra.mxu0 0
      %486 = vmatprep.subr.bf16.mxu0 0
      %487 = vmatpush2.bf16.msra.mxu0 0
      %488 = vmatprep.subr.bf16.mxu0 0
      %489 = vmatpush2.bf16.msra.mxu0 0
      %490 = vmatprep.subr.bf16.mxu0 0
      %491 = vmatpush2.bf16.msra.mxu0 0
      %492 = vmatprep.subr.bf16.mxu0 0
      %493 = vmatpush2.bf16.msra.mxu0 0
      %494 = vmatprep.subr.bf16.mxu0 0
      %495 = vmatpush2.bf16.msra.mxu0 0
      %496 = vmatprep.subr.bf16.mxu0 0
      %497 = vmatpush2.bf16.msra.mxu0 0
      %498 = vmatprep.mubr.bf16.mxu0 0
      %499 = vmatmul.mubr.bf16.gmra.mxu0 %v393
      %v500 = vpop.f32.mrf.mxu0
      %v501 = vadd.f32 %v416, %v500
      %v502 = vpop.f32.mrf.mxu0
      %v503 = vpop.f32.mrf.mxu0
      %v504 = vadd.f32 %v416, %v503
      %v505 = vpop.f32.mrf.mxu0
      %506 = vmatprep.mubr.bf16.mxu0 0
      %507 = vmatmul.mubr.bf16.gmra.mxu0 %v394
      %v508 = vpop.f32.mrf.mxu0
      %v509 = vadd.f32 %v416, %v508
      %v510 = vpop.f32.mrf.mxu0
      %v511 = vpop.f32.mrf.mxu0
      %v512 = vadd.f32 %v416, %v511
      %v513 = vpop.f32.mrf.mxu0
      %514 = vdwg.mxu0
      %515 = vst [vmem:[%s226] sm:$0xff] %v501
      %516 = vst [vmem:[%s226 + $0x8] sm:$0xff] %v504
      %517 = vst [vmem:[%s226 + $0x10] sm:$0xff] %v509
      %518 = vst [vmem:[%s226 + $0x18] sm:$0xff] %v512
      %s519 = smul.u32 4, %s16
      %p520 = scmp.lt.s32.totalorder %s519, 7
      %s521 = scalar_select %p520, %s519, 7
      %s522 = smul.addr %s521, 8
      %s523 = scalar_lea.vmem %s5, %s522
      // Predicated region
      $region41: #{graphcast_forward.37} parent=39 // pred_check
        %p524 = pneg %p144
      $region42: #{graphcast_forward.37} parent=39 // pred_check_branch
        %526 = sbr.rel (%p524) target = $region44
      $region43: #{graphcast_forward.37} parent=39 // pred_region
        %s527 = smul.u32 4, %s16
      $region44: #{graphcast_forward.37} parent=39 // pred_fallthru
        _
    $region40: #{graphcast_forward.37} parent=5 // pred_fallthru
      _
    %p528 = scmp.le.s32.totalorder 2, %s11
    // Predicated region
    $region45: #{graphcast_forward.37} parent=5 // pred_check
      %p529 = pneg %p528
    $region46: #{graphcast_forward.37} parent=5 // pred_check_branch
      %531 = sbr.rel (%p529) target = $region48
    $region47: #{graphcast_forward.37} parent=5 // pred_region
      %s532 = ssub.s32 %s11, 2
      // Predicated region
      $region49: #{graphcast_forward.37} parent=47 // pred_check
        %p533 = pneg %p150
      $region50: #{graphcast_forward.37} parent=47 // pred_check_branch
        %535 = sbr.rel (%p533) target = $region52
      $region51: #{graphcast_forward.37} parent=47 // pred_region
        %s536 = smul.u32 4, %s17
        %p537 = scmp.lt.s32.totalorder %s536, 7
        %s538 = scalar_select %p537, %s536, 7
        %s539 = smul.addr %s538, 8
        %s540 = scalar_lea.vmem %s5, %s539
      $region52: #{graphcast_forward.37} parent=47 // pred_fallthru
        _
    $region48: #{graphcast_forward.37} parent=5 // pred_fallthru
      _
  $region6: #{graphcast_forward.37} parent=0 // loop_footer
    %s15 = sadd.s32 1, %s11
  $region7: #{graphcast_forward.37} parent=0 // loop_footer_branch
    %10 = sbr.rel target = $region3
  $region8: #{graphcast_forward.37} parent=0 // loop_exit
    _

// kernel: graphcast_forward.36
$region0: #{graphcast_forward.36}
  #allocation0 [shape = 'u32[]', space=smem, size = 0x4, offset = 0x4, fixed_abs, tag = 'smem constant byte address 0x4 - core index']
  #allocation1 [shape = 'u32[144,128]{1,0:T(1,128)}', space=vmem, size = 0x12000, scoped, tag = 'internal scratch']
  %s0 = inlined_call_operand.vmem [shape: bf16[64,128], index: 0, kind: input, shape index: {}]
  %s1 = inlined_call_operand.vmem [shape: bf16[64,128], index: 1, kind: input, shape index: {}, may-alias: {1,9}]
  %s2 = inlined_call_operand.vmem [shape: bf16[128,128], index: 2, kind: input, shape index: {}]
  %s3 = inlined_call_operand.vmem [shape: bf16[128,128], index: 3, kind: input, shape index: {}]
  %s4 = inlined_call_operand.vmem [shape: f32[1,128], index: 4, kind: input, shape index: {}]
  %s5 = inlined_call_operand.vmem [shape: bf16[128,128], index: 5, kind: input, shape index: {}]
  %s6 = inlined_call_operand.vmem [shape: f32[1,128], index: 6, kind: input, shape index: {}]
  %s7 = inlined_call_operand.vmem [shape: f32[1,128], index: 7, kind: input, shape index: {}]
  %s8 = inlined_call_operand.vmem [shape: f32[1,128], index: 8, kind: input, shape index: {}]
  %s9 = inlined_call_operand.vmem [shape: bf16[64,128], index: 9, kind: input, shape index: {}, may-alias: {1,9}]
  %s10 = inlined_call_operand.vmem [shape: bf16[64,128], index: 10, kind: output, shape index: {}]
  %s11 = sld [smem:[#allocation0]]
  $region73: #{graphcast_forward.36} parent=0
    _
  %s13 = ssub.s32 1, %s11
  %s14 = scalar_select 0, %s13, %s11
  loop: start=0, step=1, limit=4
  $region2: #{graphcast_forward.36} parent=0 // loop_pre_header
    _
  $region3: #{graphcast_forward.36} parent=0 // loop_header
    %s16 = sphi 0, %s20
    %p17 = scmp.ge.s32.totalorder %s16, 4
    %s26 = sphi 0, %s28
    %s29 = sphi 0, %s26
    %s30 = sphi 0, %s29
    %s46 = sphi 0, %s30
    %s52 = sphi 0, %s54
    %s55 = sphi 0, %s52
    %s56 = sphi 0, %s55
    %s72 = sphi 0, %s56
    %s76 = sphi 0, %s76
    %s78 = sphi 0, %s76
    %s79 = sphi 0, %s78
    %s93 = sphi 0, %s79
    %s97 = sphi 0, %s97
    %s99 = sphi 0, %s97
    %s100 = sphi 0, %s99
    %s114 = sphi 0, %s100
    %s118 = sphi 0, %s118
    %s120 = sphi 0, %s118
    %s121 = sphi 0, %s120
    %s135 = sphi 0, %s121
    %s139 = sphi 0, %s139
    %s141 = sphi 0, %s139
    %s142 = sphi 0, %s141
    %s156 = sphi 0, %s142
    %s160 = sphi 0, %s160
    %s162 = sphi 0, %s160
    %s163 = sphi 0, %s162
    %s177 = sphi 0, %s163
    %s181 = sphi 0, %s181
    %s183 = sphi 0, %s181
    %s184 = sphi 0, %s183
    %s198 = sphi 0, %s184
    %s202 = sphi 0, %s202
    %s204 = sphi 0, %s202
    %s205 = sphi 0, %s204
    %s219 = sphi 0, %s205
    %s225 = sphi 0, %s227
    %s228 = sphi 0, %s225
    %s229 = sphi 0, %s228
    %s245 = sphi 0, %s229
    %s251 = sphi 0, %s253
    %s254 = sphi 0, %s251
    %s255 = sphi 0, %s254
    %s271 = sphi 0, %s255
  $region4: #{graphcast_forward.36} parent=0 // loop_header_branch
    %19 = sbr.rel (%p17) target = $region8
  $region5: #{graphcast_forward.36} parent=0 // loop_body
    %s21 = ssub.s32 %s16, 1
    %s22 = ssub.s32 %s16, 2
    %s23 = sadd.s32 %s16, 1
    %s24 = ssub.s32 %s16, %s23
    %p25 = scmp.eq.s32.totalorder %s24, 0
    %s27 = sadd.s32 %s26, 1
    %s28 = scalar_select %p25, %s26, %s27
    %p31 = pneg %p25
    %p32 = scmp.eq.s32.totalorder %s16, 1
    %p33 = por %p31, %p32
    %p34 = scmp.ne.s32.totalorder %s26, %s29
    %p35 = scmp.eq.s32.totalorder %s16, 0
    %p36 = por %p34, %p35
    %p37 = scmp.ne.s32.totalorder %s26, %s29
    %p38 = scmp.eq.s32.totalorder %s21, 1
    %p39 = por %p37, %p38
    %p40 = scmp.ne.s32.totalorder %s29, %s30
    %p41 = scmp.eq.s32.totalorder %s21, 0
    %p42 = por %p40, %p41
    %p43 = scmp.ne.s32.totalorder %s29, %s30
    %p44 = scmp.eq.s32.totalorder %s22, 1
    %p45 = por %p43, %p44
    %p47 = scmp.ne.s32.totalorder %s30, %s46
    %p48 = scmp.eq.s32.totalorder %s22, 0
    %p49 = por %p47, %p48
    %s50 = ssub.s32 %s16, %s23
    %p51 = scmp.eq.s32.totalorder %s50, 0
    %s53 = sadd.s32 %s52, 1
    %s54 = scalar_select %p51, %s52, %s53
    %p57 = pneg %p51
    %p58 = scmp.eq.s32.totalorder %s16, 1
    %p59 = por %p57, %p58
    %p60 = scmp.ne.s32.totalorder %s52, %s55
    %p61 = scmp.eq.s32.totalorder %s16, 0
    %p62 = por %p60, %p61
    %p63 = scmp.ne.s32.totalorder %s52, %s55
    %p64 = scmp.eq.s32.totalorder %s21, 1
    %p65 = por %p63, %p64
    %p66 = scmp.ne.s32.totalorder %s55, %s56
    %p67 = scmp.eq.s32.totalorder %s21, 0
    %p68 = por %p66, %p67
    %p69 = scmp.ne.s32.totalorder %s55, %s56
    %p70 = scmp.eq.s32.totalorder %s22, 1
    %p71 = por %p69, %p70
    %p73 = scmp.ne.s32.totalorder %s56, %s72
    %p74 = scmp.eq.s32.totalorder %s22, 0
    %p75 = por %p73, %p74
    %s77 = sadd.s32 %s76, 1
    %p80 = scmp.eq.s32.totalorder %s16, 1
    %p81 = scmp.ne.s32.totalorder %s76, %s78
    %p82 = scmp.eq.s32.totalorder %s16, 0
    %p83 = por %p81, %p82
    %p84 = scmp.ne.s32.totalorder %s76, %s78
    %p85 = scmp.eq.s32.totalorder %s21, 1
    %p86 = por %p84, %p85
    %p87 = scmp.ne.s32.totalorder %s78, %s79
    %p88 = scmp.eq.s32.totalorder %s21, 0
    %p89 = por %p87, %p88
    %p90 = scmp.ne.s32.totalorder %s78, %s79
    %p91 = scmp.eq.s32.totalorder %s22, 1
    %p92 = por %p90, %p91
    %p94 = scmp.ne.s32.totalorder %s79, %s93
    %p95 = scmp.eq.s32.totalorder %s22, 0
    %p96 = por %p94, %p95
    %s98 = sadd.s32 %s97, 1
    %p101 = scmp.eq.s32.totalorder %s16, 1
    %p102 = scmp.ne.s32.totalorder %s97, %s99
    %p103 = scmp.eq.s32.totalorder %s16, 0
    %p104 = por %p102, %p103
    %p105 = scmp.ne.s32.totalorder %s97, %s99
    %p106 = scmp.eq.s32.totalorder %s21, 1
    %p107 = por %p105, %p106
    %p108 = scmp.ne.s32.totalorder %s99, %s100
    %p109 = scmp.eq.s32.totalorder %s21, 0
    %p110 = por %p108, %p109
    %p111 = scmp.ne.s32.totalorder %s99, %s100
    %p112 = scmp.eq.s32.totalorder %s22, 1
    %p113 = por %p111, %p112
    %p115 = scmp.ne.s32.totalorder %s100, %s114
    %p116 = scmp.eq.s32.totalorder %s22, 0
    %p117 = por %p115, %p116
    %s119 = sadd.s32 %s118, 1
    %p122 = scmp.eq.s32.totalorder %s16, 1
    %p123 = scmp.ne.s32.totalorder %s118, %s120
    %p124 = scmp.eq.s32.totalorder %s16, 0
    %p125 = por %p123, %p124
    %p126 = scmp.ne.s32.totalorder %s118, %s120
    %p127 = scmp.eq.s32.totalorder %s21, 1
    %p128 = por %p126, %p127
    %p129 = scmp.ne.s32.totalorder %s120, %s121
    %p130 = scmp.eq.s32.totalorder %s21, 0
    %p131 = por %p129, %p130
    %p132 = scmp.ne.s32.totalorder %s120, %s121
    %p133 = scmp.eq.s32.totalorder %s22, 1
    %p134 = por %p132, %p133
    %p136 = scmp.ne.s32.totalorder %s121, %s135
    %p137 = scmp.eq.s32.totalorder %s22, 0
    %p138 = por %p136, %p137
    %s140 = sadd.s32 %s139, 1
    %p143 = scmp.eq.s32.totalorder %s16, 1
    %p144 = scmp.ne.s32.totalorder %s139, %s141
    %p145 = scmp.eq.s32.totalorder %s16, 0
    %p146 = por %p144, %p145
    %p147 = scmp.ne.s32.totalorder %s139, %s141
    %p148 = scmp.eq.s32.totalorder %s21, 1
    %p149 = por %p147, %p148
    %p150 = scmp.ne.s32.totalorder %s141, %s142
    %p151 = scmp.eq.s32.totalorder %s21, 0
    %p152 = por %p150, %p151
    %p153 = scmp.ne.s32.totalorder %s141, %s142
    %p154 = scmp.eq.s32.totalorder %s22, 1
    %p155 = por %p153, %p154
    %p157 = scmp.ne.s32.totalorder %s142, %s156
    %p158 = scmp.eq.s32.totalorder %s22, 0
    %p159 = por %p157, %p158
    %s161 = sadd.s32 %s160, 1
    %p164 = scmp.eq.s32.totalorder %s16, 1
    %p165 = scmp.ne.s32.totalorder %s160, %s162
    %p166 = scmp.eq.s32.totalorder %s16, 0
    %p167 = por %p165, %p166
    %p168 = scmp.ne.s32.totalorder %s160, %s162
    %p169 = scmp.eq.s32.totalorder %s21, 1
    %p170 = por %p168, %p169
    %p171 = scmp.ne.s32.totalorder %s162, %s163
    %p172 = scmp.eq.s32.totalorder %s21, 0
    %p173 = por %p171, %p172
    %p174 = scmp.ne.s32.totalorder %s162, %s163
    %p175 = scmp.eq.s32.totalorder %s22, 1
    %p176 = por %p174, %p175
    %p178 = scmp.ne.s32.totalorder %s163, %s177
    %p179 = scmp.eq.s32.totalorder %s22, 0
    %p180 = por %p178, %p179
    %s182 = sadd.s32 %s181, 1
    %p185 = scmp.eq.s32.totalorder %s16, 1
    %p186 = scmp.ne.s32.totalorder %s181, %s183
    %p187 = scmp.eq.s32.totalorder %s16, 0
    %p188 = por %p186, %p187
    %p189 = scmp.ne.s32.totalorder %s181, %s183
    %p190 = scmp.eq.s32.totalorder %s21, 1
    %p191 = por %p189, %p190
    %p192 = scmp.ne.s32.totalorder %s183, %s184
    %p193 = scmp.eq.s32.totalorder %s21, 0
    %p194 = por %p192, %p193
    %p195 = scmp.ne.s32.totalorder %s183, %s184
    %p196 = scmp.eq.s32.totalorder %s22, 1
    %p197 = por %p195, %p196
    %p199 = scmp.ne.s32.totalorder %s184, %s198
    %p200 = scmp.eq.s32.totalorder %s22, 0
    %p201 = por %p199, %p200
    %s203 = sadd.s32 %s202, 1
    %p206 = scmp.eq.s32.totalorder %s16, 1
    %p207 = scmp.ne.s32.totalorder %s202, %s204
    %p208 = scmp.eq.s32.totalorder %s16, 0
    %p209 = por %p207, %p208
    %p210 = scmp.ne.s32.totalorder %s202, %s204
    %p211 = scmp.eq.s32.totalorder %s21, 1
    %p212 = por %p210, %p211
    %p213 = scmp.ne.s32.totalorder %s204, %s205
    %p214 = scmp.eq.s32.totalorder %s21, 0
    %p215 = por %p213, %p214
    %p216 = scmp.ne.s32.totalorder %s204, %s205
    %p217 = scmp.eq.s32.totalorder %s22, 1
    %p218 = por %p216, %p217
    %p220 = scmp.ne.s32.totalorder %s205, %s219
    %p221 = scmp.eq.s32.totalorder %s22, 0
    %p222 = por %p220, %p221
    %s223 = ssub.s32 %s16, %s23
    %p224 = scmp.eq.s32.totalorder %s223, 0
    %s226 = sadd.s32 %s225, 1
    %s227 = scalar_select %p224, %s225, %s226
    %p230 = pneg %p224
    %p231 = scmp.eq.s32.totalorder %s16, 1
    %p232 = por %p230, %p231
    %p233 = scmp.ne.s32.totalorder %s225, %s228
    %p234 = scmp.eq.s32.totalorder %s16, 0
    %p235 = por %p233, %p234
    %p236 = scmp.ne.s32.totalorder %s225, %s228
    %p237 = scmp.eq.s32.totalorder %s21, 1
    %p238 = por %p236, %p237
    %p239 = scmp.ne.s32.totalorder %s228, %s229
    %p240 = scmp.eq.s32.totalorder %s21, 0
    %p241 = por %p239, %p240
    %p242 = scmp.ne.s32.totalorder %s228, %s229
    %p243 = scmp.eq.s32.totalorder %s22, 1
    %p244 = por %p242, %p243
    %p246 = scmp.ne.s32.totalorder %s229, %s245
    %p247 = scmp.eq.s32.totalorder %s22, 0
    %p248 = por %p246, %p247
    %s249 = ssub.s32 %s16, %s23
    %p250 = scmp.eq.s32.totalorder %s249, 0
    %s252 = sadd.s32 %s251, 1
    %s253 = scalar_select %p250, %s251, %s252
    %p256 = pneg %p250
    %p257 = scmp.eq.s32.totalorder %s16, 1
    %p258 = por %p256, %p257
    %p259 = scmp.ne.s32.totalorder %s251, %s254
    %p260 = scmp.eq.s32.totalorder %s16, 0
    %p261 = por %p259, %p260
    %p262 = scmp.ne.s32.totalorder %s251, %s254
    %p263 = scmp.eq.s32.totalorder %s21, 1
    %p264 = por %p262, %p263
    %p265 = scmp.ne.s32.totalorder %s254, %s255
    %p266 = scmp.eq.s32.totalorder %s21, 0
    %p267 = por %p265, %p266
    %p268 = scmp.ne.s32.totalorder %s254, %s255
    %p269 = scmp.eq.s32.totalorder %s22, 1
    %p270 = por %p268, %p269
    %p272 = scmp.ne.s32.totalorder %s255, %s271
    %p273 = scmp.eq.s32.totalorder %s22, 0
    %p274 = por %p272, %p273
    %p275 = scmp.le.s32.totalorder 1, %s16
    %p276 = scmp.lt.s32.totalorder %s16, 3
    %p277 = pnand %p275, %p276
    %p278 = pneg %p277
    // Predicated region
    $region9: #{graphcast_forward.36} parent=5 // pred_check
      _
    $region10: #{graphcast_forward.36} parent=5 // pred_check_branch
      %280 = sbr.rel (%p277) target = $region12
    $region11: #{graphcast_forward.36} parent=5 // pred_region
      %s281 = ssub.s32 %s16, 1
      // Predicated region
      $region13: #{graphcast_forward.36} parent=11 // pred_check
        %p282 = pneg %p89
      $region14: #{graphcast_forward.36} parent=11 // pred_check_branch
        %284 = sbr.rel (%p282) target = $region16
      $region15: #{graphcast_forward.36} parent=11 // pred_region
        _
      $region16: #{graphcast_forward.36} parent=11 // pred_fallthru
        _
      // Predicated region
      $region17: #{graphcast_forward.36} parent=11 // pred_check
        %p285 = pneg %p110
      $region18: #{graphcast_forward.36} parent=11 // pred_check_branch
        %287 = sbr.rel (%p285) target = $region20
      $region19: #{graphcast_forward.36} parent=11 // pred_region
        _
      $region20: #{graphcast_forward.36} parent=11 // pred_fallthru
        _
      // Predicated region
      $region21: #{graphcast_forward.36} parent=11 // pred_check
        %p288 = pneg %p131
      $region22: #{graphcast_forward.36} parent=11 // pred_check_branch
        %290 = sbr.rel (%p288) target = $region24
      $region23: #{graphcast_forward.36} parent=11 // pred_region
        _
      $region24: #{graphcast_forward.36} parent=11 // pred_fallthru
        _
      // Predicated region
      $region25: #{graphcast_forward.36} parent=11 // pred_check
        %p291 = pneg %p152
      $region26: #{graphcast_forward.36} parent=11 // pred_check_branch
        %293 = sbr.rel (%p291) target = $region28
      $region27: #{graphcast_forward.36} parent=11 // pred_region
        _
      $region28: #{graphcast_forward.36} parent=11 // pred_fallthru
        _
      // Predicated region
      $region29: #{graphcast_forward.36} parent=11 // pred_check
        %p294 = pneg %p173
      $region30: #{graphcast_forward.36} parent=11 // pred_check_branch
        %296 = sbr.rel (%p294) target = $region32
      $region31: #{graphcast_forward.36} parent=11 // pred_region
        _
      $region32: #{graphcast_forward.36} parent=11 // pred_fallthru
        _
      // Predicated region
      $region33: #{graphcast_forward.36} parent=11 // pred_check
        %p297 = pneg %p194
      $region34: #{graphcast_forward.36} parent=11 // pred_check_branch
        %299 = sbr.rel (%p297) target = $region36
      $region35: #{graphcast_forward.36} parent=11 // pred_region
        _
      $region36: #{graphcast_forward.36} parent=11 // pred_fallthru
        _
      // Predicated region
      $region37: #{graphcast_forward.36} parent=11 // pred_check
        %p300 = pneg %p215
      $region38: #{graphcast_forward.36} parent=11 // pred_check_branch
        %302 = sbr.rel (%p300) target = $region40
      $region39: #{graphcast_forward.36} parent=11 // pred_region
        _
      $region40: #{graphcast_forward.36} parent=11 // pred_fallthru
        _
    $region12: #{graphcast_forward.36} parent=5 // pred_fallthru
      _
    %p303 = scmp.lt.s32.totalorder %s16, 2
    // Predicated region
    $region41: #{graphcast_forward.36} parent=5 // pred_check
      %p304 = pneg %p303
    $region42: #{graphcast_forward.36} parent=5 // pred_check_branch
      %306 = sbr.rel (%p304) target = $region44
    $region43: #{graphcast_forward.36} parent=5 // pred_region
      // Predicated region
      $region45: #{graphcast_forward.36} parent=43 // pred_check
        %p307 = pneg %p36
      $region46: #{graphcast_forward.36} parent=43 // pred_check_branch
        %309 = sbr.rel (%p307) target = $region48
      $region47: #{graphcast_forward.36} parent=43 // pred_region
        %s310 = smul.u32 4, %s16
        %p311 = scmp.lt.s32.totalorder %s310, 7
        %s312 = scalar_select %p311, %s310, 7
        %s313 = smul.addr %s312, 4
        %s314 = scalar_lea.vmem %s0, %s313
        %s315 = smul.u32 4, %s16
      $region48: #{graphcast_forward.36} parent=43 // pred_fallthru
        _
      // Predicated region
      $region49: #{graphcast_forward.36} parent=43 // pred_check
        %p316 = pneg %p62
      $region50: #{graphcast_forward.36} parent=43 // pred_check_branch
        %318 = sbr.rel (%p316) target = $region52
      $region51: #{graphcast_forward.36} parent=43 // pred_region
        %s319 = smul.u32 4, %s16
        %p320 = scmp.lt.s32.totalorder %s319, 7
        %s321 = scalar_select %p320, %s319, 7
        %s322 = smul.addr %s321, 4
        %s323 = scalar_lea.vmem %s1, %s322
        %s324 = smul.u32 4, %s16
      $region52: #{graphcast_forward.36} parent=43 // pred_fallthru
        _
      // Predicated region
      $region53: #{graphcast_forward.36} parent=43 // pred_check
        %p325 = pneg %p235
      $region54: #{graphcast_forward.36} parent=43 // pred_check_branch
        %327 = sbr.rel (%p325) target = $region56
      $region55: #{graphcast_forward.36} parent=43 // pred_region
        %s328 = smul.u32 4, %s16
        %p329 = scmp.lt.s32.totalorder %s328, 7
        %s330 = scalar_select %p329, %s328, 7
        %s331 = smul.addr %s330, 4
        %s332 = scalar_lea.vmem %s9, %s331
        %s333 = smul.u32 4, %s16
      $region56: #{graphcast_forward.36} parent=43 // pred_fallthru
        _
    $region44: #{graphcast_forward.36} parent=5 // pred_fallthru
      _
    %p334 = scmp.le.s32.totalorder 1, %s16
    %p335 = scmp.lt.s32.totalorder %s16, 3
    %p336 = pnand %p334, %p335
    %p337 = pneg %p336
    // Predicated region
    $region57: #{graphcast_forward.36} parent=5 // pred_check
      _
    $region58: #{graphcast_forward.36} parent=5 // pred_check_branch
      %339 = sbr.rel (%p336) target = $region60
    $region59: #{graphcast_forward.36} parent=5 // pred_region
      %s340 = ssub.s32 %s16, 1
      %s341 = smul.u32 4, %s21
      %p342 = scmp.lt.s32.totalorder %s341, 7
      %s343 = scalar_select %p342, %s341, 7
      %s344 = smul.addr %s343, 4
      %s345 = scalar_lea.vmem %s0, %s344
      %p346 = pneg %p42
      %p347 = pneg %p39
      %s348 = smul.u32 4, %s21
      %p349 = scmp.lt.s32.totalorder %s348, 7
      %s350 = scalar_select %p349, %s348, 7
      %s351 = smul.addr %s350, 4
      %s352 = scalar_lea.vmem %s1, %s351
      %p353 = pneg %p68
      %p354 = pneg %p65
      %p355 = pneg %p89
      %p356 = pneg %p86
      %p357 = pneg %p110
      %p358 = pneg %p107
      %p359 = pneg %p131
      %p360 = pneg %p128
      %p361 = pneg %p152
      %p362 = pneg %p149
      %p363 = pneg %p173
      %p364 = pneg %p170
      %p365 = pneg %p194
      %p366 = pneg %p191
      %p367 = pneg %p215
      %p368 = pneg %p212
      %s369 = smul.u32 4, %s21
      %p370 = scmp.lt.s32.totalorder %s369, 7
      %s371 = scalar_select %p370, %s369, 7
      %s372 = smul.addr %s371, 4
      %s373 = scalar_lea.vmem %s9, %s372
      %p374 = pneg %p241
      %p375 = pneg %p238
      %p376 = pneg %p267
      %p377 = pneg %p264
      %s378 = smul.u32 4, %s21
      %p379 = scmp.lt.s32.totalorder %s378, 7
      %s380 = scalar_select %p379, %s378, 7
      %s381 = smul.addr %s380, 4
      %s382 = scalar_lea.vmem %s10, %s381
      %s383 = smul.u32 4, %s21
      %p384 = scmp.lt.s32.totalorder %s383, 7
      %s385 = scalar_select %p384, %s383, 7
      %s386 = smul.addr %s385, 4
      %s387 = scalar_lea.vmem %s0, %s386
      %s388 = smul.u32 4, %s21
      %s389 = smul.u32 4, %s21
      %p390 = scmp.lt.s32.totalorder %s389, 7
      %s391 = scalar_select %p390, %s389, 7
      %s392 = smul.addr %s391, 4
      %s393 = scalar_lea.vmem %s1, %s392
      %s394 = smul.u32 4, %s21
      %s395 = smul.u32 4, %s21
      %p396 = scmp.lt.s32.totalorder %s395, 7
      %s397 = scalar_select %p396, %s395, 7
      %s398 = smul.addr %s397, 4
      %s399 = scalar_lea.vmem %s9, %s398
      %s400 = smul.u32 4, %s21
      %s401 = smul.u32 4, %s21
      %p402 = scmp.lt.s32.totalorder %s401, 7
      %s403 = scalar_select %p402, %s401, 7
      %s404 = smul.addr %s403, 4
      %s405 = scalar_lea.vmem %s10, %s404
      %s406 = smul.u32 4, %s21
      %v408 = vld [vmem:[%s387] sm:$0xf]
      %v409 = vld [vmem:[%s387 + $0x4] sm:$0xf]
      %v410 = vld [vmem:[%s387 + $0x8] sm:$0xf]
      %v411 = vld [vmem:[%s387 + $0xc] sm:$0xf]
      %v412 = vld [vmem:[%s2] sm:$0xf]
      %v413 = vld [vmem:[%s2 + $0x4] sm:$0xf]
      %v414 = vld [vmem:[%s2 + $0x8] sm:$0xf]
      %v415 = vld [vmem:[%s2 + $0xc] sm:$0xf]
      %v416 = vld [vmem:[%s2 + $0x10] sm:$0xf]
      %v417 = vld [vmem:[%s2 + $0x14] sm:$0xf]
      %v418 = vld [vmem:[%s2 + $0x18] sm:$0xf]
      %v419 = vld [vmem:[%s2 + $0x1c] sm:$0xf]
      %v420 = vld [vmem:[%s2 + $0x20] sm:$0xf]
      %v421 = vld [vmem:[%s2 + $0x24] sm:$0xf]
      %v422 = vld [vmem:[%s2 + $0x28] sm:$0xf]
      %v423 = vld [vmem:[%s2 + $0x2c] sm:$0xf]
      %v424 = vld [vmem:[%s2 + $0x30] sm:$0xf]
      %v425 = vld [vmem:[%s2 + $0x34] sm:$0xf]
      %v426 = vld [vmem:[%s2 + $0x38] sm:$0xf]
      %v427 = vld [vmem:[%s2 + $0x3c] sm:$0xf]
      %v428 = vld [vmem:[%s393] sm:$0xf]
      %v429 = vld [vmem:[%s393 + $0x4] sm:$0xf]
      %v430 = vld [vmem:[%s393 + $0x8] sm:$0xf]
      %v431 = vld [vmem:[%s393 + $0xc] sm:$0xf]
      %v432 = vld [vmem:[%s3] sm:$0xf]
      %v433 = vld [vmem:[%s3 + $0x4] sm:$0xf]
      %v434 = vld [vmem:[%s3 + $0x8] sm:$0xf]
      %v435 = vld [vmem:[%s3 + $0xc] sm:$0xf]
      %v436 = vld [vmem:[%s3 + $0x10] sm:$0xf]
      %v437 = vld [vmem:[%s3 + $0x14] sm:$0xf]
      %v438 = vld [vmem:[%s3 + $0x18] sm:$0xf]
      %v439 = vld [vmem:[%s3 + $0x1c] sm:$0xf]
      %v440 = vld [vmem:[%s3 + $0x20] sm:$0xf]
      %v441 = vld [vmem:[%s3 + $0x24] sm:$0xf]
      %v442 = vld [vmem:[%s3 + $0x28] sm:$0xf]
      %v443 = vld [vmem:[%s3 + $0x2c] sm:$0xf]
      %v444 = vld [vmem:[%s3 + $0x30] sm:$0xf]
      %v445 = vld [vmem:[%s3 + $0x34] sm:$0xf]
      %v446 = vld [vmem:[%s3 + $0x38] sm:$0xf]
      %v447 = vld [vmem:[%s3 + $0x3c] sm:$0xf]
      %v452 = vunpack.c.l.b16 %v428
      %v453 = vunpack.c.l.b16 %v429
      %v454 = vunpack.c.l.b16 %v430
      %v455 = vunpack.c.l.b16 %v431
      %v456 = vpack.c.b16 %v453, %v452
      %v457 = vpack.c.b16 %v455, %v454
      %v476 = vunpack.c.l.b16 %v432
      %v477 = vunpack.c.l.b16 %v433
      %v478 = vunpack.c.l.b16 %v434
      %v479 = vunpack.c.l.b16 %v435
      %v480 = vunpack.c.l.b16 %v436
      %v481 = vunpack.c.l.b16 %v437
      %v482 = vunpack.c.l.b16 %v438
      %v483 = vunpack.c.l.b16 %v439
      %v484 = vunpack.c.l.b16 %v440
      %v485 = vunpack.c.l.b16 %v441
      %v486 = vunpack.c.l.b16 %v442
      %v487 = vunpack.c.l.b16 %v443
      %v488 = vunpack.c.l.b16 %v444
      %v489 = vunpack.c.l.b16 %v445
      %v490 = vunpack.c.l.b16 %v446
      %v491 = vunpack.c.l.b16 %v447
      %v492 = vpack.c.b16 %v477, %v476
      %v493 = vpack.c.b16 %v479, %v478
      %v494 = vpack.c.b16 %v481, %v480
      %v495 = vpack.c.b16 %v483, %v482
      %v496 = vpack.c.b16 %v485, %v484
      %v497 = vpack.c.b16 %v487, %v486
      %v498 = vpack.c.b16 %v489, %v488
      %v499 = vpack.c.b16 %v491, %v490
      %508 = vmatprep.subr.bf16.mxu0 0
      %509 = vmatpush1.bf16.msra.mxu0 %v499
      %510 = vmatprep.subr.bf16.mxu0 0
      %511 = vmatpush1.bf16.msra.mxu0 %v498
      %512 = vmatprep.subr.bf16.mxu0 0
      %513 = vmatpush1.bf16.msra.mxu0 %v497
      %514 = vmatprep.subr.bf16.mxu0 0
      %515 = vmatpush1.bf16.msra.mxu0 %v496
      %516 = vmatprep.subr.bf16.mxu0 0
      %517 = vmatpush1.bf16.msra.mxu0 %v495
      %518 = vmatprep.subr.bf16.mxu0 0
      %519 = vmatpush1.bf16.msra.mxu0 %v494
      %520 = vmatprep.subr.bf16.mxu0 0
      %521 = vmatpush1.bf16.msra.mxu0 %v493
      %522 = vmatprep.subr.bf16.mxu0 0
      %523 = vmatpush1.bf16.msra.mxu0 %v492
      %524 = vmatprep.subr.bf16.mxu0 0
      %525 = vmatpush2.bf16.msra.mxu0 0
      %526 = vmatprep.subr.bf16.mxu0 0
      %527 = vmatpush2.bf16.msra.mxu0 0
      %528 = vmatprep.subr.bf16.mxu0 0
      %529 = vmatpush2.bf16.msra.mxu0 0
      %530 = vmatprep.subr.bf16.mxu0 0
      %531 = vmatpush2.bf16.msra.mxu0 0
      %532 = vmatprep.subr.bf16.mxu0 0
      %533 = vmatpush2.bf16.msra.mxu0 0
      %534 = vmatprep.subr.bf16.mxu0 0
      %535 = vmatpush2.bf16.msra.mxu0 0
      %536 = vmatprep.subr.bf16.mxu0 0
      %537 = vmatpush2.bf16.msra.mxu0 0
      %538 = vmatprep.subr.bf16.mxu0 0
      %539 = vmatpush2.bf16.msra.mxu0 0
      %540 = vmatprep.mubr.bf16.mxu0 0
      %541 = vmatmul.mubr.bf16.gmra.mxu0 %v456
      %v542 = vpop.f32.mrf.mxu0
      %v543 = vadd.f32 0.0, %v542
      %v544 = vpop.f32.mrf.mxu0
      %v545 = vpop.f32.mrf.mxu0
      %v546 = vadd.f32 0.0, %v545
      %v547 = vpop.f32.mrf.mxu0
      %548 = vmatprep.mubr.bf16.mxu0 0
      %549 = vmatmul.mubr.bf16.gmra.mxu0 %v457
      %v550 = vpop.f32.mrf.mxu0
      %v551 = vadd.f32 0.0, %v550
      %v552 = vpop.f32.mrf.mxu0
      %v553 = vpop.f32.mrf.mxu0
      %v554 = vadd.f32 0.0, %v553
      %v555 = vpop.f32.mrf.mxu0
      %556 = vdwg.mxu0
      %v561 = vunpack.c.l.b16 %v408
      %v562 = vunpack.c.l.b16 %v409
      %v563 = vunpack.c.l.b16 %v410
      %v564 = vunpack.c.l.b16 %v411
      %v565 = vpack.c.b16 %v562, %v561
      %v566 = vpack.c.b16 %v564, %v563
      %v585 = vunpack.c.l.b16 %v412
      %v586 = vunpack.c.l.b16 %v413
      %v587 = vunpack.c.l.b16 %v414
      %v588 = vunpack.c.l.b16 %v415
      %v589 = vunpack.c.l.b16 %v416
      %v590 = vunpack.c.l.b16 %v417
      %v591 = vunpack.c.l.b16 %v418
      %v592 = vunpack.c.l.b16 %v419
      %v593 = vunpack.c.l.b16 %v420
      %v594 = vunpack.c.l.b16 %v421
      %v595 = vunpack.c.l.b16 %v422
      %v596 = vunpack.c.l.b16 %v423
      %v597 = vunpack.c.l.b16 %v424
      %v598 = vunpack.c.l.b16 %v425
      %v599 = vunpack.c.l.b16 %v426
      %v600 = vunpack.c.l.b16 %v427
      %v601 = vpack.c.b16 %v586, %v585
      %v602 = vpack.c.b16 %v588, %v587
      %v603 = vpack.c.b16 %v590, %v589
      %v604 = vpack.c.b16 %v592, %v591
      %v605 = vpack.c.b16 %v594, %v593
      %v606 = vpack.c.b16 %v596, %v595
      %v607 = vpack.c.b16 %v598, %v597
      %v608 = vpack.c.b16 %v600, %v599
      %617 = vmatprep.subr.bf16.mxu0 0
      %618 = vmatpush1.bf16.msra.mxu0 %v608
      %619 = vmatprep.subr.bf16.mxu0 0
      %620 = vmatpush1.bf16.msra.mxu0 %v607
      %621 = vmatprep.subr.bf16.mxu0 0
      %622 = vmatpush1.bf16.msra.mxu0 %v606
      %623 = vmatprep.subr.bf16.mxu0 0
      %624 = vmatpush1.bf16.msra.mxu0 %v605
      %625 = vmatprep.subr.bf16.mxu0 0
      %626 = vmatpush1.bf16.msra.mxu0 %v604
      %627 = vmatprep.subr.bf16.mxu0 0
      %628 = vmatpush1.bf16.msra.mxu0 %v603
      %629 = vmatprep.subr.bf16.mxu0 0
      %630 = vmatpush1.bf16.msra.mxu0 %v602
      %631 = vmatprep.subr.bf16.mxu0 0
      %632 = vmatpush1.bf16.msra.mxu0 %v601
      %633 = vmatprep.subr.bf16.mxu0 0
      %634 = vmatpush2.bf16.msra.mxu0 0
      %635 = vmatprep.subr.bf16.mxu0 0
      %636 = vmatpush2.bf16.msra.mxu0 0
      %637 = vmatprep.subr.bf16.mxu0 0
      %638 = vmatpush2.bf16.msra.mxu0 0
      %639 = vmatprep.subr.bf16.mxu0 0
      %640 = vmatpush2.bf16.msra.mxu0 0
      %641 = vmatprep.subr.bf16.mxu0 0
      %642 = vmatpush2.bf16.msra.mxu0 0
      %643 = vmatprep.subr.bf16.mxu0 0
      %644 = vmatpush2.bf16.msra.mxu0 0
      %645 = vmatprep.subr.bf16.mxu0 0
      %646 = vmatpush2.bf16.msra.mxu0 0
      %647 = vmatprep.subr.bf16.mxu0 0
      %648 = vmatpush2.bf16.msra.mxu0 0
      %649 = vmatprep.mubr.bf16.mxu0 0
      %650 = vmatmul.mubr.bf16.gmra.mxu0 %v565
      %v651 = vpop.f32.mrf.mxu0
      %v652 = vadd.f32 %v543, %v651
      %v653 = vpop.f32.mrf.mxu0
      %v654 = vpop.f32.mrf.mxu0
      %v655 = vadd.f32 %v546, %v654
      %v656 = vpop.f32.mrf.mxu0
      %657 = vmatprep.mubr.bf16.mxu0 0
      %658 = vmatmul.mubr.bf16.gmra.mxu0 %v566
      %v659 = vpop.f32.mrf.mxu0
      %v660 = vadd.f32 %v551, %v659
      %v661 = vpop.f32.mrf.mxu0
      %v662 = vpop.f32.mrf.mxu0
      %v663 = vadd.f32 %v554, %v662
      %v664 = vpop.f32.mrf.mxu0
      %665 = vdwg.mxu0
      %v666 = vld [vmem:[%s4] sm:$0x1]
      %v668 = vlaneseq
      %v669 = vshrl.u32 %v668, 7
      %v670 = vsub.s32 0, %v669
      %v671 = vrot.slane %v666, %v670
      %v673 = vadd.f32 %v652, %v671
      %v674 = vadd.f32 %v655, %v671
      %v675 = vadd.f32 %v660, %v671
      %v676 = vadd.f32 %v663, %v671
      %v677 = vxor.u32 %v673, 2147483648
      %v678 = vxor.u32 %v674, 2147483648
      %v679 = vxor.u32 %v675, 2147483648
      %v680 = vxor.u32 %v676, 2147483648
      %v681 = vmul.f32 %v677, 1.442695
      %v682 = vpow.pop %v681
      %v683 = vmul.f32 %v678, 1.442695
      %v684 = vpow.pop %v683
      %v685 = vmul.f32 %v679, 1.442695
      %v686 = vpow.pop %v685
      %v687 = vmul.f32 %v680, 1.442695
      %v688 = vpow.pop %v687
      %v689 = vadd.f32 %v682, 1.0
      %v690 = vadd.f32 %v684, 1.0
      %v691 = vadd.f32 %v686, 1.0
      %v692 = vadd.f32 %v688, 1.0
      %v693 = vrcp.pop %v689
      %v694 = vmul.f32 1.0, %v693
      %v695 = vrcp.pop %v690
      %v696 = vmul.f32 1.0, %v695
      %v697 = vrcp.pop %v691
      %v698 = vmul.f32 1.0, %v697
      %v699 = vrcp.pop %v692
      %v700 = vmul.f32 1.0, %v699
      %v701 = vmul.f32 %v673, %v694
      %v702 = vmul.f32 %v674, %v696
      %v703 = vmul.f32 %v675, %v698
      %v704 = vmul.f32 %v676, %v700
      %v705 = vpack.c.bf16 %v702, %v701
      %v706 = vpack.c.bf16 %v704, %v703
      %v707 = vld [vmem:[%s5] sm:$0xf]
      %v708 = vld [vmem:[%s5 + $0x4] sm:$0xf]
      %v709 = vld [vmem:[%s5 + $0x8] sm:$0xf]
      %v710 = vld [vmem:[%s5 + $0xc] sm:$0xf]
      %v711 = vld [vmem:[%s5 + $0x10] sm:$0xf]
      %v712 = vld [vmem:[%s5 + $0x14] sm:$0xf]
      %v713 = vld [vmem:[%s5 + $0x18] sm:$0xf]
      %v714 = vld [vmem:[%s5 + $0x1c] sm:$0xf]
      %v715 = vld [vmem:[%s5 + $0x20] sm:$0xf]
      %v716 = vld [vmem:[%s5 + $0x24] sm:$0xf]
      %v717 = vld [vmem:[%s5 + $0x28] sm:$0xf]
      %v718 = vld [vmem:[%s5 + $0x2c] sm:$0xf]
      %v719 = vld [vmem:[%s5 + $0x30] sm:$0xf]
      %v720 = vld [vmem:[%s5 + $0x34] sm:$0xf]
      %v721 = vld [vmem:[%s5 + $0x38] sm:$0xf]
      %v722 = vld [vmem:[%s5 + $0x3c] sm:$0xf]
      %v723 = vld [vmem:[%s6] sm:$0x1]
      %v725 = vlaneseq
      %v726 = vshrl.u32 %v725, 7
      %v727 = vsub.s32 0, %v726
      %v728 = vrot.slane %v723, %v727
      %v746 = vunpack.c.l.b16 %v707
      %v747 = vunpack.c.l.b16 %v708
      %v748 = vunpack.c.l.b16 %v709
      %v749 = vunpack.c.l.b16 %v710
      %v750 = vunpack.c.l.b16 %v711
      %v751 = vunpack.c.l.b16 %v712
      %v752 = vunpack.c.l.b16 %v713
      %v753 = vunpack.c.l.b16 %v714
      %v754 = vunpack.c.l.b16 %v715
      %v755 = vunpack.c.l.b16 %v716
      %v756 = vunpack.c.l.b16 %v717
      %v757 = vunpack.c.l.b16 %v718
      %v758 = vunpack.c.l.b16 %v719
      %v759 = vunpack.c.l.b16 %v720
      %v760 = vunpack.c.l.b16 %v721
      %v761 = vunpack.c.l.b16 %v722
      %v762 = vpack.c.b16 %v747, %v746
      %v763 = vpack.c.b16 %v749, %v748
      %v764 = vpack.c.b16 %v751, %v750
      %v765 = vpack.c.b16 %v753, %v752
      %v766 = vpack.c.b16 %v755, %v754
      %v767 = vpack.c.b16 %v757, %v756
      %v768 = vpack.c.b16 %v759, %v758
      %v769 = vpack.c.b16 %v761, %v760
      %778 = vmatprep.subr.bf16.mxu0 0
      %779 = vmatpush1.bf16.msra.mxu0 %v769
      %780 = vmatprep.subr.bf16.mxu0 0
      %781 = vmatpush1.bf16.msra.mxu0 %v768
      %782 = vmatprep.subr.bf16.mxu0 0
      %783 = vmatpush1.bf16.msra.mxu0 %v767
      %784 = vmatprep.subr.bf16.mxu0 0
      %785 = vmatpush1.bf16.msra.mxu0 %v766
      %786 = vmatprep.subr.bf16.mxu0 0
      %787 = vmatpush1.bf16.msra.mxu0 %v765
      %788 = vmatprep.subr.bf16.mxu0 0
      %789 = vmatpush1.bf16.msra.mxu0 %v764
      %790 = vmatprep.subr.bf16.mxu0 0
      %791 = vmatpush1.bf16.msra.mxu0 %v763
      %792 = vmatprep.subr.bf16.mxu0 0
      %793 = vmatpush1.bf16.msra.mxu0 %v762
      %794 = vmatprep.subr.bf16.mxu0 0
      %795 = vmatpush2.bf16.msra.mxu0 0
      %796 = vmatprep.subr.bf16.mxu0 0
      %797 = vmatpush2.bf16.msra.mxu0 0
      %798 = vmatprep.subr.bf16.mxu0 0
      %799 = vmatpush2.bf16.msra.mxu0 0
      %800 = vmatprep.subr.bf16.mxu0 0
      %801 = vmatpush2.bf16.msra.mxu0 0
      %802 = vmatprep.subr.bf16.mxu0 0
      %803 = vmatpush2.bf16.msra.mxu0 0
      %804 = vmatprep.subr.bf16.mxu0 0
      %805 = vmatpush2.bf16.msra.mxu0 0
      %806 = vmatprep.subr.bf16.mxu0 0
      %807 = vmatpush2.bf16.msra.mxu0 0
      %808 = vmatprep.subr.bf16.mxu0 0
      %809 = vmatpush2.bf16.msra.mxu0 0
      %810 = vmatprep.mubr.bf16.mxu0 0
      %811 = vmatmul.mubr.bf16.gmra.mxu0 %v705
      %v812 = vpop.f32.mrf.mxu0
      %v813 = vadd.f32 %v728, %v812
      %v814 = vpop.f32.mrf.mxu0
      %v815 = vpop.f32.mrf.mxu0
      %v816 = vadd.f32 %v728, %v815
      %v817 = vpop.f32.mrf.mxu0
      %818 = vmatprep.mubr.bf16.mxu0 0
      %819 = vmatmul.mubr.bf16.gmra.mxu0 %v706
      %v820 = vpop.f32.mrf.mxu0
      %v821 = vadd.f32 %v728, %v820
      %v822 = vpop.f32.mrf.mxu0
      %v823 = vpop.f32.mrf.mxu0
      %v824 = vadd.f32 %v728, %v823
      %v825 = vpop.f32.mrf.mxu0
      %826 = vdwg.mxu0
      %827 = vadd.xlane.f32.xlu0 %v813
      %v828 = vpop.xlane.xlu0 %827
      %829 = vadd.xlane.f32.xlu0 %v816
      %v830 = vpop.xlane.xlu0 %829
      %831 = vadd.xlane.f32.xlu0 %v821
      %v832 = vpop.xlane.xlu0 %831
      %833 = vadd.xlane.f32.xlu0 %v824
      %v834 = vpop.xlane.xlu0 %833
      %v835 = vmul.f32 %v828, 0.0078125
      %v836 = vmul.f32 %v830, 0.0078125
      %v837 = vmul.f32 %v832, 0.0078125
      %v838 = vmul.f32 %v834, 0.0078125
      %v839 = vsub.f32 %v813, %v835
      %v840 = vsub.f32 %v816, %v836
      %v841 = vsub.f32 %v821, %v837
      %v842 = vsub.f32 %v824, %v838
      %v843 = vmul.f32 %v839, %v839
      %v844 = vmul.f32 %v840, %v840
      %v845 = vmul.f32 %v841, %v841
      %v846 = vmul.f32 %v842, %v842
      %847 = vadd.xlane.f32.xlu0 %v843
      %v848 = vpop.xlane.xlu0 %847
      %849 = vadd.xlane.f32.xlu0 %v844
      %v850 = vpop.xlane.xlu0 %849
      %851 = vadd.xlane.f32.xlu0 %v845
      %v852 = vpop.xlane.xlu0 %851
      %853 = vadd.xlane.f32.xlu0 %v846
      %v854 = vpop.xlane.xlu0 %853
      %v855 = vmul.f32 %v848, 0.0078125
      %v856 = vmul.f32 %v850, 0.0078125
      %v857 = vmul.f32 %v852, 0.0078125
      %v858 = vmul.f32 %v854, 0.0078125
      %v859 = vadd.f32 %v855, 1e-05
      %v860 = vadd.f32 %v856, 1e-05
      %v861 = vadd.f32 %v857, 1e-05
      %v862 = vadd.f32 %v858, 1e-05
      %v863 = vrsqrt.pop %v859
      %v864 = vrsqrt.pop %v860
      %v865 = vrsqrt.pop %v861
      %v866 = vrsqrt.pop %v862
      %v867 = vmul.f32 %v839, %v863
      %v868 = vmul.f32 %v840, %v864
      %v869 = vmul.f32 %v841, %v865
      %v870 = vmul.f32 %v842, %v866
      %v871 = vld [vmem:[%s7] sm:$0x1]
      %v873 = vlaneseq
      %v874 = vshrl.u32 %v873, 7
      %v875 = vsub.s32 0, %v874
      %v876 = vrot.slane %v871, %v875
      %v878 = vmul.f32 %v867, %v876
      %v879 = vmul.f32 %v868, %v876
      %v880 = vmul.f32 %v869, %v876
      %v881 = vmul.f32 %v870, %v876
      %v882 = vld [vmem:[%s8] sm:$0x1]
      %v884 = vlaneseq
      %v885 = vshrl.u32 %v884, 7
      %v886 = vsub.s32 0, %v885
      %v887 = vrot.slane %v882, %v886
      %v889 = vadd.f32 %v878, %v887
      %v890 = vadd.f32 %v879, %v887
      %v891 = vadd.f32 %v880, %v887
      %v892 = vadd.f32 %v881, %v887
      %v893 = vld [vmem:[%s399] sm:$0xf]
      %v894 = vld [vmem:[%s399 + $0x4] sm:$0xf]
      %v895 = vld [vmem:[%s399 + $0x8] sm:$0xf]
      %v896 = vld [vmem:[%s399 + $0xc] sm:$0xf]
      %v897 = vunpack.c.l.bf16 %v893
      %v898 = vunpack.c.l.bf16 %v894
      %v899 = vunpack.c.l.bf16 %v895
      %v900 = vunpack.c.l.bf16 %v896
      %v901 = vadd.f32 %v889, %v897
      %v902 = vadd.f32 %v890, %v898
      %v903 = vadd.f32 %v891, %v899
      %v904 = vadd.f32 %v892, %v900
      %v905 = vpack.c.bf16 %v902, %v901
      %v906 = vpack.c.bf16 %v904, %v903
      %v909 = vunpack.c.l.b16 %v905
      %v910 = vunpack.c.h.b16 %v905
      %v911 = vunpack.c.l.b16 %v906
      %v912 = vunpack.c.h.b16 %v906
      %v913 = vpack.c.b16 %v909, %v909
      %v914 = vpack.c.b16 %v910, %v910
      %v915 = vpack.c.b16 %v911, %v911
      %v916 = vpack.c.b16 %v912, %v912
      %921 = vst [vmem:[%s405] sm:$0xf] %v913
      %922 = vst [vmem:[%s405 + $0x4] sm:$0xf] %v914
      %923 = vst [vmem:[%s405 + $0x8] sm:$0xf] %v915
      %924 = vst [vmem:[%s405 + $0xc] sm:$0xf] %v916
      %s925 = smul.u32 4, %s21
      %p926 = scmp.lt.s32.totalorder %s925, 7
      %s927 = scalar_select %p926, %s925, 7
      %s928 = smul.addr %s927, 4
      %s929 = scalar_lea.vmem %s10, %s928
      // Predicated region
      $region61: #{graphcast_forward.36} parent=59 // pred_check
        %p930 = pneg %p264
      $region62: #{graphcast_forward.36} parent=59 // pred_check_branch
        %932 = sbr.rel (%p930) target = $region64
      $region63: #{graphcast_forward.36} parent=59 // pred_region
        %s933 = smul.u32 4, %s21
      $region64: #{graphcast_forward.36} parent=59 // pred_fallthru
        _
    $region60: #{graphcast_forward.36} parent=5 // pred_fallthru
      _
    %p934 = scmp.le.s32.totalorder 2, %s16
    // Predicated region
    $region65: #{graphcast_forward.36} parent=5 // pred_check
      %p935 = pneg %p934
    $region66: #{graphcast_forward.36} parent=5 // pred_check_branch
      %937 = sbr.rel (%p935) target = $region68
    $region67: #{graphcast_forward.36} parent=5 // pred_region
      %s938 = ssub.s32 %s16, 2
      // Predicated region
      $region69: #{graphcast_forward.36} parent=67 // pred_check
        %p939 = pneg %p270
      $region70: #{graphcast_forward.36} parent=67 // pred_check_branch
        %941 = sbr.rel (%p939) target = $region72
      $region71: #{graphcast_forward.36} parent=67 // pred_region
        %s942 = smul.u32 4, %s22
        %p943 = scmp.lt.s32.totalorder %s942, 7
        %s944 = scalar_select %p943, %s942, 7
        %s945 = smul.addr %s944, 4
        %s946 = scalar_lea.vmem %s10, %s945
      $region72: #{graphcast_forward.36} parent=67 // pred_fallthru
        _
    $region68: #{graphcast_forward.36} parent=5 // pred_fallthru
      _
  $region6: #{graphcast_forward.36} parent=0 // loop_footer
    %s20 = sadd.s32 1, %s16
  $region7: #{graphcast_forward.36} parent=0 // loop_footer_branch
    %15 = sbr.rel target = $region3
  $region8: #{graphcast_forward.36} parent=0 // loop_exit
    _

</llo_original>
